<compile_context>
chip_gen: v7x
topology: tpu7x:2x2x1
jax: 0.10.0
libtpu: 0.0.40
codegen_flags: <defaults>
</compile_context>

<pallas_src>
import functools
import math
from typing import NamedTuple

import jax
import jax.numpy as jnp
from jax import lax
from jax.experimental import pallas as pl
from jax.experimental.pallas import tpu as pltpu


# ----------------------------------------------------------------------------
# Small helpers
# ----------------------------------------------------------------------------

def _gelu_tanh(x):
    # GELU with tanh approximation (matches nn.GELU('tanh')).
    c = jnp.float32(0.7978845608028654)  # sqrt(2/pi)
    return 0.5 * x * (1.0 + jnp.tanh(c * (x + 0.044715 * x * x * x)))


def _rope_table(seq_len, embed_size):
    # Matches the PyTorch RoPE module: cat([sin(pos*inv_freq), cos(...)], -1)
    inv_freq = 1.0 / (10000.0 ** (jnp.arange(0, embed_size, 2, dtype=jnp.float32)
                                  / embed_size))
    sinusoid = jnp.arange(seq_len, dtype=jnp.float32)[:, None] * inv_freq[None, :]
    return jnp.concatenate([jnp.sin(sinusoid), jnp.cos(sinusoid)], axis=-1)  # (S,E)


def _choose_tm(seq_len, n_rows):
    # Prefer 128-multiples (full MXU passes, unmasked vst, bf16 sublane packing)
    # that divide the sequence (so RoPE rows never straddle a tile) and leave
    # >= 8 grid steps (>= 4 per core when the "parallel" grid shards across
    # v7x's 2 TensorCores); relax to fewer steps, then to sub-128 tiles
    # (never below 16).
    preferred = (1024, 512, 256, 128)
    fallback = (64, 32, 16)
    for min_steps in (8, 4, 2, 1):
        for tm in preferred:
            if seq_len % tm == 0 and n_rows % tm == 0 and (n_rows // tm) >= min_steps:
                return tm
    for min_steps in (4, 2, 1):
        for tm in fallback:
            if seq_len % tm == 0 and n_rows % tm == 0 and (n_rows // tm) >= min_steps:
                return tm
    return seq_len


_VMEM_CAP = None


def _vmem_capacity_bytes():
    global _VMEM_CAP
    if _VMEM_CAP is None:
        cap = 64 << 20  # conservative fallback (v7x-sized)
        try:
            info = pltpu.get_tpu_info()
            cap = int(getattr(info, "vmem_capacity_bytes", cap)) or cap
        except Exception:
            pass
        _VMEM_CAP = cap
    return _VMEM_CAP


def _vmem_limit(est_bytes):
    # 2x headroom over the static estimate, never below the 32 MiB scoped
    # default, clamped to 75% of physical VMEM (=> ~96 MiB on 128 MiB v5e/v6e,
    # 48 MiB on v7x's 64 MiB).
    cap = max((_vmem_capacity_bytes() * 3) // 4, 32 << 20)
    return int(min(max(2 * est_bytes, 32 << 20), cap))


# ----------------------------------------------------------------------------
# Single-buffered resident operands (pl.Buffered(1)) — probed once with a
# correctness check; fall back to default double buffering if unsupported.
# ----------------------------------------------------------------------------

_SINGLE_BUFFER_OK = None


def _single_buffer_supported():
    global _SINGLE_BUFFER_OK
    if _SINGLE_BUFFER_OK is not None:
        return _SINGLE_BUFFER_OK
    try:
        def probe_kernel(w_ref, o_ref):
            i = pl.program_id(0)
            o_ref[...] = w_ref[...] + i.astype(jnp.float32)

        w = jnp.full((8, 128), 3.0, jnp.float32)
        out = pl.pallas_call(
            probe_kernel,
            out_shape=jax.ShapeDtypeStruct((16, 128), jnp.float32),
            grid_spec=pltpu.PrefetchScalarGridSpec(
                num_scalar_prefetch=0,
                grid=(2,),
                in_specs=[pl.BlockSpec((8, 128), lambda i: (0, 0),
                                       pipeline_mode=pl.Buffered(1))],
                out_specs=pl.BlockSpec((8, 128), lambda i: (i, 0)),
            ),
        )(w)
        out = jax.block_until_ready(out)
        expect = jnp.concatenate(
            [jnp.full((8, 128), 3.0, jnp.float32),
             jnp.full((8, 128), 4.0, jnp.float32)], axis=0)
        _SINGLE_BUFFER_OK = bool(jnp.allclose(out, expect))
    except Exception:
        _SINGLE_BUFFER_OK = False
    return _SINGLE_BUFFER_OK


def _resident_spec(shape):
    """BlockSpec for an operand whose block is identical on every grid step."""
    idx = lambda i: (0,) * len(shape)
    if _single_buffer_supported():
        return pl.BlockSpec(shape, idx, pipeline_mode=pl.Buffered(1))
    return pl.BlockSpec(shape, idx)


# ----------------------------------------------------------------------------
# Pallas kernels
# ----------------------------------------------------------------------------

def _embed_rope_kernel(x_ref, w_ref, b_ref, pos_ref, o_ref, *, tm, pos_blocks):
    # x: (tm, F) bf16, w: (F, E) bf16, b: (1, E) f32, pos: (S, E) f32 resident.
    i = pl.program_id(0)
    row = pl.multiple_of((i % pos_blocks) * tm, tm)
    pos = pos_ref[pl.ds(row, tm), :]
    acc = jnp.dot(x_ref[...], w_ref[...], preferred_element_type=jnp.float32)
    o_ref[...] = ((acc + b_ref[...]) * pos).astype(o_ref.dtype)


def _matmul_kernel(x_ref, w_ref, o_ref):
    o_ref[...] = jnp.dot(x_ref[...], w_ref[...],
                         preferred_element_type=jnp.float32).astype(o_ref.dtype)


def _window_attn_kernel(q_ref, k_ref, v_ref, m_ref, o_ref, *,
                        heads, head_dim, window, overlap, seq_len, scale):
    # q: (window, E) bf16; k/v: (S + 2*overlap, E) bf16 (zero padded, batch-resident);
    # m: (window, 1) f32 query-validity (1.0 keep / 0.0 masked).
    w = pl.program_id(1)
    wk = window + 2 * overlap
    start = pl.multiple_of(w * window, window)
    q = q_ref[...]
    k = k_ref[pl.ds(start, wk), :]
    v = v_ref[pl.ds(start, wk), :]
    mq = m_ref[...]                                               # (window, 1)
    kpos = start - overlap + lax.broadcasted_iota(jnp.int32, (1, wk), 1)
    kvalid = (kpos >= 0) & (kpos < seq_len)                       # (1, wk)
    outs = []
    for hh in range(heads):
        sl = slice(hh * head_dim, (hh + 1) * head_dim)
        qh, kh, vh = q[:, sl], k[:, sl], v[:, sl]
        e = lax.dot_general(qh, kh, (((1,), (1,)), ((), ())),
                            preferred_element_type=jnp.float32)   # (window, wk)
        # Query-row mask (same as torch masked_fill(-1e10) then / sqrt(hd)).
        e = jnp.where(mq > 0.0, e, jnp.float32(-1e10)) * scale
        # Exclude zero-padded key positions outside the valid overlap window.
        e = jnp.where(kvalid, e, jnp.float32(-1e30))
        mmax = jnp.max(e, axis=-1, keepdims=True)
        p = jnp.exp(e - mmax)
        p = p / jnp.sum(p, axis=-1, keepdims=True)
        outs.append(jnp.dot(p.astype(jnp.bfloat16), vh,
                            preferred_element_type=jnp.float32))  # (window, hd)
    o_ref[...] = jnp.concatenate(outs, axis=-1).astype(o_ref.dtype)


def _linear_add_ln_kernel(x_ref, r_ref, w_ref, b_ref, g_ref, bt_ref, o_ref):
    # LayerNorm(x @ W + b + residual) * gamma + beta, eps = 1e-5.
    acc = jnp.dot(x_ref[...], w_ref[...], preferred_element_type=jnp.float32)
    y = acc + b_ref[...] + r_ref[...].astype(jnp.float32)
    mu = jnp.mean(y, axis=-1, keepdims=True)
    yc = y - mu
    var = jnp.mean(yc * yc, axis=-1, keepdims=True)
    o_ref[...] = (yc * lax.rsqrt(var + 1e-5) * g_ref[...] + bt_ref[...]).astype(o_ref.dtype)


def _ffn_ln_kernel(x_ref, w1_ref, b1_ref, w2_ref, b2_ref, g_ref, bt_ref, o_ref):
    # LayerNorm((Linear -> GELU(tanh) -> Linear)(x) + x) * gamma + beta.
    x = x_ref[...]
    h = jnp.dot(x, w1_ref[...], preferred_element_type=jnp.float32)
    h = _gelu_tanh(h + b1_ref[...])
    y = jnp.dot(h.astype(jnp.bfloat16), w2_ref[...],
                preferred_element_type=jnp.float32)
    y = y + b2_ref[...] + x.astype(jnp.float32)
    mu = jnp.mean(y, axis=-1, keepdims=True)
    yc = y - mu
    var = jnp.mean(yc * yc, axis=-1, keepdims=True)
    o_ref[...] = (yc * lax.rsqrt(var + 1e-5) * g_ref[...] + bt_ref[...]).astype(o_ref.dtype)


# ----------------------------------------------------------------------------
# Pallas wrappers (bf16 activations/weights on the MXU, f32 accumulation)
# ----------------------------------------------------------------------------

def embed_rope(x, w, b, pos, *, tm):
    """(B,S,F) -> (B*S,E) bf16: embedding Linear + RoPE, resident RoPE table."""
    B, S, F = x.shape
    E = w.shape[1]
    M = B * S
    pos_blocks = S // tm
    x2d = x.reshape(M, F).astype(jnp.bfloat16)
    est = 2 * tm * F * 2 + 2 * F * E * 2 + 2 * S * E * 4 + 2 * tm * E * 2 + 8 * E
    kernel = functools.partial(_embed_rope_kernel, tm=tm, pos_blocks=pos_blocks)
    return pl.pallas_call(
        kernel,
        out_shape=jax.ShapeDtypeStruct((M, E), jnp.bfloat16),
        grid_spec=pltpu.PrefetchScalarGridSpec(
            num_scalar_prefetch=0,
            grid=(M // tm,),
            in_specs=[
                pl.BlockSpec((tm, F), lambda i: (i, 0)),
                _resident_spec((F, E)),
                _resident_spec((1, E)),
                _resident_spec((S, E)),
            ],
            out_specs=pl.BlockSpec((tm, E), lambda i: (i, 0)),
        ),
        compiler_params=pltpu.CompilerParams(
            dimension_semantics=("parallel",),
            vmem_limit_bytes=_vmem_limit(est),
        ),
    )(x2d, w, b, pos)


def matmul(x2d, w, *, tm):
    """(M,K) @ (K,N), bf16 inputs, f32 accumulation, bf16 output (no bias)."""
    M, K = x2d.shape
    N = w.shape[1]
    est = 2 * tm * K * 2 + 2 * K * N * 2 + 2 * tm * N * 2
    return pl.pallas_call(
        _matmul_kernel,
        out_shape=jax.ShapeDtypeStruct((M, N), jnp.bfloat16),
        grid_spec=pltpu.PrefetchScalarGridSpec(
            num_scalar_prefetch=0,
            grid=(M // tm,),
            in_specs=[pl.BlockSpec((tm, K), lambda i: (i, 0)),
                      _resident_spec((K, N))],
            out_specs=pl.BlockSpec((tm, N), lambda i: (i, 0)),
        ),
        compiler_params=pltpu.CompilerParams(
            dimension_semantics=("parallel",),
            vmem_limit_bytes=_vmem_limit(est),
        ),
    )(x2d.astype(jnp.bfloat16), w)


def window_attention(q, k, v, maskf, *, heads, window, overlap):
    """OverlappingLocalSelfAttention core: grid (batch, window), bf16 output."""
    B, S, E = q.shape
    hd = E // heads
    wk = window + 2 * overlap
    s_pad = S + 2 * overlap
    kp = jnp.pad(k.astype(jnp.bfloat16), ((0, 0), (overlap, overlap), (0, 0)))
    vp = jnp.pad(v.astype(jnp.bfloat16), ((0, 0), (overlap, overlap), (0, 0)))
    n_win = S // window
    est = (2 * window * E * 2 + 2 * 2 * s_pad * E * 2 + 2 * window * 4
           + 2 * window * E * 2 + heads * window * wk * 4)
    kernel = functools.partial(
        _window_attn_kernel, heads=heads, head_dim=hd, window=window,
        overlap=overlap, seq_len=S, scale=1.0 / math.sqrt(hd))
    return pl.pallas_call(
        kernel,
        out_shape=jax.ShapeDtypeStruct((B, S, E), jnp.bfloat16),
        grid_spec=pltpu.PrefetchScalarGridSpec(
            num_scalar_prefetch=0,
            grid=(B, n_win),
            in_specs=[
                pl.BlockSpec((None, window, E), lambda b, w: (b, w, 0)),
                pl.BlockSpec((None, s_pad, E), lambda b, w: (b, 0, 0)),
                pl.BlockSpec((None, s_pad, E), lambda b, w: (b, 0, 0)),
                pl.BlockSpec((None, window, 1), lambda b, w: (b, w, 0)),
            ],
            out_specs=pl.BlockSpec((None, window, E), lambda b, w: (b, w, 0)),
        ),
        compiler_params=pltpu.CompilerParams(
            dimension_semantics=("parallel", "arbitrary"),
            vmem_limit_bytes=_vmem_limit(est),
        ),
    )(q.astype(jnp.bfloat16), kp, vp, maskf.astype(jnp.float32))


def linear_add_ln(x2d, r2d, w, b, g, beta, *, tm):
    """Fused out-projection + residual add + LayerNorm, bf16 output."""
    M, K = x2d.shape
    N = w.shape[1]
    est = (2 * tm * K * 2 + 2 * tm * N * 2 + 2 * K * N * 2 + 24 * N
           + 2 * tm * N * 2 + tm * N * 4)
    return pl.pallas_call(
        _linear_add_ln_kernel,
        out_shape=jax.ShapeDtypeStruct((M, N), jnp.bfloat16),
        grid_spec=pltpu.PrefetchScalarGridSpec(
            num_scalar_prefetch=0,
            grid=(M // tm,),
            in_specs=[
                pl.BlockSpec((tm, K), lambda i: (i, 0)),
                pl.BlockSpec((tm, N), lambda i: (i, 0)),
                _resident_spec((K, N)),
                _resident_spec((1, N)),
                _resident_spec((1, N)),
                _resident_spec((1, N)),
            ],
            out_specs=pl.BlockSpec((tm, N), lambda i: (i, 0)),
        ),
        compiler_params=pltpu.CompilerParams(
            dimension_semantics=("parallel",),
            vmem_limit_bytes=_vmem_limit(est),
        ),
    )(x2d.astype(jnp.bfloat16), r2d.astype(jnp.bfloat16), w, b, g, beta)


def ffn_ln(x2d, w1, b1, w2, b2, g, beta, *, tm):
    """Fused Linear -> GELU(tanh) -> Linear + residual -> LayerNorm, bf16 output."""
    M, E = x2d.shape
    H = w1.shape[1]
    est = (2 * tm * E * 2 + 2 * (E * H + H * E) * 2 + 4 * (H + 3 * E) * 2
           + tm * H * 4 + tm * E * 4 + 2 * tm * E * 2)
    # TODO(synk): add a hidden-dim reduction grid axis (f32 accumulator scratch)
    # when resident w1/w2 + the (tm,H) hidden tile exceed the v7x VMEM budget.
    return pl.pallas_call(
        _ffn_ln_kernel,
        out_shape=jax.ShapeDtypeStruct((M, E), jnp.bfloat16),
        grid_spec=pltpu.PrefetchScalarGridSpec(
            num_scalar_prefetch=0,
            grid=(M // tm,),
            in_specs=[
                pl.BlockSpec((tm, E), lambda i: (i, 0)),
                _resident_spec((E, H)),
                _resident_spec((1, H)),
                _resident_spec((H, E)),
                _resident_spec((1, E)),
                _resident_spec((1, E)),
                _resident_spec((1, E)),
            ],
            out_specs=pl.BlockSpec((tm, E), lambda i: (i, 0)),
        ),
        compiler_params=pltpu.CompilerParams(
            dimension_semantics=("parallel",),
            vmem_limit_bytes=_vmem_limit(est),
        ),
    )(x2d.astype(jnp.bfloat16), w1, b1, w2, b2, g, beta)


# ----------------------------------------------------------------------------
# Pure-JAX mirrors (same math / same bf16 casts) for the in-script check
# ----------------------------------------------------------------------------

def _embed_rope_ref(x, w, b, pos, *, tm):
    B, S, F = x.shape
    acc = jnp.dot(x.reshape(B * S, F).astype(jnp.bfloat16), w,
                  preferred_element_type=jnp.float32) + b
    acc = acc.reshape(B, S, -1) * pos[None]
    return acc.reshape(B * S, -1).astype(jnp.bfloat16)


def _matmul_ref(x2d, w, *, tm):
    return jnp.dot(x2d.astype(jnp.bfloat16), w,
                   preferred_element_type=jnp.float32).astype(jnp.bfloat16)


def _window_attention_ref(q, k, v, maskf, *, heads, window, overlap):
    # Direct analogue of the PyTorch window loop (valid-window slices).
    B, S, E = q.shape
    hd = E // heads
    scale = 1.0 / math.sqrt(hd)
    q4 = q.astype(jnp.bfloat16).reshape(B, S, heads, hd)
    k4 = k.astype(jnp.bfloat16).reshape(B, S, heads, hd)
    v4 = v.astype(jnp.bfloat16).reshape(B, S, heads, hd)
    chunks = []
    for i in range(0, S, window):
        wend = min(i + window, S)
        s0 = max(0, i - overlap)
        e0 = min(S, wend + overlap)
        lq, lk, lv = q4[:, i:wend], k4[:, s0:e0], v4[:, s0:e0]
        e = jnp.einsum('nqhd,nkhd->nhqk', lq, lk,
                       preferred_element_type=jnp.float32)
        lm = maskf[:, i:wend, 0][:, None, :, None] > 0.0      # (B,1,wq,1)
        e = jnp.where(lm, e, jnp.float32(-1e10)) * scale
        mmax = jnp.max(e, axis=-1, keepdims=True)
        p = jnp.exp(e - mmax)
        p = p / jnp.sum(p, axis=-1, keepdims=True)
        o = jnp.einsum('nhqk,nkhd->nqhd', p.astype(jnp.bfloat16), lv,
                       preferred_element_type=jnp.float32)
        chunks.append(o.reshape(B, wend - i, E))
    return jnp.concatenate(chunks, axis=1).astype(jnp.bfloat16)


def _linear_add_ln_ref(x2d, r2d, w, b, g, beta, *, tm):
    y = jnp.dot(x2d.astype(jnp.bfloat16), w, preferred_element_type=jnp.float32)
    y = y + b + r2d.astype(jnp.float32)
    mu = jnp.mean(y, axis=-1, keepdims=True)
    yc = y - mu
    var = jnp.mean(yc * yc, axis=-1, keepdims=True)
    return (yc * lax.rsqrt(var + 1e-5) * g + beta).astype(jnp.bfloat16)


def _ffn_ln_ref(x2d, w1, b1, w2, b2, g, beta, *, tm):
    x = x2d.astype(jnp.bfloat16)
    h = jnp.dot(x, w1, preferred_element_type=jnp.float32)
    h = _gelu_tanh(h + b1)
    y = jnp.dot(h.astype(jnp.bfloat16), w2, preferred_element_type=jnp.float32)
    y = y + b2 + x.astype(jnp.float32)
    mu = jnp.mean(y, axis=-1, keepdims=True)
    yc = y - mu
    var = jnp.mean(yc * yc, axis=-1, keepdims=True)
    return (yc * lax.rsqrt(var + 1e-5) * g + beta).astype(jnp.bfloat16)


PALLAS_OPS = dict(embed_rope=embed_rope, matmul=matmul, attention=window_attention,
                  linear_add_ln=linear_add_ln, ffn_ln=ffn_ln)
REF_OPS = dict(embed_rope=_embed_rope_ref, matmul=_matmul_ref,
               attention=_window_attention_ref, linear_add_ln=_linear_add_ln_ref,
               ffn_ln=_ffn_ln_ref)


# ----------------------------------------------------------------------------
# Model
# ----------------------------------------------------------------------------

class Config(NamedTuple):
    embed_size: int
    num_layers: int
    heads: int
    forward_expansion: int
    dropout: float
    window_size: int
    input_features: int
    mask_rate: float


def backbone_forward(params, x, mask, rng, *, cfg, ops):
    """Backbone.forward: returns (hidden, target, prediction_mask)."""
    B, S, F = x.shape
    E = cfg.embed_size
    H = E * cfg.forward_expansion
    heads = cfg.heads
    win = cfg.window_size
    ov = win // 8
    assert E % heads == 0
    # Lane-dense layout: all matmul last dims multiples of 128.
    assert E % 128 == 0 and H % 128 == 0 and F % 128 == 0, \
        "embed / hidden / input-feature dims must be multiples of 128"
    assert S % win == 0 and win % 8 == 0  # TODO(synk): ragged last window
    M = B * S
    tm = _choose_tm(S, M)

    k_pred, k_gate, k_rep, k_sel = jax.random.split(rng, 4)

    # --- generate_prediction_mask ---
    rand = jax.random.uniform(k_pred, (B, S))
    prediction_mask = (rand < cfg.mask_rate) & mask
    target = jnp.where(prediction_mask[..., None], x, jnp.float32(0.0))

    # --- apply_mask ---
    gate = jax.random.uniform(k_gate, ()) < 0.75
    replace_rate = jnp.where(gate, jnp.float32(0.3), jnp.float32(0.0))
    replace_mask = jax.random.uniform(k_rep, (B, S)) < replace_rate
    extended = (replace_mask & prediction_mask)[..., None]
    sel = (jax.random.uniform(k_sel, (B, S)) < 0.2)[..., None]
    mask_value = jnp.where(sel, jnp.float32(0.5), jnp.float32(-9.0))
    xm = jnp.where(extended, mask_value, x)

    # --- embedding Linear + RoPE (fused Pallas kernel); dropout = identity ---
    pos = _rope_table(S, E)
    h2d = ops["embed_rope"](xm, params["we"], params["be"], pos, tm=tm)  # (M,E) bf16

    maskf = mask.astype(jnp.float32)[..., None]  # (B,S,1)

    # --- transformer layers ---
    for lp in params["layers"]:
        qkv = ops["matmul"](h2d, lp["wqkv"], tm=tm)               # (M,3E) bf16
        qkv3 = qkv.reshape(B, S, 3 * E)
        q, k, v = qkv3[..., :E], qkv3[..., E:2 * E], qkv3[..., 2 * E:]
        attn = ops["attention"](q, k, v, maskf, heads=heads,
                                window=win, overlap=ov)           # (B,S,E) bf16
        x1 = ops["linear_add_ln"](attn.reshape(M, E), h2d, lp["wo"], lp["bo"],
                                  lp["g1"], lp["beta1"], tm=tm)   # (M,E) bf16
        h2d = ops["ffn_ln"](x1, lp["w1"], lp["b1"], lp["w2"], lp["b2"],
                            lp["g2"], lp["beta2"], tm=tm)         # (M,E) bf16

    return h2d.reshape(B, S, E), target, prediction_mask


def init_params(key, cfg):
    """nn.Linear-style uniform init (f32 master copy); weights stored as (in, out)."""
    E, F = cfg.embed_size, cfg.input_features
    H = E * cfg.forward_expansion
    hd = E // cfg.heads

    def lin(k, fan_in, shape):
        lim = 1.0 / math.sqrt(fan_in)
        return jax.random.uniform(k, shape, jnp.float32, -lim, lim)

    keys = jax.random.split(key, 2 + cfg.num_layers)
    params = {"we": lin(keys[0], F, (F, E)),
              "be": lin(keys[1], F, (E,)),
              "layers": []}
    for layer_idx in range(cfg.num_layers):
        ks = jax.random.split(keys[2 + layer_idx], 9)
        params["layers"].append({
            "wq": lin(ks[0], hd, (hd, hd)),
            "wk": lin(ks[1], hd, (hd, hd)),
            "wv": lin(ks[2], hd, (hd, hd)),
            "wo": lin(ks[3], E, (E, E)),
            "bo": lin(ks[4], E, (E,)),
            "g1": jnp.ones((E,), jnp.float32),
            "beta1": jnp.zeros((E,), jnp.float32),
            "w1": lin(ks[5], E, (E, H)),
            "b1": lin(ks[6], E, (H,)),
            "w2": lin(ks[7], H, (H, E)),
            "b2": lin(ks[8], H, (E,)),
            "g2": jnp.ones((E,), jnp.float32),
            "beta2": jnp.zeros((E,), jnp.float32),
        })
    return params


def prepare_params(params, cfg):
    """One-time conversion (outside the per-forward jit): bf16 weights, f32
    biases/LN params, and the per-head wq/wk/wv folded into one lane-dense
    block-diagonal (E, 3E) QKV matrix."""
    heads = cfg.heads
    eye = jnp.eye(heads, dtype=jnp.float32)

    def block_diag(w):  # (hd,hd) -> (E,E), same block on every head's diagonal
        return jnp.kron(eye, w)

    prepared = {"we": params["we"].astype(jnp.bfloat16),
                "be": params["be"].reshape(1, -1).astype(jnp.float32),
                "layers": []}
    for lp in params["layers"]:
        wqkv = jnp.concatenate(
            [block_diag(lp["wq"]), block_diag(lp["wk"]), block_diag(lp["wv"])],
            axis=1)
        prepared["layers"].append({
            "wqkv": wqkv.astype(jnp.bfloat16),
            "wo": lp["wo"].astype(jnp.bfloat16),
            "bo": lp["bo"].reshape(1, -1).astype(jnp.float32),
            "g1": lp["g1"].reshape(1, -1).astype(jnp.float32),
            "beta1": lp["beta1"].reshape(1, -1).astype(jnp.float32),
            "w1": lp["w1"].astype(jnp.bfloat16),
            "b1": lp["b1"].reshape(1, -1).astype(jnp.float32),
            "w2": lp["w2"].astype(jnp.bfloat16),
            "b2": lp["b2"].reshape(1, -1).astype(jnp.float32),
            "g2": lp["g2"].reshape(1, -1).astype(jnp.float32),
            "beta2": lp["beta2"].reshape(1, -1).astype(jnp.float32),
        })
    return prepared


if __name__ == "__main__":
    # Small but lane-dense demo shapes (E, F multiples of 128; M=512 rows gives
    # the row-streamed kernels a 4-step "parallel" grid with tm=128; attention
    # runs on a (B=2, windows=4) grid).
    cfg = Config(embed_size=128, num_layers=2, heads=8, forward_expansion=4,
                 dropout=0.1, window_size=64, input_features=128, mask_rate=0.15)
    B, S = 2, 256

    key = jax.random.PRNGKey(0)
    k_param, k_x, k_mask, k_fwd = jax.random.split(key, 4)
    params = init_params(k_param, cfg)
    prepared = prepare_params(params, cfg)   # one-time bf16 conversion, outside jit
    x = jax.random.normal(k_x, (B, S, cfg.input_features), jnp.float32)
    mask = jax.random.bernoulli(k_mask, 0.9, (B, S))

    # Resolve hardware capabilities before building the main kernels.
    _vmem_capacity_bytes()
    _single_buffer_supported()

    fwd = jax.jit(functools.partial(backbone_forward, cfg=cfg, ops=PALLAS_OPS))
    out, target, pred_mask = fwd(prepared, x, mask, k_fwd)
    out = jax.block_until_ready(out)

    # Pure-JAX reference with identical math (same bf16 casts, f32 accumulation).
    ref_fwd = jax.jit(functools.partial(backbone_forward, cfg=cfg, ops=REF_OPS))
    ref_out, ref_target, ref_pred = ref_fwd(prepared, x, mask, k_fwd)
    ref_out = jax.block_until_ready(ref_out)

    assert out.shape == (B, S, cfg.embed_size)
    o32 = out.astype(jnp.float32)
    r32 = ref_out.astype(jnp.float32)
    assert bool(jnp.all(jnp.isfinite(o32)))
    assert bool(jnp.array_equal(pred_mask, ref_pred))
    assert bool(jnp.allclose(target, ref_target))
    assert bool(jnp.allclose(o32, r32, atol=2e-2, rtol=2e-2)), \
        float(jnp.max(jnp.abs(o32 - r32)))

    print("KERNEL_OK")
</pallas_src>

<mosaic_0001>
module attributes {stable_mosaic.version = 11 : i64} {
  func.func @probe_kernel(%arg0: i32, %arg1: memref<8x128xf32, #tpu.memory_space<vmem>>, %arg2: memref<8x128xf32, #tpu.memory_space<vmem>>) attributes {dimension_semantics = [#tpu.dimension_semantics<arbitrary>], iteration_bounds = array<i64: 2>, scalar_prefetch = 0 : i64, scratch_operands = 0 : i64, tpu.core_type = #tpu.core_type<tc>, window_params = [{pipeline_mode = #tpu.pipeline_mode<synchronous>, transform_indices = @transform_0, window_bounds = array<i64: 8, 128>}, {transform_indices = @transform_1, window_bounds = array<i64: 8, 128>}]} {
    %c0 = arith.constant 0 : index
    %c0_0 = arith.constant 0 : index
    %0 = vector.load %arg1[%c0, %c0_0] : memref<8x128xf32, #tpu.memory_space<vmem>>, vector<8x128xf32>
    %1 = arith.sitofp %arg0 : i32 to f32
    %2 = vector.broadcast %1 : f32 to vector<8x128xf32>
    %3 = arith.addf %0, %2 : vector<8x128xf32>
    %c0_1 = arith.constant 0 : index
    %c0_2 = arith.constant 0 : index
    %4 = vector.load %arg2[%c0_1, %c0_2] : memref<8x128xf32, #tpu.memory_space<vmem>>, vector<8x128xf32>
    tpu.vector_store %arg2[%c0_1, %c0_2], %3 {strides = array<i32>} : memref<8x128xf32, #tpu.memory_space<vmem>>, vector<8x128xf32>,
    return
  }
  func.func @transform_0(%arg0: i32) -> (i32, i32) {
    %c0_i32 = arith.constant 0 : i32
    %c0_i32_0 = arith.constant 0 : i32
    %c0_i32_1 = arith.constant 0 : i32
    return %c0_i32, %c0_i32_0 : i32, i32
  }
  func.func @transform_1(%arg0: i32) -> (i32, i32) {
    %c0_i32 = arith.constant 0 : i32
    %c0_i32_0 = arith.constant 0 : i32
    return %arg0, %c0_i32 : i32, i32
  }
}

module attributes {stable_mosaic.version = 11 : i64} {
  func.func @_matmul_kernel(%arg0: i32, %arg1: memref<128x128xbf16, #tpu.memory_space<vmem>>, %arg2: memref<128x384xbf16, #tpu.memory_space<vmem>>, %arg3: memref<128x384xbf16, #tpu.memory_space<vmem>>) attributes {dimension_semantics = [#tpu.dimension_semantics<parallel>], iteration_bounds = array<i64: 4>, scalar_prefetch = 0 : i64, scratch_operands = 0 : i64, tpu.core_type = #tpu.core_type<tc>, window_params = [{transform_indices = @transform_0, window_bounds = array<i64: 128, 128>}, {pipeline_mode = #tpu.pipeline_mode<synchronous>, transform_indices = @transform_1, window_bounds = array<i64: 128, 384>}, {transform_indices = @transform_2, window_bounds = array<i64: 128, 384>}]} {
    %c0 = arith.constant 0 : index
    %c0_0 = arith.constant 0 : index
    %0 = vector.load %arg1[%c0, %c0_0] : memref<128x128xbf16, #tpu.memory_space<vmem>>, vector<128x128xbf16>
    %c0_1 = arith.constant 0 : index
    %c0_2 = arith.constant 0 : index
    %1 = vector.load %arg2[%c0_1, %c0_2] : memref<128x384xbf16, #tpu.memory_space<vmem>>, vector<128x384xbf16>
    %cst = arith.constant dense<0.000000e+00> : vector<128x384xf32>
    %2 = tpu.matmul %0, %1, %cst {dimension_numbers = #tpu.dot_dimension_numbers<[1], [0], [0], [1], [0, 0, 1, 1], [], []>} : vector<128x128xbf16>, vector<128x384xbf16>, vector<128x384xf32> -> vector<128x384xf32>
    %3 = arith.truncf %2 : vector<128x384xf32> to vector<128x384xbf16>
    %c0_3 = arith.constant 0 : index
    %c0_4 = arith.constant 0 : index
    %4 = vector.load %arg3[%c0_3, %c0_4] : memref<128x384xbf16, #tpu.memory_space<vmem>>, vector<128x384xbf16>
    tpu.vector_store %arg3[%c0_3, %c0_4], %3 {strides = array<i32>} : memref<128x384xbf16, #tpu.memory_space<vmem>>, vector<128x384xbf16>,
    return
  }
  func.func @transform_0(%arg0: i32) -> (i32, i32) {
    %c0_i32 = arith.constant 0 : i32
    %c0_i32_0 = arith.constant 0 : i32
    return %arg0, %c0_i32 : i32, i32
  }
  func.func @transform_1(%arg0: i32) -> (i32, i32) {
    %c0_i32 = arith.constant 0 : i32
    %c0_i32_0 = arith.constant 0 : i32
    %c0_i32_1 = arith.constant 0 : i32
    return %c0_i32, %c0_i32_0 : i32, i32
  }
  func.func @transform_2(%arg0: i32) -> (i32, i32) {
    %c0_i32 = arith.constant 0 : i32
    %c0_i32_0 = arith.constant 0 : i32
    return %arg0, %c0_i32 : i32, i32
  }
}

module attributes {stable_mosaic.version = 11 : i64} {
  func.func @_embed_rope_kernel(%arg0: i32, %arg1: memref<128x128xbf16, #tpu.memory_space<vmem>>, %arg2: memref<128x128xbf16, #tpu.memory_space<vmem>>, %arg3: memref<1x128xf32, #tpu.memory_space<vmem>>, %arg4: memref<256x128xf32, #tpu.memory_space<vmem>>, %arg5: memref<128x128xbf16, #tpu.memory_space<vmem>>) attributes {dimension_semantics = [#tpu.dimension_semantics<parallel>], iteration_bounds = array<i64: 4>, scalar_prefetch = 0 : i64, scratch_operands = 0 : i64, tpu.core_type = #tpu.core_type<tc>, window_params = [{transform_indices = @transform_0, window_bounds = array<i64: 128, 128>}, {pipeline_mode = #tpu.pipeline_mode<synchronous>, transform_indices = @transform_1, window_bounds = array<i64: 128, 128>}, {pipeline_mode = #tpu.pipeline_mode<synchronous>, transform_indices = @transform_2, window_bounds = array<i64: 1, 128>}, {pipeline_mode = #tpu.pipeline_mode<synchronous>, transform_indices = @transform_3, window_bounds = array<i64: 256, 128>}, {transform_indices = @transform_4, window_bounds = array<i64: 128, 128>}]} {
    %c2_i32 = arith.constant 2 : i32
    %c0_i32 = arith.constant 0 : i32
    %0 = arith.cmpi eq, %c2_i32, %c0_i32 : i32
    %c1_i32 = arith.constant 1 : i32
    %1 = arith.select %0, %c1_i32, %c2_i32 : i32
    %2 = arith.remsi %arg0, %1 : i32
    %c0_i32_0 = arith.constant 0 : i32
    %3 = arith.cmpi ne, %2, %c0_i32_0 : i32
    %c0_i32_1 = arith.constant 0 : i32
    %4 = arith.cmpi slt, %2, %c0_i32_1 : i32
    %c0_i32_2 = arith.constant 0 : i32
    %5 = arith.cmpi slt, %1, %c0_i32_2 : i32
    %6 = arith.xori %4, %5 : i1
    %7 = arith.andi %6, %3 : i1
    %8 = arith.addi %2, %1 : i32
    %9 = arith.select %7, %8, %2 : i32
    %c128_i32 = arith.constant 128 : i32
    %10 = arith.muli %9, %c128_i32 : i32
    %11 = tpu.assume_multiple %10, 128 : i32
    %12 = arith.index_cast %11 : i32 to index
    %c0 = arith.constant 0 : index
    %13 = vector.load %arg4[%12, %c0] : memref<256x128xf32, #tpu.memory_space<vmem>>, vector<128x128xf32>
    %c0_3 = arith.constant 0 : index
    %c0_4 = arith.constant 0 : index
    %14 = vector.load %arg1[%c0_3, %c0_4] : memref<128x128xbf16, #tpu.memory_space<vmem>>, vector<128x128xbf16>
    %c0_5 = arith.constant 0 : index
    %c0_6 = arith.constant 0 : index
    %15 = vector.load %arg2[%c0_5, %c0_6] : memref<128x128xbf16, #tpu.memory_space<vmem>>, vector<128x128xbf16>
    %cst = arith.constant dense<0.000000e+00> : vector<128x128xf32>
    %16 = tpu.matmul %14, %15, %cst {dimension_numbers = #tpu.dot_dimension_numbers<[1], [0], [0], [1], [0, 0, 1, 1], [], []>} : vector<128x128xbf16>, vector<128x128xbf16>, vector<128x128xf32> -> vector<128x128xf32>
    %c0_7 = arith.constant 0 : index
    %c0_8 = arith.constant 0 : index
    %17 = vector.load %arg3[%c0_7, %c0_8] : memref<1x128xf32, #tpu.memory_space<vmem>>, vector<1x128xf32>
    %18 = vector.broadcast %17 : vector<1x128xf32> to vector<128x128xf32>
    %19 = arith.addf %16, %18 : vector<128x128xf32>
    %20 = arith.mulf %19, %13 : vector<128x128xf32>
    %21 = arith.truncf %20 : vector<128x128xf32> to vector<128x128xbf16>
    %c0_9 = arith.constant 0 : index
    %c0_10 = arith.constant 0 : index
    %22 = vector.load %arg5[%c0_9, %c0_10] : memref<128x128xbf16, #tpu.memory_space<vmem>>, vector<128x128xbf16>
    tpu.vector_store %arg5[%c0_9, %c0_10], %21 {strides = array<i32>} : memref<128x128xbf16, #tpu.memory_space<vmem>>, vector<128x128xbf16>,
    return
  }
  func.func @transform_0(%arg0: i32) -> (i32, i32) {
    %c0_i32 = arith.constant 0 : i32
    %c0_i32_0 = arith.constant 0 : i32
    return %arg0, %c0_i32 : i32, i32
  }
  func.func @transform_1(%arg0: i32) -> (i32, i32) {
    %c0_i32 = arith.constant 0 : i32
    %c0_i32_0 = arith.constant 0 : i32
    %c0_i32_1 = arith.constant 0 : i32
    return %c0_i32, %c0_i32_0 : i32, i32
  }
  func.func @transform_2(%arg0: i32) -> (i32, i32) {
    %c0_i32 = arith.constant 0 : i32
    %c0_i32_0 = arith.constant 0 : i32
    %c0_i32_1 = arith.constant 0 : i32
    return %c0_i32, %c0_i32_0 : i32, i32
  }
  func.func @transform_3(%arg0: i32) -> (i32, i32) {
    %c0_i32 = arith.constant 0 : i32
    %c0_i32_0 = arith.constant 0 : i32
    %c0_i32_1 = arith.constant 0 : i32
    return %c0_i32, %c0_i32_0 : i32, i32
  }
  func.func @transform_4(%arg0: i32) -> (i32, i32) {
    %c0_i32 = arith.constant 0 : i32
    %c0_i32_0 = arith.constant 0 : i32
    return %arg0, %c0_i32 : i32, i32
  }
}

module attributes {stable_mosaic.version = 11 : i64} {
  func.func @_linear_add_ln_kernel(%arg0: i32, %arg1: memref<128x128xbf16, #tpu.memory_space<vmem>>, %arg2: memref<128x128xbf16, #tpu.memory_space<vmem>>, %arg3: memref<128x128xbf16, #tpu.memory_space<vmem>>, %arg4: memref<1x128xf32, #tpu.memory_space<vmem>>, %arg5: memref<1x128xf32, #tpu.memory_space<vmem>>, %arg6: memref<1x128xf32, #tpu.memory_space<vmem>>, %arg7: memref<128x128xbf16, #tpu.memory_space<vmem>>) attributes {dimension_semantics = [#tpu.dimension_semantics<parallel>], iteration_bounds = array<i64: 4>, scalar_prefetch = 0 : i64, scratch_operands = 0 : i64, tpu.core_type = #tpu.core_type<tc>, window_params = [{transform_indices = @transform_0, window_bounds = array<i64: 128, 128>}, {transform_indices = @transform_1, window_bounds = array<i64: 128, 128>}, {pipeline_mode = #tpu.pipeline_mode<synchronous>, transform_indices = @transform_2, window_bounds = array<i64: 128, 128>}, {pipeline_mode = #tpu.pipeline_mode<synchronous>, transform_indices = @transform_3, window_bounds = array<i64: 1, 128>}, {pipeline_mode = #tpu.pipeline_mode<synchronous>, transform_indices = @transform_4, window_bounds = array<i64: 1, 128>}, {pipeline_mode = #tpu.pipeline_mode<synchronous>, transform_indices = @transform_5, window_bounds = array<i64: 1, 128>}, {transform_indices = @transform_6, window_bounds = array<i64: 128, 128>}]} {
    %c0 = arith.constant 0 : index
    %c0_0 = arith.constant 0 : index
    %0 = vector.load %arg1[%c0, %c0_0] : memref<128x128xbf16, #tpu.memory_space<vmem>>, vector<128x128xbf16>
    %c0_1 = arith.constant 0 : index
    %c0_2 = arith.constant 0 : index
    %1 = vector.load %arg3[%c0_1, %c0_2] : memref<128x128xbf16, #tpu.memory_space<vmem>>, vector<128x128xbf16>
    %cst = arith.constant dense<0.000000e+00> : vector<128x128xf32>
    %2 = tpu.matmul %0, %1, %cst {dimension_numbers = #tpu.dot_dimension_numbers<[1], [0], [0], [1], [0, 0, 1, 1], [], []>} : vector<128x128xbf16>, vector<128x128xbf16>, vector<128x128xf32> -> vector<128x128xf32>
    %c0_3 = arith.constant 0 : index
    %c0_4 = arith.constant 0 : index
    %3 = vector.load %arg4[%c0_3, %c0_4] : memref<1x128xf32, #tpu.memory_space<vmem>>, vector<1x128xf32>
    %4 = vector.broadcast %3 : vector<1x128xf32> to vector<128x128xf32>
    %5 = arith.addf %2, %4 : vector<128x128xf32>
    %c0_5 = arith.constant 0 : index
    %c0_6 = arith.constant 0 : index
    %6 = vector.load %arg2[%c0_5, %c0_6] : memref<128x128xbf16, #tpu.memory_space<vmem>>, vector<128x128xbf16>
    %7 = arith.extf %6 : vector<128x128xbf16> to vector<128x128xf32>
    %8 = arith.addf %5, %7 : vector<128x128xf32>
    %cst_7 = arith.constant dense<0.000000e+00> : vector<128xf32>
    %9 = vector.multi_reduction <add>, %8, %cst_7 [1] : vector<128x128xf32> to vector<128xf32>
    %10 = vector.shape_cast %9 : vector<128xf32> to vector<128x1xf32>
    %cst_8 = arith.constant 1.280000e+02 : f32
    %11 = vector.broadcast %cst_8 : f32 to vector<128x1xf32>
    %12 = arith.divf %10, %11 : vector<128x1xf32>
    %13 = vector.broadcast %12 : vector<128x1xf32> to vector<128x128xf32>
    %14 = arith.subf %8, %13 : vector<128x128xf32>
    %15 = arith.mulf %14, %14 : vector<128x128xf32>
    %cst_9 = arith.constant dense<0.000000e+00> : vector<128xf32>
    %16 = vector.multi_reduction <add>, %15, %cst_9 [1] : vector<128x128xf32> to vector<128xf32>
    %17 = vector.shape_cast %16 : vector<128xf32> to vector<128x1xf32>
    %cst_10 = arith.constant 1.280000e+02 : f32
    %18 = vector.broadcast %cst_10 : f32 to vector<128x1xf32>
    %19 = arith.divf %17, %18 : vector<128x1xf32>
    %cst_11 = arith.constant 9.99999974E-6 : f32
    %20 = vector.broadcast %cst_11 : f32 to vector<128x1xf32>
    %21 = arith.addf %19, %20 : vector<128x1xf32>
    %22 = math.rsqrt %21 : vector<128x1xf32>
    %23 = vector.broadcast %22 : vector<128x1xf32> to vector<128x128xf32>
    %24 = arith.mulf %14, %23 : vector<128x128xf32>
    %c0_12 = arith.constant 0 : index
    %c0_13 = arith.constant 0 : index
    %25 = vector.load %arg5[%c0_12, %c0_13] : memref<1x128xf32, #tpu.memory_space<vmem>>, vector<1x128xf32>
    %26 = vector.broadcast %25 : vector<1x128xf32> to vector<128x128xf32>
    %27 = arith.mulf %24, %26 : vector<128x128xf32>
    %c0_14 = arith.constant 0 : index
    %c0_15 = arith.constant 0 : index
    %28 = vector.load %arg6[%c0_14, %c0_15] : memref<1x128xf32, #tpu.memory_space<vmem>>, vector<1x128xf32>
    %29 = vector.broadcast %28 : vector<1x128xf32> to vector<128x128xf32>
    %30 = arith.addf %27, %29 : vector<128x128xf32>
    %31 = arith.truncf %30 : vector<128x128xf32> to vector<128x128xbf16>
    %c0_16 = arith.constant 0 : index
    %c0_17 = arith.constant 0 : index
    %32 = vector.load %arg7[%c0_16, %c0_17] : memref<128x128xbf16, #tpu.memory_space<vmem>>, vector<128x128xbf16>
    tpu.vector_store %arg7[%c0_16, %c0_17], %31 {strides = array<i32>} : memref<128x128xbf16, #tpu.memory_space<vmem>>, vector<128x128xbf16>,
    return
  }
  func.func @transform_0(%arg0: i32) -> (i32, i32) {
    %c0_i32 = arith.constant 0 : i32
    %c0_i32_0 = arith.constant 0 : i32
    return %arg0, %c0_i32 : i32, i32
  }
  func.func @transform_1(%arg0: i32) -> (i32, i32) {
    %c0_i32 = arith.constant 0 : i32
    %c0_i32_0 = arith.constant 0 : i32
    return %arg0, %c0_i32 : i32, i32
  }
  func.func @transform_2(%arg0: i32) -> (i32, i32) {
    %c0_i32 = arith.constant 0 : i32
    %c0_i32_0 = arith.constant 0 : i32
    %c0_i32_1 = arith.constant 0 : i32
    return %c0_i32, %c0_i32_0 : i32, i32
  }
  func.func @transform_3(%arg0: i32) -> (i32, i32) {
    %c0_i32 = arith.constant 0 : i32
    %c0_i32_0 = arith.constant 0 : i32
    %c0_i32_1 = arith.constant 0 : i32
    return %c0_i32, %c0_i32_0 : i32, i32
  }
  func.func @transform_4(%arg0: i32) -> (i32, i32) {
    %c0_i32 = arith.constant 0 : i32
    %c0_i32_0 = arith.constant 0 : i32
    %c0_i32_1 = arith.constant 0 : i32
    return %c0_i32, %c0_i32_0 : i32, i32
  }
  func.func @transform_5(%arg0: i32) -> (i32, i32) {
    %c0_i32 = arith.constant 0 : i32
    %c0_i32_0 = arith.constant 0 : i32
    %c0_i32_1 = arith.constant 0 : i32
    return %c0_i32, %c0_i32_0 : i32, i32
  }
  func.func @transform_6(%arg0: i32) -> (i32, i32) {
    %c0_i32 = arith.constant 0 : i32
    %c0_i32_0 = arith.constant 0 : i32
    return %arg0, %c0_i32 : i32, i32
  }
}

module attributes {stable_mosaic.version = 11 : i64} {
  func.func @_ffn_ln_kernel(%arg0: i32, %arg1: memref<128x128xbf16, #tpu.memory_space<vmem>>, %arg2: memref<128x512xbf16, #tpu.memory_space<vmem>>, %arg3: memref<1x512xf32, #tpu.memory_space<vmem>>, %arg4: memref<512x128xbf16, #tpu.memory_space<vmem>>, %arg5: memref<1x128xf32, #tpu.memory_space<vmem>>, %arg6: memref<1x128xf32, #tpu.memory_space<vmem>>, %arg7: memref<1x128xf32, #tpu.memory_space<vmem>>, %arg8: memref<128x128xbf16, #tpu.memory_space<vmem>>) attributes {dimension_semantics = [#tpu.dimension_semantics<parallel>], iteration_bounds = array<i64: 4>, scalar_prefetch = 0 : i64, scratch_operands = 0 : i64, tpu.core_type = #tpu.core_type<tc>, window_params = [{transform_indices = @transform_0, window_bounds = array<i64: 128, 128>}, {pipeline_mode = #tpu.pipeline_mode<synchronous>, transform_indices = @transform_1, window_bounds = array<i64: 128, 512>}, {pipeline_mode = #tpu.pipeline_mode<synchronous>, transform_indices = @transform_2, window_bounds = array<i64: 1, 512>}, {pipeline_mode = #tpu.pipeline_mode<synchronous>, transform_indices = @transform_3, window_bounds = array<i64: 512, 128>}, {pipeline_mode = #tpu.pipeline_mode<synchronous>, transform_indices = @transform_4, window_bounds = array<i64: 1, 128>}, {pipeline_mode = #tpu.pipeline_mode<synchronous>, transform_indices = @transform_5, window_bounds = array<i64: 1, 128>}, {pipeline_mode = #tpu.pipeline_mode<synchronous>, transform_indices = @transform_6, window_bounds = array<i64: 1, 128>}, {transform_indices = @transform_7, window_bounds = array<i64: 128, 128>}]} {
    %c0 = arith.constant 0 : index
    %c0_0 = arith.constant 0 : index
    %0 = vector.load %arg1[%c0, %c0_0] : memref<128x128xbf16, #tpu.memory_space<vmem>>, vector<128x128xbf16>
    %c0_1 = arith.constant 0 : index
    %c0_2 = arith.constant 0 : index
    %1 = vector.load %arg2[%c0_1, %c0_2] : memref<128x512xbf16, #tpu.memory_space<vmem>>, vector<128x512xbf16>
    %cst = arith.constant dense<0.000000e+00> : vector<128x512xf32>
    %2 = tpu.matmul %0, %1, %cst {dimension_numbers = #tpu.dot_dimension_numbers<[1], [0], [0], [1], [0, 0, 1, 1], [], []>} : vector<128x128xbf16>, vector<128x512xbf16>, vector<128x512xf32> -> vector<128x512xf32>
    %c0_3 = arith.constant 0 : index
    %c0_4 = arith.constant 0 : index
    %3 = vector.load %arg3[%c0_3, %c0_4] : memref<1x512xf32, #tpu.memory_space<vmem>>, vector<1x512xf32>
    %4 = vector.broadcast %3 : vector<1x512xf32> to vector<128x512xf32>
    %5 = arith.addf %2, %4 : vector<128x512xf32>
    %cst_5 = arith.constant 5.000000e-01 : f32
    %6 = vector.broadcast %cst_5 : f32 to vector<128x512xf32>
    %7 = arith.mulf %6, %5 : vector<128x512xf32>
    %cst_6 = arith.constant 4.471500e-02 : f32
    %8 = vector.broadcast %cst_6 : f32 to vector<128x512xf32>
    %9 = arith.mulf %8, %5 : vector<128x512xf32>
    %10 = arith.mulf %9, %5 : vector<128x512xf32>
    %11 = arith.mulf %10, %5 : vector<128x512xf32>
    %12 = arith.addf %5, %11 : vector<128x512xf32>
    %cst_7 = arith.constant 0.797884583 : f32
    %13 = vector.broadcast %cst_7 : f32 to vector<128x512xf32>
    %14 = arith.mulf %13, %12 : vector<128x512xf32>
    %15 = math.tanh %14 : vector<128x512xf32>
    %cst_8 = arith.constant 1.000000e+00 : f32
    %16 = vector.broadcast %cst_8 : f32 to vector<128x512xf32>
    %17 = arith.addf %16, %15 : vector<128x512xf32>
    %18 = arith.mulf %7, %17 : vector<128x512xf32>
    %19 = arith.truncf %18 : vector<128x512xf32> to vector<128x512xbf16>
    %c0_9 = arith.constant 0 : index
    %c0_10 = arith.constant 0 : index
    %20 = vector.load %arg4[%c0_9, %c0_10] : memref<512x128xbf16, #tpu.memory_space<vmem>>, vector<512x128xbf16>
    %cst_11 = arith.constant dense<0.000000e+00> : vector<128x128xf32>
    %21 = tpu.matmul %19, %20, %cst_11 {dimension_numbers = #tpu.dot_dimension_numbers<[1], [0], [0], [1], [0, 0, 1, 1], [], []>} : vector<128x512xbf16>, vector<512x128xbf16>, vector<128x128xf32> -> vector<128x128xf32>
    %c0_12 = arith.constant 0 : index
    %c0_13 = arith.constant 0 : index
    %22 = vector.load %arg5[%c0_12, %c0_13] : memref<1x128xf32, #tpu.memory_space<vmem>>, vector<1x128xf32>
    %23 = vector.broadcast %22 : vector<1x128xf32> to vector<128x128xf32>
    %24 = arith.addf %21, %23 : vector<128x128xf32>
    %25 = arith.extf %0 : vector<128x128xbf16> to vector<128x128xf32>
    %26 = arith.addf %24, %25 : vector<128x128xf32>
    %cst_14 = arith.constant dense<0.000000e+00> : vector<128xf32>
    %27 = vector.multi_reduction <add>, %26, %cst_14 [1] : vector<128x128xf32> to vector<128xf32>
    %28 = vector.shape_cast %27 : vector<128xf32> to vector<128x1xf32>
    %cst_15 = arith.constant 1.280000e+02 : f32
    %29 = vector.broadcast %cst_15 : f32 to vector<128x1xf32>
    %30 = arith.divf %28, %29 : vector<128x1xf32>
    %31 = vector.broadcast %30 : vector<128x1xf32> to vector<128x128xf32>
    %32 = arith.subf %26, %31 : vector<128x128xf32>
    %33 = arith.mulf %32, %32 : vector<128x128xf32>
    %cst_16 = arith.constant dense<0.000000e+00> : vector<128xf32>
    %34 = vector.multi_reduction <add>, %33, %cst_16 [1] : vector<128x128xf32> to vector<128xf32>
    %35 = vector.shape_cast %34 : vector<128xf32> to vector<128x1xf32>
    %cst_17 = arith.constant 1.280000e+02 : f32
    %36 = vector.broadcast %cst_17 : f32 to vector<128x1xf32>
    %37 = arith.divf %35, %36 : vector<128x1xf32>
    %cst_18 = arith.constant 9.99999974E-6 : f32
    %38 = vector.broadcast %cst_18 : f32 to vector<128x1xf32>
    %39 = arith.addf %37, %38 : vector<128x1xf32>
    %40 = math.rsqrt %39 : vector<128x1xf32>
    %41 = vector.broadcast %40 : vector<128x1xf32> to vector<128x128xf32>
    %42 = arith.mulf %32, %41 : vector<128x128xf32>
    %c0_19 = arith.constant 0 : index
    %c0_20 = arith.constant 0 : index
    %43 = vector.load %arg6[%c0_19, %c0_20] : memref<1x128xf32, #tpu.memory_space<vmem>>, vector<1x128xf32>
    %44 = vector.broadcast %43 : vector<1x128xf32> to vector<128x128xf32>
    %45 = arith.mulf %42, %44 : vector<128x128xf32>
    %c0_21 = arith.constant 0 : index
    %c0_22 = arith.constant 0 : index
    %46 = vector.load %arg7[%c0_21, %c0_22] : memref<1x128xf32, #tpu.memory_space<vmem>>, vector<1x128xf32>
    %47 = vector.broadcast %46 : vector<1x128xf32> to vector<128x128xf32>
    %48 = arith.addf %45, %47 : vector<128x128xf32>
    %49 = arith.truncf %48 : vector<128x128xf32> to vector<128x128xbf16>
    %c0_23 = arith.constant 0 : index
    %c0_24 = arith.constant 0 : index
    %50 = vector.load %arg8[%c0_23, %c0_24] : memref<128x128xbf16, #tpu.memory_space<vmem>>, vector<128x128xbf16>
    tpu.vector_store %arg8[%c0_23, %c0_24], %49 {strides = array<i32>} : memref<128x128xbf16, #tpu.memory_space<vmem>>, vector<128x128xbf16>,
    return
  }
  func.func @transform_0(%arg0: i32) -> (i32, i32) {
    %c0_i32 = arith.constant 0 : i32
    %c0_i32_0 = arith.constant 0 : i32
    return %arg0, %c0_i32 : i32, i32
  }
  func.func @transform_1(%arg0: i32) -> (i32, i32) {
    %c0_i32 = arith.constant 0 : i32
    %c0_i32_0 = arith.constant 0 : i32
    %c0_i32_1 = arith.constant 0 : i32
    return %c0_i32, %c0_i32_0 : i32, i32
  }
  func.func @transform_2(%arg0: i32) -> (i32, i32) {
    %c0_i32 = arith.constant 0 : i32
    %c0_i32_0 = arith.constant 0 : i32
    %c0_i32_1 = arith.constant 0 : i32
    return %c0_i32, %c0_i32_0 : i32, i32
  }
  func.func @transform_3(%arg0: i32) -> (i32, i32) {
    %c0_i32 = arith.constant 0 : i32
    %c0_i32_0 = arith.constant 0 : i32
    %c0_i32_1 = arith.constant 0 : i32
    return %c0_i32, %c0_i32_0 : i32, i32
  }
  func.func @transform_4(%arg0: i32) -> (i32, i32) {
    %c0_i32 = arith.constant 0 : i32
    %c0_i32_0 = arith.constant 0 : i32
    %c0_i32_1 = arith.constant 0 : i32
    return %c0_i32, %c0_i32_0 : i32, i32
  }
  func.func @transform_5(%arg0: i32) -> (i32, i32) {
    %c0_i32 = arith.constant 0 : i32
    %c0_i32_0 = arith.constant 0 : i32
    %c0_i32_1 = arith.constant 0 : i32
    return %c0_i32, %c0_i32_0 : i32, i32
  }
  func.func @transform_6(%arg0: i32) -> (i32, i32) {
    %c0_i32 = arith.constant 0 : i32
    %c0_i32_0 = arith.constant 0 : i32
    %c0_i32_1 = arith.constant 0 : i32
    return %c0_i32, %c0_i32_0 : i32, i32
  }
  func.func @transform_7(%arg0: i32) -> (i32, i32) {
    %c0_i32 = arith.constant 0 : i32
    %c0_i32_0 = arith.constant 0 : i32
    return %arg0, %c0_i32 : i32, i32
  }
}

module attributes {stable_mosaic.version = 11 : i64} {
  func.func @_window_attn_kernel(%arg0: i32, %arg1: i32, %arg2: memref<1x64x128xbf16, #tpu.memory_space<vmem>>, %arg3: memref<1x272x128xbf16, #tpu.memory_space<vmem>>, %arg4: memref<1x272x128xbf16, #tpu.memory_space<vmem>>, %arg5: memref<1x64x1xf32, #tpu.memory_space<vmem>>, %arg6: memref<1x64x128xbf16, #tpu.memory_space<vmem>>) attributes {dimension_semantics = [#tpu.dimension_semantics<parallel>, #tpu.dimension_semantics<arbitrary>], iteration_bounds = array<i64: 2, 4>, scalar_prefetch = 0 : i64, scratch_operands = 0 : i64, tpu.core_type = #tpu.core_type<tc>, window_params = [{transform_indices = @transform_0, window_bounds = array<i64: 1, 64, 128>}, {transform_indices = @transform_1, window_bounds = array<i64: 1, 272, 128>}, {transform_indices = @transform_2, window_bounds = array<i64: 1, 272, 128>}, {transform_indices = @transform_3, window_bounds = array<i64: 1, 64, 1>}, {transform_indices = @transform_4, window_bounds = array<i64: 1, 64, 128>}]} {
    %c64_i32 = arith.constant 64 : i32
    %0 = arith.muli %arg1, %c64_i32 : i32
    %1 = tpu.assume_multiple %0, 64 : i32
    %c0 = arith.constant 0 : index
    %c0_0 = arith.constant 0 : index
    %c0_1 = arith.constant 0 : index
    %2 = vector.load %arg2[%c0, %c0_0, %c0_1] : memref<1x64x128xbf16, #tpu.memory_space<vmem>>, vector<1x64x128xbf16>
    %3 = vector.shape_cast %2 : vector<1x64x128xbf16> to vector<64x128xbf16>
    %c0_2 = arith.constant 0 : index
    %4 = arith.index_cast %1 : i32 to index
    %c0_3 = arith.constant 0 : index
    %5 = vector.load %arg3[%c0_2, %4, %c0_3] : memref<1x272x128xbf16, #tpu.memory_space<vmem>>, vector<1x80x128xbf16>
    %6 = vector.shape_cast %5 : vector<1x80x128xbf16> to vector<80x128xbf16>
    %c0_4 = arith.constant 0 : index
    %7 = arith.index_cast %1 : i32 to index
    %c0_5 = arith.constant 0 : index
    %8 = vector.load %arg4[%c0_4, %7, %c0_5] : memref<1x272x128xbf16, #tpu.memory_space<vmem>>, vector<1x80x128xbf16>
    %9 = vector.shape_cast %8 : vector<1x80x128xbf16> to vector<80x128xbf16>
    %c0_6 = arith.constant 0 : index
    %c0_7 = arith.constant 0 : index
    %c0_8 = arith.constant 0 : index
    %10 = vector.load %arg5[%c0_6, %c0_7, %c0_8] : memref<1x64x1xf32, #tpu.memory_space<vmem>>, vector<1x64x1xf32>
    %11 = vector.shape_cast %10 : vector<1x64x1xf32> to vector<64x1xf32>
    %c8_i32 = arith.constant 8 : i32
    %12 = arith.subi %1, %c8_i32 : i32
    %13 = tpu.iota {dimensions = array<i32: 1>} : vector<1x80xi32>
    %14 = vector.broadcast %12 : i32 to vector<1x80xi32>
    %15 = arith.addi %14, %13 : vector<1x80xi32>
    %c0_i32 = arith.constant 0 : i32
    %16 = vector.broadcast %c0_i32 : i32 to vector<1x80xi32>
    %17 = arith.cmpi sge, %15, %16 : vector<1x80xi32>
    %c256_i32 = arith.constant 256 : i32
    %18 = vector.broadcast %c256_i32 : i32 to vector<1x80xi32>
    %19 = arith.cmpi slt, %15, %18 : vector<1x80xi32>
    %20 = arith.andi %17, %19 : vector<1x80xi1>
    %21 = vector.extract_strided_slice %3 {offsets = [0, 0], sizes = [64, 16], strides = [1, 1]} : vector<64x128xbf16> to vector<64x16xbf16>
    %22 = vector.extract_strided_slice %6 {offsets = [0, 0], sizes = [80, 16], strides = [1, 1]} : vector<80x128xbf16> to vector<80x16xbf16>
    %23 = vector.extract_strided_slice %9 {offsets = [0, 0], sizes = [80, 16], strides = [1, 1]} : vector<80x128xbf16> to vector<80x16xbf16>
    %cst = arith.constant dense<0.000000e+00> : vector<64x80xf32>
    %24 = tpu.matmul %21, %22, %cst {dimension_numbers = #tpu.dot_dimension_numbers<[1], [1], [0], [0], [0, 0, 1, 0], [], []>} : vector<64x16xbf16>, vector<80x16xbf16>, vector<64x80xf32> -> vector<64x80xf32>
    %cst_9 = arith.constant 0.000000e+00 : f32
    %25 = vector.broadcast %cst_9 : f32 to vector<64x1xf32>
    %26 = arith.cmpf ogt, %11, %25 : vector<64x1xf32>
    %cst_10 = arith.constant -1.000000e+10 : f32
    %27 = vector.shape_cast %26 : vector<64x1xi1> to vector<64x1xi1>
    %28 = vector.broadcast %27 : vector<64x1xi1> to vector<64x80xi1>
    %29 = vector.broadcast %cst_10 : f32 to vector<64x80xf32>
    %30 = arith.select %28, %24, %29 : vector<64x80xi1>, vector<64x80xf32>
    %cst_11 = arith.constant 2.500000e-01 : f32
    %31 = vector.broadcast %cst_11 : f32 to vector<64x80xf32>
    %32 = arith.mulf %30, %31 : vector<64x80xf32>
    %cst_12 = arith.constant -1.000000e+30 : f32
    %33 = vector.shape_cast %20 : vector<1x80xi1> to vector<1x80xi1>
    %34 = vector.broadcast %33 : vector<1x80xi1> to vector<64x80xi1>
    %35 = vector.broadcast %cst_12 : f32 to vector<64x80xf32>
    %36 = arith.select %34, %32, %35 : vector<64x80xi1>, vector<64x80xf32>
    %cst_13 = arith.constant dense<0xFF800000> : vector<64xf32>
    %37 = vector.multi_reduction <maximumf>, %36, %cst_13 [1] : vector<64x80xf32> to vector<64xf32>
    %38 = vector.shape_cast %37 : vector<64xf32> to vector<64x1xf32>
    %39 = vector.broadcast %38 : vector<64x1xf32> to vector<64x80xf32>
    %40 = arith.subf %36, %39 : vector<64x80xf32>
    %41 = math.exp %40 : vector<64x80xf32>
    %cst_14 = arith.constant dense<0.000000e+00> : vector<64xf32>
    %42 = vector.multi_reduction <add>, %41, %cst_14 [1] : vector<64x80xf32> to vector<64xf32>
    %43 = vector.shape_cast %42 : vector<64xf32> to vector<64x1xf32>
    %44 = vector.broadcast %43 : vector<64x1xf32> to vector<64x80xf32>
    %45 = arith.divf %41, %44 : vector<64x80xf32>
    %46 = arith.truncf %45 : vector<64x80xf32> to vector<64x80xbf16>
    %cst_15 = arith.constant dense<0.000000e+00> : vector<64x16xf32>
    %47 = tpu.matmul %46, %23, %cst_15 {dimension_numbers = #tpu.dot_dimension_numbers<[1], [0], [0], [1], [0, 0, 1, 1], [], []>} : vector<64x80xbf16>, vector<80x16xbf16>, vector<64x16xf32> -> vector<64x16xf32>
    %48 = vector.extract_strided_slice %3 {offsets = [0, 16], sizes = [64, 16], strides = [1, 1]} : vector<64x128xbf16> to vector<64x16xbf16>
    %49 = vector.extract_strided_slice %6 {offsets = [0, 16], sizes = [80, 16], strides = [1, 1]} : vector<80x128xbf16> to vector<80x16xbf16>
    %50 = vector.extract_strided_slice %9 {offsets = [0, 16], sizes = [80, 16], strides = [1, 1]} : vector<80x128xbf16> to vector<80x16xbf16>
    %cst_16 = arith.constant dense<0.000000e+00> : vector<64x80xf32>
    %51 = tpu.matmul %48, %49, %cst_16 {dimension_numbers = #tpu.dot_dimension_numbers<[1], [1], [0], [0], [0, 0, 1, 0], [], []>} : vector<64x16xbf16>, vector<80x16xbf16>, vector<64x80xf32> -> vector<64x80xf32>
    %cst_17 = arith.constant 0.000000e+00 : f32
    %52 = vector.broadcast %cst_17 : f32 to vector<64x1xf32>
    %53 = arith.cmpf ogt, %11, %52 : vector<64x1xf32>
    %cst_18 = arith.constant -1.000000e+10 : f32
    %54 = vector.shape_cast %53 : vector<64x1xi1> to vector<64x1xi1>
    %55 = vector.broadcast %54 : vector<64x1xi1> to vector<64x80xi1>
    %56 = vector.broadcast %cst_18 : f32 to vector<64x80xf32>
    %57 = arith.select %55, %51, %56 : vector<64x80xi1>, vector<64x80xf32>
    %cst_19 = arith.constant 2.500000e-01 : f32
    %58 = vector.broadcast %cst_19 : f32 to vector<64x80xf32>
    %59 = arith.mulf %57, %58 : vector<64x80xf32>
    %cst_20 = arith.constant -1.000000e+30 : f32
    %60 = vector.shape_cast %20 : vector<1x80xi1> to vector<1x80xi1>
    %61 = vector.broadcast %60 : vector<1x80xi1> to vector<64x80xi1>
    %62 = vector.broadcast %cst_20 : f32 to vector<64x80xf32>
    %63 = arith.select %61, %59, %62 : vector<64x80xi1>, vector<64x80xf32>
    %cst_21 = arith.constant dense<0xFF800000> : vector<64xf32>
    %64 = vector.multi_reduction <maximumf>, %63, %cst_21 [1] : vector<64x80xf32> to vector<64xf32>
    %65 = vector.shape_cast %64 : vector<64xf32> to vector<64x1xf32>
    %66 = vector.broadcast %65 : vector<64x1xf32> to vector<64x80xf32>
    %67 = arith.subf %63, %66 : vector<64x80xf32>
    %68 = math.exp %67 : vector<64x80xf32>
    %cst_22 = arith.constant dense<0.000000e+00> : vector<64xf32>
    %69 = vector.multi_reduction <add>, %68, %cst_22 [1] : vector<64x80xf32> to vector<64xf32>
    %70 = vector.shape_cast %69 : vector<64xf32> to vector<64x1xf32>
    %71 = vector.broadcast %70 : vector<64x1xf32> to vector<64x80xf32>
    %72 = arith.divf %68, %71 : vector<64x80xf32>
    %73 = arith.truncf %72 : vector<64x80xf32> to vector<64x80xbf16>
    %cst_23 = arith.constant dense<0.000000e+00> : vector<64x16xf32>
    %74 = tpu.matmul %73, %50, %cst_23 {dimension_numbers = #tpu.dot_dimension_numbers<[1], [0], [0], [1], [0, 0, 1, 1], [], []>} : vector<64x80xbf16>, vector<80x16xbf16>, vector<64x16xf32> -> vector<64x16xf32>
    %75 = vector.extract_strided_slice %3 {offsets = [0, 32], sizes = [64, 16], strides = [1, 1]} : vector<64x128xbf16> to vector<64x16xbf16>
    %76 = vector.extract_strided_slice %6 {offsets = [0, 32], sizes = [80, 16], strides = [1, 1]} : vector<80x128xbf16> to vector<80x16xbf16>
    %77 = vector.extract_strided_slice %9 {offsets = [0, 32], sizes = [80, 16], strides = [1, 1]} : vector<80x128xbf16> to vector<80x16xbf16>
    %cst_24 = arith.constant dense<0.000000e+00> : vector<64x80xf32>
    %78 = tpu.matmul %75, %76, %cst_24 {dimension_numbers = #tpu.dot_dimension_numbers<[1], [1], [0], [0], [0, 0, 1, 0], [], []>} : vector<64x16xbf16>, vector<80x16xbf16>, vector<64x80xf32> -> vector<64x80xf32>
    %cst_25 = arith.constant 0.000000e+00 : f32
    %79 = vector.broadcast %cst_25 : f32 to vector<64x1xf32>
    %80 = arith.cmpf ogt, %11, %79 : vector<64x1xf32>
    %cst_26 = arith.constant -1.000000e+10 : f32
    %81 = vector.shape_cast %80 : vector<64x1xi1> to vector<64x1xi1>
    %82 = vector.broadcast %81 : vector<64x1xi1> to vector<64x80xi1>
    %83 = vector.broadcast %cst_26 : f32 to vector<64x80xf32>
    %84 = arith.select %82, %78, %83 : vector<64x80xi1>, vector<64x80xf32>
    %cst_27 = arith.constant 2.500000e-01 : f32
    %85 = vector.broadcast %cst_27 : f32 to vector<64x80xf32>
    %86 = arith.mulf %84, %85 : vector<64x80xf32>
    %cst_28 = arith.constant -1.000000e+30 : f32
    %87 = vector.shape_cast %20 : vector<1x80xi1> to vector<1x80xi1>
    %88 = vector.broadcast %87 : vector<1x80xi1> to vector<64x80xi1>
    %89 = vector.broadcast %cst_28 : f32 to vector<64x80xf32>
    %90 = arith.select %88, %86, %89 : vector<64x80xi1>, vector<64x80xf32>
    %cst_29 = arith.constant dense<0xFF800000> : vector<64xf32>
    %91 = vector.multi_reduction <maximumf>, %90, %cst_29 [1] : vector<64x80xf32> to vector<64xf32>
    %92 = vector.shape_cast %91 : vector<64xf32> to vector<64x1xf32>
    %93 = vector.broadcast %92 : vector<64x1xf32> to vector<64x80xf32>
    %94 = arith.subf %90, %93 : vector<64x80xf32>
    %95 = math.exp %94 : vector<64x80xf32>
    %cst_30 = arith.constant dense<0.000000e+00> : vector<64xf32>
    %96 = vector.multi_reduction <add>, %95, %cst_30 [1] : vector<64x80xf32> to vector<64xf32>
    %97 = vector.shape_cast %96 : vector<64xf32> to vector<64x1xf32>
    %98 = vector.broadcast %97 : vector<64x1xf32> to vector<64x80xf32>
    %99 = arith.divf %95, %98 : vector<64x80xf32>
    %100 = arith.truncf %99 : vector<64x80xf32> to vector<64x80xbf16>
    %cst_31 = arith.constant dense<0.000000e+00> : vector<64x16xf32>
    %101 = tpu.matmul %100, %77, %cst_31 {dimension_numbers = #tpu.dot_dimension_numbers<[1], [0], [0], [1], [0, 0, 1, 1], [], []>} : vector<64x80xbf16>, vector<80x16xbf16>, vector<64x16xf32> -> vector<64x16xf32>
    %102 = vector.extract_strided_slice %3 {offsets = [0, 48], sizes = [64, 16], strides = [1, 1]} : vector<64x128xbf16> to vector<64x16xbf16>
    %103 = vector.extract_strided_slice %6 {offsets = [0, 48], sizes = [80, 16], strides = [1, 1]} : vector<80x128xbf16> to vector<80x16xbf16>
    %104 = vector.extract_strided_slice %9 {offsets = [0, 48], sizes = [80, 16], strides = [1, 1]} : vector<80x128xbf16> to vector<80x16xbf16>
    %cst_32 = arith.constant dense<0.000000e+00> : vector<64x80xf32>
    %105 = tpu.matmul %102, %103, %cst_32 {dimension_numbers = #tpu.dot_dimension_numbers<[1], [1], [0], [0], [0, 0, 1, 0], [], []>} : vector<64x16xbf16>, vector<80x16xbf16>, vector<64x80xf32> -> vector<64x80xf32>
    %cst_33 = arith.constant 0.000000e+00 : f32
    %106 = vector.broadcast %cst_33 : f32 to vector<64x1xf32>
    %107 = arith.cmpf ogt, %11, %106 : vector<64x1xf32>
    %cst_34 = arith.constant -1.000000e+10 : f32
    %108 = vector.shape_cast %107 : vector<64x1xi1> to vector<64x1xi1>
    %109 = vector.broadcast %108 : vector<64x1xi1> to vector<64x80xi1>
    %110 = vector.broadcast %cst_34 : f32 to vector<64x80xf32>
    %111 = arith.select %109, %105, %110 : vector<64x80xi1>, vector<64x80xf32>
    %cst_35 = arith.constant 2.500000e-01 : f32
    %112 = vector.broadcast %cst_35 : f32 to vector<64x80xf32>
    %113 = arith.mulf %111, %112 : vector<64x80xf32>
    %cst_36 = arith.constant -1.000000e+30 : f32
    %114 = vector.shape_cast %20 : vector<1x80xi1> to vector<1x80xi1>
    %115 = vector.broadcast %114 : vector<1x80xi1> to vector<64x80xi1>
    %116 = vector.broadcast %cst_36 : f32 to vector<64x80xf32>
    %117 = arith.select %115, %113, %116 : vector<64x80xi1>, vector<64x80xf32>
    %cst_37 = arith.constant dense<0xFF800000> : vector<64xf32>
    %118 = vector.multi_reduction <maximumf>, %117, %cst_37 [1] : vector<64x80xf32> to vector<64xf32>
    %119 = vector.shape_cast %118 : vector<64xf32> to vector<64x1xf32>
    %120 = vector.broadcast %119 : vector<64x1xf32> to vector<64x80xf32>
    %121 = arith.subf %117, %120 : vector<64x80xf32>
    %122 = math.exp %121 : vector<64x80xf32>
    %cst_38 = arith.constant dense<0.000000e+00> : vector<64xf32>
    %123 = vector.multi_reduction <add>, %122, %cst_38 [1] : vector<64x80xf32> to vector<64xf32>
    %124 = vector.shape_cast %123 : vector<64xf32> to vector<64x1xf32>
    %125 = vector.broadcast %124 : vector<64x1xf32> to vector<64x80xf32>
    %126 = arith.divf %122, %125 : vector<64x80xf32>
    %127 = arith.truncf %126 : vector<64x80xf32> to vector<64x80xbf16>
    %cst_39 = arith.constant dense<0.000000e+00> : vector<64x16xf32>
    %128 = tpu.matmul %127, %104, %cst_39 {dimension_numbers = #tpu.dot_dimension_numbers<[1], [0], [0], [1], [0, 0, 1, 1], [], []>} : vector<64x80xbf16>, vector<80x16xbf16>, vector<64x16xf32> -> vector<64x16xf32>
    %129 = vector.extract_strided_slice %3 {offsets = [0, 64], sizes = [64, 16], strides = [1, 1]} : vector<64x128xbf16> to vector<64x16xbf16>
    %130 = vector.extract_strided_slice %6 {offsets = [0, 64], sizes = [80, 16], strides = [1, 1]} : vector<80x128xbf16> to vector<80x16xbf16>
    %131 = vector.extract_strided_slice %9 {offsets = [0, 64], sizes = [80, 16], strides = [1, 1]} : vector<80x128xbf16> to vector<80x16xbf16>
    %cst_40 = arith.constant dense<0.000000e+00> : vector<64x80xf32>
    %132 = tpu.matmul %129, %130, %cst_40 {dimension_numbers = #tpu.dot_dimension_numbers<[1], [1], [0], [0], [0, 0, 1, 0], [], []>} : vector<64x16xbf16>, vector<80x16xbf16>, vector<64x80xf32> -> vector<64x80xf32>
    %cst_41 = arith.constant 0.000000e+00 : f32
    %133 = vector.broadcast %cst_41 : f32 to vector<64x1xf32>
    %134 = arith.cmpf ogt, %11, %133 : vector<64x1xf32>
    %cst_42 = arith.constant -1.000000e+10 : f32
    %135 = vector.shape_cast %134 : vector<64x1xi1> to vector<64x1xi1>
    %136 = vector.broadcast %135 : vector<64x1xi1> to vector<64x80xi1>
    %137 = vector.broadcast %cst_42 : f32 to vector<64x80xf32>
    %138 = arith.select %136, %132, %137 : vector<64x80xi1>, vector<64x80xf32>
    %cst_43 = arith.constant 2.500000e-01 : f32
    %139 = vector.broadcast %cst_43 : f32 to vector<64x80xf32>
    %140 = arith.mulf %138, %139 : vector<64x80xf32>
    %cst_44 = arith.constant -1.000000e+30 : f32
    %141 = vector.shape_cast %20 : vector<1x80xi1> to vector<1x80xi1>
    %142 = vector.broadcast %141 : vector<1x80xi1> to vector<64x80xi1>
    %143 = vector.broadcast %cst_44 : f32 to vector<64x80xf32>
    %144 = arith.select %142, %140, %143 : vector<64x80xi1>, vector<64x80xf32>
    %cst_45 = arith.constant dense<0xFF800000> : vector<64xf32>
    %145 = vector.multi_reduction <maximumf>, %144, %cst_45 [1] : vector<64x80xf32> to vector<64xf32>
    %146 = vector.shape_cast %145 : vector<64xf32> to vector<64x1xf32>
    %147 = vector.broadcast %146 : vector<64x1xf32> to vector<64x80xf32>
    %148 = arith.subf %144, %147 : vector<64x80xf32>
    %149 = math.exp %148 : vector<64x80xf32>
    %cst_46 = arith.constant dense<0.000000e+00> : vector<64xf32>
    %150 = vector.multi_reduction <add>, %149, %cst_46 [1] : vector<64x80xf32> to vector<64xf32>
    %151 = vector.shape_cast %150 : vector<64xf32> to vector<64x1xf32>
    %152 = vector.broadcast %151 : vector<64x1xf32> to vector<64x80xf32>
    %153 = arith.divf %149, %152 : vector<64x80xf32>
    %154 = arith.truncf %153 : vector<64x80xf32> to vector<64x80xbf16>
    %cst_47 = arith.constant dense<0.000000e+00> : vector<64x16xf32>
    %155 = tpu.matmul %154, %131, %cst_47 {dimension_numbers = #tpu.dot_dimension_numbers<[1], [0], [0], [1], [0, 0, 1, 1], [], []>} : vector<64x80xbf16>, vector<80x16xbf16>, vector<64x16xf32> -> vector<64x16xf32>
    %156 = vector.extract_strided_slice %3 {offsets = [0, 80], sizes = [64, 16], strides = [1, 1]} : vector<64x128xbf16> to vector<64x16xbf16>
    %157 = vector.extract_strided_slice %6 {offsets = [0, 80], sizes = [80, 16], strides = [1, 1]} : vector<80x128xbf16> to vector<80x16xbf16>
    %158 = vector.extract_strided_slice %9 {offsets = [0, 80], sizes = [80, 16], strides = [1, 1]} : vector<80x128xbf16> to vector<80x16xbf16>
    %cst_48 = arith.constant dense<0.000000e+00> : vector<64x80xf32>
    %159 = tpu.matmul %156, %157, %cst_48 {dimension_numbers = #tpu.dot_dimension_numbers<[1], [1], [0], [0], [0, 0, 1, 0], [], []>} : vector<64x16xbf16>, vector<80x16xbf16>, vector<64x80xf32> -> vector<64x80xf32>
    %cst_49 = arith.constant 0.000000e+00 : f32
    %160 = vector.broadcast %cst_49 : f32 to vector<64x1xf32>
    %161 = arith.cmpf ogt, %11, %160 : vector<64x1xf32>
    %cst_50 = arith.constant -1.000000e+10 : f32
    %162 = vector.shape_cast %161 : vector<64x1xi1> to vector<64x1xi1>
    %163 = vector.broadcast %162 : vector<64x1xi1> to vector<64x80xi1>
    %164 = vector.broadcast %cst_50 : f32 to vector<64x80xf32>
    %165 = arith.select %163, %159, %164 : vector<64x80xi1>, vector<64x80xf32>
    %cst_51 = arith.constant 2.500000e-01 : f32
    %166 = vector.broadcast %cst_51 : f32 to vector<64x80xf32>
    %167 = arith.mulf %165, %166 : vector<64x80xf32>
    %cst_52 = arith.constant -1.000000e+30 : f32
    %168 = vector.shape_cast %20 : vector<1x80xi1> to vector<1x80xi1>
    %169 = vector.broadcast %168 : vector<1x80xi1> to vector<64x80xi1>
    %170 = vector.broadcast %cst_52 : f32 to vector<64x80xf32>
    %171 = arith.select %169, %167, %170 : vector<64x80xi1>, vector<64x80xf32>
    %cst_53 = arith.constant dense<0xFF800000> : vector<64xf32>
    %172 = vector.multi_reduction <maximumf>, %171, %cst_53 [1] : vector<64x80xf32> to vector<64xf32>
    %173 = vector.shape_cast %172 : vector<64xf32> to vector<64x1xf32>
    %174 = vector.broadcast %173 : vector<64x1xf32> to vector<64x80xf32>
    %175 = arith.subf %171, %174 : vector<64x80xf32>
    %176 = math.exp %175 : vector<64x80xf32>
    %cst_54 = arith.constant dense<0.000000e+00> : vector<64xf32>
    %177 = vector.multi_reduction <add>, %176, %cst_54 [1] : vector<64x80xf32> to vector<64xf32>
    %178 = vector.shape_cast %177 : vector<64xf32> to vector<64x1xf32>
    %179 = vector.broadcast %178 : vector<64x1xf32> to vector<64x80xf32>
    %180 = arith.divf %176, %179 : vector<64x80xf32>
    %181 = arith.truncf %180 : vector<64x80xf32> to vector<64x80xbf16>
    %cst_55 = arith.constant dense<0.000000e+00> : vector<64x16xf32>
    %182 = tpu.matmul %181, %158, %cst_55 {dimension_numbers = #tpu.dot_dimension_numbers<[1], [0], [0], [1], [0, 0, 1, 1], [], []>} : vector<64x80xbf16>, vector<80x16xbf16>, vector<64x16xf32> -> vector<64x16xf32>
    %183 = vector.extract_strided_slice %3 {offsets = [0, 96], sizes = [64, 16], strides = [1, 1]} : vector<64x128xbf16> to vector<64x16xbf16>
    %184 = vector.extract_strided_slice %6 {offsets = [0, 96], sizes = [80, 16], strides = [1, 1]} : vector<80x128xbf16> to vector<80x16xbf16>
    %185 = vector.extract_strided_slice %9 {offsets = [0, 96], sizes = [80, 16], strides = [1, 1]} : vector<80x128xbf16> to vector<80x16xbf16>
    %cst_56 = arith.constant dense<0.000000e+00> : vector<64x80xf32>
    %186 = tpu.matmul %183, %184, %cst_56 {dimension_numbers = #tpu.dot_dimension_numbers<[1], [1], [0], [0], [0, 0, 1, 0], [], []>} : vector<64x16xbf16>, vector<80x16xbf16>, vector<64x80xf32> -> vector<64x80xf32>
    %cst_57 = arith.constant 0.000000e+00 : f32
    %187 = vector.broadcast %cst_57 : f32 to vector<64x1xf32>
    %188 = arith.cmpf ogt, %11, %187 : vector<64x1xf32>
    %cst_58 = arith.constant -1.000000e+10 : f32
    %189 = vector.shape_cast %188 : vector<64x1xi1> to vector<64x1xi1>
    %190 = vector.broadcast %189 : vector<64x1xi1> to vector<64x80xi1>
    %191 = vector.broadcast %cst_58 : f32 to vector<64x80xf32>
    %192 = arith.select %190, %186, %191 : vector<64x80xi1>, vector<64x80xf32>
    %cst_59 = arith.constant 2.500000e-01 : f32
    %193 = vector.broadcast %cst_59 : f32 to vector<64x80xf32>
    %194 = arith.mulf %192, %193 : vector<64x80xf32>
    %cst_60 = arith.constant -1.000000e+30 : f32
    %195 = vector.shape_cast %20 : vector<1x80xi1> to vector<1x80xi1>
    %196 = vector.broadcast %195 : vector<1x80xi1> to vector<64x80xi1>
    %197 = vector.broadcast %cst_60 : f32 to vector<64x80xf32>
    %198 = arith.select %196, %194, %197 : vector<64x80xi1>, vector<64x80xf32>
    %cst_61 = arith.constant dense<0xFF800000> : vector<64xf32>
    %199 = vector.multi_reduction <maximumf>, %198, %cst_61 [1] : vector<64x80xf32> to vector<64xf32>
    %200 = vector.shape_cast %199 : vector<64xf32> to vector<64x1xf32>
    %201 = vector.broadcast %200 : vector<64x1xf32> to vector<64x80xf32>
    %202 = arith.subf %198, %201 : vector<64x80xf32>
    %203 = math.exp %202 : vector<64x80xf32>
    %cst_62 = arith.constant dense<0.000000e+00> : vector<64xf32>
    %204 = vector.multi_reduction <add>, %203, %cst_62 [1] : vector<64x80xf32> to vector<64xf32>
    %205 = vector.shape_cast %204 : vector<64xf32> to vector<64x1xf32>
    %206 = vector.broadcast %205 : vector<64x1xf32> to vector<64x80xf32>
    %207 = arith.divf %203, %206 : vector<64x80xf32>
    %208 = arith.truncf %207 : vector<64x80xf32> to vector<64x80xbf16>
    %cst_63 = arith.constant dense<0.000000e+00> : vector<64x16xf32>
    %209 = tpu.matmul %208, %185, %cst_63 {dimension_numbers = #tpu.dot_dimension_numbers<[1], [0], [0], [1], [0, 0, 1, 1], [], []>} : vector<64x80xbf16>, vector<80x16xbf16>, vector<64x16xf32> -> vector<64x16xf32>
    %210 = vector.extract_strided_slice %3 {offsets = [0, 112], sizes = [64, 16], strides = [1, 1]} : vector<64x128xbf16> to vector<64x16xbf16>
    %211 = vector.extract_strided_slice %6 {offsets = [0, 112], sizes = [80, 16], strides = [1, 1]} : vector<80x128xbf16> to vector<80x16xbf16>
    %212 = vector.extract_strided_slice %9 {offsets = [0, 112], sizes = [80, 16], strides = [1, 1]} : vector<80x128xbf16> to vector<80x16xbf16>
    %cst_64 = arith.constant dense<0.000000e+00> : vector<64x80xf32>
    %213 = tpu.matmul %210, %211, %cst_64 {dimension_numbers = #tpu.dot_dimension_numbers<[1], [1], [0], [0], [0, 0, 1, 0], [], []>} : vector<64x16xbf16>, vector<80x16xbf16>, vector<64x80xf32> -> vector<64x80xf32>
    %cst_65 = arith.constant 0.000000e+00 : f32
    %214 = vector.broadcast %cst_65 : f32 to vector<64x1xf32>
    %215 = arith.cmpf ogt, %11, %214 : vector<64x1xf32>
    %cst_66 = arith.constant -1.000000e+10 : f32
    %216 = vector.shape_cast %215 : vector<64x1xi1> to vector<64x1xi1>
    %217 = vector.broadcast %216 : vector<64x1xi1> to vector<64x80xi1>
    %218 = vector.broadcast %cst_66 : f32 to vector<64x80xf32>
    %219 = arith.select %217, %213, %218 : vector<64x80xi1>, vector<64x80xf32>
    %cst_67 = arith.constant 2.500000e-01 : f32
    %220 = vector.broadcast %cst_67 : f32 to vector<64x80xf32>
    %221 = arith.mulf %219, %220 : vector<64x80xf32>
    %cst_68 = arith.constant -1.000000e+30 : f32
    %222 = vector.shape_cast %20 : vector<1x80xi1> to vector<1x80xi1>
    %223 = vector.broadcast %222 : vector<1x80xi1> to vector<64x80xi1>
    %224 = vector.broadcast %cst_68 : f32 to vector<64x80xf32>
    %225 = arith.select %223, %221, %224 : vector<64x80xi1>, vector<64x80xf32>
    %cst_69 = arith.constant dense<0xFF800000> : vector<64xf32>
    %226 = vector.multi_reduction <maximumf>, %225, %cst_69 [1] : vector<64x80xf32> to vector<64xf32>
    %227 = vector.shape_cast %226 : vector<64xf32> to vector<64x1xf32>
    %228 = vector.broadcast %227 : vector<64x1xf32> to vector<64x80xf32>
    %229 = arith.subf %225, %228 : vector<64x80xf32>
    %230 = math.exp %229 : vector<64x80xf32>
    %cst_70 = arith.constant dense<0.000000e+00> : vector<64xf32>
    %231 = vector.multi_reduction <add>, %230, %cst_70 [1] : vector<64x80xf32> to vector<64xf32>
    %232 = vector.shape_cast %231 : vector<64xf32> to vector<64x1xf32>
    %233 = vector.broadcast %232 : vector<64x1xf32> to vector<64x80xf32>
    %234 = arith.divf %230, %233 : vector<64x80xf32>
    %235 = arith.truncf %234 : vector<64x80xf32> to vector<64x80xbf16>
    %cst_71 = arith.constant dense<0.000000e+00> : vector<64x16xf32>
    %236 = tpu.matmul %235, %212, %cst_71 {dimension_numbers = #tpu.dot_dimension_numbers<[1], [0], [0], [1], [0, 0, 1, 1], [], []>} : vector<64x80xbf16>, vector<80x16xbf16>, vector<64x16xf32> -> vector<64x16xf32>
    %237 = tpu.concatenate %47, %74, %101, %128, %155, %182, %209, %236 in 1 : vector<64x16xf32>, vector<64x16xf32>, vector<64x16xf32>, vector<64x16xf32>, vector<64x16xf32>, vector<64x16xf32>, vector<64x16xf32>, vector<64x16xf32> -> vector<64x128xf32>
    %238 = arith.truncf %237 : vector<64x128xf32> to vector<64x128xbf16>
    %c0_72 = arith.constant 0 : index
    %c0_73 = arith.constant 0 : index
    %c0_74 = arith.constant 0 : index
    %239 = vector.load %arg6[%c0_72, %c0_73, %c0_74] : memref<1x64x128xbf16, #tpu.memory_space<vmem>>, vector<1x64x128xbf16>
    %240 = vector.shape_cast %239 : vector<1x64x128xbf16> to vector<64x128xbf16>
    %241 = vector.shape_cast %238 : vector<64x128xbf16> to vector<1x64x128xbf16>
    tpu.vector_store %arg6[%c0_72, %c0_73, %c0_74], %241 {strides = array<i32>} : memref<1x64x128xbf16, #tpu.memory_space<vmem>>, vector<1x64x128xbf16>,
    return
  }
  func.func @transform_0(%arg0: i32, %arg1: i32) -> (i32, i32, i32) {
    %c0_i32 = arith.constant 0 : i32
    %c0_i32_0 = arith.constant 0 : i32
    return %arg0, %arg1, %c0_i32 : i32, i32, i32
  }
  func.func @transform_1(%arg0: i32, %arg1: i32) -> (i32, i32, i32) {
    %c0_i32 = arith.constant 0 : i32
    %c0_i32_0 = arith.constant 0 : i32
    %c0_i32_1 = arith.constant 0 : i32
    return %arg0, %c0_i32, %c0_i32_0 : i32, i32, i32
  }
  func.func @transform_2(%arg0: i32, %arg1: i32) -> (i32, i32, i32) {
    %c0_i32 = arith.constant 0 : i32
    %c0_i32_0 = arith.constant 0 : i32
    %c0_i32_1 = arith.constant 0 : i32
    return %arg0, %c0_i32, %c0_i32_0 : i32, i32, i32
  }
  func.func @transform_3(%arg0: i32, %arg1: i32) -> (i32, i32, i32) {
    %c0_i32 = arith.constant 0 : i32
    %c0_i32_0 = arith.constant 0 : i32
    return %arg0, %arg1, %c0_i32 : i32, i32, i32
  }
  func.func @transform_4(%arg0: i32, %arg1: i32) -> (i32, i32, i32) {
    %c0_i32 = arith.constant 0 : i32
    %c0_i32_0 = arith.constant 0 : i32
    return %arg0, %arg1, %c0_i32 : i32, i32, i32
  }
}

module attributes {stable_mosaic.version = 11 : i64} {
  func.func @_ffn_ln_kernel(%arg0: i32, %arg1: memref<128x128xbf16, #tpu.memory_space<vmem>>, %arg2: memref<128x512xbf16, #tpu.memory_space<vmem>>, %arg3: memref<1x512xf32, #tpu.memory_space<vmem>>, %arg4: memref<512x128xbf16, #tpu.memory_space<vmem>>, %arg5: memref<1x128xf32, #tpu.memory_space<vmem>>, %arg6: memref<1x128xf32, #tpu.memory_space<vmem>>, %arg7: memref<1x128xf32, #tpu.memory_space<vmem>>, %arg8: memref<128x128xbf16, #tpu.memory_space<vmem>>) attributes {dimension_semantics = [#tpu.dimension_semantics<parallel>], iteration_bounds = array<i64: 4>, scalar_prefetch = 0 : i64, scratch_operands = 0 : i64, tpu.core_type = #tpu.core_type<tc>, window_params = [{transform_indices = @transform_0, window_bounds = array<i64: 128, 128>}, {pipeline_mode = #tpu.pipeline_mode<synchronous>, transform_indices = @transform_1, window_bounds = array<i64: 128, 512>}, {pipeline_mode = #tpu.pipeline_mode<synchronous>, transform_indices = @transform_2, window_bounds = array<i64: 1, 512>}, {pipeline_mode = #tpu.pipeline_mode<synchronous>, transform_indices = @transform_3, window_bounds = array<i64: 512, 128>}, {pipeline_mode = #tpu.pipeline_mode<synchronous>, transform_indices = @transform_4, window_bounds = array<i64: 1, 128>}, {pipeline_mode = #tpu.pipeline_mode<synchronous>, transform_indices = @transform_5, window_bounds = array<i64: 1, 128>}, {pipeline_mode = #tpu.pipeline_mode<synchronous>, transform_indices = @transform_6, window_bounds = array<i64: 1, 128>}, {transform_indices = @transform_7, window_bounds = array<i64: 128, 128>}]} {
    %c0 = arith.constant 0 : index
    %c0_0 = arith.constant 0 : index
    %0 = vector.load %arg1[%c0, %c0_0] : memref<128x128xbf16, #tpu.memory_space<vmem>>, vector<128x128xbf16>
    %c0_1 = arith.constant 0 : index
    %c0_2 = arith.constant 0 : index
    %1 = vector.load %arg2[%c0_1, %c0_2] : memref<128x512xbf16, #tpu.memory_space<vmem>>, vector<128x512xbf16>
    %cst = arith.constant dense<0.000000e+00> : vector<128x512xf32>
    %2 = tpu.matmul %0, %1, %cst {dimension_numbers = #tpu.dot_dimension_numbers<[1], [0], [0], [1], [0, 0, 1, 1], [], []>} : vector<128x128xbf16>, vector<128x512xbf16>, vector<128x512xf32> -> vector<128x512xf32>
    %c0_3 = arith.constant 0 : index
    %c0_4 = arith.constant 0 : index
    %3 = vector.load %arg3[%c0_3, %c0_4] : memref<1x512xf32, #tpu.memory_space<vmem>>, vector<1x512xf32>
    %4 = vector.broadcast %3 : vector<1x512xf32> to vector<128x512xf32>
    %5 = arith.addf %2, %4 : vector<128x512xf32>
    %cst_5 = arith.constant 5.000000e-01 : f32
    %6 = vector.broadcast %cst_5 : f32 to vector<128x512xf32>
    %7 = arith.mulf %6, %5 : vector<128x512xf32>
    %cst_6 = arith.constant 4.471500e-02 : f32
    %8 = vector.broadcast %cst_6 : f32 to vector<128x512xf32>
    %9 = arith.mulf %8, %5 : vector<128x512xf32>
    %10 = arith.mulf %9, %5 : vector<128x512xf32>
    %11 = arith.mulf %10, %5 : vector<128x512xf32>
    %12 = arith.addf %5, %11 : vector<128x512xf32>
    %cst_7 = arith.constant 0.797884583 : f32
    %13 = vector.broadcast %cst_7 : f32 to vector<128x512xf32>
    %14 = arith.mulf %13, %12 : vector<128x512xf32>
    %15 = math.tanh %14 : vector<128x512xf32>
    %cst_8 = arith.constant 1.000000e+00 : f32
    %16 = vector.broadcast %cst_8 : f32 to vector<128x512xf32>
    %17 = arith.addf %16, %15 : vector<128x512xf32>
    %18 = arith.mulf %7, %17 : vector<128x512xf32>
    %19 = arith.truncf %18 : vector<128x512xf32> to vector<128x512xbf16>
    %c0_9 = arith.constant 0 : index
    %c0_10 = arith.constant 0 : index
    %20 = vector.load %arg4[%c0_9, %c0_10] : memref<512x128xbf16, #tpu.memory_space<vmem>>, vector<512x128xbf16>
    %cst_11 = arith.constant dense<0.000000e+00> : vector<128x128xf32>
    %21 = tpu.matmul %19, %20, %cst_11 {dimension_numbers = #tpu.dot_dimension_numbers<[1], [0], [0], [1], [0, 0, 1, 1], [], []>} : vector<128x512xbf16>, vector<512x128xbf16>, vector<128x128xf32> -> vector<128x128xf32>
    %c0_12 = arith.constant 0 : index
    %c0_13 = arith.constant 0 : index
    %22 = vector.load %arg5[%c0_12, %c0_13] : memref<1x128xf32, #tpu.memory_space<vmem>>, vector<1x128xf32>
    %23 = vector.broadcast %22 : vector<1x128xf32> to vector<128x128xf32>
    %24 = arith.addf %21, %23 : vector<128x128xf32>
    %25 = arith.extf %0 : vector<128x128xbf16> to vector<128x128xf32>
    %26 = arith.addf %24, %25 : vector<128x128xf32>
    %cst_14 = arith.constant dense<0.000000e+00> : vector<128xf32>
    %27 = vector.multi_reduction <add>, %26, %cst_14 [1] : vector<128x128xf32> to vector<128xf32>
    %28 = vector.shape_cast %27 : vector<128xf32> to vector<128x1xf32>
    %cst_15 = arith.constant 1.280000e+02 : f32
    %29 = vector.broadcast %cst_15 : f32 to vector<128x1xf32>
    %30 = arith.divf %28, %29 : vector<128x1xf32>
    %31 = vector.broadcast %30 : vector<128x1xf32> to vector<128x128xf32>
    %32 = arith.subf %26, %31 : vector<128x128xf32>
    %33 = arith.mulf %32, %32 : vector<128x128xf32>
    %cst_16 = arith.constant dense<0.000000e+00> : vector<128xf32>
    %34 = vector.multi_reduction <add>, %33, %cst_16 [1] : vector<128x128xf32> to vector<128xf32>
    %35 = vector.shape_cast %34 : vector<128xf32> to vector<128x1xf32>
    %cst_17 = arith.constant 1.280000e+02 : f32
    %36 = vector.broadcast %cst_17 : f32 to vector<128x1xf32>
    %37 = arith.divf %35, %36 : vector<128x1xf32>
    %cst_18 = arith.constant 9.99999974E-6 : f32
    %38 = vector.broadcast %cst_18 : f32 to vector<128x1xf32>
    %39 = arith.addf %37, %38 : vector<128x1xf32>
    %40 = math.rsqrt %39 : vector<128x1xf32>
    %41 = vector.broadcast %40 : vector<128x1xf32> to vector<128x128xf32>
    %42 = arith.mulf %32, %41 : vector<128x128xf32>
    %c0_19 = arith.constant 0 : index
    %c0_20 = arith.constant 0 : index
    %43 = vector.load %arg6[%c0_19, %c0_20] : memref<1x128xf32, #tpu.memory_space<vmem>>, vector<1x128xf32>
    %44 = vector.broadcast %43 : vector<1x128xf32> to vector<128x128xf32>
    %45 = arith.mulf %42, %44 : vector<128x128xf32>
    %c0_21 = arith.constant 0 : index
    %c0_22 = arith.constant 0 : index
    %46 = vector.load %arg7[%c0_21, %c0_22] : memref<1x128xf32, #tpu.memory_space<vmem>>, vector<1x128xf32>
    %47 = vector.broadcast %46 : vector<1x128xf32> to vector<128x128xf32>
    %48 = arith.addf %45, %47 : vector<128x128xf32>
    %49 = arith.truncf %48 : vector<128x128xf32> to vector<128x128xbf16>
    %c0_23 = arith.constant 0 : index
    %c0_24 = arith.constant 0 : index
    %50 = vector.load %arg8[%c0_23, %c0_24] : memref<128x128xbf16, #tpu.memory_space<vmem>>, vector<128x128xbf16>
    tpu.vector_store %arg8[%c0_23, %c0_24], %49 {strides = array<i32>} : memref<128x128xbf16, #tpu.memory_space<vmem>>, vector<128x128xbf16>,
    return
  }
  func.func @transform_0(%arg0: i32) -> (i32, i32) {
    %c0_i32 = arith.constant 0 : i32
    %c0_i32_0 = arith.constant 0 : i32
    return %arg0, %c0_i32 : i32, i32
  }
  func.func @transform_1(%arg0: i32) -> (i32, i32) {
    %c0_i32 = arith.constant 0 : i32
    %c0_i32_0 = arith.constant 0 : i32
    %c0_i32_1 = arith.constant 0 : i32
    return %c0_i32, %c0_i32_0 : i32, i32
  }
  func.func @transform_2(%arg0: i32) -> (i32, i32) {
    %c0_i32 = arith.constant 0 : i32
    %c0_i32_0 = arith.constant 0 : i32
    %c0_i32_1 = arith.constant 0 : i32
    return %c0_i32, %c0_i32_0 : i32, i32
  }
  func.func @transform_3(%arg0: i32) -> (i32, i32) {
    %c0_i32 = arith.constant 0 : i32
    %c0_i32_0 = arith.constant 0 : i32
    %c0_i32_1 = arith.constant 0 : i32
    return %c0_i32, %c0_i32_0 : i32, i32
  }
  func.func @transform_4(%arg0: i32) -> (i32, i32) {
    %c0_i32 = arith.constant 0 : i32
    %c0_i32_0 = arith.constant 0 : i32
    %c0_i32_1 = arith.constant 0 : i32
    return %c0_i32, %c0_i32_0 : i32, i32
  }
  func.func @transform_5(%arg0: i32) -> (i32, i32) {
    %c0_i32 = arith.constant 0 : i32
    %c0_i32_0 = arith.constant 0 : i32
    %c0_i32_1 = arith.constant 0 : i32
    return %c0_i32, %c0_i32_0 : i32, i32
  }
  func.func @transform_6(%arg0: i32) -> (i32, i32) {
    %c0_i32 = arith.constant 0 : i32
    %c0_i32_0 = arith.constant 0 : i32
    %c0_i32_1 = arith.constant 0 : i32
    return %c0_i32, %c0_i32_0 : i32, i32
  }
  func.func @transform_7(%arg0: i32) -> (i32, i32) {
    %c0_i32 = arith.constant 0 : i32
    %c0_i32_0 = arith.constant 0 : i32
    return %arg0, %c0_i32 : i32, i32
  }
}

</mosaic_0001>

<llo_original>
// kernel: tpu_custom_call.1
$region0: #{tpu_custom_call.1}
  #allocation0 [shape = 'u32[]', space=smem, size = 0x4, offset = 0x4, fixed_abs, tag = 'smem constant byte address 0x4 - core index']
  #allocation1 [shape = 'u32[144,128]{1,0:T(1,128)}', space=vmem, size = 0x12000, scoped, tag = 'internal scratch']
  %s0 = inlined_call_operand.hbm [shape: f32[8,128], index: 0, kind: input, shape index: {}]
  %s1 = inlined_call_operand.hbm [shape: f32[16,128], index: 1, kind: output, shape index: {}]
  %s2 = sld [smem:[#allocation0]]
  $region41: #{tpu_custom_call.1} parent=0
    _
  %s4 = ssub.s32 1, %s2
  %s5 = scalar_select 0, %s4, %s2
  $region1: #{tpu_custom_call.1} parent=0
    #allocation2 [shape = 'u8[4096]{0}', space=vmem, size = 0x1000, scoped, tag = 'input window, operand 0, single buffered']
    #allocation3 [shape = 's32[2]{0}', space=sflag, size = 0x8, scoped, tag = 'scoped memory for tpu_custom_call.1']
    #allocation4 [shape = 's32[2]{0}', space=sflag, size = 0x8, scoped, tag = 'scoped memory for tpu_custom_call.1']
    #allocation5 [shape = 'u8[8192]{0}', space=vmem, size = 0x2000, scoped, tag = 'output window, operand 0']
    %6 = vsyncpa [#allocation3], 0
    %7 = vsyncpa [#allocation4], 0
    %s8 = scalar_lea.sflag [#allocation4], 1
    %9 = vsyncpa %s8, 0
    loop: start=0, step=1, limit=4
    $region2: #{tpu_custom_call.1} parent=1 // loop_pre_header
      _
    $region3: #{tpu_custom_call.1} parent=1 // loop_header
      %s11 = sphi 0, %s15
      %p12 = scmp.ge.s32.totalorder %s11, 4
      %s19 = sphi 0, %s19
      %s21 = sphi 0, %s19
      %s22 = sphi 0, %s21
      %s36 = sphi 0, %s22
      %s42 = sphi 0, %s44
      %s45 = sphi 0, %s42
      %s46 = sphi 0, %s45
      %s62 = sphi 0, %s46
    $region4: #{tpu_custom_call.1} parent=1 // loop_header_branch
      %14 = sbr.rel (%p12) target = $region8
    $region5: #{tpu_custom_call.1} parent=1 // loop_body
      %s16 = ssub.s32 %s11, 1
      %s17 = ssub.s32 %s11, 2
      %s18 = sadd.s32 %s11, 1
      %s20 = sadd.s32 %s19, 1
      %p23 = scmp.eq.s32.totalorder %s11, 1
      %p24 = scmp.ne.s32.totalorder %s19, %s21
      %p25 = scmp.eq.s32.totalorder %s11, 0
      %p26 = por %p24, %p25
      %p27 = scmp.ne.s32.totalorder %s19, %s21
      %p28 = scmp.eq.s32.totalorder %s16, 1
      %p29 = por %p27, %p28
      %p30 = scmp.ne.s32.totalorder %s21, %s22
      %p31 = scmp.eq.s32.totalorder %s16, 0
      %p32 = por %p30, %p31
      %p33 = scmp.ne.s32.totalorder %s21, %s22
      %p34 = scmp.eq.s32.totalorder %s17, 1
      %p35 = por %p33, %p34
      %p37 = scmp.ne.s32.totalorder %s22, %s36
      %p38 = scmp.eq.s32.totalorder %s17, 0
      %p39 = por %p37, %p38
      %s40 = ssub.s32 %s11, %s18
      %p41 = scmp.eq.s32.totalorder %s40, 0
      %s43 = sadd.s32 %s42, 1
      %s44 = scalar_select %p41, %s42, %s43
      %p47 = pneg %p41
      %p48 = scmp.eq.s32.totalorder %s11, 1
      %p49 = por %p47, %p48
      %p50 = scmp.ne.s32.totalorder %s42, %s45
      %p51 = scmp.eq.s32.totalorder %s11, 0
      %p52 = por %p50, %p51
      %p53 = scmp.ne.s32.totalorder %s42, %s45
      %p54 = scmp.eq.s32.totalorder %s16, 1
      %p55 = por %p53, %p54
      %p56 = scmp.ne.s32.totalorder %s45, %s46
      %p57 = scmp.eq.s32.totalorder %s16, 0
      %p58 = por %p56, %p57
      %p59 = scmp.ne.s32.totalorder %s45, %s46
      %p60 = scmp.eq.s32.totalorder %s17, 1
      %p61 = por %p59, %p60
      %p63 = scmp.ne.s32.totalorder %s46, %s62
      %p64 = scmp.eq.s32.totalorder %s17, 0
      %p65 = por %p63, %p64
      %p66 = scmp.le.s32.totalorder 1, %s11
      %p67 = scmp.lt.s32.totalorder %s11, 3
      %p68 = pnand %p66, %p67
      %p69 = pneg %p68
      // Predicated region
      $region9: #{tpu_custom_call.1} parent=5 // pred_check
        _
      $region10: #{tpu_custom_call.1} parent=5 // pred_check_branch
        %71 = sbr.rel (%p68) target = $region12
      $region11: #{tpu_custom_call.1} parent=5 // pred_region
        %s72 = ssub.s32 %s11, 1
        // Predicated region
        $region13: #{tpu_custom_call.1} parent=11 // pred_check
          %p73 = pneg %p32
        $region14: #{tpu_custom_call.1} parent=11 // pred_check_branch
          %75 = sbr.rel (%p73) target = $region16
        $region15: #{tpu_custom_call.1} parent=11 // pred_region
          %s77 = ssub.s32 128, 128
          %78 = vsyncadd [#allocation3], %s77
          %s80 = sshll.u32 [#allocation2], 4
          %s81 = int_to_ptr.vmem [resolvable:$true] %s80
          %83 = dma.hbm_to_vmem [thread:$0]  %s0, 128, %s81, [#allocation3]
        $region16: #{tpu_custom_call.1} parent=11 // pred_fallthru
          _
      $region12: #{tpu_custom_call.1} parent=5 // pred_fallthru
        _
      %p84 = scmp.lt.s32.totalorder %s11, 2
      // Predicated region
      $region17: #{tpu_custom_call.1} parent=5 // pred_check
        %p85 = pneg %p84
      $region18: #{tpu_custom_call.1} parent=5 // pred_check_branch
        %87 = sbr.rel (%p85) target = $region20
      $region19: #{tpu_custom_call.1} parent=5 // pred_region
        _
      $region20: #{tpu_custom_call.1} parent=5 // pred_fallthru
        _
      %p88 = scmp.le.s32.totalorder 1, %s11
      %p89 = scmp.lt.s32.totalorder %s11, 3
      %p90 = pnand %p88, %p89
      %p91 = pneg %p90
      // Predicated region
      $region21: #{tpu_custom_call.1} parent=5 // pred_check
        _
      $region22: #{tpu_custom_call.1} parent=5 // pred_check_branch
        %93 = sbr.rel (%p90) target = $region24
      $region23: #{tpu_custom_call.1} parent=5 // pred_region
        %s94 = ssub.s32 %s11, 1
        // Predicated region
        $region25: #{tpu_custom_call.1} parent=23 // pred_check
          %p95 = pneg %p32
        $region26: #{tpu_custom_call.1} parent=23 // pred_check_branch
          %97 = sbr.rel (%p95) target = $region28
        $region27: #{tpu_custom_call.1} parent=23 // pred_region
          %98 = dma.done [#allocation3], 128
        $region28: #{tpu_custom_call.1} parent=23 // pred_fallthru
          _
        %p99 = pneg %p32
        %p100 = pneg %p29
        %p101 = pneg %p58
        %p102 = pneg %p55
        %s103 = sand.u32 %s45, 1
        %s104 = scalar_lea.sflag [#allocation4], %s103
        %s105 = sand.u32 %s45, 1
        %s106 = smul.addr %s105, 8
        %s107 = scalar_lea.vmem [#allocation5], %s106
        %v108 = vld [vmem:[#allocation2] sm:$0xff]
        %s109 = scvt.s32.f32 %s16
        %v110 = vstv %s109
        %v111 = vadd.f32 %v108, %v110
        %112 = vst [vmem:[%s107] sm:$0xff] %v111
        %s113 = sand.u32 %s45, 1
        %s114 = scalar_lea.sflag [#allocation4], %s113
        %s115 = sand.u32 %s45, 1
        %s116 = smul.addr %s115, 8
        %s117 = scalar_lea.vmem [#allocation5], %s116
        // Predicated region
        $region29: #{tpu_custom_call.1} parent=23 // pred_check
          %p118 = pneg %p55
        $region30: #{tpu_custom_call.1} parent=23 // pred_check_branch
          %120 = sbr.rel (%p118) target = $region32
        $region31: #{tpu_custom_call.1} parent=23 // pred_region
          %s122 = ssub.s32 128, 128
          %123 = vsyncadd %s114, %s122
          %s124 = smul.addr %s16, 128
          %s125 = scalar_lea.hbm %s1, %s124
          %s127 = sshll.u32 %s117, 4
          %s128 = int_to_ptr.vmem [resolvable:$true] %s127
          %130 = dma.vmem_to_hbm [thread:$0]  %s128, 128, %s125, %s114
        $region32: #{tpu_custom_call.1} parent=23 // pred_fallthru
          _
      $region24: #{tpu_custom_call.1} parent=5 // pred_fallthru
        _
      %p131 = scmp.le.s32.totalorder 2, %s11
      // Predicated region
      $region33: #{tpu_custom_call.1} parent=5 // pred_check
        %p132 = pneg %p131
      $region34: #{tpu_custom_call.1} parent=5 // pred_check_branch
        %134 = sbr.rel (%p132) target = $region36
      $region35: #{tpu_custom_call.1} parent=5 // pred_region
        %s135 = ssub.s32 %s11, 2
        // Predicated region
        $region37: #{tpu_custom_call.1} parent=35 // pred_check
          %p136 = pneg %p61
        $region38: #{tpu_custom_call.1} parent=35 // pred_check_branch
          %138 = sbr.rel (%p136) target = $region40
        $region39: #{tpu_custom_call.1} parent=35 // pred_region
          %s139 = sand.u32 %s46, 1
          %s140 = scalar_lea.sflag [#allocation4], %s139
          %s141 = sand.u32 %s46, 1
          %s142 = smul.addr %s141, 8
          %s143 = scalar_lea.vmem [#allocation5], %s142
          %144 = dma.done %s140, 128
        $region40: #{tpu_custom_call.1} parent=35 // pred_fallthru
          _
      $region36: #{tpu_custom_call.1} parent=5 // pred_fallthru
        _
    $region6: #{tpu_custom_call.1} parent=1 // loop_footer
      %s15 = sadd.s32 1, %s11
    $region7: #{tpu_custom_call.1} parent=1 // loop_footer_branch
      %10 = sbr.rel target = $region3
    $region8: #{tpu_custom_call.1} parent=1 // loop_exit
      _
    %145 = vsyncpa [#allocation3], 1
    %s146 = scalar_lea.sflag [#allocation3], 1
    %147 = vsyncpa %s146, 1
    %148 = vsyncpa [#allocation4], 1
    %s149 = scalar_lea.sflag [#allocation4], 1
    %150 = vsyncpa %s149, 1

// kernel: backbone_forward.11
$region0: #{backbone_forward.11}
  #allocation0 [shape = 'u32[]', space=smem, size = 0x4, offset = 0x4, fixed_abs, tag = 'smem constant byte address 0x4 - core index']
  #allocation1 [shape = 'u32[144,128]{1,0:T(1,128)}', space=vmem, size = 0x12000, scoped, tag = 'internal scratch']
  %s0 = inlined_call_operand.vmem [shape: bf16[512,128], index: 0, kind: input, shape index: {}]
  %s1 = inlined_call_operand.vmem [shape: bf16[128,128], index: 1, kind: input, shape index: {}]
  %s2 = inlined_call_operand.vmem [shape: f32[1,128], index: 2, kind: input, shape index: {}]
  %s3 = inlined_call_operand.vmem [shape: f32[256,128], index: 3, kind: input, shape index: {}]
  %s4 = inlined_call_operand.vmem [shape: bf16[512,128], index: 4, kind: output, shape index: {}]
  %s5 = sld [smem:[#allocation0]]
  $region49: #{backbone_forward.11} parent=0
    _
  %s7 = ssub.s32 1, %s5
  %s8 = scalar_select 0, %s7, %s5
  loop: start=0, step=1, limit=6
  $region2: #{backbone_forward.11} parent=0 // loop_pre_header
    _
  $region3: #{backbone_forward.11} parent=0 // loop_header
    %s10 = sphi 0, %s14
    %p11 = scmp.ge.s32.totalorder %s10, 6
    %s20 = sphi 0, %s22
    %s23 = sphi 0, %s20
    %s24 = sphi 0, %s23
    %s40 = sphi 0, %s24
    %s44 = sphi 0, %s44
    %s46 = sphi 0, %s44
    %s47 = sphi 0, %s46
    %s61 = sphi 0, %s47
    %s65 = sphi 0, %s65
    %s67 = sphi 0, %s65
    %s68 = sphi 0, %s67
    %s82 = sphi 0, %s68
    %s86 = sphi 0, %s86
    %s88 = sphi 0, %s86
    %s89 = sphi 0, %s88
    %s103 = sphi 0, %s89
    %s109 = sphi 0, %s111
    %s112 = sphi 0, %s109
    %s113 = sphi 0, %s112
    %s129 = sphi 0, %s113
  $region4: #{backbone_forward.11} parent=0 // loop_header_branch
    %13 = sbr.rel (%p11) target = $region8
  $region5: #{backbone_forward.11} parent=0 // loop_body
    %s15 = ssub.s32 %s10, 1
    %s16 = ssub.s32 %s10, 2
    %s17 = sadd.s32 %s10, 1
    %s18 = ssub.s32 %s10, %s17
    %p19 = scmp.eq.s32.totalorder %s18, 0
    %s21 = sadd.s32 %s20, 1
    %s22 = scalar_select %p19, %s20, %s21
    %p25 = pneg %p19
    %p26 = scmp.eq.s32.totalorder %s10, 3
    %p27 = por %p25, %p26
    %p28 = scmp.ne.s32.totalorder %s20, %s23
    %p29 = scmp.eq.s32.totalorder %s10, 0
    %p30 = por %p28, %p29
    %p31 = scmp.ne.s32.totalorder %s20, %s23
    %p32 = scmp.eq.s32.totalorder %s15, 3
    %p33 = por %p31, %p32
    %p34 = scmp.ne.s32.totalorder %s23, %s24
    %p35 = scmp.eq.s32.totalorder %s15, 0
    %p36 = por %p34, %p35
    %p37 = scmp.ne.s32.totalorder %s23, %s24
    %p38 = scmp.eq.s32.totalorder %s16, 3
    %p39 = por %p37, %p38
    %p41 = scmp.ne.s32.totalorder %s24, %s40
    %p42 = scmp.eq.s32.totalorder %s16, 0
    %p43 = por %p41, %p42
    %s45 = sadd.s32 %s44, 1
    %p48 = scmp.eq.s32.totalorder %s10, 3
    %p49 = scmp.ne.s32.totalorder %s44, %s46
    %p50 = scmp.eq.s32.totalorder %s10, 0
    %p51 = por %p49, %p50
    %p52 = scmp.ne.s32.totalorder %s44, %s46
    %p53 = scmp.eq.s32.totalorder %s15, 3
    %p54 = por %p52, %p53
    %p55 = scmp.ne.s32.totalorder %s46, %s47
    %p56 = scmp.eq.s32.totalorder %s15, 0
    %p57 = por %p55, %p56
    %p58 = scmp.ne.s32.totalorder %s46, %s47
    %p59 = scmp.eq.s32.totalorder %s16, 3
    %p60 = por %p58, %p59
    %p62 = scmp.ne.s32.totalorder %s47, %s61
    %p63 = scmp.eq.s32.totalorder %s16, 0
    %p64 = por %p62, %p63
    %s66 = sadd.s32 %s65, 1
    %p69 = scmp.eq.s32.totalorder %s10, 3
    %p70 = scmp.ne.s32.totalorder %s65, %s67
    %p71 = scmp.eq.s32.totalorder %s10, 0
    %p72 = por %p70, %p71
    %p73 = scmp.ne.s32.totalorder %s65, %s67
    %p74 = scmp.eq.s32.totalorder %s15, 3
    %p75 = por %p73, %p74
    %p76 = scmp.ne.s32.totalorder %s67, %s68
    %p77 = scmp.eq.s32.totalorder %s15, 0
    %p78 = por %p76, %p77
    %p79 = scmp.ne.s32.totalorder %s67, %s68
    %p80 = scmp.eq.s32.totalorder %s16, 3
    %p81 = por %p79, %p80
    %p83 = scmp.ne.s32.totalorder %s68, %s82
    %p84 = scmp.eq.s32.totalorder %s16, 0
    %p85 = por %p83, %p84
    %s87 = sadd.s32 %s86, 1
    %p90 = scmp.eq.s32.totalorder %s10, 3
    %p91 = scmp.ne.s32.totalorder %s86, %s88
    %p92 = scmp.eq.s32.totalorder %s10, 0
    %p93 = por %p91, %p92
    %p94 = scmp.ne.s32.totalorder %s86, %s88
    %p95 = scmp.eq.s32.totalorder %s15, 3
    %p96 = por %p94, %p95
    %p97 = scmp.ne.s32.totalorder %s88, %s89
    %p98 = scmp.eq.s32.totalorder %s15, 0
    %p99 = por %p97, %p98
    %p100 = scmp.ne.s32.totalorder %s88, %s89
    %p101 = scmp.eq.s32.totalorder %s16, 3
    %p102 = por %p100, %p101
    %p104 = scmp.ne.s32.totalorder %s89, %s103
    %p105 = scmp.eq.s32.totalorder %s16, 0
    %p106 = por %p104, %p105
    %s107 = ssub.s32 %s10, %s17
    %p108 = scmp.eq.s32.totalorder %s107, 0
    %s110 = sadd.s32 %s109, 1
    %s111 = scalar_select %p108, %s109, %s110
    %p114 = pneg %p108
    %p115 = scmp.eq.s32.totalorder %s10, 3
    %p116 = por %p114, %p115
    %p117 = scmp.ne.s32.totalorder %s109, %s112
    %p118 = scmp.eq.s32.totalorder %s10, 0
    %p119 = por %p117, %p118
    %p120 = scmp.ne.s32.totalorder %s109, %s112
    %p121 = scmp.eq.s32.totalorder %s15, 3
    %p122 = por %p120, %p121
    %p123 = scmp.ne.s32.totalorder %s112, %s113
    %p124 = scmp.eq.s32.totalorder %s15, 0
    %p125 = por %p123, %p124
    %p126 = scmp.ne.s32.totalorder %s112, %s113
    %p127 = scmp.eq.s32.totalorder %s16, 3
    %p128 = por %p126, %p127
    %p130 = scmp.ne.s32.totalorder %s113, %s129
    %p131 = scmp.eq.s32.totalorder %s16, 0
    %p132 = por %p130, %p131
    %p133 = scmp.le.s32.totalorder 1, %s10
    %p134 = scmp.lt.s32.totalorder %s10, 5
    %p135 = pnand %p133, %p134
    %p136 = pneg %p135
    // Predicated region
    $region9: #{backbone_forward.11} parent=5 // pred_check
      _
    $region10: #{backbone_forward.11} parent=5 // pred_check_branch
      %138 = sbr.rel (%p135) target = $region12
    $region11: #{backbone_forward.11} parent=5 // pred_region
      %s139 = ssub.s32 %s10, 1
      // Predicated region
      $region13: #{backbone_forward.11} parent=11 // pred_check
        %p140 = pneg %p57
      $region14: #{backbone_forward.11} parent=11 // pred_check_branch
        %142 = sbr.rel (%p140) target = $region16
      $region15: #{backbone_forward.11} parent=11 // pred_region
        _
      $region16: #{backbone_forward.11} parent=11 // pred_fallthru
        _
      // Predicated region
      $region17: #{backbone_forward.11} parent=11 // pred_check
        %p143 = pneg %p78
      $region18: #{backbone_forward.11} parent=11 // pred_check_branch
        %145 = sbr.rel (%p143) target = $region20
      $region19: #{backbone_forward.11} parent=11 // pred_region
        _
      $region20: #{backbone_forward.11} parent=11 // pred_fallthru
        _
      // Predicated region
      $region21: #{backbone_forward.11} parent=11 // pred_check
        %p146 = pneg %p99
      $region22: #{backbone_forward.11} parent=11 // pred_check_branch
        %148 = sbr.rel (%p146) target = $region24
      $region23: #{backbone_forward.11} parent=11 // pred_region
        _
      $region24: #{backbone_forward.11} parent=11 // pred_fallthru
        _
    $region12: #{backbone_forward.11} parent=5 // pred_fallthru
      _
    %p149 = scmp.lt.s32.totalorder %s10, 4
    // Predicated region
    $region25: #{backbone_forward.11} parent=5 // pred_check
      %p150 = pneg %p149
    $region26: #{backbone_forward.11} parent=5 // pred_check_branch
      %152 = sbr.rel (%p150) target = $region28
    $region27: #{backbone_forward.11} parent=5 // pred_region
      // Predicated region
      $region29: #{backbone_forward.11} parent=27 // pred_check
        %p153 = pneg %p30
      $region30: #{backbone_forward.11} parent=27 // pred_check_branch
        %155 = sbr.rel (%p153) target = $region32
      $region31: #{backbone_forward.11} parent=27 // pred_region
        %s156 = smul.u32 16, %s10
        %p157 = scmp.lt.s32.totalorder %s156, 63
        %s158 = scalar_select %p157, %s156, 63
        %s159 = smul.addr %s158, 4
        %s160 = scalar_lea.vmem %s0, %s159
        %s161 = smul.u32 16, %s10
      $region32: #{backbone_forward.11} parent=27 // pred_fallthru
        _
    $region28: #{backbone_forward.11} parent=5 // pred_fallthru
      _
    %p162 = scmp.le.s32.totalorder 1, %s10
    %p163 = scmp.lt.s32.totalorder %s10, 5
    %p164 = pnand %p162, %p163
    %p165 = pneg %p164
    // Predicated region
    $region33: #{backbone_forward.11} parent=5 // pred_check
      _
    $region34: #{backbone_forward.11} parent=5 // pred_check_branch
      %167 = sbr.rel (%p164) target = $region36
    $region35: #{backbone_forward.11} parent=5 // pred_region
      %s168 = ssub.s32 %s10, 1
      %s169 = smul.u32 16, %s15
      %p170 = scmp.lt.s32.totalorder %s169, 63
      %s171 = scalar_select %p170, %s169, 63
      %s172 = smul.addr %s171, 4
      %s173 = scalar_lea.vmem %s0, %s172
      %p174 = pneg %p36
      %p175 = pneg %p33
      %p176 = pneg %p57
      %p177 = pneg %p54
      %p178 = pneg %p78
      %p179 = pneg %p75
      %p180 = pneg %p99
      %p181 = pneg %p96
      %p182 = pneg %p125
      %p183 = pneg %p122
      %s184 = smul.u32 16, %s15
      %p185 = scmp.lt.s32.totalorder %s184, 63
      %s186 = scalar_select %p185, %s184, 63
      %s187 = smul.addr %s186, 4
      %s188 = scalar_lea.vmem %s4, %s187
      %s189 = smul.u32 16, %s15
      %p190 = scmp.lt.s32.totalorder %s189, 63
      %s191 = scalar_select %p190, %s189, 63
      %s192 = smul.addr %s191, 4
      %s193 = scalar_lea.vmem %s0, %s192
      %s194 = smul.u32 16, %s15
      %s195 = smul.u32 16, %s15
      %p196 = scmp.lt.s32.totalorder %s195, 63
      %s197 = scalar_select %p196, %s195, 63
      %s198 = smul.addr %s197, 4
      %s199 = scalar_lea.vmem %s4, %s198
      %s200 = smul.u32 16, %s15
      %p202 = scmp.lt.s32.totalorder %s15, 0
      %s203 = ssub.s32 0, %s15
      %s204 = scalar_select %p202, %s203, %s15
      %s205 = sand.u32 %s204, 1
      %s206 = ssub.s32 0, %s205
      %s207 = scalar_select %p202, %s206, %s205
      %p208 = scmp.ne.s32.totalorder %s207, 0
      %p209 = scmp.lt.s32.totalorder %s207, 0
      %p210 = pnand %p209, %p208
      %p211 = pneg %p210
      %s212 = sadd.s32 %s207, 2
      %s213 = scalar_select %p211, %s212, %s207
      %s214 = smul.u32 %s213, 128
      %s215 = scalar_lea.vmem %s3, %s214
      %v216 = vld [vmem:[%s215] sm:$0xff]
      %v217 = vld [vmem:[%s215 + $0x8] sm:$0xff]
      %v218 = vld [vmem:[%s215 + $0x10] sm:$0xff]
      %v219 = vld [vmem:[%s215 + $0x18] sm:$0xff]
      %v220 = vld [vmem:[%s215 + $0x20] sm:$0xff]
      %v221 = vld [vmem:[%s215 + $0x28] sm:$0xff]
      %v222 = vld [vmem:[%s215 + $0x30] sm:$0xff]
      %v223 = vld [vmem:[%s215 + $0x38] sm:$0xff]
      %v224 = vld [vmem:[%s215 + $0x40] sm:$0xff]
      %v225 = vld [vmem:[%s215 + $0x48] sm:$0xff]
      %v226 = vld [vmem:[%s215 + $0x50] sm:$0xff]
      %v227 = vld [vmem:[%s215 + $0x58] sm:$0xff]
      %v228 = vld [vmem:[%s215 + $0x60] sm:$0xff]
      %v229 = vld [vmem:[%s215 + $0x68] sm:$0xff]
      %v230 = vld [vmem:[%s215 + $0x70] sm:$0xff]
      %v231 = vld [vmem:[%s215 + $0x78] sm:$0xff]
      %v232 = vld [vmem:[%s193] sm:$0xf]
      %v233 = vld [vmem:[%s193 + $0x4] sm:$0xf]
      %v234 = vld [vmem:[%s193 + $0x8] sm:$0xf]
      %v235 = vld [vmem:[%s193 + $0xc] sm:$0xf]
      %v236 = vld [vmem:[%s193 + $0x10] sm:$0xf]
      %v237 = vld [vmem:[%s193 + $0x14] sm:$0xf]
      %v238 = vld [vmem:[%s193 + $0x18] sm:$0xf]
      %v239 = vld [vmem:[%s193 + $0x1c] sm:$0xf]
      %v240 = vld [vmem:[%s193 + $0x20] sm:$0xf]
      %v241 = vld [vmem:[%s193 + $0x24] sm:$0xf]
      %v242 = vld [vmem:[%s193 + $0x28] sm:$0xf]
      %v243 = vld [vmem:[%s193 + $0x2c] sm:$0xf]
      %v244 = vld [vmem:[%s193 + $0x30] sm:$0xf]
      %v245 = vld [vmem:[%s193 + $0x34] sm:$0xf]
      %v246 = vld [vmem:[%s193 + $0x38] sm:$0xf]
      %v247 = vld [vmem:[%s193 + $0x3c] sm:$0xf]
      %v248 = vld [vmem:[%s1] sm:$0xf]
      %v249 = vld [vmem:[%s1 + $0x4] sm:$0xf]
      %v250 = vld [vmem:[%s1 + $0x8] sm:$0xf]
      %v251 = vld [vmem:[%s1 + $0xc] sm:$0xf]
      %v252 = vld [vmem:[%s1 + $0x10] sm:$0xf]
      %v253 = vld [vmem:[%s1 + $0x14] sm:$0xf]
      %v254 = vld [vmem:[%s1 + $0x18] sm:$0xf]
      %v255 = vld [vmem:[%s1 + $0x1c] sm:$0xf]
      %v256 = vld [vmem:[%s1 + $0x20] sm:$0xf]
      %v257 = vld [vmem:[%s1 + $0x24] sm:$0xf]
      %v258 = vld [vmem:[%s1 + $0x28] sm:$0xf]
      %v259 = vld [vmem:[%s1 + $0x2c] sm:$0xf]
      %v260 = vld [vmem:[%s1 + $0x30] sm:$0xf]
      %v261 = vld [vmem:[%s1 + $0x34] sm:$0xf]
      %v262 = vld [vmem:[%s1 + $0x38] sm:$0xf]
      %v263 = vld [vmem:[%s1 + $0x3c] sm:$0xf]
      %v264 = vld [vmem:[%s2] sm:$0x1]
      %v266 = vlaneseq
      %v267 = vshrl.u32 %v266, 7
      %v268 = vsub.s32 0, %v267
      %v269 = vrot.slane %v264, %v268
      %v287 = vunpack.c.l.b16 %v232
      %v288 = vunpack.c.l.b16 %v233
      %v289 = vunpack.c.l.b16 %v234
      %v290 = vunpack.c.l.b16 %v235
      %v291 = vunpack.c.l.b16 %v236
      %v292 = vunpack.c.l.b16 %v237
      %v293 = vunpack.c.l.b16 %v238
      %v294 = vunpack.c.l.b16 %v239
      %v295 = vunpack.c.l.b16 %v240
      %v296 = vunpack.c.l.b16 %v241
      %v297 = vunpack.c.l.b16 %v242
      %v298 = vunpack.c.l.b16 %v243
      %v299 = vunpack.c.l.b16 %v244
      %v300 = vunpack.c.l.b16 %v245
      %v301 = vunpack.c.l.b16 %v246
      %v302 = vunpack.c.l.b16 %v247
      %v303 = vpack.c.b16 %v288, %v287
      %v304 = vpack.c.b16 %v290, %v289
      %v305 = vpack.c.b16 %v292, %v291
      %v306 = vpack.c.b16 %v294, %v293
      %v307 = vpack.c.b16 %v296, %v295
      %v308 = vpack.c.b16 %v298, %v297
      %v309 = vpack.c.b16 %v300, %v299
      %v310 = vpack.c.b16 %v302, %v301
      %v335 = vunpack.c.l.b16 %v248
      %v336 = vunpack.c.l.b16 %v249
      %v337 = vunpack.c.l.b16 %v250
      %v338 = vunpack.c.l.b16 %v251
      %v339 = vunpack.c.l.b16 %v252
      %v340 = vunpack.c.l.b16 %v253
      %v341 = vunpack.c.l.b16 %v254
      %v342 = vunpack.c.l.b16 %v255
      %v343 = vunpack.c.l.b16 %v256
      %v344 = vunpack.c.l.b16 %v257
      %v345 = vunpack.c.l.b16 %v258
      %v346 = vunpack.c.l.b16 %v259
      %v347 = vunpack.c.l.b16 %v260
      %v348 = vunpack.c.l.b16 %v261
      %v349 = vunpack.c.l.b16 %v262
      %v350 = vunpack.c.l.b16 %v263
      %v351 = vpack.c.b16 %v336, %v335
      %v352 = vpack.c.b16 %v338, %v337
      %v353 = vpack.c.b16 %v340, %v339
      %v354 = vpack.c.b16 %v342, %v341
      %v355 = vpack.c.b16 %v344, %v343
      %v356 = vpack.c.b16 %v346, %v345
      %v357 = vpack.c.b16 %v348, %v347
      %v358 = vpack.c.b16 %v350, %v349
      %367 = vmatprep.subr.bf16.mxu0 0
      %368 = vmatpush1.bf16.msra.mxu0 %v351
      %369 = vmatprep.subr.bf16.mxu0 0
      %370 = vmatpush1.bf16.msra.mxu0 %v352
      %371 = vmatprep.subr.bf16.mxu0 0
      %372 = vmatpush1.bf16.msra.mxu0 %v353
      %373 = vmatprep.subr.bf16.mxu0 0
      %374 = vmatpush1.bf16.msra.mxu0 %v354
      %375 = vmatprep.subr.bf16.mxu0 0
      %376 = vmatpush1.bf16.msra.mxu0 %v355
      %377 = vmatprep.subr.bf16.mxu0 0
      %378 = vmatpush1.bf16.msra.mxu0 %v356
      %379 = vmatprep.subr.bf16.mxu0 0
      %380 = vmatpush1.bf16.msra.mxu0 %v357
      %381 = vmatprep.subr.bf16.mxu0 0
      %382 = vmatpush1.bf16.msra.mxu0 %v358
      %383 = vmatprep.subr.bf16.mxu0 0
      %384 = vmatpush1.bf16.msra.mxu0 0
      %385 = vmatprep.subr.bf16.mxu0 0
      %386 = vmatpush1.bf16.msra.mxu0 0
      %387 = vmatprep.subr.bf16.mxu0 0
      %388 = vmatpush1.bf16.msra.mxu0 0
      %389 = vmatprep.subr.bf16.mxu0 0
      %390 = vmatpush1.bf16.msra.mxu0 0
      %391 = vmatprep.subr.bf16.mxu0 0
      %392 = vmatpush1.bf16.msra.mxu0 0
      %393 = vmatprep.subr.bf16.mxu0 0
      %394 = vmatpush1.bf16.msra.mxu0 0
      %395 = vmatprep.subr.bf16.mxu0 0
      %396 = vmatpush1.bf16.msra.mxu0 0
      %397 = vmatprep.subr.bf16.mxu0 0
      %398 = vmatpush1.bf16.msra.mxu0 0
      %399 = vmatprep.mubr.bf16.mxu0 0
      %400 = vmatmul.mubr.bf16.gmra.mrb[0].mxu0 %v303
      %v401 = vpop.f32.mrb[0].mxu0
      %v402 = vadd.f32 %v269, %v401
      %v403 = vpop.f32.mrb[0].mxu0
      %v404 = vpop.f32.mrb[0].mxu0
      %v405 = vadd.f32 %v269, %v404
      %v406 = vpop.f32.mrb[0].mxu0
      %407 = vmatprep.mubr.bf16.mxu0 0
      %408 = vmatmul.mubr.bf16.gmra.mrb[0].mxu0 %v304
      %v409 = vpop.f32.mrb[0].mxu0
      %v410 = vadd.f32 %v269, %v409
      %v411 = vpop.f32.mrb[0].mxu0
      %v412 = vpop.f32.mrb[0].mxu0
      %v413 = vadd.f32 %v269, %v412
      %v414 = vpop.f32.mrb[0].mxu0
      %415 = vmatprep.mubr.bf16.mxu0 0
      %416 = vmatmul.mubr.bf16.gmra.mrb[0].mxu0 %v305
      %v417 = vpop.f32.mrb[0].mxu0
      %v418 = vadd.f32 %v269, %v417
      %v419 = vpop.f32.mrb[0].mxu0
      %v420 = vpop.f32.mrb[0].mxu0
      %v421 = vadd.f32 %v269, %v420
      %v422 = vpop.f32.mrb[0].mxu0
      %423 = vmatprep.mubr.bf16.mxu0 0
      %424 = vmatmul.mubr.bf16.gmra.mrb[0].mxu0 %v306
      %v425 = vpop.f32.mrb[0].mxu0
      %v426 = vadd.f32 %v269, %v425
      %v427 = vpop.f32.mrb[0].mxu0
      %v428 = vpop.f32.mrb[0].mxu0
      %v429 = vadd.f32 %v269, %v428
      %v430 = vpop.f32.mrb[0].mxu0
      %431 = vmatprep.mubr.bf16.mxu0 0
      %432 = vmatmul.mubr.bf16.gmra.mrb[0].mxu0 %v307
      %v433 = vpop.f32.mrb[0].mxu0
      %v434 = vadd.f32 %v269, %v433
      %v435 = vpop.f32.mrb[0].mxu0
      %v436 = vpop.f32.mrb[0].mxu0
      %v437 = vadd.f32 %v269, %v436
      %v438 = vpop.f32.mrb[0].mxu0
      %439 = vmatprep.mubr.bf16.mxu0 0
      %440 = vmatmul.mubr.bf16.gmra.mrb[0].mxu0 %v308
      %v441 = vpop.f32.mrb[0].mxu0
      %v442 = vadd.f32 %v269, %v441
      %v443 = vpop.f32.mrb[0].mxu0
      %v444 = vpop.f32.mrb[0].mxu0
      %v445 = vadd.f32 %v269, %v444
      %v446 = vpop.f32.mrb[0].mxu0
      %447 = vmatprep.mubr.bf16.mxu0 0
      %448 = vmatmul.mubr.bf16.gmra.mrb[0].mxu0 %v309
      %v449 = vpop.f32.mrb[0].mxu0
      %v450 = vadd.f32 %v269, %v449
      %v451 = vpop.f32.mrb[0].mxu0
      %v452 = vpop.f32.mrb[0].mxu0
      %v453 = vadd.f32 %v269, %v452
      %v454 = vpop.f32.mrb[0].mxu0
      %455 = vmatprep.mubr.bf16.mxu0 0
      %456 = vmatmul.mubr.bf16.gmra.mrb[0].mxu0 %v310
      %v457 = vpop.f32.mrb[0].mxu0
      %v458 = vadd.f32 %v269, %v457
      %v459 = vpop.f32.mrb[0].mxu0
      %v460 = vpop.f32.mrb[0].mxu0
      %v461 = vadd.f32 %v269, %v460
      %v462 = vpop.f32.mrb[0].mxu0
      %463 = vdwg.mxu0
      %v464 = vmul.f32 %v402, %v216
      %v465 = vmul.f32 %v405, %v217
      %v466 = vmul.f32 %v410, %v218
      %v467 = vmul.f32 %v413, %v219
      %v468 = vmul.f32 %v418, %v220
      %v469 = vmul.f32 %v421, %v221
      %v470 = vmul.f32 %v426, %v222
      %v471 = vmul.f32 %v429, %v223
      %v472 = vmul.f32 %v434, %v224
      %v473 = vmul.f32 %v437, %v225
      %v474 = vmul.f32 %v442, %v226
      %v475 = vmul.f32 %v445, %v227
      %v476 = vmul.f32 %v450, %v228
      %v477 = vmul.f32 %v453, %v229
      %v478 = vmul.f32 %v458, %v230
      %v479 = vmul.f32 %v461, %v231
      %v480 = vpack.c.bf16 %v465, %v464
      %v481 = vpack.c.bf16 %v467, %v466
      %v482 = vpack.c.bf16 %v469, %v468
      %v483 = vpack.c.bf16 %v471, %v470
      %v484 = vpack.c.bf16 %v473, %v472
      %v485 = vpack.c.bf16 %v475, %v474
      %v486 = vpack.c.bf16 %v477, %v476
      %v487 = vpack.c.bf16 %v479, %v478
      %v496 = vunpack.c.l.b16 %v480
      %v497 = vunpack.c.h.b16 %v480
      %v498 = vunpack.c.l.b16 %v481
      %v499 = vunpack.c.h.b16 %v481
      %v500 = vunpack.c.l.b16 %v482
      %v501 = vunpack.c.h.b16 %v482
      %v502 = vunpack.c.l.b16 %v483
      %v503 = vunpack.c.h.b16 %v483
      %v504 = vunpack.c.l.b16 %v484
      %v505 = vunpack.c.h.b16 %v484
      %v506 = vunpack.c.l.b16 %v485
      %v507 = vunpack.c.h.b16 %v485
      %v508 = vunpack.c.l.b16 %v486
      %v509 = vunpack.c.h.b16 %v486
      %v510 = vunpack.c.l.b16 %v487
      %v511 = vunpack.c.h.b16 %v487
      %v512 = vpack.c.b16 %v496, %v496
      %v513 = vpack.c.b16 %v497, %v497
      %v514 = vpack.c.b16 %v498, %v498
      %v515 = vpack.c.b16 %v499, %v499
      %v516 = vpack.c.b16 %v500, %v500
      %v517 = vpack.c.b16 %v501, %v501
      %v518 = vpack.c.b16 %v502, %v502
      %v519 = vpack.c.b16 %v503, %v503
      %v520 = vpack.c.b16 %v504, %v504
      %v521 = vpack.c.b16 %v505, %v505
      %v522 = vpack.c.b16 %v506, %v506
      %v523 = vpack.c.b16 %v507, %v507
      %v524 = vpack.c.b16 %v508, %v508
      %v525 = vpack.c.b16 %v509, %v509
      %v526 = vpack.c.b16 %v510, %v510
      %v527 = vpack.c.b16 %v511, %v511
      %544 = vst [vmem:[%s199] sm:$0xf] %v512
      %545 = vst [vmem:[%s199 + $0x4] sm:$0xf] %v513
      %546 = vst [vmem:[%s199 + $0x8] sm:$0xf] %v514
      %547 = vst [vmem:[%s199 + $0xc] sm:$0xf] %v515
      %548 = vst [vmem:[%s199 + $0x10] sm:$0xf] %v516
      %549 = vst [vmem:[%s199 + $0x14] sm:$0xf] %v517
      %550 = vst [vmem:[%s199 + $0x18] sm:$0xf] %v518
      %551 = vst [vmem:[%s199 + $0x1c] sm:$0xf] %v519
      %552 = vst [vmem:[%s199 + $0x20] sm:$0xf] %v520
      %553 = vst [vmem:[%s199 + $0x24] sm:$0xf] %v521
      %554 = vst [vmem:[%s199 + $0x28] sm:$0xf] %v522
      %555 = vst [vmem:[%s199 + $0x2c] sm:$0xf] %v523
      %556 = vst [vmem:[%s199 + $0x30] sm:$0xf] %v524
      %557 = vst [vmem:[%s199 + $0x34] sm:$0xf] %v525
      %558 = vst [vmem:[%s199 + $0x38] sm:$0xf] %v526
      %559 = vst [vmem:[%s199 + $0x3c] sm:$0xf] %v527
      %s560 = smul.u32 16, %s15
      %p561 = scmp.lt.s32.totalorder %s560, 63
      %s562 = scalar_select %p561, %s560, 63
      %s563 = smul.addr %s562, 4
      %s564 = scalar_lea.vmem %s4, %s563
      // Predicated region
      $region37: #{backbone_forward.11} parent=35 // pred_check
        %p565 = pneg %p122
      $region38: #{backbone_forward.11} parent=35 // pred_check_branch
        %567 = sbr.rel (%p565) target = $region40
      $region39: #{backbone_forward.11} parent=35 // pred_region
        %s568 = smul.u32 16, %s15
      $region40: #{backbone_forward.11} parent=35 // pred_fallthru
        _
    $region36: #{backbone_forward.11} parent=5 // pred_fallthru
      _
    %p569 = scmp.le.s32.totalorder 2, %s10
    // Predicated region
    $region41: #{backbone_forward.11} parent=5 // pred_check
      %p570 = pneg %p569
    $region42: #{backbone_forward.11} parent=5 // pred_check_branch
      %572 = sbr.rel (%p570) target = $region44
    $region43: #{backbone_forward.11} parent=5 // pred_region
      %s573 = ssub.s32 %s10, 2
      // Predicated region
      $region45: #{backbone_forward.11} parent=43 // pred_check
        %p574 = pneg %p128
      $region46: #{backbone_forward.11} parent=43 // pred_check_branch
        %576 = sbr.rel (%p574) target = $region48
      $region47: #{backbone_forward.11} parent=43 // pred_region
        %s577 = smul.u32 16, %s16
        %p578 = scmp.lt.s32.totalorder %s577, 63
        %s579 = scalar_select %p578, %s577, 63
        %s580 = smul.addr %s579, 4
        %s581 = scalar_lea.vmem %s4, %s580
      $region48: #{backbone_forward.11} parent=43 // pred_fallthru
        _
    $region44: #{backbone_forward.11} parent=5 // pred_fallthru
      _
  $region6: #{backbone_forward.11} parent=0 // loop_footer
    %s14 = sadd.s32 1, %s10
  $region7: #{backbone_forward.11} parent=0 // loop_footer_branch
    %9 = sbr.rel target = $region3
  $region8: #{backbone_forward.11} parent=0 // loop_exit
    _

// kernel: backbone_forward.12
$region0: #{backbone_forward.12}
  #allocation0 [shape = 'u32[]', space=smem, size = 0x4, offset = 0x4, fixed_abs, tag = 'smem constant byte address 0x4 - core index']
  #allocation1 [shape = 'u32[144,128]{1,0:T(1,128)}', space=vmem, size = 0x12000, scoped, tag = 'internal scratch']
  %s0 = inlined_call_operand.vmem [shape: bf16[512,128], index: 0, kind: input, shape index: {}]
  %s1 = inlined_call_operand.vmem [shape: bf16[128,384], index: 1, kind: input, shape index: {}]
  %s2 = inlined_call_operand.vmem [shape: bf16[512,384], index: 2, kind: output, shape index: {}]
  %s3 = sld [smem:[#allocation0]]
  $region41: #{backbone_forward.12} parent=0
    _
  %s5 = ssub.s32 1, %s3
  %s6 = scalar_select 0, %s5, %s3
  loop: start=0, step=1, limit=6
  $region2: #{backbone_forward.12} parent=0 // loop_pre_header
    _
  $region3: #{backbone_forward.12} parent=0 // loop_header
    %s8 = sphi 0, %s12
    %p9 = scmp.ge.s32.totalorder %s8, 6
    %s18 = sphi 0, %s20
    %s21 = sphi 0, %s18
    %s22 = sphi 0, %s21
    %s38 = sphi 0, %s22
    %s42 = sphi 0, %s42
    %s44 = sphi 0, %s42
    %s45 = sphi 0, %s44
    %s59 = sphi 0, %s45
    %s65 = sphi 0, %s67
    %s68 = sphi 0, %s65
    %s69 = sphi 0, %s68
    %s85 = sphi 0, %s69
  $region4: #{backbone_forward.12} parent=0 // loop_header_branch
    %11 = sbr.rel (%p9) target = $region8
  $region5: #{backbone_forward.12} parent=0 // loop_body
    %s13 = ssub.s32 %s8, 1
    %s14 = ssub.s32 %s8, 2
    %s15 = sadd.s32 %s8, 1
    %s16 = ssub.s32 %s8, %s15
    %p17 = scmp.eq.s32.totalorder %s16, 0
    %s19 = sadd.s32 %s18, 1
    %s20 = scalar_select %p17, %s18, %s19
    %p23 = pneg %p17
    %p24 = scmp.eq.s32.totalorder %s8, 3
    %p25 = por %p23, %p24
    %p26 = scmp.ne.s32.totalorder %s18, %s21
    %p27 = scmp.eq.s32.totalorder %s8, 0
    %p28 = por %p26, %p27
    %p29 = scmp.ne.s32.totalorder %s18, %s21
    %p30 = scmp.eq.s32.totalorder %s13, 3
    %p31 = por %p29, %p30
    %p32 = scmp.ne.s32.totalorder %s21, %s22
    %p33 = scmp.eq.s32.totalorder %s13, 0
    %p34 = por %p32, %p33
    %p35 = scmp.ne.s32.totalorder %s21, %s22
    %p36 = scmp.eq.s32.totalorder %s14, 3
    %p37 = por %p35, %p36
    %p39 = scmp.ne.s32.totalorder %s22, %s38
    %p40 = scmp.eq.s32.totalorder %s14, 0
    %p41 = por %p39, %p40
    %s43 = sadd.s32 %s42, 1
    %p46 = scmp.eq.s32.totalorder %s8, 3
    %p47 = scmp.ne.s32.totalorder %s42, %s44
    %p48 = scmp.eq.s32.totalorder %s8, 0
    %p49 = por %p47, %p48
    %p50 = scmp.ne.s32.totalorder %s42, %s44
    %p51 = scmp.eq.s32.totalorder %s13, 3
    %p52 = por %p50, %p51
    %p53 = scmp.ne.s32.totalorder %s44, %s45
    %p54 = scmp.eq.s32.totalorder %s13, 0
    %p55 = por %p53, %p54
    %p56 = scmp.ne.s32.totalorder %s44, %s45
    %p57 = scmp.eq.s32.totalorder %s14, 3
    %p58 = por %p56, %p57
    %p60 = scmp.ne.s32.totalorder %s45, %s59
    %p61 = scmp.eq.s32.totalorder %s14, 0
    %p62 = por %p60, %p61
    %s63 = ssub.s32 %s8, %s15
    %p64 = scmp.eq.s32.totalorder %s63, 0
    %s66 = sadd.s32 %s65, 1
    %s67 = scalar_select %p64, %s65, %s66
    %p70 = pneg %p64
    %p71 = scmp.eq.s32.totalorder %s8, 3
    %p72 = por %p70, %p71
    %p73 = scmp.ne.s32.totalorder %s65, %s68
    %p74 = scmp.eq.s32.totalorder %s8, 0
    %p75 = por %p73, %p74
    %p76 = scmp.ne.s32.totalorder %s65, %s68
    %p77 = scmp.eq.s32.totalorder %s13, 3
    %p78 = por %p76, %p77
    %p79 = scmp.ne.s32.totalorder %s68, %s69
    %p80 = scmp.eq.s32.totalorder %s13, 0
    %p81 = por %p79, %p80
    %p82 = scmp.ne.s32.totalorder %s68, %s69
    %p83 = scmp.eq.s32.totalorder %s14, 3
    %p84 = por %p82, %p83
    %p86 = scmp.ne.s32.totalorder %s69, %s85
    %p87 = scmp.eq.s32.totalorder %s14, 0
    %p88 = por %p86, %p87
    %p89 = scmp.le.s32.totalorder 1, %s8
    %p90 = scmp.lt.s32.totalorder %s8, 5
    %p91 = pnand %p89, %p90
    %p92 = pneg %p91
    // Predicated region
    $region9: #{backbone_forward.12} parent=5 // pred_check
      _
    $region10: #{backbone_forward.12} parent=5 // pred_check_branch
      %94 = sbr.rel (%p91) target = $region12
    $region11: #{backbone_forward.12} parent=5 // pred_region
      %s95 = ssub.s32 %s8, 1
      // Predicated region
      $region13: #{backbone_forward.12} parent=11 // pred_check
        %p96 = pneg %p55
      $region14: #{backbone_forward.12} parent=11 // pred_check_branch
        %98 = sbr.rel (%p96) target = $region16
      $region15: #{backbone_forward.12} parent=11 // pred_region
        _
      $region16: #{backbone_forward.12} parent=11 // pred_fallthru
        _
    $region12: #{backbone_forward.12} parent=5 // pred_fallthru
      _
    %p99 = scmp.lt.s32.totalorder %s8, 4
    // Predicated region
    $region17: #{backbone_forward.12} parent=5 // pred_check
      %p100 = pneg %p99
    $region18: #{backbone_forward.12} parent=5 // pred_check_branch
      %102 = sbr.rel (%p100) target = $region20
    $region19: #{backbone_forward.12} parent=5 // pred_region
      // Predicated region
      $region21: #{backbone_forward.12} parent=19 // pred_check
        %p103 = pneg %p28
      $region22: #{backbone_forward.12} parent=19 // pred_check_branch
        %105 = sbr.rel (%p103) target = $region24
      $region23: #{backbone_forward.12} parent=19 // pred_region
        %s106 = smul.u32 16, %s8
        %p107 = scmp.lt.s32.totalorder %s106, 63
        %s108 = scalar_select %p107, %s106, 63
        %s109 = smul.addr %s108, 4
        %s110 = scalar_lea.vmem %s0, %s109
        %s111 = smul.u32 16, %s8
      $region24: #{backbone_forward.12} parent=19 // pred_fallthru
        _
    $region20: #{backbone_forward.12} parent=5 // pred_fallthru
      _
    %p112 = scmp.le.s32.totalorder 1, %s8
    %p113 = scmp.lt.s32.totalorder %s8, 5
    %p114 = pnand %p112, %p113
    %p115 = pneg %p114
    // Predicated region
    $region25: #{backbone_forward.12} parent=5 // pred_check
      _
    $region26: #{backbone_forward.12} parent=5 // pred_check_branch
      %117 = sbr.rel (%p114) target = $region28
    $region27: #{backbone_forward.12} parent=5 // pred_region
      %s118 = ssub.s32 %s8, 1
      %s119 = smul.u32 16, %s13
      %p120 = scmp.lt.s32.totalorder %s119, 63
      %s121 = scalar_select %p120, %s119, 63
      %s122 = smul.addr %s121, 4
      %s123 = scalar_lea.vmem %s0, %s122
      %p124 = pneg %p34
      %p125 = pneg %p31
      %p126 = pneg %p55
      %p127 = pneg %p52
      %p128 = pneg %p81
      %p129 = pneg %p78
      %s130 = smul.u32 16, %s13
      %p131 = scmp.lt.s32.totalorder %s130, 63
      %s132 = scalar_select %p131, %s130, 63
      %s133 = smul.addr %s132, 3
      %s134 = smul.addr %s133, 4
      %s135 = scalar_lea.vmem %s2, %s134
      %s136 = smul.u32 16, %s13
      %p137 = scmp.lt.s32.totalorder %s136, 63
      %s138 = scalar_select %p137, %s136, 63
      %s139 = smul.addr %s138, 4
      %s140 = scalar_lea.vmem %s0, %s139
      %s141 = smul.u32 16, %s13
      %s142 = smul.u32 16, %s13
      %p143 = scmp.lt.s32.totalorder %s142, 63
      %s144 = scalar_select %p143, %s142, 63
      %s145 = smul.addr %s144, 3
      %s146 = smul.addr %s145, 4
      %s147 = scalar_lea.vmem %s2, %s146
      %s148 = smul.u32 16, %s13
      %v150 = vld [vmem:[%s140] sm:$0xf]
      %v151 = vld [vmem:[%s140 + $0x4] sm:$0xf]
      %v152 = vld [vmem:[%s140 + $0x8] sm:$0xf]
      %v153 = vld [vmem:[%s140 + $0xc] sm:$0xf]
      %v154 = vld [vmem:[%s140 + $0x10] sm:$0xf]
      %v155 = vld [vmem:[%s140 + $0x14] sm:$0xf]
      %v156 = vld [vmem:[%s140 + $0x18] sm:$0xf]
      %v157 = vld [vmem:[%s140 + $0x1c] sm:$0xf]
      %v158 = vld [vmem:[%s140 + $0x20] sm:$0xf]
      %v159 = vld [vmem:[%s140 + $0x24] sm:$0xf]
      %v160 = vld [vmem:[%s140 + $0x28] sm:$0xf]
      %v161 = vld [vmem:[%s140 + $0x2c] sm:$0xf]
      %v162 = vld [vmem:[%s140 + $0x30] sm:$0xf]
      %v163 = vld [vmem:[%s140 + $0x34] sm:$0xf]
      %v164 = vld [vmem:[%s140 + $0x38] sm:$0xf]
      %v165 = vld [vmem:[%s140 + $0x3c] sm:$0xf]
      %v166 = vld [vmem:[%s1] sm:$0xff]
      %v167 = vld [vmem:[%s1 + $0x8] sm:$0xf]
      %v168 = vld [vmem:[%s1 + $0xc] sm:$0xff]
      %v169 = vld [vmem:[%s1 + $0x14] sm:$0xf]
      %v170 = vld [vmem:[%s1 + $0x18] sm:$0xff]
      %v171 = vld [vmem:[%s1 + $0x20] sm:$0xf]
      %v172 = vld [vmem:[%s1 + $0x24] sm:$0xff]
      %v173 = vld [vmem:[%s1 + $0x2c] sm:$0xf]
      %v174 = vld [vmem:[%s1 + $0x30] sm:$0xff]
      %v175 = vld [vmem:[%s1 + $0x38] sm:$0xf]
      %v176 = vld [vmem:[%s1 + $0x3c] sm:$0xff]
      %v177 = vld [vmem:[%s1 + $0x44] sm:$0xf]
      %v178 = vld [vmem:[%s1 + $0x48] sm:$0xff]
      %v179 = vld [vmem:[%s1 + $0x50] sm:$0xf]
      %v180 = vld [vmem:[%s1 + $0x54] sm:$0xff]
      %v181 = vld [vmem:[%s1 + $0x5c] sm:$0xf]
      %v182 = vld [vmem:[%s1 + $0x60] sm:$0xff]
      %v183 = vld [vmem:[%s1 + $0x68] sm:$0xf]
      %v184 = vld [vmem:[%s1 + $0x6c] sm:$0xff]
      %v185 = vld [vmem:[%s1 + $0x74] sm:$0xf]
      %v186 = vld [vmem:[%s1 + $0x78] sm:$0xff]
      %v187 = vld [vmem:[%s1 + $0x80] sm:$0xf]
      %v188 = vld [vmem:[%s1 + $0x84] sm:$0xff]
      %v189 = vld [vmem:[%s1 + $0x8c] sm:$0xf]
      %v190 = vld [vmem:[%s1 + $0x90] sm:$0xff]
      %v191 = vld [vmem:[%s1 + $0x98] sm:$0xf]
      %v192 = vld [vmem:[%s1 + $0x9c] sm:$0xff]
      %v193 = vld [vmem:[%s1 + $0xa4] sm:$0xf]
      %v194 = vld [vmem:[%s1 + $0xa8] sm:$0xff]
      %v195 = vld [vmem:[%s1 + $0xb0] sm:$0xf]
      %v196 = vld [vmem:[%s1 + $0xb4] sm:$0xff]
      %v197 = vld [vmem:[%s1 + $0xbc] sm:$0xf]
      %v214 = vunpack.c.l.b16 %v150
      %v215 = vunpack.c.l.b16 %v151
      %v216 = vunpack.c.l.b16 %v152
      %v217 = vunpack.c.l.b16 %v153
      %v218 = vunpack.c.l.b16 %v154
      %v219 = vunpack.c.l.b16 %v155
      %v220 = vunpack.c.l.b16 %v156
      %v221 = vunpack.c.l.b16 %v157
      %v222 = vunpack.c.l.b16 %v158
      %v223 = vunpack.c.l.b16 %v159
      %v224 = vunpack.c.l.b16 %v160
      %v225 = vunpack.c.l.b16 %v161
      %v226 = vunpack.c.l.b16 %v162
      %v227 = vunpack.c.l.b16 %v163
      %v228 = vunpack.c.l.b16 %v164
      %v229 = vunpack.c.l.b16 %v165
      %v230 = vpack.c.b16 %v215, %v214
      %v231 = vpack.c.b16 %v217, %v216
      %v232 = vpack.c.b16 %v219, %v218
      %v233 = vpack.c.b16 %v221, %v220
      %v234 = vpack.c.b16 %v223, %v222
      %v235 = vpack.c.b16 %v225, %v224
      %v236 = vpack.c.b16 %v227, %v226
      %v237 = vpack.c.b16 %v229, %v228
      %v278 = vunpack.c.l.b16 %v166
      %v279 = vunpack.c.h.b16 %v166
      %v280 = vunpack.c.l.b16 %v167
      %v281 = vunpack.c.l.b16 %v168
      %v282 = vunpack.c.h.b16 %v168
      %v283 = vunpack.c.l.b16 %v169
      %v284 = vunpack.c.l.b16 %v170
      %v285 = vunpack.c.h.b16 %v170
      %v286 = vunpack.c.l.b16 %v171
      %v287 = vunpack.c.l.b16 %v172
      %v288 = vunpack.c.h.b16 %v172
      %v289 = vunpack.c.l.b16 %v173
      %v290 = vunpack.c.l.b16 %v174
      %v291 = vunpack.c.h.b16 %v174
      %v292 = vunpack.c.l.b16 %v175
      %v293 = vunpack.c.l.b16 %v176
      %v294 = vunpack.c.h.b16 %v176
      %v295 = vunpack.c.l.b16 %v177
      %v296 = vunpack.c.l.b16 %v178
      %v297 = vunpack.c.h.b16 %v178
      %v298 = vunpack.c.l.b16 %v179
      %v299 = vunpack.c.l.b16 %v180
      %v300 = vunpack.c.h.b16 %v180
      %v301 = vunpack.c.l.b16 %v181
      %v302 = vunpack.c.l.b16 %v182
      %v303 = vunpack.c.h.b16 %v182
      %v304 = vunpack.c.l.b16 %v183
      %v305 = vunpack.c.l.b16 %v184
      %v306 = vunpack.c.h.b16 %v184
      %v307 = vunpack.c.l.b16 %v185
      %v308 = vunpack.c.l.b16 %v186
      %v309 = vunpack.c.h.b16 %v186
      %v310 = vunpack.c.l.b16 %v187
      %v311 = vunpack.c.l.b16 %v188
      %v312 = vunpack.c.h.b16 %v188
      %v313 = vunpack.c.l.b16 %v189
      %v314 = vunpack.c.l.b16 %v190
      %v315 = vunpack.c.h.b16 %v190
      %v316 = vunpack.c.l.b16 %v191
      %v317 = vunpack.c.l.b16 %v192
      %v318 = vunpack.c.h.b16 %v192
      %v319 = vunpack.c.l.b16 %v193
      %v320 = vunpack.c.l.b16 %v194
      %v321 = vunpack.c.h.b16 %v194
      %v322 = vunpack.c.l.b16 %v195
      %v323 = vunpack.c.l.b16 %v196
      %v324 = vunpack.c.h.b16 %v196
      %v325 = vunpack.c.l.b16 %v197
      %v326 = vpack.c.b16 %v281, %v278
      %v327 = vpack.c.b16 %v282, %v279
      %v328 = vpack.c.b16 %v283, %v280
      %v329 = vpack.c.b16 %v287, %v284
      %v330 = vpack.c.b16 %v288, %v285
      %v331 = vpack.c.b16 %v289, %v286
      %v332 = vpack.c.b16 %v293, %v290
      %v333 = vpack.c.b16 %v294, %v291
      %v334 = vpack.c.b16 %v295, %v292
      %v335 = vpack.c.b16 %v299, %v296
      %v336 = vpack.c.b16 %v300, %v297
      %v337 = vpack.c.b16 %v301, %v298
      %v338 = vpack.c.b16 %v305, %v302
      %v339 = vpack.c.b16 %v306, %v303
      %v340 = vpack.c.b16 %v307, %v304
      %v341 = vpack.c.b16 %v311, %v308
      %v342 = vpack.c.b16 %v312, %v309
      %v343 = vpack.c.b16 %v313, %v310
      %v344 = vpack.c.b16 %v317, %v314
      %v345 = vpack.c.b16 %v318, %v315
      %v346 = vpack.c.b16 %v319, %v316
      %v347 = vpack.c.b16 %v323, %v320
      %v348 = vpack.c.b16 %v324, %v321
      %v349 = vpack.c.b16 %v325, %v322
      %374 = vmatprep.subr.bf16.mxu0 %v327
      %375 = vmatpush1.bf16.msra.mxu0 %v326
      %376 = vmatprep.subr.bf16.mxu0 %v330
      %377 = vmatpush1.bf16.msra.mxu0 %v329
      %378 = vmatprep.subr.bf16.mxu0 %v333
      %379 = vmatpush1.bf16.msra.mxu0 %v332
      %380 = vmatprep.subr.bf16.mxu0 %v336
      %381 = vmatpush1.bf16.msra.mxu0 %v335
      %382 = vmatprep.subr.bf16.mxu0 %v339
      %383 = vmatpush1.bf16.msra.mxu0 %v338
      %384 = vmatprep.subr.bf16.mxu0 %v342
      %385 = vmatpush1.bf16.msra.mxu0 %v341
      %386 = vmatprep.subr.bf16.mxu0 %v345
      %387 = vmatpush1.bf16.msra.mxu0 %v344
      %388 = vmatprep.subr.bf16.mxu0 %v348
      %389 = vmatpush1.bf16.msra.mxu0 %v347
      %390 = vmatprep.subr.bf16.mxu0 0
      %391 = vmatpush1.bf16.msra.mxu0 0
      %392 = vmatprep.subr.bf16.mxu0 0
      %393 = vmatpush1.bf16.msra.mxu0 0
      %394 = vmatprep.subr.bf16.mxu0 0
      %395 = vmatpush1.bf16.msra.mxu0 0
      %396 = vmatprep.subr.bf16.mxu0 0
      %397 = vmatpush1.bf16.msra.mxu0 0
      %398 = vmatprep.subr.bf16.mxu0 0
      %399 = vmatpush1.bf16.msra.mxu0 0
      %400 = vmatprep.subr.bf16.mxu0 0
      %401 = vmatpush1.bf16.msra.mxu0 0
      %402 = vmatprep.subr.bf16.mxu0 0
      %403 = vmatpush1.bf16.msra.mxu0 0
      %404 = vmatprep.subr.bf16.mxu0 0
      %405 = vmatpush1.bf16.msra.mxu0 0
      %406 = vmatprep.mubr.bf16.mxu0 0
      %407 = vmatmul.mubr.bf16.gmra.mrb[0].mxu0 %v230
      %v408 = vpop.f32.mrb[0].mxu0
      %v409 = vadd.f32 0.0, %v408
      %v410 = vpop.f32.mrb[0].mxu0
      %v411 = vadd.f32 0.0, %v410
      %v412 = vpop.f32.mrb[0].mxu0
      %v413 = vadd.f32 0.0, %v412
      %v414 = vpop.f32.mrb[0].mxu0
      %v415 = vadd.f32 0.0, %v414
      %416 = vmatprep.mubr.bf16.mxu0 0
      %417 = vmatmul.mubr.bf16.gmra.mrb[0].mxu0 %v231
      %v418 = vpop.f32.mrb[0].mxu0
      %v419 = vadd.f32 0.0, %v418
      %v420 = vpop.f32.mrb[0].mxu0
      %v421 = vadd.f32 0.0, %v420
      %v422 = vpop.f32.mrb[0].mxu0
      %v423 = vadd.f32 0.0, %v422
      %v424 = vpop.f32.mrb[0].mxu0
      %v425 = vadd.f32 0.0, %v424
      %426 = vmatprep.mubr.bf16.mxu0 0
      %427 = vmatmul.mubr.bf16.gmra.mrb[0].mxu0 %v232
      %v428 = vpop.f32.mrb[0].mxu0
      %v429 = vadd.f32 0.0, %v428
      %v430 = vpop.f32.mrb[0].mxu0
      %v431 = vadd.f32 0.0, %v430
      %v432 = vpop.f32.mrb[0].mxu0
      %v433 = vadd.f32 0.0, %v432
      %v434 = vpop.f32.mrb[0].mxu0
      %v435 = vadd.f32 0.0, %v434
      %436 = vmatprep.mubr.bf16.mxu0 0
      %437 = vmatmul.mubr.bf16.gmra.mrb[0].mxu0 %v233
      %v438 = vpop.f32.mrb[0].mxu0
      %v439 = vadd.f32 0.0, %v438
      %v440 = vpop.f32.mrb[0].mxu0
      %v441 = vadd.f32 0.0, %v440
      %v442 = vpop.f32.mrb[0].mxu0
      %v443 = vadd.f32 0.0, %v442
      %v444 = vpop.f32.mrb[0].mxu0
      %v445 = vadd.f32 0.0, %v444
      %446 = vmatprep.mubr.bf16.mxu0 0
      %447 = vmatmul.mubr.bf16.gmra.mrb[0].mxu0 %v234
      %v448 = vpop.f32.mrb[0].mxu0
      %v449 = vadd.f32 0.0, %v448
      %v450 = vpop.f32.mrb[0].mxu0
      %v451 = vadd.f32 0.0, %v450
      %v452 = vpop.f32.mrb[0].mxu0
      %v453 = vadd.f32 0.0, %v452
      %v454 = vpop.f32.mrb[0].mxu0
      %v455 = vadd.f32 0.0, %v454
      %456 = vmatprep.mubr.bf16.mxu0 0
      %457 = vmatmul.mubr.bf16.gmra.mrb[0].mxu0 %v235
      %v458 = vpop.f32.mrb[0].mxu0
      %v459 = vadd.f32 0.0, %v458
      %v460 = vpop.f32.mrb[0].mxu0
      %v461 = vadd.f32 0.0, %v460
      %v462 = vpop.f32.mrb[0].mxu0
      %v463 = vadd.f32 0.0, %v462
      %v464 = vpop.f32.mrb[0].mxu0
      %v465 = vadd.f32 0.0, %v464
      %466 = vmatprep.mubr.bf16.mxu0 0
      %467 = vmatmul.mubr.bf16.gmra.mrb[0].mxu0 %v236
      %v468 = vpop.f32.mrb[0].mxu0
      %v469 = vadd.f32 0.0, %v468
      %v470 = vpop.f32.mrb[0].mxu0
      %v471 = vadd.f32 0.0, %v470
      %v472 = vpop.f32.mrb[0].mxu0
      %v473 = vadd.f32 0.0, %v472
      %v474 = vpop.f32.mrb[0].mxu0
      %v475 = vadd.f32 0.0, %v474
      %476 = vmatprep.mubr.bf16.mxu0 0
      %477 = vmatmul.mubr.bf16.gmra.mrb[0].mxu0 %v237
      %v478 = vpop.f32.mrb[0].mxu0
      %v479 = vadd.f32 0.0, %v478
      %v480 = vpop.f32.mrb[0].mxu0
      %v481 = vadd.f32 0.0, %v480
      %v482 = vpop.f32.mrb[0].mxu0
      %v483 = vadd.f32 0.0, %v482
      %v484 = vpop.f32.mrb[0].mxu0
      %v485 = vadd.f32 0.0, %v484
      %486 = vdwg.mxu0
      %487 = vmatprep.subr.bf16.mxu0 0
      %488 = vmatpush1.bf16.msra.mxu0 %v328
      %489 = vmatprep.subr.bf16.mxu0 0
      %490 = vmatpush1.bf16.msra.mxu0 %v331
      %491 = vmatprep.subr.bf16.mxu0 0
      %492 = vmatpush1.bf16.msra.mxu0 %v334
      %493 = vmatprep.subr.bf16.mxu0 0
      %494 = vmatpush1.bf16.msra.mxu0 %v337
      %495 = vmatprep.subr.bf16.mxu0 0
      %496 = vmatpush1.bf16.msra.mxu0 %v340
      %497 = vmatprep.subr.bf16.mxu0 0
      %498 = vmatpush1.bf16.msra.mxu0 %v343
      %499 = vmatprep.subr.bf16.mxu0 0
      %500 = vmatpush1.bf16.msra.mxu0 %v346
      %501 = vmatprep.subr.bf16.mxu0 0
      %502 = vmatpush1.bf16.msra.mxu0 %v349
      %503 = vmatprep.subr.bf16.mxu0 0
      %504 = vmatpush1.bf16.msra.mxu0 0
      %505 = vmatprep.subr.bf16.mxu0 0
      %506 = vmatpush1.bf16.msra.mxu0 0
      %507 = vmatprep.subr.bf16.mxu0 0
      %508 = vmatpush1.bf16.msra.mxu0 0
      %509 = vmatprep.subr.bf16.mxu0 0
      %510 = vmatpush1.bf16.msra.mxu0 0
      %511 = vmatprep.subr.bf16.mxu0 0
      %512 = vmatpush1.bf16.msra.mxu0 0
      %513 = vmatprep.subr.bf16.mxu0 0
      %514 = vmatpush1.bf16.msra.mxu0 0
      %515 = vmatprep.subr.bf16.mxu0 0
      %516 = vmatpush1.bf16.msra.mxu0 0
      %517 = vmatprep.subr.bf16.mxu0 0
      %518 = vmatpush1.bf16.msra.mxu0 0
      %519 = vmatprep.mubr.bf16.mxu0 0
      %520 = vmatmul.mubr.bf16.gmra.mrb[0].mxu0 %v230
      %v521 = vpop.f32.mrb[0].mxu0
      %v522 = vadd.f32 0.0, %v521
      %v523 = vpop.f32.mrb[0].mxu0
      %v524 = vpop.f32.mrb[0].mxu0
      %v525 = vadd.f32 0.0, %v524
      %v526 = vpop.f32.mrb[0].mxu0
      %527 = vmatprep.mubr.bf16.mxu0 0
      %528 = vmatmul.mubr.bf16.gmra.mrb[0].mxu0 %v231
      %v529 = vpop.f32.mrb[0].mxu0
      %v530 = vadd.f32 0.0, %v529
      %v531 = vpop.f32.mrb[0].mxu0
      %v532 = vpop.f32.mrb[0].mxu0
      %v533 = vadd.f32 0.0, %v532
      %v534 = vpop.f32.mrb[0].mxu0
      %535 = vmatprep.mubr.bf16.mxu0 0
      %536 = vmatmul.mubr.bf16.gmra.mrb[0].mxu0 %v232
      %v537 = vpop.f32.mrb[0].mxu0
      %v538 = vadd.f32 0.0, %v537
      %v539 = vpop.f32.mrb[0].mxu0
      %v540 = vpop.f32.mrb[0].mxu0
      %v541 = vadd.f32 0.0, %v540
      %v542 = vpop.f32.mrb[0].mxu0
      %543 = vmatprep.mubr.bf16.mxu0 0
      %544 = vmatmul.mubr.bf16.gmra.mrb[0].mxu0 %v233
      %v545 = vpop.f32.mrb[0].mxu0
      %v546 = vadd.f32 0.0, %v545
      %v547 = vpop.f32.mrb[0].mxu0
      %v548 = vpop.f32.mrb[0].mxu0
      %v549 = vadd.f32 0.0, %v548
      %v550 = vpop.f32.mrb[0].mxu0
      %551 = vmatprep.mubr.bf16.mxu0 0
      %552 = vmatmul.mubr.bf16.gmra.mrb[0].mxu0 %v234
      %v553 = vpop.f32.mrb[0].mxu0
      %v554 = vadd.f32 0.0, %v553
      %v555 = vpop.f32.mrb[0].mxu0
      %v556 = vpop.f32.mrb[0].mxu0
      %v557 = vadd.f32 0.0, %v556
      %v558 = vpop.f32.mrb[0].mxu0
      %559 = vmatprep.mubr.bf16.mxu0 0
      %560 = vmatmul.mubr.bf16.gmra.mrb[0].mxu0 %v235
      %v561 = vpop.f32.mrb[0].mxu0
      %v562 = vadd.f32 0.0, %v561
      %v563 = vpop.f32.mrb[0].mxu0
      %v564 = vpop.f32.mrb[0].mxu0
      %v565 = vadd.f32 0.0, %v564
      %v566 = vpop.f32.mrb[0].mxu0
      %567 = vmatprep.mubr.bf16.mxu0 0
      %568 = vmatmul.mubr.bf16.gmra.mrb[0].mxu0 %v236
      %v569 = vpop.f32.mrb[0].mxu0
      %v570 = vadd.f32 0.0, %v569
      %v571 = vpop.f32.mrb[0].mxu0
      %v572 = vpop.f32.mrb[0].mxu0
      %v573 = vadd.f32 0.0, %v572
      %v574 = vpop.f32.mrb[0].mxu0
      %575 = vmatprep.mubr.bf16.mxu0 0
      %576 = vmatmul.mubr.bf16.gmra.mrb[0].mxu0 %v237
      %v577 = vpop.f32.mrb[0].mxu0
      %v578 = vadd.f32 0.0, %v577
      %v579 = vpop.f32.mrb[0].mxu0
      %v580 = vpop.f32.mrb[0].mxu0
      %v581 = vadd.f32 0.0, %v580
      %v582 = vpop.f32.mrb[0].mxu0
      %583 = vdwg.mxu0
      %v584 = vpack.c.bf16 %v413, %v409
      %v585 = vpack.c.bf16 %v415, %v411
      %v586 = vpack.c.bf16 %v525, %v522
      %v587 = vpack.c.bf16 %v423, %v419
      %v588 = vpack.c.bf16 %v425, %v421
      %v589 = vpack.c.bf16 %v533, %v530
      %v590 = vpack.c.bf16 %v433, %v429
      %v591 = vpack.c.bf16 %v435, %v431
      %v592 = vpack.c.bf16 %v541, %v538
      %v593 = vpack.c.bf16 %v443, %v439
      %v594 = vpack.c.bf16 %v445, %v441
      %v595 = vpack.c.bf16 %v549, %v546
      %v596 = vpack.c.bf16 %v453, %v449
      %v597 = vpack.c.bf16 %v455, %v451
      %v598 = vpack.c.bf16 %v557, %v554
      %v599 = vpack.c.bf16 %v463, %v459
      %v600 = vpack.c.bf16 %v465, %v461
      %v601 = vpack.c.bf16 %v565, %v562
      %v602 = vpack.c.bf16 %v473, %v469
      %v603 = vpack.c.bf16 %v475, %v471
      %v604 = vpack.c.bf16 %v573, %v570
      %v605 = vpack.c.bf16 %v483, %v479
      %v606 = vpack.c.bf16 %v485, %v481
      %v607 = vpack.c.bf16 %v581, %v578
      %v632 = vunpack.c.l.b16 %v584
      %v633 = vunpack.c.l.b16 %v585
      %v634 = vunpack.c.l.b16 %v586
      %v635 = vunpack.c.h.b16 %v584
      %v636 = vunpack.c.h.b16 %v585
      %v637 = vunpack.c.h.b16 %v586
      %v638 = vunpack.c.l.b16 %v587
      %v639 = vunpack.c.l.b16 %v588
      %v640 = vunpack.c.l.b16 %v589
      %v641 = vunpack.c.h.b16 %v587
      %v642 = vunpack.c.h.b16 %v588
      %v643 = vunpack.c.h.b16 %v589
      %v644 = vunpack.c.l.b16 %v590
      %v645 = vunpack.c.l.b16 %v591
      %v646 = vunpack.c.l.b16 %v592
      %v647 = vunpack.c.h.b16 %v590
      %v648 = vunpack.c.h.b16 %v591
      %v649 = vunpack.c.h.b16 %v592
      %v650 = vunpack.c.l.b16 %v593
      %v651 = vunpack.c.l.b16 %v594
      %v652 = vunpack.c.l.b16 %v595
      %v653 = vunpack.c.h.b16 %v593
      %v654 = vunpack.c.h.b16 %v594
      %v655 = vunpack.c.h.b16 %v595
      %v656 = vunpack.c.l.b16 %v596
      %v657 = vunpack.c.l.b16 %v597
      %v658 = vunpack.c.l.b16 %v598
      %v659 = vunpack.c.h.b16 %v596
      %v660 = vunpack.c.h.b16 %v597
      %v661 = vunpack.c.h.b16 %v598
      %v662 = vunpack.c.l.b16 %v599
      %v663 = vunpack.c.l.b16 %v600
      %v664 = vunpack.c.l.b16 %v601
      %v665 = vunpack.c.h.b16 %v599
      %v666 = vunpack.c.h.b16 %v600
      %v667 = vunpack.c.h.b16 %v601
      %v668 = vunpack.c.l.b16 %v602
      %v669 = vunpack.c.l.b16 %v603
      %v670 = vunpack.c.l.b16 %v604
      %v671 = vunpack.c.h.b16 %v602
      %v672 = vunpack.c.h.b16 %v603
      %v673 = vunpack.c.h.b16 %v604
      %v674 = vunpack.c.l.b16 %v605
      %v675 = vunpack.c.l.b16 %v606
      %v676 = vunpack.c.l.b16 %v607
      %v677 = vunpack.c.h.b16 %v605
      %v678 = vunpack.c.h.b16 %v606
      %v679 = vunpack.c.h.b16 %v607
      %v680 = vpack.c.b16 %v633, %v632
      %v681 = vpack.c.b16 %v634, %v634
      %v682 = vpack.c.b16 %v636, %v635
      %v683 = vpack.c.b16 %v637, %v637
      %v684 = vpack.c.b16 %v639, %v638
      %v685 = vpack.c.b16 %v640, %v640
      %v686 = vpack.c.b16 %v642, %v641
      %v687 = vpack.c.b16 %v643, %v643
      %v688 = vpack.c.b16 %v645, %v644
      %v689 = vpack.c.b16 %v646, %v646
      %v690 = vpack.c.b16 %v648, %v647
      %v691 = vpack.c.b16 %v649, %v649
      %v692 = vpack.c.b16 %v651, %v650
      %v693 = vpack.c.b16 %v652, %v652
      %v694 = vpack.c.b16 %v654, %v653
      %v695 = vpack.c.b16 %v655, %v655
      %v696 = vpack.c.b16 %v657, %v656
      %v697 = vpack.c.b16 %v658, %v658
      %v698 = vpack.c.b16 %v660, %v659
      %v699 = vpack.c.b16 %v661, %v661
      %v700 = vpack.c.b16 %v663, %v662
      %v701 = vpack.c.b16 %v664, %v664
      %v702 = vpack.c.b16 %v666, %v665
      %v703 = vpack.c.b16 %v667, %v667
      %v704 = vpack.c.b16 %v669, %v668
      %v705 = vpack.c.b16 %v670, %v670
      %v706 = vpack.c.b16 %v672, %v671
      %v707 = vpack.c.b16 %v673, %v673
      %v708 = vpack.c.b16 %v675, %v674
      %v709 = vpack.c.b16 %v676, %v676
      %v710 = vpack.c.b16 %v678, %v677
      %v711 = vpack.c.b16 %v679, %v679
      %744 = vst [vmem:[%s147] sm:$0xff] %v680
      %745 = vst [vmem:[%s147 + $0x8] sm:$0xf] %v681
      %746 = vst [vmem:[%s147 + $0xc] sm:$0xff] %v682
      %747 = vst [vmem:[%s147 + $0x14] sm:$0xf] %v683
      %748 = vst [vmem:[%s147 + $0x18] sm:$0xff] %v684
      %749 = vst [vmem:[%s147 + $0x20] sm:$0xf] %v685
      %750 = vst [vmem:[%s147 + $0x24] sm:$0xff] %v686
      %751 = vst [vmem:[%s147 + $0x2c] sm:$0xf] %v687
      %752 = vst [vmem:[%s147 + $0x30] sm:$0xff] %v688
      %753 = vst [vmem:[%s147 + $0x38] sm:$0xf] %v689
      %754 = vst [vmem:[%s147 + $0x3c] sm:$0xff] %v690
      %755 = vst [vmem:[%s147 + $0x44] sm:$0xf] %v691
      %756 = vst [vmem:[%s147 + $0x48] sm:$0xff] %v692
      %757 = vst [vmem:[%s147 + $0x50] sm:$0xf] %v693
      %758 = vst [vmem:[%s147 + $0x54] sm:$0xff] %v694
      %759 = vst [vmem:[%s147 + $0x5c] sm:$0xf] %v695
      %760 = vst [vmem:[%s147 + $0x60] sm:$0xff] %v696
      %761 = vst [vmem:[%s147 + $0x68] sm:$0xf] %v697
      %762 = vst [vmem:[%s147 + $0x6c] sm:$0xff] %v698
      %763 = vst [vmem:[%s147 + $0x74] sm:$0xf] %v699
      %764 = vst [vmem:[%s147 + $0x78] sm:$0xff] %v700
      %765 = vst [vmem:[%s147 + $0x80] sm:$0xf] %v701
      %766 = vst [vmem:[%s147 + $0x84] sm:$0xff] %v702
      %767 = vst [vmem:[%s147 + $0x8c] sm:$0xf] %v703
      %768 = vst [vmem:[%s147 + $0x90] sm:$0xff] %v704
      %769 = vst [vmem:[%s147 + $0x98] sm:$0xf] %v705
      %770 = vst [vmem:[%s147 + $0x9c] sm:$0xff] %v706
      %771 = vst [vmem:[%s147 + $0xa4] sm:$0xf] %v707
      %772 = vst [vmem:[%s147 + $0xa8] sm:$0xff] %v708
      %773 = vst [vmem:[%s147 + $0xb0] sm:$0xf] %v709
      %774 = vst [vmem:[%s147 + $0xb4] sm:$0xff] %v710
      %775 = vst [vmem:[%s147 + $0xbc] sm:$0xf] %v711
      %s776 = smul.u32 16, %s13
      %p777 = scmp.lt.s32.totalorder %s776, 63
      %s778 = scalar_select %p777, %s776, 63
      %s779 = smul.addr %s778, 3
      %s780 = smul.addr %s779, 4
      %s781 = scalar_lea.vmem %s2, %s780
      // Predicated region
      $region29: #{backbone_forward.12} parent=27 // pred_check
        %p782 = pneg %p78
      $region30: #{backbone_forward.12} parent=27 // pred_check_branch
        %784 = sbr.rel (%p782) target = $region32
      $region31: #{backbone_forward.12} parent=27 // pred_region
        %s785 = smul.u32 16, %s13
      $region32: #{backbone_forward.12} parent=27 // pred_fallthru
        _
    $region28: #{backbone_forward.12} parent=5 // pred_fallthru
      _
    %p786 = scmp.le.s32.totalorder 2, %s8
    // Predicated region
    $region33: #{backbone_forward.12} parent=5 // pred_check
      %p787 = pneg %p786
    $region34: #{backbone_forward.12} parent=5 // pred_check_branch
      %789 = sbr.rel (%p787) target = $region36
    $region35: #{backbone_forward.12} parent=5 // pred_region
      %s790 = ssub.s32 %s8, 2
      // Predicated region
      $region37: #{backbone_forward.12} parent=35 // pred_check
        %p791 = pneg %p84
      $region38: #{backbone_forward.12} parent=35 // pred_check_branch
        %793 = sbr.rel (%p791) target = $region40
      $region39: #{backbone_forward.12} parent=35 // pred_region
        %s794 = smul.u32 16, %s14
        %p795 = scmp.lt.s32.totalorder %s794, 63
        %s796 = scalar_select %p795, %s794, 63
        %s797 = smul.addr %s796, 3
        %s798 = smul.addr %s797, 4
        %s799 = scalar_lea.vmem %s2, %s798
      $region40: #{backbone_forward.12} parent=35 // pred_fallthru
        _
    $region36: #{backbone_forward.12} parent=5 // pred_fallthru
      _
  $region6: #{backbone_forward.12} parent=0 // loop_footer
    %s12 = sadd.s32 1, %s8
  $region7: #{backbone_forward.12} parent=0 // loop_footer_branch
    %7 = sbr.rel target = $region3
  $region8: #{backbone_forward.12} parent=0 // loop_exit
    _

// kernel: backbone_forward.14
$region0: #{backbone_forward.14}
  #allocation0 [shape = 'u32[]', space=smem, size = 0x4, offset = 0x4, fixed_abs, tag = 'smem constant byte address 0x4 - core index']
  #allocation1 [shape = 'u32[144,128]{1,0:T(1,128)}', space=vmem, size = 0x12000, scoped, tag = 'internal scratch']
  %s0 = inlined_call_operand.vmem [shape: bf16[512,128], index: 0, kind: input, shape index: {}]
  %s1 = inlined_call_operand.vmem [shape: bf16[512,128], index: 1, kind: input, shape index: {}]
  %s2 = inlined_call_operand.vmem [shape: bf16[128,128], index: 2, kind: input, shape index: {}]
  %s3 = inlined_call_operand.vmem [shape: f32[1,128], index: 3, kind: input, shape index: {}]
  %s4 = inlined_call_operand.vmem [shape: f32[1,128], index: 4, kind: input, shape index: {}]
  %s5 = inlined_call_operand.vmem [shape: f32[1,128], index: 5, kind: input, shape index: {}]
  %s6 = inlined_call_operand.vmem [shape: bf16[512,128], index: 6, kind: output, shape index: {}]
  %s7 = sld [smem:[#allocation0]]
  $region57: #{backbone_forward.14} parent=0
    _
  %s9 = ssub.s32 1, %s7
  %s10 = scalar_select 0, %s9, %s7
  loop: start=0, step=1, limit=6
  $region2: #{backbone_forward.14} parent=0 // loop_pre_header
    _
  $region3: #{backbone_forward.14} parent=0 // loop_header
    %s12 = sphi 0, %s16
    %p13 = scmp.ge.s32.totalorder %s12, 6
    %s22 = sphi 0, %s24
    %s25 = sphi 0, %s22
    %s26 = sphi 0, %s25
    %s42 = sphi 0, %s26
    %s48 = sphi 0, %s50
    %s51 = sphi 0, %s48
    %s52 = sphi 0, %s51
    %s68 = sphi 0, %s52
    %s72 = sphi 0, %s72
    %s74 = sphi 0, %s72
    %s75 = sphi 0, %s74
    %s89 = sphi 0, %s75
    %s93 = sphi 0, %s93
    %s95 = sphi 0, %s93
    %s96 = sphi 0, %s95
    %s110 = sphi 0, %s96
    %s114 = sphi 0, %s114
    %s116 = sphi 0, %s114
    %s117 = sphi 0, %s116
    %s131 = sphi 0, %s117
    %s135 = sphi 0, %s135
    %s137 = sphi 0, %s135
    %s138 = sphi 0, %s137
    %s152 = sphi 0, %s138
    %s158 = sphi 0, %s160
    %s161 = sphi 0, %s158
    %s162 = sphi 0, %s161
    %s178 = sphi 0, %s162
  $region4: #{backbone_forward.14} parent=0 // loop_header_branch
    %15 = sbr.rel (%p13) target = $region8
  $region5: #{backbone_forward.14} parent=0 // loop_body
    %s17 = ssub.s32 %s12, 1
    %s18 = ssub.s32 %s12, 2
    %s19 = sadd.s32 %s12, 1
    %s20 = ssub.s32 %s12, %s19
    %p21 = scmp.eq.s32.totalorder %s20, 0
    %s23 = sadd.s32 %s22, 1
    %s24 = scalar_select %p21, %s22, %s23
    %p27 = pneg %p21
    %p28 = scmp.eq.s32.totalorder %s12, 3
    %p29 = por %p27, %p28
    %p30 = scmp.ne.s32.totalorder %s22, %s25
    %p31 = scmp.eq.s32.totalorder %s12, 0
    %p32 = por %p30, %p31
    %p33 = scmp.ne.s32.totalorder %s22, %s25
    %p34 = scmp.eq.s32.totalorder %s17, 3
    %p35 = por %p33, %p34
    %p36 = scmp.ne.s32.totalorder %s25, %s26
    %p37 = scmp.eq.s32.totalorder %s17, 0
    %p38 = por %p36, %p37
    %p39 = scmp.ne.s32.totalorder %s25, %s26
    %p40 = scmp.eq.s32.totalorder %s18, 3
    %p41 = por %p39, %p40
    %p43 = scmp.ne.s32.totalorder %s26, %s42
    %p44 = scmp.eq.s32.totalorder %s18, 0
    %p45 = por %p43, %p44
    %s46 = ssub.s32 %s12, %s19
    %p47 = scmp.eq.s32.totalorder %s46, 0
    %s49 = sadd.s32 %s48, 1
    %s50 = scalar_select %p47, %s48, %s49
    %p53 = pneg %p47
    %p54 = scmp.eq.s32.totalorder %s12, 3
    %p55 = por %p53, %p54
    %p56 = scmp.ne.s32.totalorder %s48, %s51
    %p57 = scmp.eq.s32.totalorder %s12, 0
    %p58 = por %p56, %p57
    %p59 = scmp.ne.s32.totalorder %s48, %s51
    %p60 = scmp.eq.s32.totalorder %s17, 3
    %p61 = por %p59, %p60
    %p62 = scmp.ne.s32.totalorder %s51, %s52
    %p63 = scmp.eq.s32.totalorder %s17, 0
    %p64 = por %p62, %p63
    %p65 = scmp.ne.s32.totalorder %s51, %s52
    %p66 = scmp.eq.s32.totalorder %s18, 3
    %p67 = por %p65, %p66
    %p69 = scmp.ne.s32.totalorder %s52, %s68
    %p70 = scmp.eq.s32.totalorder %s18, 0
    %p71 = por %p69, %p70
    %s73 = sadd.s32 %s72, 1
    %p76 = scmp.eq.s32.totalorder %s12, 3
    %p77 = scmp.ne.s32.totalorder %s72, %s74
    %p78 = scmp.eq.s32.totalorder %s12, 0
    %p79 = por %p77, %p78
    %p80 = scmp.ne.s32.totalorder %s72, %s74
    %p81 = scmp.eq.s32.totalorder %s17, 3
    %p82 = por %p80, %p81
    %p83 = scmp.ne.s32.totalorder %s74, %s75
    %p84 = scmp.eq.s32.totalorder %s17, 0
    %p85 = por %p83, %p84
    %p86 = scmp.ne.s32.totalorder %s74, %s75
    %p87 = scmp.eq.s32.totalorder %s18, 3
    %p88 = por %p86, %p87
    %p90 = scmp.ne.s32.totalorder %s75, %s89
    %p91 = scmp.eq.s32.totalorder %s18, 0
    %p92 = por %p90, %p91
    %s94 = sadd.s32 %s93, 1
    %p97 = scmp.eq.s32.totalorder %s12, 3
    %p98 = scmp.ne.s32.totalorder %s93, %s95
    %p99 = scmp.eq.s32.totalorder %s12, 0
    %p100 = por %p98, %p99
    %p101 = scmp.ne.s32.totalorder %s93, %s95
    %p102 = scmp.eq.s32.totalorder %s17, 3
    %p103 = por %p101, %p102
    %p104 = scmp.ne.s32.totalorder %s95, %s96
    %p105 = scmp.eq.s32.totalorder %s17, 0
    %p106 = por %p104, %p105
    %p107 = scmp.ne.s32.totalorder %s95, %s96
    %p108 = scmp.eq.s32.totalorder %s18, 3
    %p109 = por %p107, %p108
    %p111 = scmp.ne.s32.totalorder %s96, %s110
    %p112 = scmp.eq.s32.totalorder %s18, 0
    %p113 = por %p111, %p112
    %s115 = sadd.s32 %s114, 1
    %p118 = scmp.eq.s32.totalorder %s12, 3
    %p119 = scmp.ne.s32.totalorder %s114, %s116
    %p120 = scmp.eq.s32.totalorder %s12, 0
    %p121 = por %p119, %p120
    %p122 = scmp.ne.s32.totalorder %s114, %s116
    %p123 = scmp.eq.s32.totalorder %s17, 3
    %p124 = por %p122, %p123
    %p125 = scmp.ne.s32.totalorder %s116, %s117
    %p126 = scmp.eq.s32.totalorder %s17, 0
    %p127 = por %p125, %p126
    %p128 = scmp.ne.s32.totalorder %s116, %s117
    %p129 = scmp.eq.s32.totalorder %s18, 3
    %p130 = por %p128, %p129
    %p132 = scmp.ne.s32.totalorder %s117, %s131
    %p133 = scmp.eq.s32.totalorder %s18, 0
    %p134 = por %p132, %p133
    %s136 = sadd.s32 %s135, 1
    %p139 = scmp.eq.s32.totalorder %s12, 3
    %p140 = scmp.ne.s32.totalorder %s135, %s137
    %p141 = scmp.eq.s32.totalorder %s12, 0
    %p142 = por %p140, %p141
    %p143 = scmp.ne.s32.totalorder %s135, %s137
    %p144 = scmp.eq.s32.totalorder %s17, 3
    %p145 = por %p143, %p144
    %p146 = scmp.ne.s32.totalorder %s137, %s138
    %p147 = scmp.eq.s32.totalorder %s17, 0
    %p148 = por %p146, %p147
    %p149 = scmp.ne.s32.totalorder %s137, %s138
    %p150 = scmp.eq.s32.totalorder %s18, 3
    %p151 = por %p149, %p150
    %p153 = scmp.ne.s32.totalorder %s138, %s152
    %p154 = scmp.eq.s32.totalorder %s18, 0
    %p155 = por %p153, %p154
    %s156 = ssub.s32 %s12, %s19
    %p157 = scmp.eq.s32.totalorder %s156, 0
    %s159 = sadd.s32 %s158, 1
    %s160 = scalar_select %p157, %s158, %s159
    %p163 = pneg %p157
    %p164 = scmp.eq.s32.totalorder %s12, 3
    %p165 = por %p163, %p164
    %p166 = scmp.ne.s32.totalorder %s158, %s161
    %p167 = scmp.eq.s32.totalorder %s12, 0
    %p168 = por %p166, %p167
    %p169 = scmp.ne.s32.totalorder %s158, %s161
    %p170 = scmp.eq.s32.totalorder %s17, 3
    %p171 = por %p169, %p170
    %p172 = scmp.ne.s32.totalorder %s161, %s162
    %p173 = scmp.eq.s32.totalorder %s17, 0
    %p174 = por %p172, %p173
    %p175 = scmp.ne.s32.totalorder %s161, %s162
    %p176 = scmp.eq.s32.totalorder %s18, 3
    %p177 = por %p175, %p176
    %p179 = scmp.ne.s32.totalorder %s162, %s178
    %p180 = scmp.eq.s32.totalorder %s18, 0
    %p181 = por %p179, %p180
    %p182 = scmp.le.s32.totalorder 1, %s12
    %p183 = scmp.lt.s32.totalorder %s12, 5
    %p184 = pnand %p182, %p183
    %p185 = pneg %p184
    // Predicated region
    $region9: #{backbone_forward.14} parent=5 // pred_check
      _
    $region10: #{backbone_forward.14} parent=5 // pred_check_branch
      %187 = sbr.rel (%p184) target = $region12
    $region11: #{backbone_forward.14} parent=5 // pred_region
      %s188 = ssub.s32 %s12, 1
      // Predicated region
      $region13: #{backbone_forward.14} parent=11 // pred_check
        %p189 = pneg %p85
      $region14: #{backbone_forward.14} parent=11 // pred_check_branch
        %191 = sbr.rel (%p189) target = $region16
      $region15: #{backbone_forward.14} parent=11 // pred_region
        _
      $region16: #{backbone_forward.14} parent=11 // pred_fallthru
        _
      // Predicated region
      $region17: #{backbone_forward.14} parent=11 // pred_check
        %p192 = pneg %p106
      $region18: #{backbone_forward.14} parent=11 // pred_check_branch
        %194 = sbr.rel (%p192) target = $region20
      $region19: #{backbone_forward.14} parent=11 // pred_region
        _
      $region20: #{backbone_forward.14} parent=11 // pred_fallthru
        _
      // Predicated region
      $region21: #{backbone_forward.14} parent=11 // pred_check
        %p195 = pneg %p127
      $region22: #{backbone_forward.14} parent=11 // pred_check_branch
        %197 = sbr.rel (%p195) target = $region24
      $region23: #{backbone_forward.14} parent=11 // pred_region
        _
      $region24: #{backbone_forward.14} parent=11 // pred_fallthru
        _
      // Predicated region
      $region25: #{backbone_forward.14} parent=11 // pred_check
        %p198 = pneg %p148
      $region26: #{backbone_forward.14} parent=11 // pred_check_branch
        %200 = sbr.rel (%p198) target = $region28
      $region27: #{backbone_forward.14} parent=11 // pred_region
        _
      $region28: #{backbone_forward.14} parent=11 // pred_fallthru
        _
    $region12: #{backbone_forward.14} parent=5 // pred_fallthru
      _
    %p201 = scmp.lt.s32.totalorder %s12, 4
    // Predicated region
    $region29: #{backbone_forward.14} parent=5 // pred_check
      %p202 = pneg %p201
    $region30: #{backbone_forward.14} parent=5 // pred_check_branch
      %204 = sbr.rel (%p202) target = $region32
    $region31: #{backbone_forward.14} parent=5 // pred_region
      // Predicated region
      $region33: #{backbone_forward.14} parent=31 // pred_check
        %p205 = pneg %p32
      $region34: #{backbone_forward.14} parent=31 // pred_check_branch
        %207 = sbr.rel (%p205) target = $region36
      $region35: #{backbone_forward.14} parent=31 // pred_region
        %s208 = smul.u32 16, %s12
        %p209 = scmp.lt.s32.totalorder %s208, 63
        %s210 = scalar_select %p209, %s208, 63
        %s211 = smul.addr %s210, 4
        %s212 = scalar_lea.vmem %s0, %s211
        %s213 = smul.u32 16, %s12
      $region36: #{backbone_forward.14} parent=31 // pred_fallthru
        _
      // Predicated region
      $region37: #{backbone_forward.14} parent=31 // pred_check
        %p214 = pneg %p58
      $region38: #{backbone_forward.14} parent=31 // pred_check_branch
        %216 = sbr.rel (%p214) target = $region40
      $region39: #{backbone_forward.14} parent=31 // pred_region
        %s217 = smul.u32 16, %s12
        %p218 = scmp.lt.s32.totalorder %s217, 63
        %s219 = scalar_select %p218, %s217, 63
        %s220 = smul.addr %s219, 4
        %s221 = scalar_lea.vmem %s1, %s220
        %s222 = smul.u32 16, %s12
      $region40: #{backbone_forward.14} parent=31 // pred_fallthru
        _
    $region32: #{backbone_forward.14} parent=5 // pred_fallthru
      _
    %p223 = scmp.le.s32.totalorder 1, %s12
    %p224 = scmp.lt.s32.totalorder %s12, 5
    %p225 = pnand %p223, %p224
    %p226 = pneg %p225
    // Predicated region
    $region41: #{backbone_forward.14} parent=5 // pred_check
      _
    $region42: #{backbone_forward.14} parent=5 // pred_check_branch
      %228 = sbr.rel (%p225) target = $region44
    $region43: #{backbone_forward.14} parent=5 // pred_region
      %s229 = ssub.s32 %s12, 1
      %s230 = smul.u32 16, %s17
      %p231 = scmp.lt.s32.totalorder %s230, 63
      %s232 = scalar_select %p231, %s230, 63
      %s233 = smul.addr %s232, 4
      %s234 = scalar_lea.vmem %s0, %s233
      %p235 = pneg %p38
      %p236 = pneg %p35
      %s237 = smul.u32 16, %s17
      %p238 = scmp.lt.s32.totalorder %s237, 63
      %s239 = scalar_select %p238, %s237, 63
      %s240 = smul.addr %s239, 4
      %s241 = scalar_lea.vmem %s1, %s240
      %p242 = pneg %p64
      %p243 = pneg %p61
      %p244 = pneg %p85
      %p245 = pneg %p82
      %p246 = pneg %p106
      %p247 = pneg %p103
      %p248 = pneg %p127
      %p249 = pneg %p124
      %p250 = pneg %p148
      %p251 = pneg %p145
      %p252 = pneg %p174
      %p253 = pneg %p171
      %s254 = smul.u32 16, %s17
      %p255 = scmp.lt.s32.totalorder %s254, 63
      %s256 = scalar_select %p255, %s254, 63
      %s257 = smul.addr %s256, 4
      %s258 = scalar_lea.vmem %s6, %s257
      %s259 = smul.u32 16, %s17
      %p260 = scmp.lt.s32.totalorder %s259, 63
      %s261 = scalar_select %p260, %s259, 63
      %s262 = smul.addr %s261, 4
      %s263 = scalar_lea.vmem %s0, %s262
      %s264 = smul.u32 16, %s17
      %s265 = smul.u32 16, %s17
      %p266 = scmp.lt.s32.totalorder %s265, 63
      %s267 = scalar_select %p266, %s265, 63
      %s268 = smul.addr %s267, 4
      %s269 = scalar_lea.vmem %s1, %s268
      %s270 = smul.u32 16, %s17
      %s271 = smul.u32 16, %s17
      %p272 = scmp.lt.s32.totalorder %s271, 63
      %s273 = scalar_select %p272, %s271, 63
      %s274 = smul.addr %s273, 4
      %s275 = scalar_lea.vmem %s6, %s274
      %s276 = smul.u32 16, %s17
      %v278 = vld [vmem:[%s263] sm:$0xf]
      %v279 = vld [vmem:[%s263 + $0x4] sm:$0xf]
      %v280 = vld [vmem:[%s263 + $0x8] sm:$0xf]
      %v281 = vld [vmem:[%s263 + $0xc] sm:$0xf]
      %v282 = vld [vmem:[%s263 + $0x10] sm:$0xf]
      %v283 = vld [vmem:[%s263 + $0x14] sm:$0xf]
      %v284 = vld [vmem:[%s263 + $0x18] sm:$0xf]
      %v285 = vld [vmem:[%s263 + $0x1c] sm:$0xf]
      %v286 = vld [vmem:[%s263 + $0x20] sm:$0xf]
      %v287 = vld [vmem:[%s263 + $0x24] sm:$0xf]
      %v288 = vld [vmem:[%s263 + $0x28] sm:$0xf]
      %v289 = vld [vmem:[%s263 + $0x2c] sm:$0xf]
      %v290 = vld [vmem:[%s263 + $0x30] sm:$0xf]
      %v291 = vld [vmem:[%s263 + $0x34] sm:$0xf]
      %v292 = vld [vmem:[%s263 + $0x38] sm:$0xf]
      %v293 = vld [vmem:[%s263 + $0x3c] sm:$0xf]
      %v294 = vld [vmem:[%s2] sm:$0xf]
      %v295 = vld [vmem:[%s2 + $0x4] sm:$0xf]
      %v296 = vld [vmem:[%s2 + $0x8] sm:$0xf]
      %v297 = vld [vmem:[%s2 + $0xc] sm:$0xf]
      %v298 = vld [vmem:[%s2 + $0x10] sm:$0xf]
      %v299 = vld [vmem:[%s2 + $0x14] sm:$0xf]
      %v300 = vld [vmem:[%s2 + $0x18] sm:$0xf]
      %v301 = vld [vmem:[%s2 + $0x1c] sm:$0xf]
      %v302 = vld [vmem:[%s2 + $0x20] sm:$0xf]
      %v303 = vld [vmem:[%s2 + $0x24] sm:$0xf]
      %v304 = vld [vmem:[%s2 + $0x28] sm:$0xf]
      %v305 = vld [vmem:[%s2 + $0x2c] sm:$0xf]
      %v306 = vld [vmem:[%s2 + $0x30] sm:$0xf]
      %v307 = vld [vmem:[%s2 + $0x34] sm:$0xf]
      %v308 = vld [vmem:[%s2 + $0x38] sm:$0xf]
      %v309 = vld [vmem:[%s2 + $0x3c] sm:$0xf]
      %v310 = vld [vmem:[%s3] sm:$0x1]
      %v312 = vlaneseq
      %v313 = vshrl.u32 %v312, 7
      %v314 = vsub.s32 0, %v313
      %v315 = vrot.slane %v310, %v314
      %v333 = vunpack.c.l.b16 %v278
      %v334 = vunpack.c.l.b16 %v279
      %v335 = vunpack.c.l.b16 %v280
      %v336 = vunpack.c.l.b16 %v281
      %v337 = vunpack.c.l.b16 %v282
      %v338 = vunpack.c.l.b16 %v283
      %v339 = vunpack.c.l.b16 %v284
      %v340 = vunpack.c.l.b16 %v285
      %v341 = vunpack.c.l.b16 %v286
      %v342 = vunpack.c.l.b16 %v287
      %v343 = vunpack.c.l.b16 %v288
      %v344 = vunpack.c.l.b16 %v289
      %v345 = vunpack.c.l.b16 %v290
      %v346 = vunpack.c.l.b16 %v291
      %v347 = vunpack.c.l.b16 %v292
      %v348 = vunpack.c.l.b16 %v293
      %v349 = vpack.c.b16 %v334, %v333
      %v350 = vpack.c.b16 %v336, %v335
      %v351 = vpack.c.b16 %v338, %v337
      %v352 = vpack.c.b16 %v340, %v339
      %v353 = vpack.c.b16 %v342, %v341
      %v354 = vpack.c.b16 %v344, %v343
      %v355 = vpack.c.b16 %v346, %v345
      %v356 = vpack.c.b16 %v348, %v347
      %v381 = vunpack.c.l.b16 %v294
      %v382 = vunpack.c.l.b16 %v295
      %v383 = vunpack.c.l.b16 %v296
      %v384 = vunpack.c.l.b16 %v297
      %v385 = vunpack.c.l.b16 %v298
      %v386 = vunpack.c.l.b16 %v299
      %v387 = vunpack.c.l.b16 %v300
      %v388 = vunpack.c.l.b16 %v301
      %v389 = vunpack.c.l.b16 %v302
      %v390 = vunpack.c.l.b16 %v303
      %v391 = vunpack.c.l.b16 %v304
      %v392 = vunpack.c.l.b16 %v305
      %v393 = vunpack.c.l.b16 %v306
      %v394 = vunpack.c.l.b16 %v307
      %v395 = vunpack.c.l.b16 %v308
      %v396 = vunpack.c.l.b16 %v309
      %v397 = vpack.c.b16 %v382, %v381
      %v398 = vpack.c.b16 %v384, %v383
      %v399 = vpack.c.b16 %v386, %v385
      %v400 = vpack.c.b16 %v388, %v387
      %v401 = vpack.c.b16 %v390, %v389
      %v402 = vpack.c.b16 %v392, %v391
      %v403 = vpack.c.b16 %v394, %v393
      %v404 = vpack.c.b16 %v396, %v395
      %413 = vmatprep.subr.bf16.mxu0 0
      %414 = vmatpush1.bf16.msra.mxu0 %v397
      %415 = vmatprep.subr.bf16.mxu0 0
      %416 = vmatpush1.bf16.msra.mxu0 %v398
      %417 = vmatprep.subr.bf16.mxu0 0
      %418 = vmatpush1.bf16.msra.mxu0 %v399
      %419 = vmatprep.subr.bf16.mxu0 0
      %420 = vmatpush1.bf16.msra.mxu0 %v400
      %421 = vmatprep.subr.bf16.mxu0 0
      %422 = vmatpush1.bf16.msra.mxu0 %v401
      %423 = vmatprep.subr.bf16.mxu0 0
      %424 = vmatpush1.bf16.msra.mxu0 %v402
      %425 = vmatprep.subr.bf16.mxu0 0
      %426 = vmatpush1.bf16.msra.mxu0 %v403
      %427 = vmatprep.subr.bf16.mxu0 0
      %428 = vmatpush1.bf16.msra.mxu0 %v404
      %429 = vmatprep.subr.bf16.mxu0 0
      %430 = vmatpush1.bf16.msra.mxu0 0
      %431 = vmatprep.subr.bf16.mxu0 0
      %432 = vmatpush1.bf16.msra.mxu0 0
      %433 = vmatprep.subr.bf16.mxu0 0
      %434 = vmatpush1.bf16.msra.mxu0 0
      %435 = vmatprep.subr.bf16.mxu0 0
      %436 = vmatpush1.bf16.msra.mxu0 0
      %437 = vmatprep.subr.bf16.mxu0 0
      %438 = vmatpush1.bf16.msra.mxu0 0
      %439 = vmatprep.subr.bf16.mxu0 0
      %440 = vmatpush1.bf16.msra.mxu0 0
      %441 = vmatprep.subr.bf16.mxu0 0
      %442 = vmatpush1.bf16.msra.mxu0 0
      %443 = vmatprep.subr.bf16.mxu0 0
      %444 = vmatpush1.bf16.msra.mxu0 0
      %445 = vmatprep.mubr.bf16.mxu0 0
      %446 = vmatmul.mubr.bf16.gmra.mrb[0].mxu0 %v349
      %v447 = vpop.f32.mrb[0].mxu0
      %v448 = vadd.f32 %v315, %v447
      %v449 = vpop.f32.mrb[0].mxu0
      %v450 = vpop.f32.mrb[0].mxu0
      %v451 = vadd.f32 %v315, %v450
      %v452 = vpop.f32.mrb[0].mxu0
      %453 = vmatprep.mubr.bf16.mxu0 0
      %454 = vmatmul.mubr.bf16.gmra.mrb[0].mxu0 %v350
      %v455 = vpop.f32.mrb[0].mxu0
      %v456 = vadd.f32 %v315, %v455
      %v457 = vpop.f32.mrb[0].mxu0
      %v458 = vpop.f32.mrb[0].mxu0
      %v459 = vadd.f32 %v315, %v458
      %v460 = vpop.f32.mrb[0].mxu0
      %461 = vmatprep.mubr.bf16.mxu0 0
      %462 = vmatmul.mubr.bf16.gmra.mrb[0].mxu0 %v351
      %v463 = vpop.f32.mrb[0].mxu0
      %v464 = vadd.f32 %v315, %v463
      %v465 = vpop.f32.mrb[0].mxu0
      %v466 = vpop.f32.mrb[0].mxu0
      %v467 = vadd.f32 %v315, %v466
      %v468 = vpop.f32.mrb[0].mxu0
      %469 = vmatprep.mubr.bf16.mxu0 0
      %470 = vmatmul.mubr.bf16.gmra.mrb[0].mxu0 %v352
      %v471 = vpop.f32.mrb[0].mxu0
      %v472 = vadd.f32 %v315, %v471
      %v473 = vpop.f32.mrb[0].mxu0
      %v474 = vpop.f32.mrb[0].mxu0
      %v475 = vadd.f32 %v315, %v474
      %v476 = vpop.f32.mrb[0].mxu0
      %477 = vmatprep.mubr.bf16.mxu0 0
      %478 = vmatmul.mubr.bf16.gmra.mrb[0].mxu0 %v353
      %v479 = vpop.f32.mrb[0].mxu0
      %v480 = vadd.f32 %v315, %v479
      %v481 = vpop.f32.mrb[0].mxu0
      %v482 = vpop.f32.mrb[0].mxu0
      %v483 = vadd.f32 %v315, %v482
      %v484 = vpop.f32.mrb[0].mxu0
      %485 = vmatprep.mubr.bf16.mxu0 0
      %486 = vmatmul.mubr.bf16.gmra.mrb[0].mxu0 %v354
      %v487 = vpop.f32.mrb[0].mxu0
      %v488 = vadd.f32 %v315, %v487
      %v489 = vpop.f32.mrb[0].mxu0
      %v490 = vpop.f32.mrb[0].mxu0
      %v491 = vadd.f32 %v315, %v490
      %v492 = vpop.f32.mrb[0].mxu0
      %493 = vmatprep.mubr.bf16.mxu0 0
      %494 = vmatmul.mubr.bf16.gmra.mrb[0].mxu0 %v355
      %v495 = vpop.f32.mrb[0].mxu0
      %v496 = vadd.f32 %v315, %v495
      %v497 = vpop.f32.mrb[0].mxu0
      %v498 = vpop.f32.mrb[0].mxu0
      %v499 = vadd.f32 %v315, %v498
      %v500 = vpop.f32.mrb[0].mxu0
      %501 = vmatprep.mubr.bf16.mxu0 0
      %502 = vmatmul.mubr.bf16.gmra.mrb[0].mxu0 %v356
      %v503 = vpop.f32.mrb[0].mxu0
      %v504 = vadd.f32 %v315, %v503
      %v505 = vpop.f32.mrb[0].mxu0
      %v506 = vpop.f32.mrb[0].mxu0
      %v507 = vadd.f32 %v315, %v506
      %v508 = vpop.f32.mrb[0].mxu0
      %509 = vdwg.mxu0
      %v510 = vld [vmem:[%s269] sm:$0xf]
      %v511 = vld [vmem:[%s269 + $0x4] sm:$0xf]
      %v512 = vld [vmem:[%s269 + $0x8] sm:$0xf]
      %v513 = vld [vmem:[%s269 + $0xc] sm:$0xf]
      %v514 = vld [vmem:[%s269 + $0x10] sm:$0xf]
      %v515 = vld [vmem:[%s269 + $0x14] sm:$0xf]
      %v516 = vld [vmem:[%s269 + $0x18] sm:$0xf]
      %v517 = vld [vmem:[%s269 + $0x1c] sm:$0xf]
      %v518 = vld [vmem:[%s269 + $0x20] sm:$0xf]
      %v519 = vld [vmem:[%s269 + $0x24] sm:$0xf]
      %v520 = vld [vmem:[%s269 + $0x28] sm:$0xf]
      %v521 = vld [vmem:[%s269 + $0x2c] sm:$0xf]
      %v522 = vld [vmem:[%s269 + $0x30] sm:$0xf]
      %v523 = vld [vmem:[%s269 + $0x34] sm:$0xf]
      %v524 = vld [vmem:[%s269 + $0x38] sm:$0xf]
      %v525 = vld [vmem:[%s269 + $0x3c] sm:$0xf]
      %v526 = vunpack.c.l.bf16 %v510
      %v527 = vunpack.c.l.bf16 %v511
      %v528 = vunpack.c.l.bf16 %v512
      %v529 = vunpack.c.l.bf16 %v513
      %v530 = vunpack.c.l.bf16 %v514
      %v531 = vunpack.c.l.bf16 %v515
      %v532 = vunpack.c.l.bf16 %v516
      %v533 = vunpack.c.l.bf16 %v517
      %v534 = vunpack.c.l.bf16 %v518
      %v535 = vunpack.c.l.bf16 %v519
      %v536 = vunpack.c.l.bf16 %v520
      %v537 = vunpack.c.l.bf16 %v521
      %v538 = vunpack.c.l.bf16 %v522
      %v539 = vunpack.c.l.bf16 %v523
      %v540 = vunpack.c.l.bf16 %v524
      %v541 = vunpack.c.l.bf16 %v525
      %v542 = vadd.f32 %v448, %v526
      %v543 = vadd.f32 %v451, %v527
      %v544 = vadd.f32 %v456, %v528
      %v545 = vadd.f32 %v459, %v529
      %v546 = vadd.f32 %v464, %v530
      %v547 = vadd.f32 %v467, %v531
      %v548 = vadd.f32 %v472, %v532
      %v549 = vadd.f32 %v475, %v533
      %v550 = vadd.f32 %v480, %v534
      %v551 = vadd.f32 %v483, %v535
      %v552 = vadd.f32 %v488, %v536
      %v553 = vadd.f32 %v491, %v537
      %v554 = vadd.f32 %v496, %v538
      %v555 = vadd.f32 %v499, %v539
      %v556 = vadd.f32 %v504, %v540
      %v557 = vadd.f32 %v507, %v541
      %558 = vadd.xlane.f32.xlu0 %v542
      %v559 = vpop.xlane.xlu0 %558
      %560 = vadd.xlane.f32.xlu0 %v543
      %v561 = vpop.xlane.xlu0 %560
      %562 = vadd.xlane.f32.xlu0 %v544
      %v563 = vpop.xlane.xlu0 %562
      %564 = vadd.xlane.f32.xlu0 %v545
      %v565 = vpop.xlane.xlu0 %564
      %566 = vadd.xlane.f32.xlu0 %v546
      %v567 = vpop.xlane.xlu0 %566
      %568 = vadd.xlane.f32.xlu0 %v547
      %v569 = vpop.xlane.xlu0 %568
      %570 = vadd.xlane.f32.xlu0 %v548
      %v571 = vpop.xlane.xlu0 %570
      %572 = vadd.xlane.f32.xlu0 %v549
      %v573 = vpop.xlane.xlu0 %572
      %574 = vadd.xlane.f32.xlu0 %v550
      %v575 = vpop.xlane.xlu0 %574
      %576 = vadd.xlane.f32.xlu0 %v551
      %v577 = vpop.xlane.xlu0 %576
      %578 = vadd.xlane.f32.xlu0 %v552
      %v579 = vpop.xlane.xlu0 %578
      %580 = vadd.xlane.f32.xlu0 %v553
      %v581 = vpop.xlane.xlu0 %580
      %582 = vadd.xlane.f32.xlu0 %v554
      %v583 = vpop.xlane.xlu0 %582
      %584 = vadd.xlane.f32.xlu0 %v555
      %v585 = vpop.xlane.xlu0 %584
      %586 = vadd.xlane.f32.xlu0 %v556
      %v587 = vpop.xlane.xlu0 %586
      %588 = vadd.xlane.f32.xlu0 %v557
      %v589 = vpop.xlane.xlu0 %588
      %v590 = vrcp.pop 128.0
      %v591 = vmul.f32 %v559, %v590
      %v592 = vmul.f32 %v561, %v590
      %v593 = vmul.f32 %v563, %v590
      %v594 = vmul.f32 %v565, %v590
      %v595 = vmul.f32 %v567, %v590
      %v596 = vmul.f32 %v569, %v590
      %v597 = vmul.f32 %v571, %v590
      %v598 = vmul.f32 %v573, %v590
      %v599 = vmul.f32 %v575, %v590
      %v600 = vmul.f32 %v577, %v590
      %v601 = vmul.f32 %v579, %v590
      %v602 = vmul.f32 %v581, %v590
      %v603 = vmul.f32 %v583, %v590
      %v604 = vmul.f32 %v585, %v590
      %v605 = vmul.f32 %v587, %v590
      %v606 = vmul.f32 %v589, %v590
      %v607 = vsub.f32 %v542, %v591
      %v608 = vsub.f32 %v543, %v592
      %v609 = vsub.f32 %v544, %v593
      %v610 = vsub.f32 %v545, %v594
      %v611 = vsub.f32 %v546, %v595
      %v612 = vsub.f32 %v547, %v596
      %v613 = vsub.f32 %v548, %v597
      %v614 = vsub.f32 %v549, %v598
      %v615 = vsub.f32 %v550, %v599
      %v616 = vsub.f32 %v551, %v600
      %v617 = vsub.f32 %v552, %v601
      %v618 = vsub.f32 %v553, %v602
      %v619 = vsub.f32 %v554, %v603
      %v620 = vsub.f32 %v555, %v604
      %v621 = vsub.f32 %v556, %v605
      %v622 = vsub.f32 %v557, %v606
      %v623 = vmul.f32 %v607, %v607
      %v624 = vmul.f32 %v608, %v608
      %v625 = vmul.f32 %v609, %v609
      %v626 = vmul.f32 %v610, %v610
      %v627 = vmul.f32 %v611, %v611
      %v628 = vmul.f32 %v612, %v612
      %v629 = vmul.f32 %v613, %v613
      %v630 = vmul.f32 %v614, %v614
      %v631 = vmul.f32 %v615, %v615
      %v632 = vmul.f32 %v616, %v616
      %v633 = vmul.f32 %v617, %v617
      %v634 = vmul.f32 %v618, %v618
      %v635 = vmul.f32 %v619, %v619
      %v636 = vmul.f32 %v620, %v620
      %v637 = vmul.f32 %v621, %v621
      %v638 = vmul.f32 %v622, %v622
      %639 = vadd.xlane.f32.xlu0 %v623
      %v640 = vpop.xlane.xlu0 %639
      %641 = vadd.xlane.f32.xlu0 %v624
      %v642 = vpop.xlane.xlu0 %641
      %643 = vadd.xlane.f32.xlu0 %v625
      %v644 = vpop.xlane.xlu0 %643
      %645 = vadd.xlane.f32.xlu0 %v626
      %v646 = vpop.xlane.xlu0 %645
      %647 = vadd.xlane.f32.xlu0 %v627
      %v648 = vpop.xlane.xlu0 %647
      %649 = vadd.xlane.f32.xlu0 %v628
      %v650 = vpop.xlane.xlu0 %649
      %651 = vadd.xlane.f32.xlu0 %v629
      %v652 = vpop.xlane.xlu0 %651
      %653 = vadd.xlane.f32.xlu0 %v630
      %v654 = vpop.xlane.xlu0 %653
      %655 = vadd.xlane.f32.xlu0 %v631
      %v656 = vpop.xlane.xlu0 %655
      %657 = vadd.xlane.f32.xlu0 %v632
      %v658 = vpop.xlane.xlu0 %657
      %659 = vadd.xlane.f32.xlu0 %v633
      %v660 = vpop.xlane.xlu0 %659
      %661 = vadd.xlane.f32.xlu0 %v634
      %v662 = vpop.xlane.xlu0 %661
      %663 = vadd.xlane.f32.xlu0 %v635
      %v664 = vpop.xlane.xlu0 %663
      %665 = vadd.xlane.f32.xlu0 %v636
      %v666 = vpop.xlane.xlu0 %665
      %667 = vadd.xlane.f32.xlu0 %v637
      %v668 = vpop.xlane.xlu0 %667
      %669 = vadd.xlane.f32.xlu0 %v638
      %v670 = vpop.xlane.xlu0 %669
      %v671 = vmul.f32 %v640, %v590
      %v672 = vmul.f32 %v642, %v590
      %v673 = vmul.f32 %v644, %v590
      %v674 = vmul.f32 %v646, %v590
      %v675 = vmul.f32 %v648, %v590
      %v676 = vmul.f32 %v650, %v590
      %v677 = vmul.f32 %v652, %v590
      %v678 = vmul.f32 %v654, %v590
      %v679 = vmul.f32 %v656, %v590
      %v680 = vmul.f32 %v658, %v590
      %v681 = vmul.f32 %v660, %v590
      %v682 = vmul.f32 %v662, %v590
      %v683 = vmul.f32 %v664, %v590
      %v684 = vmul.f32 %v666, %v590
      %v685 = vmul.f32 %v668, %v590
      %v686 = vmul.f32 %v670, %v590
      %v687 = vadd.f32 %v671, 1e-05
      %v688 = vadd.f32 %v672, 1e-05
      %v689 = vadd.f32 %v673, 1e-05
      %v690 = vadd.f32 %v674, 1e-05
      %v691 = vadd.f32 %v675, 1e-05
      %v692 = vadd.f32 %v676, 1e-05
      %v693 = vadd.f32 %v677, 1e-05
      %v694 = vadd.f32 %v678, 1e-05
      %v695 = vadd.f32 %v679, 1e-05
      %v696 = vadd.f32 %v680, 1e-05
      %v697 = vadd.f32 %v681, 1e-05
      %v698 = vadd.f32 %v682, 1e-05
      %v699 = vadd.f32 %v683, 1e-05
      %v700 = vadd.f32 %v684, 1e-05
      %v701 = vadd.f32 %v685, 1e-05
      %v702 = vadd.f32 %v686, 1e-05
      %v703 = vrsqrt.pop %v687
      %v704 = vrsqrt.pop %v688
      %v705 = vrsqrt.pop %v689
      %v706 = vrsqrt.pop %v690
      %v707 = vrsqrt.pop %v691
      %v708 = vrsqrt.pop %v692
      %v709 = vrsqrt.pop %v693
      %v710 = vrsqrt.pop %v694
      %v711 = vrsqrt.pop %v695
      %v712 = vrsqrt.pop %v696
      %v713 = vrsqrt.pop %v697
      %v714 = vrsqrt.pop %v698
      %v715 = vrsqrt.pop %v699
      %v716 = vrsqrt.pop %v700
      %v717 = vrsqrt.pop %v701
      %v718 = vrsqrt.pop %v702
      %v719 = vmul.f32 %v607, %v703
      %v720 = vmul.f32 %v608, %v704
      %v721 = vmul.f32 %v609, %v705
      %v722 = vmul.f32 %v610, %v706
      %v723 = vmul.f32 %v611, %v707
      %v724 = vmul.f32 %v612, %v708
      %v725 = vmul.f32 %v613, %v709
      %v726 = vmul.f32 %v614, %v710
      %v727 = vmul.f32 %v615, %v711
      %v728 = vmul.f32 %v616, %v712
      %v729 = vmul.f32 %v617, %v713
      %v730 = vmul.f32 %v618, %v714
      %v731 = vmul.f32 %v619, %v715
      %v732 = vmul.f32 %v620, %v716
      %v733 = vmul.f32 %v621, %v717
      %v734 = vmul.f32 %v622, %v718
      %v735 = vld [vmem:[%s4] sm:$0x1]
      %v737 = vlaneseq
      %v738 = vshrl.u32 %v737, 7
      %v739 = vsub.s32 0, %v738
      %v740 = vrot.slane %v735, %v739
      %v742 = vmul.f32 %v719, %v740
      %v743 = vmul.f32 %v720, %v740
      %v744 = vmul.f32 %v721, %v740
      %v745 = vmul.f32 %v722, %v740
      %v746 = vmul.f32 %v723, %v740
      %v747 = vmul.f32 %v724, %v740
      %v748 = vmul.f32 %v725, %v740
      %v749 = vmul.f32 %v726, %v740
      %v750 = vmul.f32 %v727, %v740
      %v751 = vmul.f32 %v728, %v740
      %v752 = vmul.f32 %v729, %v740
      %v753 = vmul.f32 %v730, %v740
      %v754 = vmul.f32 %v731, %v740
      %v755 = vmul.f32 %v732, %v740
      %v756 = vmul.f32 %v733, %v740
      %v757 = vmul.f32 %v734, %v740
      %v758 = vld [vmem:[%s5] sm:$0x1]
      %v760 = vlaneseq
      %v761 = vshrl.u32 %v760, 7
      %v762 = vsub.s32 0, %v761
      %v763 = vrot.slane %v758, %v762
      %v765 = vadd.f32 %v742, %v763
      %v766 = vadd.f32 %v743, %v763
      %v767 = vadd.f32 %v744, %v763
      %v768 = vadd.f32 %v745, %v763
      %v769 = vadd.f32 %v746, %v763
      %v770 = vadd.f32 %v747, %v763
      %v771 = vadd.f32 %v748, %v763
      %v772 = vadd.f32 %v749, %v763
      %v773 = vadd.f32 %v750, %v763
      %v774 = vadd.f32 %v751, %v763
      %v775 = vadd.f32 %v752, %v763
      %v776 = vadd.f32 %v753, %v763
      %v777 = vadd.f32 %v754, %v763
      %v778 = vadd.f32 %v755, %v763
      %v779 = vadd.f32 %v756, %v763
      %v780 = vadd.f32 %v757, %v763
      %v781 = vpack.c.bf16 %v766, %v765
      %v782 = vpack.c.bf16 %v768, %v767
      %v783 = vpack.c.bf16 %v770, %v769
      %v784 = vpack.c.bf16 %v772, %v771
      %v785 = vpack.c.bf16 %v774, %v773
      %v786 = vpack.c.bf16 %v776, %v775
      %v787 = vpack.c.bf16 %v778, %v777
      %v788 = vpack.c.bf16 %v780, %v779
      %v797 = vunpack.c.l.b16 %v781
      %v798 = vunpack.c.h.b16 %v781
      %v799 = vunpack.c.l.b16 %v782
      %v800 = vunpack.c.h.b16 %v782
      %v801 = vunpack.c.l.b16 %v783
      %v802 = vunpack.c.h.b16 %v783
      %v803 = vunpack.c.l.b16 %v784
      %v804 = vunpack.c.h.b16 %v784
      %v805 = vunpack.c.l.b16 %v785
      %v806 = vunpack.c.h.b16 %v785
      %v807 = vunpack.c.l.b16 %v786
      %v808 = vunpack.c.h.b16 %v786
      %v809 = vunpack.c.l.b16 %v787
      %v810 = vunpack.c.h.b16 %v787
      %v811 = vunpack.c.l.b16 %v788
      %v812 = vunpack.c.h.b16 %v788
      %v813 = vpack.c.b16 %v797, %v797
      %v814 = vpack.c.b16 %v798, %v798
      %v815 = vpack.c.b16 %v799, %v799
      %v816 = vpack.c.b16 %v800, %v800
      %v817 = vpack.c.b16 %v801, %v801
      %v818 = vpack.c.b16 %v802, %v802
      %v819 = vpack.c.b16 %v803, %v803
      %v820 = vpack.c.b16 %v804, %v804
      %v821 = vpack.c.b16 %v805, %v805
      %v822 = vpack.c.b16 %v806, %v806
      %v823 = vpack.c.b16 %v807, %v807
      %v824 = vpack.c.b16 %v808, %v808
      %v825 = vpack.c.b16 %v809, %v809
      %v826 = vpack.c.b16 %v810, %v810
      %v827 = vpack.c.b16 %v811, %v811
      %v828 = vpack.c.b16 %v812, %v812
      %845 = vst [vmem:[%s275] sm:$0xf] %v813
      %846 = vst [vmem:[%s275 + $0x4] sm:$0xf] %v814
      %847 = vst [vmem:[%s275 + $0x8] sm:$0xf] %v815
      %848 = vst [vmem:[%s275 + $0xc] sm:$0xf] %v816
      %849 = vst [vmem:[%s275 + $0x10] sm:$0xf] %v817
      %850 = vst [vmem:[%s275 + $0x14] sm:$0xf] %v818
      %851 = vst [vmem:[%s275 + $0x18] sm:$0xf] %v819
      %852 = vst [vmem:[%s275 + $0x1c] sm:$0xf] %v820
      %853 = vst [vmem:[%s275 + $0x20] sm:$0xf] %v821
      %854 = vst [vmem:[%s275 + $0x24] sm:$0xf] %v822
      %855 = vst [vmem:[%s275 + $0x28] sm:$0xf] %v823
      %856 = vst [vmem:[%s275 + $0x2c] sm:$0xf] %v824
      %857 = vst [vmem:[%s275 + $0x30] sm:$0xf] %v825
      %858 = vst [vmem:[%s275 + $0x34] sm:$0xf] %v826
      %859 = vst [vmem:[%s275 + $0x38] sm:$0xf] %v827
      %860 = vst [vmem:[%s275 + $0x3c] sm:$0xf] %v828
      %s861 = smul.u32 16, %s17
      %p862 = scmp.lt.s32.totalorder %s861, 63
      %s863 = scalar_select %p862, %s861, 63
      %s864 = smul.addr %s863, 4
      %s865 = scalar_lea.vmem %s6, %s864
      // Predicated region
      $region45: #{backbone_forward.14} parent=43 // pred_check
        %p866 = pneg %p171
      $region46: #{backbone_forward.14} parent=43 // pred_check_branch
        %868 = sbr.rel (%p866) target = $region48
      $region47: #{backbone_forward.14} parent=43 // pred_region
        %s869 = smul.u32 16, %s17
      $region48: #{backbone_forward.14} parent=43 // pred_fallthru
        _
    $region44: #{backbone_forward.14} parent=5 // pred_fallthru
      _
    %p870 = scmp.le.s32.totalorder 2, %s12
    // Predicated region
    $region49: #{backbone_forward.14} parent=5 // pred_check
      %p871 = pneg %p870
    $region50: #{backbone_forward.14} parent=5 // pred_check_branch
      %873 = sbr.rel (%p871) target = $region52
    $region51: #{backbone_forward.14} parent=5 // pred_region
      %s874 = ssub.s32 %s12, 2
      // Predicated region
      $region53: #{backbone_forward.14} parent=51 // pred_check
        %p875 = pneg %p177
      $region54: #{backbone_forward.14} parent=51 // pred_check_branch
        %877 = sbr.rel (%p875) target = $region56
      $region55: #{backbone_forward.14} parent=51 // pred_region
        %s878 = smul.u32 16, %s18
        %p879 = scmp.lt.s32.totalorder %s878, 63
        %s880 = scalar_select %p879, %s878, 63
        %s881 = smul.addr %s880, 4
        %s882 = scalar_lea.vmem %s6, %s881
      $region56: #{backbone_forward.14} parent=51 // pred_fallthru
        _
    $region52: #{backbone_forward.14} parent=5 // pred_fallthru
      _
  $region6: #{backbone_forward.14} parent=0 // loop_footer
    %s16 = sadd.s32 1, %s12
  $region7: #{backbone_forward.14} parent=0 // loop_footer_branch
    %11 = sbr.rel target = $region3
  $region8: #{backbone_forward.14} parent=0 // loop_exit
    _

// kernel: backbone_forward.15
$region0: #{backbone_forward.15}
  #allocation0 [shape = 'u32[]', space=smem, size = 0x4, offset = 0x4, fixed_abs, tag = 'smem constant byte address 0x4 - core index']
  #allocation1 [shape = 'u32[144,128]{1,0:T(1,128)}', space=vmem, size = 0x12000, scoped, tag = 'internal scratch']
  %s0 = inlined_call_operand.vmem [shape: bf16[512,128], index: 0, kind: input, shape index: {}]
  %s1 = inlined_call_operand.vmem [shape: bf16[128,512], index: 1, kind: input, shape index: {}]
  %s2 = inlined_call_operand.vmem [shape: f32[1,512], index: 2, kind: input, shape index: {}]
  %s3 = inlined_call_operand.vmem [shape: bf16[512,128], index: 3, kind: input, shape index: {}]
  %s4 = inlined_call_operand.vmem [shape: f32[1,128], index: 4, kind: input, shape index: {}]
  %s5 = inlined_call_operand.vmem [shape: f32[1,128], index: 5, kind: input, shape index: {}]
  %s6 = inlined_call_operand.vmem [shape: f32[1,128], index: 6, kind: input, shape index: {}]
  %s7 = inlined_call_operand.vmem [shape: bf16[512,128], index: 7, kind: output, shape index: {}]
  %s8 = sld [smem:[#allocation0]]
  $region61: #{backbone_forward.15} parent=0
    _
  %s10 = ssub.s32 1, %s8
  %s11 = scalar_select 0, %s10, %s8
  loop: start=0, step=1, limit=6
  $region2: #{backbone_forward.15} parent=0 // loop_pre_header
    _
  $region3: #{backbone_forward.15} parent=0 // loop_header
    %s13 = sphi 0, %s17
    %p14 = scmp.ge.s32.totalorder %s13, 6
    %s23 = sphi 0, %s25
    %s26 = sphi 0, %s23
    %s27 = sphi 0, %s26
    %s43 = sphi 0, %s27
    %s47 = sphi 0, %s47
    %s49 = sphi 0, %s47
    %s50 = sphi 0, %s49
    %s64 = sphi 0, %s50
    %s68 = sphi 0, %s68
    %s70 = sphi 0, %s68
    %s71 = sphi 0, %s70
    %s85 = sphi 0, %s71
    %s89 = sphi 0, %s89
    %s91 = sphi 0, %s89
    %s92 = sphi 0, %s91
    %s106 = sphi 0, %s92
    %s110 = sphi 0, %s110
    %s112 = sphi 0, %s110
    %s113 = sphi 0, %s112
    %s127 = sphi 0, %s113
    %s131 = sphi 0, %s131
    %s133 = sphi 0, %s131
    %s134 = sphi 0, %s133
    %s148 = sphi 0, %s134
    %s152 = sphi 0, %s152
    %s154 = sphi 0, %s152
    %s155 = sphi 0, %s154
    %s169 = sphi 0, %s155
    %s175 = sphi 0, %s177
    %s178 = sphi 0, %s175
    %s179 = sphi 0, %s178
    %s195 = sphi 0, %s179
  $region4: #{backbone_forward.15} parent=0 // loop_header_branch
    %16 = sbr.rel (%p14) target = $region8
  $region5: #{backbone_forward.15} parent=0 // loop_body
    %s18 = ssub.s32 %s13, 1
    %s19 = ssub.s32 %s13, 2
    %s20 = sadd.s32 %s13, 1
    %s21 = ssub.s32 %s13, %s20
    %p22 = scmp.eq.s32.totalorder %s21, 0
    %s24 = sadd.s32 %s23, 1
    %s25 = scalar_select %p22, %s23, %s24
    %p28 = pneg %p22
    %p29 = scmp.eq.s32.totalorder %s13, 3
    %p30 = por %p28, %p29
    %p31 = scmp.ne.s32.totalorder %s23, %s26
    %p32 = scmp.eq.s32.totalorder %s13, 0
    %p33 = por %p31, %p32
    %p34 = scmp.ne.s32.totalorder %s23, %s26
    %p35 = scmp.eq.s32.totalorder %s18, 3
    %p36 = por %p34, %p35
    %p37 = scmp.ne.s32.totalorder %s26, %s27
    %p38 = scmp.eq.s32.totalorder %s18, 0
    %p39 = por %p37, %p38
    %p40 = scmp.ne.s32.totalorder %s26, %s27
    %p41 = scmp.eq.s32.totalorder %s19, 3
    %p42 = por %p40, %p41
    %p44 = scmp.ne.s32.totalorder %s27, %s43
    %p45 = scmp.eq.s32.totalorder %s19, 0
    %p46 = por %p44, %p45
    %s48 = sadd.s32 %s47, 1
    %p51 = scmp.eq.s32.totalorder %s13, 3
    %p52 = scmp.ne.s32.totalorder %s47, %s49
    %p53 = scmp.eq.s32.totalorder %s13, 0
    %p54 = por %p52, %p53
    %p55 = scmp.ne.s32.totalorder %s47, %s49
    %p56 = scmp.eq.s32.totalorder %s18, 3
    %p57 = por %p55, %p56
    %p58 = scmp.ne.s32.totalorder %s49, %s50
    %p59 = scmp.eq.s32.totalorder %s18, 0
    %p60 = por %p58, %p59
    %p61 = scmp.ne.s32.totalorder %s49, %s50
    %p62 = scmp.eq.s32.totalorder %s19, 3
    %p63 = por %p61, %p62
    %p65 = scmp.ne.s32.totalorder %s50, %s64
    %p66 = scmp.eq.s32.totalorder %s19, 0
    %p67 = por %p65, %p66
    %s69 = sadd.s32 %s68, 1
    %p72 = scmp.eq.s32.totalorder %s13, 3
    %p73 = scmp.ne.s32.totalorder %s68, %s70
    %p74 = scmp.eq.s32.totalorder %s13, 0
    %p75 = por %p73, %p74
    %p76 = scmp.ne.s32.totalorder %s68, %s70
    %p77 = scmp.eq.s32.totalorder %s18, 3
    %p78 = por %p76, %p77
    %p79 = scmp.ne.s32.totalorder %s70, %s71
    %p80 = scmp.eq.s32.totalorder %s18, 0
    %p81 = por %p79, %p80
    %p82 = scmp.ne.s32.totalorder %s70, %s71
    %p83 = scmp.eq.s32.totalorder %s19, 3
    %p84 = por %p82, %p83
    %p86 = scmp.ne.s32.totalorder %s71, %s85
    %p87 = scmp.eq.s32.totalorder %s19, 0
    %p88 = por %p86, %p87
    %s90 = sadd.s32 %s89, 1
    %p93 = scmp.eq.s32.totalorder %s13, 3
    %p94 = scmp.ne.s32.totalorder %s89, %s91
    %p95 = scmp.eq.s32.totalorder %s13, 0
    %p96 = por %p94, %p95
    %p97 = scmp.ne.s32.totalorder %s89, %s91
    %p98 = scmp.eq.s32.totalorder %s18, 3
    %p99 = por %p97, %p98
    %p100 = scmp.ne.s32.totalorder %s91, %s92
    %p101 = scmp.eq.s32.totalorder %s18, 0
    %p102 = por %p100, %p101
    %p103 = scmp.ne.s32.totalorder %s91, %s92
    %p104 = scmp.eq.s32.totalorder %s19, 3
    %p105 = por %p103, %p104
    %p107 = scmp.ne.s32.totalorder %s92, %s106
    %p108 = scmp.eq.s32.totalorder %s19, 0
    %p109 = por %p107, %p108
    %s111 = sadd.s32 %s110, 1
    %p114 = scmp.eq.s32.totalorder %s13, 3
    %p115 = scmp.ne.s32.totalorder %s110, %s112
    %p116 = scmp.eq.s32.totalorder %s13, 0
    %p117 = por %p115, %p116
    %p118 = scmp.ne.s32.totalorder %s110, %s112
    %p119 = scmp.eq.s32.totalorder %s18, 3
    %p120 = por %p118, %p119
    %p121 = scmp.ne.s32.totalorder %s112, %s113
    %p122 = scmp.eq.s32.totalorder %s18, 0
    %p123 = por %p121, %p122
    %p124 = scmp.ne.s32.totalorder %s112, %s113
    %p125 = scmp.eq.s32.totalorder %s19, 3
    %p126 = por %p124, %p125
    %p128 = scmp.ne.s32.totalorder %s113, %s127
    %p129 = scmp.eq.s32.totalorder %s19, 0
    %p130 = por %p128, %p129
    %s132 = sadd.s32 %s131, 1
    %p135 = scmp.eq.s32.totalorder %s13, 3
    %p136 = scmp.ne.s32.totalorder %s131, %s133
    %p137 = scmp.eq.s32.totalorder %s13, 0
    %p138 = por %p136, %p137
    %p139 = scmp.ne.s32.totalorder %s131, %s133
    %p140 = scmp.eq.s32.totalorder %s18, 3
    %p141 = por %p139, %p140
    %p142 = scmp.ne.s32.totalorder %s133, %s134
    %p143 = scmp.eq.s32.totalorder %s18, 0
    %p144 = por %p142, %p143
    %p145 = scmp.ne.s32.totalorder %s133, %s134
    %p146 = scmp.eq.s32.totalorder %s19, 3
    %p147 = por %p145, %p146
    %p149 = scmp.ne.s32.totalorder %s134, %s148
    %p150 = scmp.eq.s32.totalorder %s19, 0
    %p151 = por %p149, %p150
    %s153 = sadd.s32 %s152, 1
    %p156 = scmp.eq.s32.totalorder %s13, 3
    %p157 = scmp.ne.s32.totalorder %s152, %s154
    %p158 = scmp.eq.s32.totalorder %s13, 0
    %p159 = por %p157, %p158
    %p160 = scmp.ne.s32.totalorder %s152, %s154
    %p161 = scmp.eq.s32.totalorder %s18, 3
    %p162 = por %p160, %p161
    %p163 = scmp.ne.s32.totalorder %s154, %s155
    %p164 = scmp.eq.s32.totalorder %s18, 0
    %p165 = por %p163, %p164
    %p166 = scmp.ne.s32.totalorder %s154, %s155
    %p167 = scmp.eq.s32.totalorder %s19, 3
    %p168 = por %p166, %p167
    %p170 = scmp.ne.s32.totalorder %s155, %s169
    %p171 = scmp.eq.s32.totalorder %s19, 0
    %p172 = por %p170, %p171
    %s173 = ssub.s32 %s13, %s20
    %p174 = scmp.eq.s32.totalorder %s173, 0
    %s176 = sadd.s32 %s175, 1
    %s177 = scalar_select %p174, %s175, %s176
    %p180 = pneg %p174
    %p181 = scmp.eq.s32.totalorder %s13, 3
    %p182 = por %p180, %p181
    %p183 = scmp.ne.s32.totalorder %s175, %s178
    %p184 = scmp.eq.s32.totalorder %s13, 0
    %p185 = por %p183, %p184
    %p186 = scmp.ne.s32.totalorder %s175, %s178
    %p187 = scmp.eq.s32.totalorder %s18, 3
    %p188 = por %p186, %p187
    %p189 = scmp.ne.s32.totalorder %s178, %s179
    %p190 = scmp.eq.s32.totalorder %s18, 0
    %p191 = por %p189, %p190
    %p192 = scmp.ne.s32.totalorder %s178, %s179
    %p193 = scmp.eq.s32.totalorder %s19, 3
    %p194 = por %p192, %p193
    %p196 = scmp.ne.s32.totalorder %s179, %s195
    %p197 = scmp.eq.s32.totalorder %s19, 0
    %p198 = por %p196, %p197
    %p199 = scmp.le.s32.totalorder 1, %s13
    %p200 = scmp.lt.s32.totalorder %s13, 5
    %p201 = pnand %p199, %p200
    %p202 = pneg %p201
    // Predicated region
    $region9: #{backbone_forward.15} parent=5 // pred_check
      _
    $region10: #{backbone_forward.15} parent=5 // pred_check_branch
      %204 = sbr.rel (%p201) target = $region12
    $region11: #{backbone_forward.15} parent=5 // pred_region
      %s205 = ssub.s32 %s13, 1
      // Predicated region
      $region13: #{backbone_forward.15} parent=11 // pred_check
        %p206 = pneg %p60
      $region14: #{backbone_forward.15} parent=11 // pred_check_branch
        %208 = sbr.rel (%p206) target = $region16
      $region15: #{backbone_forward.15} parent=11 // pred_region
        _
      $region16: #{backbone_forward.15} parent=11 // pred_fallthru
        _
      // Predicated region
      $region17: #{backbone_forward.15} parent=11 // pred_check
        %p209 = pneg %p81
      $region18: #{backbone_forward.15} parent=11 // pred_check_branch
        %211 = sbr.rel (%p209) target = $region20
      $region19: #{backbone_forward.15} parent=11 // pred_region
        _
      $region20: #{backbone_forward.15} parent=11 // pred_fallthru
        _
      // Predicated region
      $region21: #{backbone_forward.15} parent=11 // pred_check
        %p212 = pneg %p102
      $region22: #{backbone_forward.15} parent=11 // pred_check_branch
        %214 = sbr.rel (%p212) target = $region24
      $region23: #{backbone_forward.15} parent=11 // pred_region
        _
      $region24: #{backbone_forward.15} parent=11 // pred_fallthru
        _
      // Predicated region
      $region25: #{backbone_forward.15} parent=11 // pred_check
        %p215 = pneg %p123
      $region26: #{backbone_forward.15} parent=11 // pred_check_branch
        %217 = sbr.rel (%p215) target = $region28
      $region27: #{backbone_forward.15} parent=11 // pred_region
        _
      $region28: #{backbone_forward.15} parent=11 // pred_fallthru
        _
      // Predicated region
      $region29: #{backbone_forward.15} parent=11 // pred_check
        %p218 = pneg %p144
      $region30: #{backbone_forward.15} parent=11 // pred_check_branch
        %220 = sbr.rel (%p218) target = $region32
      $region31: #{backbone_forward.15} parent=11 // pred_region
        _
      $region32: #{backbone_forward.15} parent=11 // pred_fallthru
        _
      // Predicated region
      $region33: #{backbone_forward.15} parent=11 // pred_check
        %p221 = pneg %p165
      $region34: #{backbone_forward.15} parent=11 // pred_check_branch
        %223 = sbr.rel (%p221) target = $region36
      $region35: #{backbone_forward.15} parent=11 // pred_region
        _
      $region36: #{backbone_forward.15} parent=11 // pred_fallthru
        _
    $region12: #{backbone_forward.15} parent=5 // pred_fallthru
      _
    %p224 = scmp.lt.s32.totalorder %s13, 4
    // Predicated region
    $region37: #{backbone_forward.15} parent=5 // pred_check
      %p225 = pneg %p224
    $region38: #{backbone_forward.15} parent=5 // pred_check_branch
      %227 = sbr.rel (%p225) target = $region40
    $region39: #{backbone_forward.15} parent=5 // pred_region
      // Predicated region
      $region41: #{backbone_forward.15} parent=39 // pred_check
        %p228 = pneg %p33
      $region42: #{backbone_forward.15} parent=39 // pred_check_branch
        %230 = sbr.rel (%p228) target = $region44
      $region43: #{backbone_forward.15} parent=39 // pred_region
        %s231 = smul.u32 16, %s13
        %p232 = scmp.lt.s32.totalorder %s231, 63
        %s233 = scalar_select %p232, %s231, 63
        %s234 = smul.addr %s233, 4
        %s235 = scalar_lea.vmem %s0, %s234
        %s236 = smul.u32 16, %s13
      $region44: #{backbone_forward.15} parent=39 // pred_fallthru
        _
    $region40: #{backbone_forward.15} parent=5 // pred_fallthru
      _
    %p237 = scmp.le.s32.totalorder 1, %s13
    %p238 = scmp.lt.s32.totalorder %s13, 5
    %p239 = pnand %p237, %p238
    %p240 = pneg %p239
    // Predicated region
    $region45: #{backbone_forward.15} parent=5 // pred_check
      _
    $region46: #{backbone_forward.15} parent=5 // pred_check_branch
      %242 = sbr.rel (%p239) target = $region48
    $region47: #{backbone_forward.15} parent=5 // pred_region
      %s243 = ssub.s32 %s13, 1
      %s244 = smul.u32 16, %s18
      %p245 = scmp.lt.s32.totalorder %s244, 63
      %s246 = scalar_select %p245, %s244, 63
      %s247 = smul.addr %s246, 4
      %s248 = scalar_lea.vmem %s0, %s247
      %p249 = pneg %p39
      %p250 = pneg %p36
      %p251 = pneg %p60
      %p252 = pneg %p57
      %p253 = pneg %p81
      %p254 = pneg %p78
      %p255 = pneg %p102
      %p256 = pneg %p99
      %p257 = pneg %p123
      %p258 = pneg %p120
      %p259 = pneg %p144
      %p260 = pneg %p141
      %p261 = pneg %p165
      %p262 = pneg %p162
      %p263 = pneg %p191
      %p264 = pneg %p188
      %s265 = smul.u32 16, %s18
      %p266 = scmp.lt.s32.totalorder %s265, 63
      %s267 = scalar_select %p266, %s265, 63
      %s268 = smul.addr %s267, 4
      %s269 = scalar_lea.vmem %s7, %s268
      %s270 = smul.u32 16, %s18
      %p271 = scmp.lt.s32.totalorder %s270, 63
      %s272 = scalar_select %p271, %s270, 63
      %s273 = smul.addr %s272, 4
      %s274 = scalar_lea.vmem %s0, %s273
      %s275 = smul.u32 16, %s18
      %s276 = smul.u32 16, %s18
      %p277 = scmp.lt.s32.totalorder %s276, 63
      %s278 = scalar_select %p277, %s276, 63
      %s279 = smul.addr %s278, 4
      %s280 = scalar_lea.vmem %s7, %s279
      %s281 = smul.u32 16, %s18
      %v283 = vld [vmem:[%s274] sm:$0xf]
      %v284 = vld [vmem:[%s274 + $0x4] sm:$0xf]
      %v285 = vld [vmem:[%s274 + $0x8] sm:$0xf]
      %v286 = vld [vmem:[%s274 + $0xc] sm:$0xf]
      %v287 = vld [vmem:[%s274 + $0x10] sm:$0xf]
      %v288 = vld [vmem:[%s274 + $0x14] sm:$0xf]
      %v289 = vld [vmem:[%s274 + $0x18] sm:$0xf]
      %v290 = vld [vmem:[%s274 + $0x1c] sm:$0xf]
      %v291 = vld [vmem:[%s274 + $0x20] sm:$0xf]
      %v292 = vld [vmem:[%s274 + $0x24] sm:$0xf]
      %v293 = vld [vmem:[%s274 + $0x28] sm:$0xf]
      %v294 = vld [vmem:[%s274 + $0x2c] sm:$0xf]
      %v295 = vld [vmem:[%s274 + $0x30] sm:$0xf]
      %v296 = vld [vmem:[%s274 + $0x34] sm:$0xf]
      %v297 = vld [vmem:[%s274 + $0x38] sm:$0xf]
      %v298 = vld [vmem:[%s274 + $0x3c] sm:$0xf]
      %v299 = vld [vmem:[%s1] sm:$0xff]
      %v300 = vld [vmem:[%s1 + $0x8] sm:$0xff]
      %v301 = vld [vmem:[%s1 + $0x10] sm:$0xff]
      %v302 = vld [vmem:[%s1 + $0x18] sm:$0xff]
      %v303 = vld [vmem:[%s1 + $0x20] sm:$0xff]
      %v304 = vld [vmem:[%s1 + $0x28] sm:$0xff]
      %v305 = vld [vmem:[%s1 + $0x30] sm:$0xff]
      %v306 = vld [vmem:[%s1 + $0x38] sm:$0xff]
      %v307 = vld [vmem:[%s1 + $0x40] sm:$0xff]
      %v308 = vld [vmem:[%s1 + $0x48] sm:$0xff]
      %v309 = vld [vmem:[%s1 + $0x50] sm:$0xff]
      %v310 = vld [vmem:[%s1 + $0x58] sm:$0xff]
      %v311 = vld [vmem:[%s1 + $0x60] sm:$0xff]
      %v312 = vld [vmem:[%s1 + $0x68] sm:$0xff]
      %v313 = vld [vmem:[%s1 + $0x70] sm:$0xff]
      %v314 = vld [vmem:[%s1 + $0x78] sm:$0xff]
      %v315 = vld [vmem:[%s1 + $0x80] sm:$0xff]
      %v316 = vld [vmem:[%s1 + $0x88] sm:$0xff]
      %v317 = vld [vmem:[%s1 + $0x90] sm:$0xff]
      %v318 = vld [vmem:[%s1 + $0x98] sm:$0xff]
      %v319 = vld [vmem:[%s1 + $0xa0] sm:$0xff]
      %v320 = vld [vmem:[%s1 + $0xa8] sm:$0xff]
      %v321 = vld [vmem:[%s1 + $0xb0] sm:$0xff]
      %v322 = vld [vmem:[%s1 + $0xb8] sm:$0xff]
      %v323 = vld [vmem:[%s1 + $0xc0] sm:$0xff]
      %v324 = vld [vmem:[%s1 + $0xc8] sm:$0xff]
      %v325 = vld [vmem:[%s1 + $0xd0] sm:$0xff]
      %v326 = vld [vmem:[%s1 + $0xd8] sm:$0xff]
      %v327 = vld [vmem:[%s1 + $0xe0] sm:$0xff]
      %v328 = vld [vmem:[%s1 + $0xe8] sm:$0xff]
      %v329 = vld [vmem:[%s1 + $0xf0] sm:$0xff]
      %v330 = vld [vmem:[%s1 + $0xf8] sm:$0xff]
      %v331 = vld [vmem:[%s2] sm:$0xf]
      %v333 = vlaneseq
      %v334 = vshrl.u32 %v333, 7
      %v335 = vsub.s32 0, %v334
      %v336 = vrot.slane %v331, %v335
      %v337 = vlaneseq
      %v338 = vshrl.u32 %v337, 7
      %v339 = vsub.s32 1, %v338
      %v340 = vrot.slane %v331, %v339
      %v341 = vlaneseq
      %v342 = vshrl.u32 %v341, 7
      %v343 = vsub.s32 2, %v342
      %v344 = vrot.slane %v331, %v343
      %v345 = vlaneseq
      %v346 = vshrl.u32 %v345, 7
      %v347 = vsub.s32 3, %v346
      %v348 = vrot.slane %v331, %v347
      %v369 = vunpack.c.l.b16 %v283
      %v370 = vunpack.c.l.b16 %v284
      %v371 = vunpack.c.l.b16 %v285
      %v372 = vunpack.c.l.b16 %v286
      %v373 = vunpack.c.l.b16 %v287
      %v374 = vunpack.c.l.b16 %v288
      %v375 = vunpack.c.l.b16 %v289
      %v376 = vunpack.c.l.b16 %v290
      %v377 = vunpack.c.l.b16 %v291
      %v378 = vunpack.c.l.b16 %v292
      %v379 = vunpack.c.l.b16 %v293
      %v380 = vunpack.c.l.b16 %v294
      %v381 = vunpack.c.l.b16 %v295
      %v382 = vunpack.c.l.b16 %v296
      %v383 = vunpack.c.l.b16 %v297
      %v384 = vunpack.c.l.b16 %v298
      %v385 = vpack.c.b16 %v370, %v369
      %v386 = vpack.c.b16 %v372, %v371
      %v387 = vpack.c.b16 %v374, %v373
      %v388 = vpack.c.b16 %v376, %v375
      %v389 = vpack.c.b16 %v378, %v377
      %v390 = vpack.c.b16 %v380, %v379
      %v391 = vpack.c.b16 %v382, %v381
      %v392 = vpack.c.b16 %v384, %v383
      %v433 = vunpack.c.l.b16 %v299
      %v434 = vunpack.c.h.b16 %v299
      %v435 = vunpack.c.l.b16 %v300
      %v436 = vunpack.c.h.b16 %v300
      %v437 = vunpack.c.l.b16 %v301
      %v438 = vunpack.c.h.b16 %v301
      %v439 = vunpack.c.l.b16 %v302
      %v440 = vunpack.c.h.b16 %v302
      %v441 = vunpack.c.l.b16 %v303
      %v442 = vunpack.c.h.b16 %v303
      %v443 = vunpack.c.l.b16 %v304
      %v444 = vunpack.c.h.b16 %v304
      %v445 = vunpack.c.l.b16 %v305
      %v446 = vunpack.c.h.b16 %v305
      %v447 = vunpack.c.l.b16 %v306
      %v448 = vunpack.c.h.b16 %v306
      %v449 = vunpack.c.l.b16 %v307
      %v450 = vunpack.c.h.b16 %v307
      %v451 = vunpack.c.l.b16 %v308
      %v452 = vunpack.c.h.b16 %v308
      %v453 = vunpack.c.l.b16 %v309
      %v454 = vunpack.c.h.b16 %v309
      %v455 = vunpack.c.l.b16 %v310
      %v456 = vunpack.c.h.b16 %v310
      %v457 = vunpack.c.l.b16 %v311
      %v458 = vunpack.c.h.b16 %v311
      %v459 = vunpack.c.l.b16 %v312
      %v460 = vunpack.c.h.b16 %v312
      %v461 = vunpack.c.l.b16 %v313
      %v462 = vunpack.c.h.b16 %v313
      %v463 = vunpack.c.l.b16 %v314
      %v464 = vunpack.c.h.b16 %v314
      %v465 = vunpack.c.l.b16 %v315
      %v466 = vunpack.c.h.b16 %v315
      %v467 = vunpack.c.l.b16 %v316
      %v468 = vunpack.c.h.b16 %v316
      %v469 = vunpack.c.l.b16 %v317
      %v470 = vunpack.c.h.b16 %v317
      %v471 = vunpack.c.l.b16 %v318
      %v472 = vunpack.c.h.b16 %v318
      %v473 = vunpack.c.l.b16 %v319
      %v474 = vunpack.c.h.b16 %v319
      %v475 = vunpack.c.l.b16 %v320
      %v476 = vunpack.c.h.b16 %v320
      %v477 = vunpack.c.l.b16 %v321
      %v478 = vunpack.c.h.b16 %v321
      %v479 = vunpack.c.l.b16 %v322
      %v480 = vunpack.c.h.b16 %v322
      %v481 = vunpack.c.l.b16 %v323
      %v482 = vunpack.c.h.b16 %v323
      %v483 = vunpack.c.l.b16 %v324
      %v484 = vunpack.c.h.b16 %v324
      %v485 = vunpack.c.l.b16 %v325
      %v486 = vunpack.c.h.b16 %v325
      %v487 = vunpack.c.l.b16 %v326
      %v488 = vunpack.c.h.b16 %v326
      %v489 = vunpack.c.l.b16 %v327
      %v490 = vunpack.c.h.b16 %v327
      %v491 = vunpack.c.l.b16 %v328
      %v492 = vunpack.c.h.b16 %v328
      %v493 = vunpack.c.l.b16 %v329
      %v494 = vunpack.c.h.b16 %v329
      %v495 = vunpack.c.l.b16 %v330
      %v496 = vunpack.c.h.b16 %v330
      %v497 = vpack.c.b16 %v437, %v433
      %v498 = vpack.c.b16 %v438, %v434
      %v499 = vpack.c.b16 %v439, %v435
      %v500 = vpack.c.b16 %v440, %v436
      %v501 = vpack.c.b16 %v445, %v441
      %v502 = vpack.c.b16 %v446, %v442
      %v503 = vpack.c.b16 %v447, %v443
      %v504 = vpack.c.b16 %v448, %v444
      %v505 = vpack.c.b16 %v453, %v449
      %v506 = vpack.c.b16 %v454, %v450
      %v507 = vpack.c.b16 %v455, %v451
      %v508 = vpack.c.b16 %v456, %v452
      %v509 = vpack.c.b16 %v461, %v457
      %v510 = vpack.c.b16 %v462, %v458
      %v511 = vpack.c.b16 %v463, %v459
      %v512 = vpack.c.b16 %v464, %v460
      %v513 = vpack.c.b16 %v469, %v465
      %v514 = vpack.c.b16 %v470, %v466
      %v515 = vpack.c.b16 %v471, %v467
      %v516 = vpack.c.b16 %v472, %v468
      %v517 = vpack.c.b16 %v477, %v473
      %v518 = vpack.c.b16 %v478, %v474
      %v519 = vpack.c.b16 %v479, %v475
      %v520 = vpack.c.b16 %v480, %v476
      %v521 = vpack.c.b16 %v485, %v481
      %v522 = vpack.c.b16 %v486, %v482
      %v523 = vpack.c.b16 %v487, %v483
      %v524 = vpack.c.b16 %v488, %v484
      %v525 = vpack.c.b16 %v493, %v489
      %v526 = vpack.c.b16 %v494, %v490
      %v527 = vpack.c.b16 %v495, %v491
      %v528 = vpack.c.b16 %v496, %v492
      %561 = vmatprep.subr.bf16.mxu0 %v498
      %562 = vmatpush1.bf16.msra.mxu0 %v497
      %563 = vmatprep.subr.bf16.mxu0 %v502
      %564 = vmatpush1.bf16.msra.mxu0 %v501
      %565 = vmatprep.subr.bf16.mxu0 %v506
      %566 = vmatpush1.bf16.msra.mxu0 %v505
      %567 = vmatprep.subr.bf16.mxu0 %v510
      %568 = vmatpush1.bf16.msra.mxu0 %v509
      %569 = vmatprep.subr.bf16.mxu0 %v514
      %570 = vmatpush1.bf16.msra.mxu0 %v513
      %571 = vmatprep.subr.bf16.mxu0 %v518
      %572 = vmatpush1.bf16.msra.mxu0 %v517
      %573 = vmatprep.subr.bf16.mxu0 %v522
      %574 = vmatpush1.bf16.msra.mxu0 %v521
      %575 = vmatprep.subr.bf16.mxu0 %v526
      %576 = vmatpush1.bf16.msra.mxu0 %v525
      %577 = vmatprep.subr.bf16.mxu0 0
      %578 = vmatpush1.bf16.msra.mxu0 0
      %579 = vmatprep.subr.bf16.mxu0 0
      %580 = vmatpush1.bf16.msra.mxu0 0
      %581 = vmatprep.subr.bf16.mxu0 0
      %582 = vmatpush1.bf16.msra.mxu0 0
      %583 = vmatprep.subr.bf16.mxu0 0
      %584 = vmatpush1.bf16.msra.mxu0 0
      %585 = vmatprep.subr.bf16.mxu0 0
      %586 = vmatpush1.bf16.msra.mxu0 0
      %587 = vmatprep.subr.bf16.mxu0 0
      %588 = vmatpush1.bf16.msra.mxu0 0
      %589 = vmatprep.subr.bf16.mxu0 0
      %590 = vmatpush1.bf16.msra.mxu0 0
      %591 = vmatprep.subr.bf16.mxu0 0
      %592 = vmatpush1.bf16.msra.mxu0 0
      %593 = vmatprep.mubr.bf16.mxu0 0
      %594 = vmatmul.mubr.bf16.gmra.mrb[0].mxu0 %v385
      %v595 = vpop.f32.mrb[0].mxu0
      %v596 = vadd.f32 %v336, %v595
      %v597 = vpop.f32.mrb[0].mxu0
      %v598 = vadd.f32 %v340, %v597
      %v599 = vpop.f32.mrb[0].mxu0
      %v600 = vadd.f32 %v336, %v599
      %v601 = vpop.f32.mrb[0].mxu0
      %v602 = vadd.f32 %v340, %v601
      %603 = vmatprep.mubr.bf16.mxu0 0
      %604 = vmatmul.mubr.bf16.gmra.mrb[0].mxu0 %v386
      %v605 = vpop.f32.mrb[0].mxu0
      %v606 = vadd.f32 %v336, %v605
      %v607 = vpop.f32.mrb[0].mxu0
      %v608 = vadd.f32 %v340, %v607
      %v609 = vpop.f32.mrb[0].mxu0
      %v610 = vadd.f32 %v336, %v609
      %v611 = vpop.f32.mrb[0].mxu0
      %v612 = vadd.f32 %v340, %v611
      %613 = vmatprep.mubr.bf16.mxu0 0
      %614 = vmatmul.mubr.bf16.gmra.mrb[0].mxu0 %v387
      %v615 = vpop.f32.mrb[0].mxu0
      %v616 = vadd.f32 %v336, %v615
      %v617 = vpop.f32.mrb[0].mxu0
      %v618 = vadd.f32 %v340, %v617
      %v619 = vpop.f32.mrb[0].mxu0
      %v620 = vadd.f32 %v336, %v619
      %v621 = vpop.f32.mrb[0].mxu0
      %v622 = vadd.f32 %v340, %v621
      %623 = vmatprep.mubr.bf16.mxu0 0
      %624 = vmatmul.mubr.bf16.gmra.mrb[0].mxu0 %v388
      %v625 = vpop.f32.mrb[0].mxu0
      %v626 = vadd.f32 %v336, %v625
      %v627 = vpop.f32.mrb[0].mxu0
      %v628 = vadd.f32 %v340, %v627
      %v629 = vpop.f32.mrb[0].mxu0
      %v630 = vadd.f32 %v336, %v629
      %v631 = vpop.f32.mrb[0].mxu0
      %v632 = vadd.f32 %v340, %v631
      %633 = vmatprep.mubr.bf16.mxu0 0
      %634 = vmatmul.mubr.bf16.gmra.mrb[0].mxu0 %v389
      %v635 = vpop.f32.mrb[0].mxu0
      %v636 = vadd.f32 %v336, %v635
      %v637 = vpop.f32.mrb[0].mxu0
      %v638 = vadd.f32 %v340, %v637
      %v639 = vpop.f32.mrb[0].mxu0
      %v640 = vadd.f32 %v336, %v639
      %v641 = vpop.f32.mrb[0].mxu0
      %v642 = vadd.f32 %v340, %v641
      %643 = vmatprep.mubr.bf16.mxu0 0
      %644 = vmatmul.mubr.bf16.gmra.mrb[0].mxu0 %v390
      %v645 = vpop.f32.mrb[0].mxu0
      %v646 = vadd.f32 %v336, %v645
      %v647 = vpop.f32.mrb[0].mxu0
      %v648 = vadd.f32 %v340, %v647
      %v649 = vpop.f32.mrb[0].mxu0
      %v650 = vadd.f32 %v336, %v649
      %v651 = vpop.f32.mrb[0].mxu0
      %v652 = vadd.f32 %v340, %v651
      %653 = vmatprep.mubr.bf16.mxu0 0
      %654 = vmatmul.mubr.bf16.gmra.mrb[0].mxu0 %v391
      %v655 = vpop.f32.mrb[0].mxu0
      %v656 = vadd.f32 %v336, %v655
      %v657 = vpop.f32.mrb[0].mxu0
      %v658 = vadd.f32 %v340, %v657
      %v659 = vpop.f32.mrb[0].mxu0
      %v660 = vadd.f32 %v336, %v659
      %v661 = vpop.f32.mrb[0].mxu0
      %v662 = vadd.f32 %v340, %v661
      %663 = vmatprep.mubr.bf16.mxu0 0
      %664 = vmatmul.mubr.bf16.gmra.mrb[0].mxu0 %v392
      %v665 = vpop.f32.mrb[0].mxu0
      %v666 = vadd.f32 %v336, %v665
      %v667 = vpop.f32.mrb[0].mxu0
      %v668 = vadd.f32 %v340, %v667
      %v669 = vpop.f32.mrb[0].mxu0
      %v670 = vadd.f32 %v336, %v669
      %v671 = vpop.f32.mrb[0].mxu0
      %v672 = vadd.f32 %v340, %v671
      %673 = vdwg.mxu0
      %674 = vmatprep.subr.bf16.mxu0 %v500
      %675 = vmatpush1.bf16.msra.mxu0 %v499
      %676 = vmatprep.subr.bf16.mxu0 %v504
      %677 = vmatpush1.bf16.msra.mxu0 %v503
      %678 = vmatprep.subr.bf16.mxu0 %v508
      %679 = vmatpush1.bf16.msra.mxu0 %v507
      %680 = vmatprep.subr.bf16.mxu0 %v512
      %681 = vmatpush1.bf16.msra.mxu0 %v511
      %682 = vmatprep.subr.bf16.mxu0 %v516
      %683 = vmatpush1.bf16.msra.mxu0 %v515
      %684 = vmatprep.subr.bf16.mxu0 %v520
      %685 = vmatpush1.bf16.msra.mxu0 %v519
      %686 = vmatprep.subr.bf16.mxu0 %v524
      %687 = vmatpush1.bf16.msra.mxu0 %v523
      %688 = vmatprep.subr.bf16.mxu0 %v528
      %689 = vmatpush1.bf16.msra.mxu0 %v527
      %690 = vmatprep.subr.bf16.mxu0 0
      %691 = vmatpush1.bf16.msra.mxu0 0
      %692 = vmatprep.subr.bf16.mxu0 0
      %693 = vmatpush1.bf16.msra.mxu0 0
      %694 = vmatprep.subr.bf16.mxu0 0
      %695 = vmatpush1.bf16.msra.mxu0 0
      %696 = vmatprep.subr.bf16.mxu0 0
      %697 = vmatpush1.bf16.msra.mxu0 0
      %698 = vmatprep.subr.bf16.mxu0 0
      %699 = vmatpush1.bf16.msra.mxu0 0
      %700 = vmatprep.subr.bf16.mxu0 0
      %701 = vmatpush1.bf16.msra.mxu0 0
      %702 = vmatprep.subr.bf16.mxu0 0
      %703 = vmatpush1.bf16.msra.mxu0 0
      %704 = vmatprep.subr.bf16.mxu0 0
      %705 = vmatpush1.bf16.msra.mxu0 0
      %706 = vmatprep.mubr.bf16.mxu0 0
      %707 = vmatmul.mubr.bf16.gmra.mrb[0].mxu0 %v385
      %v708 = vpop.f32.mrb[0].mxu0
      %v709 = vadd.f32 %v344, %v708
      %v710 = vpop.f32.mrb[0].mxu0
      %v711 = vadd.f32 %v348, %v710
      %v712 = vpop.f32.mrb[0].mxu0
      %v713 = vadd.f32 %v344, %v712
      %v714 = vpop.f32.mrb[0].mxu0
      %v715 = vadd.f32 %v348, %v714
      %716 = vmatprep.mubr.bf16.mxu0 0
      %717 = vmatmul.mubr.bf16.gmra.mrb[0].mxu0 %v386
      %v718 = vpop.f32.mrb[0].mxu0
      %v719 = vadd.f32 %v344, %v718
      %v720 = vpop.f32.mrb[0].mxu0
      %v721 = vadd.f32 %v348, %v720
      %v722 = vpop.f32.mrb[0].mxu0
      %v723 = vadd.f32 %v344, %v722
      %v724 = vpop.f32.mrb[0].mxu0
      %v725 = vadd.f32 %v348, %v724
      %726 = vmatprep.mubr.bf16.mxu0 0
      %727 = vmatmul.mubr.bf16.gmra.mrb[0].mxu0 %v387
      %v728 = vpop.f32.mrb[0].mxu0
      %v729 = vadd.f32 %v344, %v728
      %v730 = vpop.f32.mrb[0].mxu0
      %v731 = vadd.f32 %v348, %v730
      %v732 = vpop.f32.mrb[0].mxu0
      %v733 = vadd.f32 %v344, %v732
      %v734 = vpop.f32.mrb[0].mxu0
      %v735 = vadd.f32 %v348, %v734
      %736 = vmatprep.mubr.bf16.mxu0 0
      %737 = vmatmul.mubr.bf16.gmra.mrb[0].mxu0 %v388
      %v738 = vpop.f32.mrb[0].mxu0
      %v739 = vadd.f32 %v344, %v738
      %v740 = vpop.f32.mrb[0].mxu0
      %v741 = vadd.f32 %v348, %v740
      %v742 = vpop.f32.mrb[0].mxu0
      %v743 = vadd.f32 %v344, %v742
      %v744 = vpop.f32.mrb[0].mxu0
      %v745 = vadd.f32 %v348, %v744
      %746 = vmatprep.mubr.bf16.mxu0 0
      %747 = vmatmul.mubr.bf16.gmra.mrb[0].mxu0 %v389
      %v748 = vpop.f32.mrb[0].mxu0
      %v749 = vadd.f32 %v344, %v748
      %v750 = vpop.f32.mrb[0].mxu0
      %v751 = vadd.f32 %v348, %v750
      %v752 = vpop.f32.mrb[0].mxu0
      %v753 = vadd.f32 %v344, %v752
      %v754 = vpop.f32.mrb[0].mxu0
      %v755 = vadd.f32 %v348, %v754
      %756 = vmatprep.mubr.bf16.mxu0 0
      %757 = vmatmul.mubr.bf16.gmra.mrb[0].mxu0 %v390
      %v758 = vpop.f32.mrb[0].mxu0
      %v759 = vadd.f32 %v344, %v758
      %v760 = vpop.f32.mrb[0].mxu0
      %v761 = vadd.f32 %v348, %v760
      %v762 = vpop.f32.mrb[0].mxu0
      %v763 = vadd.f32 %v344, %v762
      %v764 = vpop.f32.mrb[0].mxu0
      %v765 = vadd.f32 %v348, %v764
      %766 = vmatprep.mubr.bf16.mxu0 0
      %767 = vmatmul.mubr.bf16.gmra.mrb[0].mxu0 %v391
      %v768 = vpop.f32.mrb[0].mxu0
      %v769 = vadd.f32 %v344, %v768
      %v770 = vpop.f32.mrb[0].mxu0
      %v771 = vadd.f32 %v348, %v770
      %v772 = vpop.f32.mrb[0].mxu0
      %v773 = vadd.f32 %v344, %v772
      %v774 = vpop.f32.mrb[0].mxu0
      %v775 = vadd.f32 %v348, %v774
      %776 = vmatprep.mubr.bf16.mxu0 0
      %777 = vmatmul.mubr.bf16.gmra.mrb[0].mxu0 %v392
      %v778 = vpop.f32.mrb[0].mxu0
      %v779 = vadd.f32 %v344, %v778
      %v780 = vpop.f32.mrb[0].mxu0
      %v781 = vadd.f32 %v348, %v780
      %v782 = vpop.f32.mrb[0].mxu0
      %v783 = vadd.f32 %v344, %v782
      %v784 = vpop.f32.mrb[0].mxu0
      %v785 = vadd.f32 %v348, %v784
      %786 = vdwg.mxu0
      %v787 = vmul.f32 %v596, 0.5
      %v788 = vmul.f32 %v598, 0.5
      %v789 = vmul.f32 %v709, 0.5
      %v790 = vmul.f32 %v711, 0.5
      %v791 = vmul.f32 %v600, 0.5
      %v792 = vmul.f32 %v602, 0.5
      %v793 = vmul.f32 %v713, 0.5
      %v794 = vmul.f32 %v715, 0.5
      %v795 = vmul.f32 %v606, 0.5
      %v796 = vmul.f32 %v608, 0.5
      %v797 = vmul.f32 %v719, 0.5
      %v798 = vmul.f32 %v721, 0.5
      %v799 = vmul.f32 %v610, 0.5
      %v800 = vmul.f32 %v612, 0.5
      %v801 = vmul.f32 %v723, 0.5
      %v802 = vmul.f32 %v725, 0.5
      %v803 = vmul.f32 %v616, 0.5
      %v804 = vmul.f32 %v618, 0.5
      %v805 = vmul.f32 %v729, 0.5
      %v806 = vmul.f32 %v731, 0.5
      %v807 = vmul.f32 %v620, 0.5
      %v808 = vmul.f32 %v622, 0.5
      %v809 = vmul.f32 %v733, 0.5
      %v810 = vmul.f32 %v735, 0.5
      %v811 = vmul.f32 %v626, 0.5
      %v812 = vmul.f32 %v628, 0.5
      %v813 = vmul.f32 %v739, 0.5
      %v814 = vmul.f32 %v741, 0.5
      %v815 = vmul.f32 %v630, 0.5
      %v816 = vmul.f32 %v632, 0.5
      %v817 = vmul.f32 %v743, 0.5
      %v818 = vmul.f32 %v745, 0.5
      %v819 = vmul.f32 %v636, 0.5
      %v820 = vmul.f32 %v638, 0.5
      %v821 = vmul.f32 %v749, 0.5
      %v822 = vmul.f32 %v751, 0.5
      %v823 = vmul.f32 %v640, 0.5
      %v824 = vmul.f32 %v642, 0.5
      %v825 = vmul.f32 %v753, 0.5
      %v826 = vmul.f32 %v755, 0.5
      %v827 = vmul.f32 %v646, 0.5
      %v828 = vmul.f32 %v648, 0.5
      %v829 = vmul.f32 %v759, 0.5
      %v830 = vmul.f32 %v761, 0.5
      %v831 = vmul.f32 %v650, 0.5
      %v832 = vmul.f32 %v652, 0.5
      %v833 = vmul.f32 %v763, 0.5
      %v834 = vmul.f32 %v765, 0.5
      %v835 = vmul.f32 %v656, 0.5
      %v836 = vmul.f32 %v658, 0.5
      %v837 = vmul.f32 %v769, 0.5
      %v838 = vmul.f32 %v771, 0.5
      %v839 = vmul.f32 %v660, 0.5
      %v840 = vmul.f32 %v662, 0.5
      %v841 = vmul.f32 %v773, 0.5
      %v842 = vmul.f32 %v775, 0.5
      %v843 = vmul.f32 %v666, 0.5
      %v844 = vmul.f32 %v668, 0.5
      %v845 = vmul.f32 %v779, 0.5
      %v846 = vmul.f32 %v781, 0.5
      %v847 = vmul.f32 %v670, 0.5
      %v848 = vmul.f32 %v672, 0.5
      %v849 = vmul.f32 %v783, 0.5
      %v850 = vmul.f32 %v785, 0.5
      %v851 = vmul.f32 %v596, 0.044715
      %v852 = vmul.f32 %v598, 0.044715
      %v853 = vmul.f32 %v709, 0.044715
      %v854 = vmul.f32 %v711, 0.044715
      %v855 = vmul.f32 %v600, 0.044715
      %v856 = vmul.f32 %v602, 0.044715
      %v857 = vmul.f32 %v713, 0.044715
      %v858 = vmul.f32 %v715, 0.044715
      %v859 = vmul.f32 %v606, 0.044715
      %v860 = vmul.f32 %v608, 0.044715
      %v861 = vmul.f32 %v719, 0.044715
      %v862 = vmul.f32 %v721, 0.044715
      %v863 = vmul.f32 %v610, 0.044715
      %v864 = vmul.f32 %v612, 0.044715
      %v865 = vmul.f32 %v723, 0.044715
      %v866 = vmul.f32 %v725, 0.044715
      %v867 = vmul.f32 %v616, 0.044715
      %v868 = vmul.f32 %v618, 0.044715
      %v869 = vmul.f32 %v729, 0.044715
      %v870 = vmul.f32 %v731, 0.044715
      %v871 = vmul.f32 %v620, 0.044715
      %v872 = vmul.f32 %v622, 0.044715
      %v873 = vmul.f32 %v733, 0.044715
      %v874 = vmul.f32 %v735, 0.044715
      %v875 = vmul.f32 %v626, 0.044715
      %v876 = vmul.f32 %v628, 0.044715
      %v877 = vmul.f32 %v739, 0.044715
      %v878 = vmul.f32 %v741, 0.044715
      %v879 = vmul.f32 %v630, 0.044715
      %v880 = vmul.f32 %v632, 0.044715
      %v881 = vmul.f32 %v743, 0.044715
      %v882 = vmul.f32 %v745, 0.044715
      %v883 = vmul.f32 %v636, 0.044715
      %v884 = vmul.f32 %v638, 0.044715
      %v885 = vmul.f32 %v749, 0.044715
      %v886 = vmul.f32 %v751, 0.044715
      %v887 = vmul.f32 %v640, 0.044715
      %v888 = vmul.f32 %v642, 0.044715
      %v889 = vmul.f32 %v753, 0.044715
      %v890 = vmul.f32 %v755, 0.044715
      %v891 = vmul.f32 %v646, 0.044715
      %v892 = vmul.f32 %v648, 0.044715
      %v893 = vmul.f32 %v759, 0.044715
      %v894 = vmul.f32 %v761, 0.044715
      %v895 = vmul.f32 %v650, 0.044715
      %v896 = vmul.f32 %v652, 0.044715
      %v897 = vmul.f32 %v763, 0.044715
      %v898 = vmul.f32 %v765, 0.044715
      %v899 = vmul.f32 %v656, 0.044715
      %v900 = vmul.f32 %v658, 0.044715
      %v901 = vmul.f32 %v769, 0.044715
      %v902 = vmul.f32 %v771, 0.044715
      %v903 = vmul.f32 %v660, 0.044715
      %v904 = vmul.f32 %v662, 0.044715
      %v905 = vmul.f32 %v773, 0.044715
      %v906 = vmul.f32 %v775, 0.044715
      %v907 = vmul.f32 %v666, 0.044715
      %v908 = vmul.f32 %v668, 0.044715
      %v909 = vmul.f32 %v779, 0.044715
      %v910 = vmul.f32 %v781, 0.044715
      %v911 = vmul.f32 %v670, 0.044715
      %v912 = vmul.f32 %v672, 0.044715
      %v913 = vmul.f32 %v783, 0.044715
      %v914 = vmul.f32 %v785, 0.044715
      %v915 = vmul.f32 %v851, %v596
      %v916 = vmul.f32 %v852, %v598
      %v917 = vmul.f32 %v853, %v709
      %v918 = vmul.f32 %v854, %v711
      %v919 = vmul.f32 %v855, %v600
      %v920 = vmul.f32 %v856, %v602
      %v921 = vmul.f32 %v857, %v713
      %v922 = vmul.f32 %v858, %v715
      %v923 = vmul.f32 %v859, %v606
      %v924 = vmul.f32 %v860, %v608
      %v925 = vmul.f32 %v861, %v719
      %v926 = vmul.f32 %v862, %v721
      %v927 = vmul.f32 %v863, %v610
      %v928 = vmul.f32 %v864, %v612
      %v929 = vmul.f32 %v865, %v723
      %v930 = vmul.f32 %v866, %v725
      %v931 = vmul.f32 %v867, %v616
      %v932 = vmul.f32 %v868, %v618
      %v933 = vmul.f32 %v869, %v729
      %v934 = vmul.f32 %v870, %v731
      %v935 = vmul.f32 %v871, %v620
      %v936 = vmul.f32 %v872, %v622
      %v937 = vmul.f32 %v873, %v733
      %v938 = vmul.f32 %v874, %v735
      %v939 = vmul.f32 %v875, %v626
      %v940 = vmul.f32 %v876, %v628
      %v941 = vmul.f32 %v877, %v739
      %v942 = vmul.f32 %v878, %v741
      %v943 = vmul.f32 %v879, %v630
      %v944 = vmul.f32 %v880, %v632
      %v945 = vmul.f32 %v881, %v743
      %v946 = vmul.f32 %v882, %v745
      %v947 = vmul.f32 %v883, %v636
      %v948 = vmul.f32 %v884, %v638
      %v949 = vmul.f32 %v885, %v749
      %v950 = vmul.f32 %v886, %v751
      %v951 = vmul.f32 %v887, %v640
      %v952 = vmul.f32 %v888, %v642
      %v953 = vmul.f32 %v889, %v753
      %v954 = vmul.f32 %v890, %v755
      %v955 = vmul.f32 %v891, %v646
      %v956 = vmul.f32 %v892, %v648
      %v957 = vmul.f32 %v893, %v759
      %v958 = vmul.f32 %v894, %v761
      %v959 = vmul.f32 %v895, %v650
      %v960 = vmul.f32 %v896, %v652
      %v961 = vmul.f32 %v897, %v763
      %v962 = vmul.f32 %v898, %v765
      %v963 = vmul.f32 %v899, %v656
      %v964 = vmul.f32 %v900, %v658
      %v965 = vmul.f32 %v901, %v769
      %v966 = vmul.f32 %v902, %v771
      %v967 = vmul.f32 %v903, %v660
      %v968 = vmul.f32 %v904, %v662
      %v969 = vmul.f32 %v905, %v773
      %v970 = vmul.f32 %v906, %v775
      %v971 = vmul.f32 %v907, %v666
      %v972 = vmul.f32 %v908, %v668
      %v973 = vmul.f32 %v909, %v779
      %v974 = vmul.f32 %v910, %v781
      %v975 = vmul.f32 %v911, %v670
      %v976 = vmul.f32 %v912, %v672
      %v977 = vmul.f32 %v913, %v783
      %v978 = vmul.f32 %v914, %v785
      %v979 = vmul.f32 %v915, %v596
      %v980 = vmul.f32 %v916, %v598
      %v981 = vmul.f32 %v917, %v709
      %v982 = vmul.f32 %v918, %v711
      %v983 = vmul.f32 %v919, %v600
      %v984 = vmul.f32 %v920, %v602
      %v985 = vmul.f32 %v921, %v713
      %v986 = vmul.f32 %v922, %v715
      %v987 = vmul.f32 %v923, %v606
      %v988 = vmul.f32 %v924, %v608
      %v989 = vmul.f32 %v925, %v719
      %v990 = vmul.f32 %v926, %v721
      %v991 = vmul.f32 %v927, %v610
      %v992 = vmul.f32 %v928, %v612
      %v993 = vmul.f32 %v929, %v723
      %v994 = vmul.f32 %v930, %v725
      %v995 = vmul.f32 %v931, %v616
      %v996 = vmul.f32 %v932, %v618
      %v997 = vmul.f32 %v933, %v729
      %v998 = vmul.f32 %v934, %v731
      %v999 = vmul.f32 %v935, %v620
      %v1000 = vmul.f32 %v936, %v622
      %v1001 = vmul.f32 %v937, %v733
      %v1002 = vmul.f32 %v938, %v735
      %v1003 = vmul.f32 %v939, %v626
      %v1004 = vmul.f32 %v940, %v628
      %v1005 = vmul.f32 %v941, %v739
      %v1006 = vmul.f32 %v942, %v741
      %v1007 = vmul.f32 %v943, %v630
      %v1008 = vmul.f32 %v944, %v632
      %v1009 = vmul.f32 %v945, %v743
      %v1010 = vmul.f32 %v946, %v745
      %v1011 = vmul.f32 %v947, %v636
      %v1012 = vmul.f32 %v948, %v638
      %v1013 = vmul.f32 %v949, %v749
      %v1014 = vmul.f32 %v950, %v751
      %v1015 = vmul.f32 %v951, %v640
      %v1016 = vmul.f32 %v952, %v642
      %v1017 = vmul.f32 %v953, %v753
      %v1018 = vmul.f32 %v954, %v755
      %v1019 = vmul.f32 %v955, %v646
      %v1020 = vmul.f32 %v956, %v648
      %v1021 = vmul.f32 %v957, %v759
      %v1022 = vmul.f32 %v958, %v761
      %v1023 = vmul.f32 %v959, %v650
      %v1024 = vmul.f32 %v960, %v652
      %v1025 = vmul.f32 %v961, %v763
      %v1026 = vmul.f32 %v962, %v765
      %v1027 = vmul.f32 %v963, %v656
      %v1028 = vmul.f32 %v964, %v658
      %v1029 = vmul.f32 %v965, %v769
      %v1030 = vmul.f32 %v966, %v771
      %v1031 = vmul.f32 %v967, %v660
      %v1032 = vmul.f32 %v968, %v662
      %v1033 = vmul.f32 %v969, %v773
      %v1034 = vmul.f32 %v970, %v775
      %v1035 = vmul.f32 %v971, %v666
      %v1036 = vmul.f32 %v972, %v668
      %v1037 = vmul.f32 %v973, %v779
      %v1038 = vmul.f32 %v974, %v781
      %v1039 = vmul.f32 %v975, %v670
      %v1040 = vmul.f32 %v976, %v672
      %v1041 = vmul.f32 %v977, %v783
      %v1042 = vmul.f32 %v978, %v785
      %v1043 = vadd.f32 %v596, %v979
      %v1044 = vadd.f32 %v598, %v980
      %v1045 = vadd.f32 %v709, %v981
      %v1046 = vadd.f32 %v711, %v982
      %v1047 = vadd.f32 %v600, %v983
      %v1048 = vadd.f32 %v602, %v984
      %v1049 = vadd.f32 %v713, %v985
      %v1050 = vadd.f32 %v715, %v986
      %v1051 = vadd.f32 %v606, %v987
      %v1052 = vadd.f32 %v608, %v988
      %v1053 = vadd.f32 %v719, %v989
      %v1054 = vadd.f32 %v721, %v990
      %v1055 = vadd.f32 %v610, %v991
      %v1056 = vadd.f32 %v612, %v992
      %v1057 = vadd.f32 %v723, %v993
      %v1058 = vadd.f32 %v725, %v994
      %v1059 = vadd.f32 %v616, %v995
      %v1060 = vadd.f32 %v618, %v996
      %v1061 = vadd.f32 %v729, %v997
      %v1062 = vadd.f32 %v731, %v998
      %v1063 = vadd.f32 %v620, %v999
      %v1064 = vadd.f32 %v622, %v1000
      %v1065 = vadd.f32 %v733, %v1001
      %v1066 = vadd.f32 %v735, %v1002
      %v1067 = vadd.f32 %v626, %v1003
      %v1068 = vadd.f32 %v628, %v1004
      %v1069 = vadd.f32 %v739, %v1005
      %v1070 = vadd.f32 %v741, %v1006
      %v1071 = vadd.f32 %v630, %v1007
      %v1072 = vadd.f32 %v632, %v1008
      %v1073 = vadd.f32 %v743, %v1009
      %v1074 = vadd.f32 %v745, %v1010
      %v1075 = vadd.f32 %v636, %v1011
      %v1076 = vadd.f32 %v638, %v1012
      %v1077 = vadd.f32 %v749, %v1013
      %v1078 = vadd.f32 %v751, %v1014
      %v1079 = vadd.f32 %v640, %v1015
      %v1080 = vadd.f32 %v642, %v1016
      %v1081 = vadd.f32 %v753, %v1017
      %v1082 = vadd.f32 %v755, %v1018
      %v1083 = vadd.f32 %v646, %v1019
      %v1084 = vadd.f32 %v648, %v1020
      %v1085 = vadd.f32 %v759, %v1021
      %v1086 = vadd.f32 %v761, %v1022
      %v1087 = vadd.f32 %v650, %v1023
      %v1088 = vadd.f32 %v652, %v1024
      %v1089 = vadd.f32 %v763, %v1025
      %v1090 = vadd.f32 %v765, %v1026
      %v1091 = vadd.f32 %v656, %v1027
      %v1092 = vadd.f32 %v658, %v1028
      %v1093 = vadd.f32 %v769, %v1029
      %v1094 = vadd.f32 %v771, %v1030
      %v1095 = vadd.f32 %v660, %v1031
      %v1096 = vadd.f32 %v662, %v1032
      %v1097 = vadd.f32 %v773, %v1033
      %v1098 = vadd.f32 %v775, %v1034
      %v1099 = vadd.f32 %v666, %v1035
      %v1100 = vadd.f32 %v668, %v1036
      %v1101 = vadd.f32 %v779, %v1037
      %v1102 = vadd.f32 %v781, %v1038
      %v1103 = vadd.f32 %v670, %v1039
      %v1104 = vadd.f32 %v672, %v1040
      %v1105 = vadd.f32 %v783, %v1041
      %v1106 = vadd.f32 %v785, %v1042
      %v1107 = vmul.f32 %v1043, 0.7978846
      %v1108 = vmul.f32 %v1044, 0.7978846
      %v1109 = vmul.f32 %v1045, 0.7978846
      %v1110 = vmul.f32 %v1046, 0.7978846
      %v1111 = vmul.f32 %v1047, 0.7978846
      %v1112 = vmul.f32 %v1048, 0.7978846
      %v1113 = vmul.f32 %v1049, 0.7978846
      %v1114 = vmul.f32 %v1050, 0.7978846
      %v1115 = vmul.f32 %v1051, 0.7978846
      %v1116 = vmul.f32 %v1052, 0.7978846
      %v1117 = vmul.f32 %v1053, 0.7978846
      %v1118 = vmul.f32 %v1054, 0.7978846
      %v1119 = vmul.f32 %v1055, 0.7978846
      %v1120 = vmul.f32 %v1056, 0.7978846
      %v1121 = vmul.f32 %v1057, 0.7978846
      %v1122 = vmul.f32 %v1058, 0.7978846
      %v1123 = vmul.f32 %v1059, 0.7978846
      %v1124 = vmul.f32 %v1060, 0.7978846
      %v1125 = vmul.f32 %v1061, 0.7978846
      %v1126 = vmul.f32 %v1062, 0.7978846
      %v1127 = vmul.f32 %v1063, 0.7978846
      %v1128 = vmul.f32 %v1064, 0.7978846
      %v1129 = vmul.f32 %v1065, 0.7978846
      %v1130 = vmul.f32 %v1066, 0.7978846
      %v1131 = vmul.f32 %v1067, 0.7978846
      %v1132 = vmul.f32 %v1068, 0.7978846
      %v1133 = vmul.f32 %v1069, 0.7978846
      %v1134 = vmul.f32 %v1070, 0.7978846
      %v1135 = vmul.f32 %v1071, 0.7978846
      %v1136 = vmul.f32 %v1072, 0.7978846
      %v1137 = vmul.f32 %v1073, 0.7978846
      %v1138 = vmul.f32 %v1074, 0.7978846
      %v1139 = vmul.f32 %v1075, 0.7978846
      %v1140 = vmul.f32 %v1076, 0.7978846
      %v1141 = vmul.f32 %v1077, 0.7978846
      %v1142 = vmul.f32 %v1078, 0.7978846
      %v1143 = vmul.f32 %v1079, 0.7978846
      %v1144 = vmul.f32 %v1080, 0.7978846
      %v1145 = vmul.f32 %v1081, 0.7978846
      %v1146 = vmul.f32 %v1082, 0.7978846
      %v1147 = vmul.f32 %v1083, 0.7978846
      %v1148 = vmul.f32 %v1084, 0.7978846
      %v1149 = vmul.f32 %v1085, 0.7978846
      %v1150 = vmul.f32 %v1086, 0.7978846
      %v1151 = vmul.f32 %v1087, 0.7978846
      %v1152 = vmul.f32 %v1088, 0.7978846
      %v1153 = vmul.f32 %v1089, 0.7978846
      %v1154 = vmul.f32 %v1090, 0.7978846
      %v1155 = vmul.f32 %v1091, 0.7978846
      %v1156 = vmul.f32 %v1092, 0.7978846
      %v1157 = vmul.f32 %v1093, 0.7978846
      %v1158 = vmul.f32 %v1094, 0.7978846
      %v1159 = vmul.f32 %v1095, 0.7978846
      %v1160 = vmul.f32 %v1096, 0.7978846
      %v1161 = vmul.f32 %v1097, 0.7978846
      %v1162 = vmul.f32 %v1098, 0.7978846
      %v1163 = vmul.f32 %v1099, 0.7978846
      %v1164 = vmul.f32 %v1100, 0.7978846
      %v1165 = vmul.f32 %v1101, 0.7978846
      %v1166 = vmul.f32 %v1102, 0.7978846
      %v1167 = vmul.f32 %v1103, 0.7978846
      %v1168 = vmul.f32 %v1104, 0.7978846
      %v1169 = vmul.f32 %v1105, 0.7978846
      %v1170 = vmul.f32 %v1106, 0.7978846
      %v1171 = vtanh.pop %v1107
      %v1172 = vtanh.pop %v1108
      %v1173 = vtanh.pop %v1109
      %v1174 = vtanh.pop %v1110
      %v1175 = vtanh.pop %v1111
      %v1176 = vtanh.pop %v1112
      %v1177 = vtanh.pop %v1113
      %v1178 = vtanh.pop %v1114
      %v1179 = vtanh.pop %v1115
      %v1180 = vtanh.pop %v1116
      %v1181 = vtanh.pop %v1117
      %v1182 = vtanh.pop %v1118
      %v1183 = vtanh.pop %v1119
      %v1184 = vtanh.pop %v1120
      %v1185 = vtanh.pop %v1121
      %v1186 = vtanh.pop %v1122
      %v1187 = vtanh.pop %v1123
      %v1188 = vtanh.pop %v1124
      %v1189 = vtanh.pop %v1125
      %v1190 = vtanh.pop %v1126
      %v1191 = vtanh.pop %v1127
      %v1192 = vtanh.pop %v1128
      %v1193 = vtanh.pop %v1129
      %v1194 = vtanh.pop %v1130
      %v1195 = vtanh.pop %v1131
      %v1196 = vtanh.pop %v1132
      %v1197 = vtanh.pop %v1133
      %v1198 = vtanh.pop %v1134
      %v1199 = vtanh.pop %v1135
      %v1200 = vtanh.pop %v1136
      %v1201 = vtanh.pop %v1137
      %v1202 = vtanh.pop %v1138
      %v1203 = vtanh.pop %v1139
      %v1204 = vtanh.pop %v1140
      %v1205 = vtanh.pop %v1141
      %v1206 = vtanh.pop %v1142
      %v1207 = vtanh.pop %v1143
      %v1208 = vtanh.pop %v1144
      %v1209 = vtanh.pop %v1145
      %v1210 = vtanh.pop %v1146
      %v1211 = vtanh.pop %v1147
      %v1212 = vtanh.pop %v1148
      %v1213 = vtanh.pop %v1149
      %v1214 = vtanh.pop %v1150
      %v1215 = vtanh.pop %v1151
      %v1216 = vtanh.pop %v1152
      %v1217 = vtanh.pop %v1153
      %v1218 = vtanh.pop %v1154
      %v1219 = vtanh.pop %v1155
      %v1220 = vtanh.pop %v1156
      %v1221 = vtanh.pop %v1157
      %v1222 = vtanh.pop %v1158
      %v1223 = vtanh.pop %v1159
      %v1224 = vtanh.pop %v1160
      %v1225 = vtanh.pop %v1161
      %v1226 = vtanh.pop %v1162
      %v1227 = vtanh.pop %v1163
      %v1228 = vtanh.pop %v1164
      %v1229 = vtanh.pop %v1165
      %v1230 = vtanh.pop %v1166
      %v1231 = vtanh.pop %v1167
      %v1232 = vtanh.pop %v1168
      %v1233 = vtanh.pop %v1169
      %v1234 = vtanh.pop %v1170
      %v1235 = vadd.f32 %v1171, 1.0
      %v1236 = vadd.f32 %v1172, 1.0
      %v1237 = vadd.f32 %v1173, 1.0
      %v1238 = vadd.f32 %v1174, 1.0
      %v1239 = vadd.f32 %v1175, 1.0
      %v1240 = vadd.f32 %v1176, 1.0
      %v1241 = vadd.f32 %v1177, 1.0
      %v1242 = vadd.f32 %v1178, 1.0
      %v1243 = vadd.f32 %v1179, 1.0
      %v1244 = vadd.f32 %v1180, 1.0
      %v1245 = vadd.f32 %v1181, 1.0
      %v1246 = vadd.f32 %v1182, 1.0
      %v1247 = vadd.f32 %v1183, 1.0
      %v1248 = vadd.f32 %v1184, 1.0
      %v1249 = vadd.f32 %v1185, 1.0
      %v1250 = vadd.f32 %v1186, 1.0
      %v1251 = vadd.f32 %v1187, 1.0
      %v1252 = vadd.f32 %v1188, 1.0
      %v1253 = vadd.f32 %v1189, 1.0
      %v1254 = vadd.f32 %v1190, 1.0
      %v1255 = vadd.f32 %v1191, 1.0
      %v1256 = vadd.f32 %v1192, 1.0
      %v1257 = vadd.f32 %v1193, 1.0
      %v1258 = vadd.f32 %v1194, 1.0
      %v1259 = vadd.f32 %v1195, 1.0
      %v1260 = vadd.f32 %v1196, 1.0
      %v1261 = vadd.f32 %v1197, 1.0
      %v1262 = vadd.f32 %v1198, 1.0
      %v1263 = vadd.f32 %v1199, 1.0
      %v1264 = vadd.f32 %v1200, 1.0
      %v1265 = vadd.f32 %v1201, 1.0
      %v1266 = vadd.f32 %v1202, 1.0
      %v1267 = vadd.f32 %v1203, 1.0
      %v1268 = vadd.f32 %v1204, 1.0
      %v1269 = vadd.f32 %v1205, 1.0
      %v1270 = vadd.f32 %v1206, 1.0
      %v1271 = vadd.f32 %v1207, 1.0
      %v1272 = vadd.f32 %v1208, 1.0
      %v1273 = vadd.f32 %v1209, 1.0
      %v1274 = vadd.f32 %v1210, 1.0
      %v1275 = vadd.f32 %v1211, 1.0
      %v1276 = vadd.f32 %v1212, 1.0
      %v1277 = vadd.f32 %v1213, 1.0
      %v1278 = vadd.f32 %v1214, 1.0
      %v1279 = vadd.f32 %v1215, 1.0
      %v1280 = vadd.f32 %v1216, 1.0
      %v1281 = vadd.f32 %v1217, 1.0
      %v1282 = vadd.f32 %v1218, 1.0
      %v1283 = vadd.f32 %v1219, 1.0
      %v1284 = vadd.f32 %v1220, 1.0
      %v1285 = vadd.f32 %v1221, 1.0
      %v1286 = vadd.f32 %v1222, 1.0
      %v1287 = vadd.f32 %v1223, 1.0
      %v1288 = vadd.f32 %v1224, 1.0
      %v1289 = vadd.f32 %v1225, 1.0
      %v1290 = vadd.f32 %v1226, 1.0
      %v1291 = vadd.f32 %v1227, 1.0
      %v1292 = vadd.f32 %v1228, 1.0
      %v1293 = vadd.f32 %v1229, 1.0
      %v1294 = vadd.f32 %v1230, 1.0
      %v1295 = vadd.f32 %v1231, 1.0
      %v1296 = vadd.f32 %v1232, 1.0
      %v1297 = vadd.f32 %v1233, 1.0
      %v1298 = vadd.f32 %v1234, 1.0
      %v1299 = vmul.f32 %v787, %v1235
      %v1300 = vmul.f32 %v788, %v1236
      %v1301 = vmul.f32 %v789, %v1237
      %v1302 = vmul.f32 %v790, %v1238
      %v1303 = vmul.f32 %v791, %v1239
      %v1304 = vmul.f32 %v792, %v1240
      %v1305 = vmul.f32 %v793, %v1241
      %v1306 = vmul.f32 %v794, %v1242
      %v1307 = vmul.f32 %v795, %v1243
      %v1308 = vmul.f32 %v796, %v1244
      %v1309 = vmul.f32 %v797, %v1245
      %v1310 = vmul.f32 %v798, %v1246
      %v1311 = vmul.f32 %v799, %v1247
      %v1312 = vmul.f32 %v800, %v1248
      %v1313 = vmul.f32 %v801, %v1249
      %v1314 = vmul.f32 %v802, %v1250
      %v1315 = vmul.f32 %v803, %v1251
      %v1316 = vmul.f32 %v804, %v1252
      %v1317 = vmul.f32 %v805, %v1253
      %v1318 = vmul.f32 %v806, %v1254
      %v1319 = vmul.f32 %v807, %v1255
      %v1320 = vmul.f32 %v808, %v1256
      %v1321 = vmul.f32 %v809, %v1257
      %v1322 = vmul.f32 %v810, %v1258
      %v1323 = vmul.f32 %v811, %v1259
      %v1324 = vmul.f32 %v812, %v1260
      %v1325 = vmul.f32 %v813, %v1261
      %v1326 = vmul.f32 %v814, %v1262
      %v1327 = vmul.f32 %v815, %v1263
      %v1328 = vmul.f32 %v816, %v1264
      %v1329 = vmul.f32 %v817, %v1265
      %v1330 = vmul.f32 %v818, %v1266
      %v1331 = vmul.f32 %v819, %v1267
      %v1332 = vmul.f32 %v820, %v1268
      %v1333 = vmul.f32 %v821, %v1269
      %v1334 = vmul.f32 %v822, %v1270
      %v1335 = vmul.f32 %v823, %v1271
      %v1336 = vmul.f32 %v824, %v1272
      %v1337 = vmul.f32 %v825, %v1273
      %v1338 = vmul.f32 %v826, %v1274
      %v1339 = vmul.f32 %v827, %v1275
      %v1340 = vmul.f32 %v828, %v1276
      %v1341 = vmul.f32 %v829, %v1277
      %v1342 = vmul.f32 %v830, %v1278
      %v1343 = vmul.f32 %v831, %v1279
      %v1344 = vmul.f32 %v832, %v1280
      %v1345 = vmul.f32 %v833, %v1281
      %v1346 = vmul.f32 %v834, %v1282
      %v1347 = vmul.f32 %v835, %v1283
      %v1348 = vmul.f32 %v836, %v1284
      %v1349 = vmul.f32 %v837, %v1285
      %v1350 = vmul.f32 %v838, %v1286
      %v1351 = vmul.f32 %v839, %v1287
      %v1352 = vmul.f32 %v840, %v1288
      %v1353 = vmul.f32 %v841, %v1289
      %v1354 = vmul.f32 %v842, %v1290
      %v1355 = vmul.f32 %v843, %v1291
      %v1356 = vmul.f32 %v844, %v1292
      %v1357 = vmul.f32 %v845, %v1293
      %v1358 = vmul.f32 %v846, %v1294
      %v1359 = vmul.f32 %v847, %v1295
      %v1360 = vmul.f32 %v848, %v1296
      %v1361 = vmul.f32 %v849, %v1297
      %v1362 = vmul.f32 %v850, %v1298
      %v1363 = vpack.c.bf16 %v1303, %v1299
      %v1364 = vpack.c.bf16 %v1304, %v1300
      %v1365 = vpack.c.bf16 %v1305, %v1301
      %v1366 = vpack.c.bf16 %v1306, %v1302
      %v1367 = vpack.c.bf16 %v1311, %v1307
      %v1368 = vpack.c.bf16 %v1312, %v1308
      %v1369 = vpack.c.bf16 %v1313, %v1309
      %v1370 = vpack.c.bf16 %v1314, %v1310
      %v1371 = vpack.c.bf16 %v1319, %v1315
      %v1372 = vpack.c.bf16 %v1320, %v1316
      %v1373 = vpack.c.bf16 %v1321, %v1317
      %v1374 = vpack.c.bf16 %v1322, %v1318
      %v1375 = vpack.c.bf16 %v1327, %v1323
      %v1376 = vpack.c.bf16 %v1328, %v1324
      %v1377 = vpack.c.bf16 %v1329, %v1325
      %v1378 = vpack.c.bf16 %v1330, %v1326
      %v1379 = vpack.c.bf16 %v1335, %v1331
      %v1380 = vpack.c.bf16 %v1336, %v1332
      %v1381 = vpack.c.bf16 %v1337, %v1333
      %v1382 = vpack.c.bf16 %v1338, %v1334
      %v1383 = vpack.c.bf16 %v1343, %v1339
      %v1384 = vpack.c.bf16 %v1344, %v1340
      %v1385 = vpack.c.bf16 %v1345, %v1341
      %v1386 = vpack.c.bf16 %v1346, %v1342
      %v1387 = vpack.c.bf16 %v1351, %v1347
      %v1388 = vpack.c.bf16 %v1352, %v1348
      %v1389 = vpack.c.bf16 %v1353, %v1349
      %v1390 = vpack.c.bf16 %v1354, %v1350
      %v1391 = vpack.c.bf16 %v1359, %v1355
      %v1392 = vpack.c.bf16 %v1360, %v1356
      %v1393 = vpack.c.bf16 %v1361, %v1357
      %v1394 = vpack.c.bf16 %v1362, %v1358
      %v1395 = vld [vmem:[%s3] sm:$0xf]
      %v1396 = vld [vmem:[%s3 + $0x4] sm:$0xf]
      %v1397 = vld [vmem:[%s3 + $0x8] sm:$0xf]
      %v1398 = vld [vmem:[%s3 + $0xc] sm:$0xf]
      %v1399 = vld [vmem:[%s3 + $0x10] sm:$0xf]
      %v1400 = vld [vmem:[%s3 + $0x14] sm:$0xf]
      %v1401 = vld [vmem:[%s3 + $0x18] sm:$0xf]
      %v1402 = vld [vmem:[%s3 + $0x1c] sm:$0xf]
      %v1403 = vld [vmem:[%s3 + $0x20] sm:$0xf]
      %v1404 = vld [vmem:[%s3 + $0x24] sm:$0xf]
      %v1405 = vld [vmem:[%s3 + $0x28] sm:$0xf]
      %v1406 = vld [vmem:[%s3 + $0x2c] sm:$0xf]
      %v1407 = vld [vmem:[%s3 + $0x30] sm:$0xf]
      %v1408 = vld [vmem:[%s3 + $0x34] sm:$0xf]
      %v1409 = vld [vmem:[%s3 + $0x38] sm:$0xf]
      %v1410 = vld [vmem:[%s3 + $0x3c] sm:$0xf]
      %v1411 = vld [vmem:[%s3 + $0x40] sm:$0xf]
      %v1412 = vld [vmem:[%s3 + $0x44] sm:$0xf]
      %v1413 = vld [vmem:[%s3 + $0x48] sm:$0xf]
      %v1414 = vld [vmem:[%s3 + $0x4c] sm:$0xf]
      %v1415 = vld [vmem:[%s3 + $0x50] sm:$0xf]
      %v1416 = vld [vmem:[%s3 + $0x54] sm:$0xf]
      %v1417 = vld [vmem:[%s3 + $0x58] sm:$0xf]
      %v1418 = vld [vmem:[%s3 + $0x5c] sm:$0xf]
      %v1419 = vld [vmem:[%s3 + $0x60] sm:$0xf]
      %v1420 = vld [vmem:[%s3 + $0x64] sm:$0xf]
      %v1421 = vld [vmem:[%s3 + $0x68] sm:$0xf]
      %v1422 = vld [vmem:[%s3 + $0x6c] sm:$0xf]
      %v1423 = vld [vmem:[%s3 + $0x70] sm:$0xf]
      %v1424 = vld [vmem:[%s3 + $0x74] sm:$0xf]
      %v1425 = vld [vmem:[%s3 + $0x78] sm:$0xf]
      %v1426 = vld [vmem:[%s3 + $0x7c] sm:$0xf]
      %v1427 = vld [vmem:[%s3 + $0x80] sm:$0xf]
      %v1428 = vld [vmem:[%s3 + $0x84] sm:$0xf]
      %v1429 = vld [vmem:[%s3 + $0x88] sm:$0xf]
      %v1430 = vld [vmem:[%s3 + $0x8c] sm:$0xf]
      %v1431 = vld [vmem:[%s3 + $0x90] sm:$0xf]
      %v1432 = vld [vmem:[%s3 + $0x94] sm:$0xf]
      %v1433 = vld [vmem:[%s3 + $0x98] sm:$0xf]
      %v1434 = vld [vmem:[%s3 + $0x9c] sm:$0xf]
      %v1435 = vld [vmem:[%s3 + $0xa0] sm:$0xf]
      %v1436 = vld [vmem:[%s3 + $0xa4] sm:$0xf]
      %v1437 = vld [vmem:[%s3 + $0xa8] sm:$0xf]
      %v1438 = vld [vmem:[%s3 + $0xac] sm:$0xf]
      %v1439 = vld [vmem:[%s3 + $0xb0] sm:$0xf]
      %v1440 = vld [vmem:[%s3 + $0xb4] sm:$0xf]
      %v1441 = vld [vmem:[%s3 + $0xb8] sm:$0xf]
      %v1442 = vld [vmem:[%s3 + $0xbc] sm:$0xf]
      %v1443 = vld [vmem:[%s3 + $0xc0] sm:$0xf]
      %v1444 = vld [vmem:[%s3 + $0xc4] sm:$0xf]
      %v1445 = vld [vmem:[%s3 + $0xc8] sm:$0xf]
      %v1446 = vld [vmem:[%s3 + $0xcc] sm:$0xf]
      %v1447 = vld [vmem:[%s3 + $0xd0] sm:$0xf]
      %v1448 = vld [vmem:[%s3 + $0xd4] sm:$0xf]
      %v1449 = vld [vmem:[%s3 + $0xd8] sm:$0xf]
      %v1450 = vld [vmem:[%s3 + $0xdc] sm:$0xf]
      %v1451 = vld [vmem:[%s3 + $0xe0] sm:$0xf]
      %v1452 = vld [vmem:[%s3 + $0xe4] sm:$0xf]
      %v1453 = vld [vmem:[%s3 + $0xe8] sm:$0xf]
      %v1454 = vld [vmem:[%s3 + $0xec] sm:$0xf]
      %v1455 = vld [vmem:[%s3 + $0xf0] sm:$0xf]
      %v1456 = vld [vmem:[%s3 + $0xf4] sm:$0xf]
      %v1457 = vld [vmem:[%s3 + $0xf8] sm:$0xf]
      %v1458 = vld [vmem:[%s3 + $0xfc] sm:$0xf]
      %v1459 = vld [vmem:[%s4] sm:$0x1]
      %v1461 = vlaneseq
      %v1462 = vshrl.u32 %v1461, 7
      %v1463 = vsub.s32 0, %v1462
      %v1464 = vrot.slane %v1459, %v1463
      %v1530 = vunpack.c.l.b16 %v1395
      %v1531 = vunpack.c.l.b16 %v1396
      %v1532 = vunpack.c.l.b16 %v1397
      %v1533 = vunpack.c.l.b16 %v1398
      %v1534 = vunpack.c.l.b16 %v1399
      %v1535 = vunpack.c.l.b16 %v1400
      %v1536 = vunpack.c.l.b16 %v1401
      %v1537 = vunpack.c.l.b16 %v1402
      %v1538 = vunpack.c.l.b16 %v1403
      %v1539 = vunpack.c.l.b16 %v1404
      %v1540 = vunpack.c.l.b16 %v1405
      %v1541 = vunpack.c.l.b16 %v1406
      %v1542 = vunpack.c.l.b16 %v1407
      %v1543 = vunpack.c.l.b16 %v1408
      %v1544 = vunpack.c.l.b16 %v1409
      %v1545 = vunpack.c.l.b16 %v1410
      %v1546 = vunpack.c.l.b16 %v1411
      %v1547 = vunpack.c.l.b16 %v1412
      %v1548 = vunpack.c.l.b16 %v1413
      %v1549 = vunpack.c.l.b16 %v1414
      %v1550 = vunpack.c.l.b16 %v1415
      %v1551 = vunpack.c.l.b16 %v1416
      %v1552 = vunpack.c.l.b16 %v1417
      %v1553 = vunpack.c.l.b16 %v1418
      %v1554 = vunpack.c.l.b16 %v1419
      %v1555 = vunpack.c.l.b16 %v1420
      %v1556 = vunpack.c.l.b16 %v1421
      %v1557 = vunpack.c.l.b16 %v1422
      %v1558 = vunpack.c.l.b16 %v1423
      %v1559 = vunpack.c.l.b16 %v1424
      %v1560 = vunpack.c.l.b16 %v1425
      %v1561 = vunpack.c.l.b16 %v1426
      %v1562 = vunpack.c.l.b16 %v1427
      %v1563 = vunpack.c.l.b16 %v1428
      %v1564 = vunpack.c.l.b16 %v1429
      %v1565 = vunpack.c.l.b16 %v1430
      %v1566 = vunpack.c.l.b16 %v1431
      %v1567 = vunpack.c.l.b16 %v1432
      %v1568 = vunpack.c.l.b16 %v1433
      %v1569 = vunpack.c.l.b16 %v1434
      %v1570 = vunpack.c.l.b16 %v1435
      %v1571 = vunpack.c.l.b16 %v1436
      %v1572 = vunpack.c.l.b16 %v1437
      %v1573 = vunpack.c.l.b16 %v1438
      %v1574 = vunpack.c.l.b16 %v1439
      %v1575 = vunpack.c.l.b16 %v1440
      %v1576 = vunpack.c.l.b16 %v1441
      %v1577 = vunpack.c.l.b16 %v1442
      %v1578 = vunpack.c.l.b16 %v1443
      %v1579 = vunpack.c.l.b16 %v1444
      %v1580 = vunpack.c.l.b16 %v1445
      %v1581 = vunpack.c.l.b16 %v1446
      %v1582 = vunpack.c.l.b16 %v1447
      %v1583 = vunpack.c.l.b16 %v1448
      %v1584 = vunpack.c.l.b16 %v1449
      %v1585 = vunpack.c.l.b16 %v1450
      %v1586 = vunpack.c.l.b16 %v1451
      %v1587 = vunpack.c.l.b16 %v1452
      %v1588 = vunpack.c.l.b16 %v1453
      %v1589 = vunpack.c.l.b16 %v1454
      %v1590 = vunpack.c.l.b16 %v1455
      %v1591 = vunpack.c.l.b16 %v1456
      %v1592 = vunpack.c.l.b16 %v1457
      %v1593 = vunpack.c.l.b16 %v1458
      %v1594 = vpack.c.b16 %v1531, %v1530
      %v1595 = vpack.c.b16 %v1533, %v1532
      %v1596 = vpack.c.b16 %v1535, %v1534
      %v1597 = vpack.c.b16 %v1537, %v1536
      %v1598 = vpack.c.b16 %v1539, %v1538
      %v1599 = vpack.c.b16 %v1541, %v1540
      %v1600 = vpack.c.b16 %v1543, %v1542
      %v1601 = vpack.c.b16 %v1545, %v1544
      %v1602 = vpack.c.b16 %v1547, %v1546
      %v1603 = vpack.c.b16 %v1549, %v1548
      %v1604 = vpack.c.b16 %v1551, %v1550
      %v1605 = vpack.c.b16 %v1553, %v1552
      %v1606 = vpack.c.b16 %v1555, %v1554
      %v1607 = vpack.c.b16 %v1557, %v1556
      %v1608 = vpack.c.b16 %v1559, %v1558
      %v1609 = vpack.c.b16 %v1561, %v1560
      %v1610 = vpack.c.b16 %v1563, %v1562
      %v1611 = vpack.c.b16 %v1565, %v1564
      %v1612 = vpack.c.b16 %v1567, %v1566
      %v1613 = vpack.c.b16 %v1569, %v1568
      %v1614 = vpack.c.b16 %v1571, %v1570
      %v1615 = vpack.c.b16 %v1573, %v1572
      %v1616 = vpack.c.b16 %v1575, %v1574
      %v1617 = vpack.c.b16 %v1577, %v1576
      %v1618 = vpack.c.b16 %v1579, %v1578
      %v1619 = vpack.c.b16 %v1581, %v1580
      %v1620 = vpack.c.b16 %v1583, %v1582
      %v1621 = vpack.c.b16 %v1585, %v1584
      %v1622 = vpack.c.b16 %v1587, %v1586
      %v1623 = vpack.c.b16 %v1589, %v1588
      %v1624 = vpack.c.b16 %v1591, %v1590
      %v1625 = vpack.c.b16 %v1593, %v1592
      %1658 = vmatprep.subr.bf16.mxu0 0
      %1659 = vmatpush1.bf16.msra.mxu0 %v1594
      %1660 = vmatprep.subr.bf16.mxu0 0
      %1661 = vmatpush1.bf16.msra.mxu0 %v1595
      %1662 = vmatprep.subr.bf16.mxu0 0
      %1663 = vmatpush1.bf16.msra.mxu0 %v1596
      %1664 = vmatprep.subr.bf16.mxu0 0
      %1665 = vmatpush1.bf16.msra.mxu0 %v1597
      %1666 = vmatprep.subr.bf16.mxu0 0
      %1667 = vmatpush1.bf16.msra.mxu0 %v1598
      %1668 = vmatprep.subr.bf16.mxu0 0
      %1669 = vmatpush1.bf16.msra.mxu0 %v1599
      %1670 = vmatprep.subr.bf16.mxu0 0
      %1671 = vmatpush1.bf16.msra.mxu0 %v1600
      %1672 = vmatprep.subr.bf16.mxu0 0
      %1673 = vmatpush1.bf16.msra.mxu0 %v1601
      %1674 = vmatprep.subr.bf16.mxu0 0
      %1675 = vmatpush1.bf16.msra.mxu0 %v1602
      %1676 = vmatprep.subr.bf16.mxu0 0
      %1677 = vmatpush1.bf16.msra.mxu0 %v1603
      %1678 = vmatprep.subr.bf16.mxu0 0
      %1679 = vmatpush1.bf16.msra.mxu0 %v1604
      %1680 = vmatprep.subr.bf16.mxu0 0
      %1681 = vmatpush1.bf16.msra.mxu0 %v1605
      %1682 = vmatprep.subr.bf16.mxu0 0
      %1683 = vmatpush1.bf16.msra.mxu0 %v1606
      %1684 = vmatprep.subr.bf16.mxu0 0
      %1685 = vmatpush1.bf16.msra.mxu0 %v1607
      %1686 = vmatprep.subr.bf16.mxu0 0
      %1687 = vmatpush1.bf16.msra.mxu0 %v1608
      %1688 = vmatprep.subr.bf16.mxu0 0
      %1689 = vmatpush1.bf16.msra.mxu0 %v1609
      %1690 = vmatprep.mubr.bf16.mxu0 %v1364
      %1691 = vmatmul.mubr.bf16.gmra.mrb[0].mxu0 %v1363
      %v1692 = vpop.f32.mrb[0].mxu0
      %v1693 = vadd.f32 %v1464, %v1692
      %v1694 = vpop.f32.mrb[0].mxu0
      %v1695 = vpop.f32.mrb[0].mxu0
      %v1696 = vadd.f32 %v1464, %v1695
      %v1697 = vpop.f32.mrb[0].mxu0
      %1698 = vmatprep.mubr.bf16.mxu0 %v1368
      %1699 = vmatmul.mubr.bf16.gmra.mrb[0].mxu0 %v1367
      %v1700 = vpop.f32.mrb[0].mxu0
      %v1701 = vadd.f32 %v1464, %v1700
      %v1702 = vpop.f32.mrb[0].mxu0
      %v1703 = vpop.f32.mrb[0].mxu0
      %v1704 = vadd.f32 %v1464, %v1703
      %v1705 = vpop.f32.mrb[0].mxu0
      %1706 = vmatprep.mubr.bf16.mxu0 %v1372
      %1707 = vmatmul.mubr.bf16.gmra.mrb[0].mxu0 %v1371
      %v1708 = vpop.f32.mrb[0].mxu0
      %v1709 = vadd.f32 %v1464, %v1708
      %v1710 = vpop.f32.mrb[0].mxu0
      %v1711 = vpop.f32.mrb[0].mxu0
      %v1712 = vadd.f32 %v1464, %v1711
      %v1713 = vpop.f32.mrb[0].mxu0
      %1714 = vmatprep.mubr.bf16.mxu0 %v1376
      %1715 = vmatmul.mubr.bf16.gmra.mrb[0].mxu0 %v1375
      %v1716 = vpop.f32.mrb[0].mxu0
      %v1717 = vadd.f32 %v1464, %v1716
      %v1718 = vpop.f32.mrb[0].mxu0
      %v1719 = vpop.f32.mrb[0].mxu0
      %v1720 = vadd.f32 %v1464, %v1719
      %v1721 = vpop.f32.mrb[0].mxu0
      %1722 = vmatprep.mubr.bf16.mxu0 %v1380
      %1723 = vmatmul.mubr.bf16.gmra.mrb[0].mxu0 %v1379
      %v1724 = vpop.f32.mrb[0].mxu0
      %v1725 = vadd.f32 %v1464, %v1724
      %v1726 = vpop.f32.mrb[0].mxu0
      %v1727 = vpop.f32.mrb[0].mxu0
      %v1728 = vadd.f32 %v1464, %v1727
      %v1729 = vpop.f32.mrb[0].mxu0
      %1730 = vmatprep.mubr.bf16.mxu0 %v1384
      %1731 = vmatmul.mubr.bf16.gmra.mrb[0].mxu0 %v1383
      %v1732 = vpop.f32.mrb[0].mxu0
      %v1733 = vadd.f32 %v1464, %v1732
      %v1734 = vpop.f32.mrb[0].mxu0
      %v1735 = vpop.f32.mrb[0].mxu0
      %v1736 = vadd.f32 %v1464, %v1735
      %v1737 = vpop.f32.mrb[0].mxu0
      %1738 = vmatprep.mubr.bf16.mxu0 %v1388
      %1739 = vmatmul.mubr.bf16.gmra.mrb[0].mxu0 %v1387
      %v1740 = vpop.f32.mrb[0].mxu0
      %v1741 = vadd.f32 %v1464, %v1740
      %v1742 = vpop.f32.mrb[0].mxu0
      %v1743 = vpop.f32.mrb[0].mxu0
      %v1744 = vadd.f32 %v1464, %v1743
      %v1745 = vpop.f32.mrb[0].mxu0
      %1746 = vmatprep.mubr.bf16.mxu0 %v1392
      %1747 = vmatmul.mubr.bf16.gmra.mrb[0].mxu0 %v1391
      %v1748 = vpop.f32.mrb[0].mxu0
      %v1749 = vadd.f32 %v1464, %v1748
      %v1750 = vpop.f32.mrb[0].mxu0
      %v1751 = vpop.f32.mrb[0].mxu0
      %v1752 = vadd.f32 %v1464, %v1751
      %v1753 = vpop.f32.mrb[0].mxu0
      %1754 = vdwg.mxu0
      %1755 = vmatprep.subr.bf16.mxu0 0
      %1756 = vmatpush1.bf16.msra.mxu0 %v1610
      %1757 = vmatprep.subr.bf16.mxu0 0
      %1758 = vmatpush1.bf16.msra.mxu0 %v1611
      %1759 = vmatprep.subr.bf16.mxu0 0
      %1760 = vmatpush1.bf16.msra.mxu0 %v1612
      %1761 = vmatprep.subr.bf16.mxu0 0
      %1762 = vmatpush1.bf16.msra.mxu0 %v1613
      %1763 = vmatprep.subr.bf16.mxu0 0
      %1764 = vmatpush1.bf16.msra.mxu0 %v1614
      %1765 = vmatprep.subr.bf16.mxu0 0
      %1766 = vmatpush1.bf16.msra.mxu0 %v1615
      %1767 = vmatprep.subr.bf16.mxu0 0
      %1768 = vmatpush1.bf16.msra.mxu0 %v1616
      %1769 = vmatprep.subr.bf16.mxu0 0
      %1770 = vmatpush1.bf16.msra.mxu0 %v1617
      %1771 = vmatprep.subr.bf16.mxu0 0
      %1772 = vmatpush1.bf16.msra.mxu0 %v1618
      %1773 = vmatprep.subr.bf16.mxu0 0
      %1774 = vmatpush1.bf16.msra.mxu0 %v1619
      %1775 = vmatprep.subr.bf16.mxu0 0
      %1776 = vmatpush1.bf16.msra.mxu0 %v1620
      %1777 = vmatprep.subr.bf16.mxu0 0
      %1778 = vmatpush1.bf16.msra.mxu0 %v1621
      %1779 = vmatprep.subr.bf16.mxu0 0
      %1780 = vmatpush1.bf16.msra.mxu0 %v1622
      %1781 = vmatprep.subr.bf16.mxu0 0
      %1782 = vmatpush1.bf16.msra.mxu0 %v1623
      %1783 = vmatprep.subr.bf16.mxu0 0
      %1784 = vmatpush1.bf16.msra.mxu0 %v1624
      %1785 = vmatprep.subr.bf16.mxu0 0
      %1786 = vmatpush1.bf16.msra.mxu0 %v1625
      %1787 = vmatprep.mubr.bf16.mxu0 %v1366
      %1788 = vmatmul.mubr.bf16.gmra.mrb[0].mxu0 %v1365
      %v1789 = vpop.f32.mrb[0].mxu0
      %v1790 = vadd.f32 %v1693, %v1789
      %v1791 = vpop.f32.mrb[0].mxu0
      %v1792 = vpop.f32.mrb[0].mxu0
      %v1793 = vadd.f32 %v1696, %v1792
      %v1794 = vpop.f32.mrb[0].mxu0
      %1795 = vmatprep.mubr.bf16.mxu0 %v1370
      %1796 = vmatmul.mubr.bf16.gmra.mrb[0].mxu0 %v1369
      %v1797 = vpop.f32.mrb[0].mxu0
      %v1798 = vadd.f32 %v1701, %v1797
      %v1799 = vpop.f32.mrb[0].mxu0
      %v1800 = vpop.f32.mrb[0].mxu0
      %v1801 = vadd.f32 %v1704, %v1800
      %v1802 = vpop.f32.mrb[0].mxu0
      %1803 = vmatprep.mubr.bf16.mxu0 %v1374
      %1804 = vmatmul.mubr.bf16.gmra.mrb[0].mxu0 %v1373
      %v1805 = vpop.f32.mrb[0].mxu0
      %v1806 = vadd.f32 %v1709, %v1805
      %v1807 = vpop.f32.mrb[0].mxu0
      %v1808 = vpop.f32.mrb[0].mxu0
      %v1809 = vadd.f32 %v1712, %v1808
      %v1810 = vpop.f32.mrb[0].mxu0
      %1811 = vmatprep.mubr.bf16.mxu0 %v1378
      %1812 = vmatmul.mubr.bf16.gmra.mrb[0].mxu0 %v1377
      %v1813 = vpop.f32.mrb[0].mxu0
      %v1814 = vadd.f32 %v1717, %v1813
      %v1815 = vpop.f32.mrb[0].mxu0
      %v1816 = vpop.f32.mrb[0].mxu0
      %v1817 = vadd.f32 %v1720, %v1816
      %v1818 = vpop.f32.mrb[0].mxu0
      %1819 = vmatprep.mubr.bf16.mxu0 %v1382
      %1820 = vmatmul.mubr.bf16.gmra.mrb[0].mxu0 %v1381
      %v1821 = vpop.f32.mrb[0].mxu0
      %v1822 = vadd.f32 %v1725, %v1821
      %v1823 = vpop.f32.mrb[0].mxu0
      %v1824 = vpop.f32.mrb[0].mxu0
      %v1825 = vadd.f32 %v1728, %v1824
      %v1826 = vpop.f32.mrb[0].mxu0
      %1827 = vmatprep.mubr.bf16.mxu0 %v1386
      %1828 = vmatmul.mubr.bf16.gmra.mrb[0].mxu0 %v1385
      %v1829 = vpop.f32.mrb[0].mxu0
      %v1830 = vadd.f32 %v1733, %v1829
      %v1831 = vpop.f32.mrb[0].mxu0
      %v1832 = vpop.f32.mrb[0].mxu0
      %v1833 = vadd.f32 %v1736, %v1832
      %v1834 = vpop.f32.mrb[0].mxu0
      %1835 = vmatprep.mubr.bf16.mxu0 %v1390
      %1836 = vmatmul.mubr.bf16.gmra.mrb[0].mxu0 %v1389
      %v1837 = vpop.f32.mrb[0].mxu0
      %v1838 = vadd.f32 %v1741, %v1837
      %v1839 = vpop.f32.mrb[0].mxu0
      %v1840 = vpop.f32.mrb[0].mxu0
      %v1841 = vadd.f32 %v1744, %v1840
      %v1842 = vpop.f32.mrb[0].mxu0
      %1843 = vmatprep.mubr.bf16.mxu0 %v1394
      %1844 = vmatmul.mubr.bf16.gmra.mrb[0].mxu0 %v1393
      %v1845 = vpop.f32.mrb[0].mxu0
      %v1846 = vadd.f32 %v1749, %v1845
      %v1847 = vpop.f32.mrb[0].mxu0
      %v1848 = vpop.f32.mrb[0].mxu0
      %v1849 = vadd.f32 %v1752, %v1848
      %v1850 = vpop.f32.mrb[0].mxu0
      %1851 = vdwg.mxu0
      %v1852 = vunpack.c.l.bf16 %v283
      %v1853 = vunpack.c.l.bf16 %v284
      %v1854 = vunpack.c.l.bf16 %v285
      %v1855 = vunpack.c.l.bf16 %v286
      %v1856 = vunpack.c.l.bf16 %v287
      %v1857 = vunpack.c.l.bf16 %v288
      %v1858 = vunpack.c.l.bf16 %v289
      %v1859 = vunpack.c.l.bf16 %v290
      %v1860 = vunpack.c.l.bf16 %v291
      %v1861 = vunpack.c.l.bf16 %v292
      %v1862 = vunpack.c.l.bf16 %v293
      %v1863 = vunpack.c.l.bf16 %v294
      %v1864 = vunpack.c.l.bf16 %v295
      %v1865 = vunpack.c.l.bf16 %v296
      %v1866 = vunpack.c.l.bf16 %v297
      %v1867 = vunpack.c.l.bf16 %v298
      %v1868 = vadd.f32 %v1790, %v1852
      %v1869 = vadd.f32 %v1793, %v1853
      %v1870 = vadd.f32 %v1798, %v1854
      %v1871 = vadd.f32 %v1801, %v1855
      %v1872 = vadd.f32 %v1806, %v1856
      %v1873 = vadd.f32 %v1809, %v1857
      %v1874 = vadd.f32 %v1814, %v1858
      %v1875 = vadd.f32 %v1817, %v1859
      %v1876 = vadd.f32 %v1822, %v1860
      %v1877 = vadd.f32 %v1825, %v1861
      %v1878 = vadd.f32 %v1830, %v1862
      %v1879 = vadd.f32 %v1833, %v1863
      %v1880 = vadd.f32 %v1838, %v1864
      %v1881 = vadd.f32 %v1841, %v1865
      %v1882 = vadd.f32 %v1846, %v1866
      %v1883 = vadd.f32 %v1849, %v1867
      %1884 = vadd.xlane.f32.xlu0 %v1868
      %v1885 = vpop.xlane.xlu0 %1884
      %1886 = vadd.xlane.f32.xlu0 %v1869
      %v1887 = vpop.xlane.xlu0 %1886
      %1888 = vadd.xlane.f32.xlu0 %v1870
      %v1889 = vpop.xlane.xlu0 %1888
      %1890 = vadd.xlane.f32.xlu0 %v1871
      %v1891 = vpop.xlane.xlu0 %1890
      %1892 = vadd.xlane.f32.xlu0 %v1872
      %v1893 = vpop.xlane.xlu0 %1892
      %1894 = vadd.xlane.f32.xlu0 %v1873
      %v1895 = vpop.xlane.xlu0 %1894
      %1896 = vadd.xlane.f32.xlu0 %v1874
      %v1897 = vpop.xlane.xlu0 %1896
      %1898 = vadd.xlane.f32.xlu0 %v1875
      %v1899 = vpop.xlane.xlu0 %1898
      %1900 = vadd.xlane.f32.xlu0 %v1876
      %v1901 = vpop.xlane.xlu0 %1900
      %1902 = vadd.xlane.f32.xlu0 %v1877
      %v1903 = vpop.xlane.xlu0 %1902
      %1904 = vadd.xlane.f32.xlu0 %v1878
      %v1905 = vpop.xlane.xlu0 %1904
      %1906 = vadd.xlane.f32.xlu0 %v1879
      %v1907 = vpop.xlane.xlu0 %1906
      %1908 = vadd.xlane.f32.xlu0 %v1880
      %v1909 = vpop.xlane.xlu0 %1908
      %1910 = vadd.xlane.f32.xlu0 %v1881
      %v1911 = vpop.xlane.xlu0 %1910
      %1912 = vadd.xlane.f32.xlu0 %v1882
      %v1913 = vpop.xlane.xlu0 %1912
      %1914 = vadd.xlane.f32.xlu0 %v1883
      %v1915 = vpop.xlane.xlu0 %1914
      %v1916 = vrcp.pop 128.0
      %v1917 = vmul.f32 %v1885, %v1916
      %v1918 = vmul.f32 %v1887, %v1916
      %v1919 = vmul.f32 %v1889, %v1916
      %v1920 = vmul.f32 %v1891, %v1916
      %v1921 = vmul.f32 %v1893, %v1916
      %v1922 = vmul.f32 %v1895, %v1916
      %v1923 = vmul.f32 %v1897, %v1916
      %v1924 = vmul.f32 %v1899, %v1916
      %v1925 = vmul.f32 %v1901, %v1916
      %v1926 = vmul.f32 %v1903, %v1916
      %v1927 = vmul.f32 %v1905, %v1916
      %v1928 = vmul.f32 %v1907, %v1916
      %v1929 = vmul.f32 %v1909, %v1916
      %v1930 = vmul.f32 %v1911, %v1916
      %v1931 = vmul.f32 %v1913, %v1916
      %v1932 = vmul.f32 %v1915, %v1916
      %v1933 = vsub.f32 %v1868, %v1917
      %v1934 = vsub.f32 %v1869, %v1918
      %v1935 = vsub.f32 %v1870, %v1919
      %v1936 = vsub.f32 %v1871, %v1920
      %v1937 = vsub.f32 %v1872, %v1921
      %v1938 = vsub.f32 %v1873, %v1922
      %v1939 = vsub.f32 %v1874, %v1923
      %v1940 = vsub.f32 %v1875, %v1924
      %v1941 = vsub.f32 %v1876, %v1925
      %v1942 = vsub.f32 %v1877, %v1926
      %v1943 = vsub.f32 %v1878, %v1927
      %v1944 = vsub.f32 %v1879, %v1928
      %v1945 = vsub.f32 %v1880, %v1929
      %v1946 = vsub.f32 %v1881, %v1930
      %v1947 = vsub.f32 %v1882, %v1931
      %v1948 = vsub.f32 %v1883, %v1932
      %v1949 = vmul.f32 %v1933, %v1933
      %v1950 = vmul.f32 %v1934, %v1934
      %v1951 = vmul.f32 %v1935, %v1935
      %v1952 = vmul.f32 %v1936, %v1936
      %v1953 = vmul.f32 %v1937, %v1937
      %v1954 = vmul.f32 %v1938, %v1938
      %v1955 = vmul.f32 %v1939, %v1939
      %v1956 = vmul.f32 %v1940, %v1940
      %v1957 = vmul.f32 %v1941, %v1941
      %v1958 = vmul.f32 %v1942, %v1942
      %v1959 = vmul.f32 %v1943, %v1943
      %v1960 = vmul.f32 %v1944, %v1944
      %v1961 = vmul.f32 %v1945, %v1945
      %v1962 = vmul.f32 %v1946, %v1946
      %v1963 = vmul.f32 %v1947, %v1947
      %v1964 = vmul.f32 %v1948, %v1948
      %1965 = vadd.xlane.f32.xlu0 %v1949
      %v1966 = vpop.xlane.xlu0 %1965
      %1967 = vadd.xlane.f32.xlu0 %v1950
      %v1968 = vpop.xlane.xlu0 %1967
      %1969 = vadd.xlane.f32.xlu0 %v1951
      %v1970 = vpop.xlane.xlu0 %1969
      %1971 = vadd.xlane.f32.xlu0 %v1952
      %v1972 = vpop.xlane.xlu0 %1971
      %1973 = vadd.xlane.f32.xlu0 %v1953
      %v1974 = vpop.xlane.xlu0 %1973
      %1975 = vadd.xlane.f32.xlu0 %v1954
      %v1976 = vpop.xlane.xlu0 %1975
      %1977 = vadd.xlane.f32.xlu0 %v1955
      %v1978 = vpop.xlane.xlu0 %1977
      %1979 = vadd.xlane.f32.xlu0 %v1956
      %v1980 = vpop.xlane.xlu0 %1979
      %1981 = vadd.xlane.f32.xlu0 %v1957
      %v1982 = vpop.xlane.xlu0 %1981
      %1983 = vadd.xlane.f32.xlu0 %v1958
      %v1984 = vpop.xlane.xlu0 %1983
      %1985 = vadd.xlane.f32.xlu0 %v1959
      %v1986 = vpop.xlane.xlu0 %1985
      %1987 = vadd.xlane.f32.xlu0 %v1960
      %v1988 = vpop.xlane.xlu0 %1987
      %1989 = vadd.xlane.f32.xlu0 %v1961
      %v1990 = vpop.xlane.xlu0 %1989
      %1991 = vadd.xlane.f32.xlu0 %v1962
      %v1992 = vpop.xlane.xlu0 %1991
      %1993 = vadd.xlane.f32.xlu0 %v1963
      %v1994 = vpop.xlane.xlu0 %1993
      %1995 = vadd.xlane.f32.xlu0 %v1964
      %v1996 = vpop.xlane.xlu0 %1995
      %v1997 = vmul.f32 %v1966, %v1916
      %v1998 = vmul.f32 %v1968, %v1916
      %v1999 = vmul.f32 %v1970, %v1916
      %v2000 = vmul.f32 %v1972, %v1916
      %v2001 = vmul.f32 %v1974, %v1916
      %v2002 = vmul.f32 %v1976, %v1916
      %v2003 = vmul.f32 %v1978, %v1916
      %v2004 = vmul.f32 %v1980, %v1916
      %v2005 = vmul.f32 %v1982, %v1916
      %v2006 = vmul.f32 %v1984, %v1916
      %v2007 = vmul.f32 %v1986, %v1916
      %v2008 = vmul.f32 %v1988, %v1916
      %v2009 = vmul.f32 %v1990, %v1916
      %v2010 = vmul.f32 %v1992, %v1916
      %v2011 = vmul.f32 %v1994, %v1916
      %v2012 = vmul.f32 %v1996, %v1916
      %v2013 = vadd.f32 %v1997, 1e-05
      %v2014 = vadd.f32 %v1998, 1e-05
      %v2015 = vadd.f32 %v1999, 1e-05
      %v2016 = vadd.f32 %v2000, 1e-05
      %v2017 = vadd.f32 %v2001, 1e-05
      %v2018 = vadd.f32 %v2002, 1e-05
      %v2019 = vadd.f32 %v2003, 1e-05
      %v2020 = vadd.f32 %v2004, 1e-05
      %v2021 = vadd.f32 %v2005, 1e-05
      %v2022 = vadd.f32 %v2006, 1e-05
      %v2023 = vadd.f32 %v2007, 1e-05
      %v2024 = vadd.f32 %v2008, 1e-05
      %v2025 = vadd.f32 %v2009, 1e-05
      %v2026 = vadd.f32 %v2010, 1e-05
      %v2027 = vadd.f32 %v2011, 1e-05
      %v2028 = vadd.f32 %v2012, 1e-05
      %v2029 = vrsqrt.pop %v2013
      %v2030 = vrsqrt.pop %v2014
      %v2031 = vrsqrt.pop %v2015
      %v2032 = vrsqrt.pop %v2016
      %v2033 = vrsqrt.pop %v2017
      %v2034 = vrsqrt.pop %v2018
      %v2035 = vrsqrt.pop %v2019
      %v2036 = vrsqrt.pop %v2020
      %v2037 = vrsqrt.pop %v2021
      %v2038 = vrsqrt.pop %v2022
      %v2039 = vrsqrt.pop %v2023
      %v2040 = vrsqrt.pop %v2024
      %v2041 = vrsqrt.pop %v2025
      %v2042 = vrsqrt.pop %v2026
      %v2043 = vrsqrt.pop %v2027
      %v2044 = vrsqrt.pop %v2028
      %v2045 = vmul.f32 %v1933, %v2029
      %v2046 = vmul.f32 %v1934, %v2030
      %v2047 = vmul.f32 %v1935, %v2031
      %v2048 = vmul.f32 %v1936, %v2032
      %v2049 = vmul.f32 %v1937, %v2033
      %v2050 = vmul.f32 %v1938, %v2034
      %v2051 = vmul.f32 %v1939, %v2035
      %v2052 = vmul.f32 %v1940, %v2036
      %v2053 = vmul.f32 %v1941, %v2037
      %v2054 = vmul.f32 %v1942, %v2038
      %v2055 = vmul.f32 %v1943, %v2039
      %v2056 = vmul.f32 %v1944, %v2040
      %v2057 = vmul.f32 %v1945, %v2041
      %v2058 = vmul.f32 %v1946, %v2042
      %v2059 = vmul.f32 %v1947, %v2043
      %v2060 = vmul.f32 %v1948, %v2044
      %v2061 = vld [vmem:[%s5] sm:$0x1]
      %v2063 = vlaneseq
      %v2064 = vshrl.u32 %v2063, 7
      %v2065 = vsub.s32 0, %v2064
      %v2066 = vrot.slane %v2061, %v2065
      %v2068 = vmul.f32 %v2045, %v2066
      %v2069 = vmul.f32 %v2046, %v2066
      %v2070 = vmul.f32 %v2047, %v2066
      %v2071 = vmul.f32 %v2048, %v2066
      %v2072 = vmul.f32 %v2049, %v2066
      %v2073 = vmul.f32 %v2050, %v2066
      %v2074 = vmul.f32 %v2051, %v2066
      %v2075 = vmul.f32 %v2052, %v2066
      %v2076 = vmul.f32 %v2053, %v2066
      %v2077 = vmul.f32 %v2054, %v2066
      %v2078 = vmul.f32 %v2055, %v2066
      %v2079 = vmul.f32 %v2056, %v2066
      %v2080 = vmul.f32 %v2057, %v2066
      %v2081 = vmul.f32 %v2058, %v2066
      %v2082 = vmul.f32 %v2059, %v2066
      %v2083 = vmul.f32 %v2060, %v2066
      %v2084 = vld [vmem:[%s6] sm:$0x1]
      %v2086 = vlaneseq
      %v2087 = vshrl.u32 %v2086, 7
      %v2088 = vsub.s32 0, %v2087
      %v2089 = vrot.slane %v2084, %v2088
      %v2091 = vadd.f32 %v2068, %v2089
      %v2092 = vadd.f32 %v2069, %v2089
      %v2093 = vadd.f32 %v2070, %v2089
      %v2094 = vadd.f32 %v2071, %v2089
      %v2095 = vadd.f32 %v2072, %v2089
      %v2096 = vadd.f32 %v2073, %v2089
      %v2097 = vadd.f32 %v2074, %v2089
      %v2098 = vadd.f32 %v2075, %v2089
      %v2099 = vadd.f32 %v2076, %v2089
      %v2100 = vadd.f32 %v2077, %v2089
      %v2101 = vadd.f32 %v2078, %v2089
      %v2102 = vadd.f32 %v2079, %v2089
      %v2103 = vadd.f32 %v2080, %v2089
      %v2104 = vadd.f32 %v2081, %v2089
      %v2105 = vadd.f32 %v2082, %v2089
      %v2106 = vadd.f32 %v2083, %v2089
      %v2107 = vpack.c.bf16 %v2092, %v2091
      %v2108 = vpack.c.bf16 %v2094, %v2093
      %v2109 = vpack.c.bf16 %v2096, %v2095
      %v2110 = vpack.c.bf16 %v2098, %v2097
      %v2111 = vpack.c.bf16 %v2100, %v2099
      %v2112 = vpack.c.bf16 %v2102, %v2101
      %v2113 = vpack.c.bf16 %v2104, %v2103
      %v2114 = vpack.c.bf16 %v2106, %v2105
      %v2123 = vunpack.c.l.b16 %v2107
      %v2124 = vunpack.c.h.b16 %v2107
      %v2125 = vunpack.c.l.b16 %v2108
      %v2126 = vunpack.c.h.b16 %v2108
      %v2127 = vunpack.c.l.b16 %v2109
      %v2128 = vunpack.c.h.b16 %v2109
      %v2129 = vunpack.c.l.b16 %v2110
      %v2130 = vunpack.c.h.b16 %v2110
      %v2131 = vunpack.c.l.b16 %v2111
      %v2132 = vunpack.c.h.b16 %v2111
      %v2133 = vunpack.c.l.b16 %v2112
      %v2134 = vunpack.c.h.b16 %v2112
      %v2135 = vunpack.c.l.b16 %v2113
      %v2136 = vunpack.c.h.b16 %v2113
      %v2137 = vunpack.c.l.b16 %v2114
      %v2138 = vunpack.c.h.b16 %v2114
      %v2139 = vpack.c.b16 %v2123, %v2123
      %v2140 = vpack.c.b16 %v2124, %v2124
      %v2141 = vpack.c.b16 %v2125, %v2125
      %v2142 = vpack.c.b16 %v2126, %v2126
      %v2143 = vpack.c.b16 %v2127, %v2127
      %v2144 = vpack.c.b16 %v2128, %v2128
      %v2145 = vpack.c.b16 %v2129, %v2129
      %v2146 = vpack.c.b16 %v2130, %v2130
      %v2147 = vpack.c.b16 %v2131, %v2131
      %v2148 = vpack.c.b16 %v2132, %v2132
      %v2149 = vpack.c.b16 %v2133, %v2133
      %v2150 = vpack.c.b16 %v2134, %v2134
      %v2151 = vpack.c.b16 %v2135, %v2135
      %v2152 = vpack.c.b16 %v2136, %v2136
      %v2153 = vpack.c.b16 %v2137, %v2137
      %v2154 = vpack.c.b16 %v2138, %v2138
      %2171 = vst [vmem:[%s280] sm:$0xf] %v2139
      %2172 = vst [vmem:[%s280 + $0x4] sm:$0xf] %v2140
      %2173 = vst [vmem:[%s280 + $0x8] sm:$0xf] %v2141
      %2174 = vst [vmem:[%s280 + $0xc] sm:$0xf] %v2142
      %2175 = vst [vmem:[%s280 + $0x10] sm:$0xf] %v2143
      %2176 = vst [vmem:[%s280 + $0x14] sm:$0xf] %v2144
      %2177 = vst [vmem:[%s280 + $0x18] sm:$0xf] %v2145
      %2178 = vst [vmem:[%s280 + $0x1c] sm:$0xf] %v2146
      %2179 = vst [vmem:[%s280 + $0x20] sm:$0xf] %v2147
      %2180 = vst [vmem:[%s280 + $0x24] sm:$0xf] %v2148
      %2181 = vst [vmem:[%s280 + $0x28] sm:$0xf] %v2149
      %2182 = vst [vmem:[%s280 + $0x2c] sm:$0xf] %v2150
      %2183 = vst [vmem:[%s280 + $0x30] sm:$0xf] %v2151
      %2184 = vst [vmem:[%s280 + $0x34] sm:$0xf] %v2152
      %2185 = vst [vmem:[%s280 + $0x38] sm:$0xf] %v2153
      %2186 = vst [vmem:[%s280 + $0x3c] sm:$0xf] %v2154
      %s2187 = smul.u32 16, %s18
      %p2188 = scmp.lt.s32.totalorder %s2187, 63
      %s2189 = scalar_select %p2188, %s2187, 63
      %s2190 = smul.addr %s2189, 4
      %s2191 = scalar_lea.vmem %s7, %s2190
      // Predicated region
      $region49: #{backbone_forward.15} parent=47 // pred_check
        %p2192 = pneg %p188
      $region50: #{backbone_forward.15} parent=47 // pred_check_branch
        %2194 = sbr.rel (%p2192) target = $region52
      $region51: #{backbone_forward.15} parent=47 // pred_region
        %s2195 = smul.u32 16, %s18
      $region52: #{backbone_forward.15} parent=47 // pred_fallthru
        _
    $region48: #{backbone_forward.15} parent=5 // pred_fallthru
      _
    %p2196 = scmp.le.s32.totalorder 2, %s13
    // Predicated region
    $region53: #{backbone_forward.15} parent=5 // pred_check
      %p2197 = pneg %p2196
    $region54: #{backbone_forward.15} parent=5 // pred_check_branch
      %2199 = sbr.rel (%p2197) target = $region56
    $region55: #{backbone_forward.15} parent=5 // pred_region
      %s2200 = ssub.s32 %s13, 2
      // Predicated region
      $region57: #{backbone_forward.15} parent=55 // pred_check
        %p2201 = pneg %p194
      $region58: #{backbone_forward.15} parent=55 // pred_check_branch
        %2203 = sbr.rel (%p2201) target = $region60
      $region59: #{backbone_forward.15} parent=55 // pred_region
        %s2204 = smul.u32 16, %s19
        %p2205 = scmp.lt.s32.totalorder %s2204, 63
        %s2206 = scalar_select %p2205, %s2204, 63
        %s2207 = smul.addr %s2206, 4
        %s2208 = scalar_lea.vmem %s7, %s2207
      $region60: #{backbone_forward.15} parent=55 // pred_fallthru
        _
    $region56: #{backbone_forward.15} parent=5 // pred_fallthru
      _
  $region6: #{backbone_forward.15} parent=0 // loop_footer
    %s17 = sadd.s32 1, %s13
  $region7: #{backbone_forward.15} parent=0 // loop_footer_branch
    %12 = sbr.rel target = $region3
  $region8: #{backbone_forward.15} parent=0 // loop_exit
    _

// kernel: backbone_forward.13
$region0: #{backbone_forward.13}
  #allocation0 [shape = 'u32[]', space=smem, size = 0x4, offset = 0x4, fixed_abs, tag = 'smem constant byte address 0x4 - core index']
  #allocation1 [shape = 'u32[144,128]{1,0:T(1,128)}', space=vmem, size = 0x12000, scoped, tag = 'internal scratch']
  %s0 = inlined_call_operand.vmem [shape: bf16[2,256,128], index: 0, kind: input, shape index: {}]
  %s1 = inlined_call_operand.vmem [shape: bf16[2,272,128], index: 1, kind: input, shape index: {}]
  %s2 = inlined_call_operand.vmem [shape: bf16[2,272,128], index: 2, kind: input, shape index: {}]
  %s3 = inlined_call_operand.vmem [shape: f32[2,256,1], index: 3, kind: input, shape index: {}]
  %s4 = inlined_call_operand.vmem [shape: bf16[2,256,128], index: 4, kind: output, shape index: {}]
  %s5 = sld [smem:[#allocation0]]
  $region49: #{backbone_forward.13} parent=0
    _
  %s7 = ssub.s32 1, %s5
  %s8 = scalar_select 0, %s7, %s5
  loop: start=0, step=1, limit=10
  $region2: #{backbone_forward.13} parent=0 // loop_pre_header
    _
  $region3: #{backbone_forward.13} parent=0 // loop_header
    %s10 = sphi 0, %s14
    %p11 = scmp.ge.s32.totalorder %s10, 10
    %s17 = sphi 0, %s29
    %s18 = sphi 0, %s25
    %s19 = sphi 0, %s17
    %s20 = sphi 0, %s18
    %s21 = sphi 0, %s19
    %s22 = sphi 0, %s20
    %s34 = sphi 0, %s36
    %s37 = sphi 0, %s34
    %s38 = sphi 0, %s37
    %s54 = sphi 0, %s38
    %s60 = sphi 0, %s62
    %s63 = sphi 0, %s60
    %s64 = sphi 0, %s63
    %s80 = sphi 0, %s64
    %s86 = sphi 0, %s88
    %s89 = sphi 0, %s86
    %s90 = sphi 0, %s89
    %s106 = sphi 0, %s90
    %s114 = sphi 0, %s116
    %s117 = sphi 0, %s114
    %s118 = sphi 0, %s117
    %s134 = sphi 0, %s118
    %s142 = sphi 0, %s144
    %s145 = sphi 0, %s142
    %s146 = sphi 0, %s145
    %s162 = sphi 0, %s146
  $region4: #{backbone_forward.13} parent=0 // loop_header_branch
    %13 = sbr.rel (%p11) target = $region8
  $region5: #{backbone_forward.13} parent=0 // loop_body
    %s15 = ssub.s32 %s10, 1
    %s16 = ssub.s32 %s10, 2
    %s23 = sadd.s32 1, %s18
    %p24 = scmp.ge.s32.totalorder %s23, 4
    %s25 = scalar_select %p24, 0, %s23
    %s26 = sadd.s32 1, %s17
    %s27 = scalar_select %p24, %s26, %s17
    %p28 = scmp.ge.s32.totalorder %s27, 2
    %s29 = scalar_select %p28, 0, %s27
    %s30 = ssub.s32 %s17, %s29
    %s31 = ssub.s32 %s18, %s25
    %s32 = sor.u32 %s30, %s31
    %p33 = scmp.eq.s32.totalorder %s32, 0
    %s35 = sadd.s32 %s34, 1
    %s36 = scalar_select %p33, %s34, %s35
    %p39 = pneg %p33
    %p40 = scmp.eq.s32.totalorder %s10, 7
    %p41 = por %p39, %p40
    %p42 = scmp.ne.s32.totalorder %s34, %s37
    %p43 = scmp.eq.s32.totalorder %s10, 0
    %p44 = por %p42, %p43
    %p45 = scmp.ne.s32.totalorder %s34, %s37
    %p46 = scmp.eq.s32.totalorder %s15, 7
    %p47 = por %p45, %p46
    %p48 = scmp.ne.s32.totalorder %s37, %s38
    %p49 = scmp.eq.s32.totalorder %s15, 0
    %p50 = por %p48, %p49
    %p51 = scmp.ne.s32.totalorder %s37, %s38
    %p52 = scmp.eq.s32.totalorder %s16, 7
    %p53 = por %p51, %p52
    %p55 = scmp.ne.s32.totalorder %s38, %s54
    %p56 = scmp.eq.s32.totalorder %s16, 0
    %p57 = por %p55, %p56
    %s58 = ssub.s32 %s17, %s29
    %p59 = scmp.eq.s32.totalorder %s58, 0
    %s61 = sadd.s32 %s60, 1
    %s62 = scalar_select %p59, %s60, %s61
    %p65 = pneg %p59
    %p66 = scmp.eq.s32.totalorder %s10, 7
    %p67 = por %p65, %p66
    %p68 = scmp.ne.s32.totalorder %s60, %s63
    %p69 = scmp.eq.s32.totalorder %s10, 0
    %p70 = por %p68, %p69
    %p71 = scmp.ne.s32.totalorder %s60, %s63
    %p72 = scmp.eq.s32.totalorder %s15, 7
    %p73 = por %p71, %p72
    %p74 = scmp.ne.s32.totalorder %s63, %s64
    %p75 = scmp.eq.s32.totalorder %s15, 0
    %p76 = por %p74, %p75
    %p77 = scmp.ne.s32.totalorder %s63, %s64
    %p78 = scmp.eq.s32.totalorder %s16, 7
    %p79 = por %p77, %p78
    %p81 = scmp.ne.s32.totalorder %s64, %s80
    %p82 = scmp.eq.s32.totalorder %s16, 0
    %p83 = por %p81, %p82
    %s84 = ssub.s32 %s17, %s29
    %p85 = scmp.eq.s32.totalorder %s84, 0
    %s87 = sadd.s32 %s86, 1
    %s88 = scalar_select %p85, %s86, %s87
    %p91 = pneg %p85
    %p92 = scmp.eq.s32.totalorder %s10, 7
    %p93 = por %p91, %p92
    %p94 = scmp.ne.s32.totalorder %s86, %s89
    %p95 = scmp.eq.s32.totalorder %s10, 0
    %p96 = por %p94, %p95
    %p97 = scmp.ne.s32.totalorder %s86, %s89
    %p98 = scmp.eq.s32.totalorder %s15, 7
    %p99 = por %p97, %p98
    %p100 = scmp.ne.s32.totalorder %s89, %s90
    %p101 = scmp.eq.s32.totalorder %s15, 0
    %p102 = por %p100, %p101
    %p103 = scmp.ne.s32.totalorder %s89, %s90
    %p104 = scmp.eq.s32.totalorder %s16, 7
    %p105 = por %p103, %p104
    %p107 = scmp.ne.s32.totalorder %s90, %s106
    %p108 = scmp.eq.s32.totalorder %s16, 0
    %p109 = por %p107, %p108
    %s110 = ssub.s32 %s17, %s29
    %s111 = ssub.s32 %s18, %s25
    %s112 = sor.u32 %s110, %s111
    %p113 = scmp.eq.s32.totalorder %s112, 0
    %s115 = sadd.s32 %s114, 1
    %s116 = scalar_select %p113, %s114, %s115
    %p119 = pneg %p113
    %p120 = scmp.eq.s32.totalorder %s10, 7
    %p121 = por %p119, %p120
    %p122 = scmp.ne.s32.totalorder %s114, %s117
    %p123 = scmp.eq.s32.totalorder %s10, 0
    %p124 = por %p122, %p123
    %p125 = scmp.ne.s32.totalorder %s114, %s117
    %p126 = scmp.eq.s32.totalorder %s15, 7
    %p127 = por %p125, %p126
    %p128 = scmp.ne.s32.totalorder %s117, %s118
    %p129 = scmp.eq.s32.totalorder %s15, 0
    %p130 = por %p128, %p129
    %p131 = scmp.ne.s32.totalorder %s117, %s118
    %p132 = scmp.eq.s32.totalorder %s16, 7
    %p133 = por %p131, %p132
    %p135 = scmp.ne.s32.totalorder %s118, %s134
    %p136 = scmp.eq.s32.totalorder %s16, 0
    %p137 = por %p135, %p136
    %s138 = ssub.s32 %s17, %s29
    %s139 = ssub.s32 %s18, %s25
    %s140 = sor.u32 %s138, %s139
    %p141 = scmp.eq.s32.totalorder %s140, 0
    %s143 = sadd.s32 %s142, 1
    %s144 = scalar_select %p141, %s142, %s143
    %p147 = pneg %p141
    %p148 = scmp.eq.s32.totalorder %s10, 7
    %p149 = por %p147, %p148
    %p150 = scmp.ne.s32.totalorder %s142, %s145
    %p151 = scmp.eq.s32.totalorder %s10, 0
    %p152 = por %p150, %p151
    %p153 = scmp.ne.s32.totalorder %s142, %s145
    %p154 = scmp.eq.s32.totalorder %s15, 7
    %p155 = por %p153, %p154
    %p156 = scmp.ne.s32.totalorder %s145, %s146
    %p157 = scmp.eq.s32.totalorder %s15, 0
    %p158 = por %p156, %p157
    %p159 = scmp.ne.s32.totalorder %s145, %s146
    %p160 = scmp.eq.s32.totalorder %s16, 7
    %p161 = por %p159, %p160
    %p163 = scmp.ne.s32.totalorder %s146, %s162
    %p164 = scmp.eq.s32.totalorder %s16, 0
    %p165 = por %p163, %p164
    %p166 = scmp.le.s32.totalorder 1, %s10
    %p167 = scmp.lt.s32.totalorder %s10, 9
    %p168 = pnand %p166, %p167
    %p169 = pneg %p168
    // Predicated region
    $region9: #{backbone_forward.13} parent=5 // pred_check
      _
    $region10: #{backbone_forward.13} parent=5 // pred_check_branch
      %171 = sbr.rel (%p168) target = $region12
    $region11: #{backbone_forward.13} parent=5 // pred_region
      %s172 = ssub.s32 %s10, 1
    $region12: #{backbone_forward.13} parent=5 // pred_fallthru
      _
    %p173 = scmp.lt.s32.totalorder %s10, 8
    // Predicated region
    $region13: #{backbone_forward.13} parent=5 // pred_check
      %p174 = pneg %p173
    $region14: #{backbone_forward.13} parent=5 // pred_check_branch
      %176 = sbr.rel (%p174) target = $region16
    $region15: #{backbone_forward.13} parent=5 // pred_region
      // Predicated region
      $region17: #{backbone_forward.13} parent=15 // pred_check
        %p177 = pneg %p44
      $region18: #{backbone_forward.13} parent=15 // pred_check_branch
        %179 = sbr.rel (%p177) target = $region20
      $region19: #{backbone_forward.13} parent=15 // pred_region
        %s180 = smul.u32 8, %s18
        %p181 = scmp.lt.s32.totalorder %s17, 1
        %s182 = scalar_select %p181, %s17, 1
        %p183 = scmp.lt.s32.totalorder %s180, 31
        %s184 = scalar_select %p183, %s180, 31
        %s185 = smul.addr %s182, 32
        %s186 = sadd.s32 %s184, %s185
        %s187 = smul.addr %s186, 4
        %s188 = scalar_lea.vmem %s0, %s187
        %s189 = smul.u32 8, %s18
      $region20: #{backbone_forward.13} parent=15 // pred_fallthru
        _
      // Predicated region
      $region21: #{backbone_forward.13} parent=15 // pred_check
        %p190 = pneg %p70
      $region22: #{backbone_forward.13} parent=15 // pred_check_branch
        %192 = sbr.rel (%p190) target = $region24
      $region23: #{backbone_forward.13} parent=15 // pred_region
        %p193 = scmp.lt.s32.totalorder %s17, 1
        %s194 = scalar_select %p193, %s17, 1
        %s195 = smul.addr %s194, 34
        %s196 = smul.addr %s195, 4
        %s197 = scalar_lea.vmem %s1, %s196
      $region24: #{backbone_forward.13} parent=15 // pred_fallthru
        _
      // Predicated region
      $region25: #{backbone_forward.13} parent=15 // pred_check
        %p198 = pneg %p96
      $region26: #{backbone_forward.13} parent=15 // pred_check_branch
        %200 = sbr.rel (%p198) target = $region28
      $region27: #{backbone_forward.13} parent=15 // pred_region
        %p201 = scmp.lt.s32.totalorder %s17, 1
        %s202 = scalar_select %p201, %s17, 1
        %s203 = smul.addr %s202, 34
        %s204 = smul.addr %s203, 4
        %s205 = scalar_lea.vmem %s2, %s204
      $region28: #{backbone_forward.13} parent=15 // pred_fallthru
        _
      // Predicated region
      $region29: #{backbone_forward.13} parent=15 // pred_check
        %p206 = pneg %p124
      $region30: #{backbone_forward.13} parent=15 // pred_check_branch
        %208 = sbr.rel (%p206) target = $region32
      $region31: #{backbone_forward.13} parent=15 // pred_region
        %s209 = smul.u32 8, %s18
        %p210 = scmp.lt.s32.totalorder %s17, 1
        %s211 = scalar_select %p210, %s17, 1
        %p212 = scmp.lt.s32.totalorder %s209, 31
        %s213 = scalar_select %p212, %s209, 31
        %s214 = smul.addr %s211, 32
        %s215 = sadd.s32 %s213, %s214
        %s216 = smul.addr %s215, 8
        %s217 = scalar_lea.vmem %s3, %s216
        %s218 = smul.u32 8, %s18
      $region32: #{backbone_forward.13} parent=15 // pred_fallthru
        _
    $region16: #{backbone_forward.13} parent=5 // pred_fallthru
      _
    %p219 = scmp.le.s32.totalorder 1, %s10
    %p220 = scmp.lt.s32.totalorder %s10, 9
    %p221 = pnand %p219, %p220
    %p222 = pneg %p221
    // Predicated region
    $region33: #{backbone_forward.13} parent=5 // pred_check
      _
    $region34: #{backbone_forward.13} parent=5 // pred_check_branch
      %224 = sbr.rel (%p221) target = $region36
    $region35: #{backbone_forward.13} parent=5 // pred_region
      %s225 = ssub.s32 %s10, 1
      %s226 = smul.u32 8, %s20
      %p227 = scmp.lt.s32.totalorder %s19, 1
      %s228 = scalar_select %p227, %s19, 1
      %p229 = scmp.lt.s32.totalorder %s226, 31
      %s230 = scalar_select %p229, %s226, 31
      %s231 = smul.addr %s228, 32
      %s232 = sadd.s32 %s230, %s231
      %s233 = smul.addr %s232, 4
      %s234 = scalar_lea.vmem %s0, %s233
      %p235 = pneg %p50
      %p236 = pneg %p47
      %p237 = scmp.lt.s32.totalorder %s19, 1
      %s238 = scalar_select %p237, %s19, 1
      %s239 = smul.addr %s238, 34
      %s240 = smul.addr %s239, 4
      %s241 = scalar_lea.vmem %s1, %s240
      %p242 = pneg %p76
      %p243 = pneg %p73
      %p244 = scmp.lt.s32.totalorder %s19, 1
      %s245 = scalar_select %p244, %s19, 1
      %s246 = smul.addr %s245, 34
      %s247 = smul.addr %s246, 4
      %s248 = scalar_lea.vmem %s2, %s247
      %p249 = pneg %p102
      %p250 = pneg %p99
      %s251 = smul.u32 8, %s20
      %p252 = scmp.lt.s32.totalorder %s19, 1
      %s253 = scalar_select %p252, %s19, 1
      %p254 = scmp.lt.s32.totalorder %s251, 31
      %s255 = scalar_select %p254, %s251, 31
      %s256 = smul.addr %s253, 32
      %s257 = sadd.s32 %s255, %s256
      %s258 = smul.addr %s257, 8
      %s259 = scalar_lea.vmem %s3, %s258
      %p260 = pneg %p130
      %p261 = pneg %p127
      %p262 = pneg %p158
      %p263 = pneg %p155
      %s264 = smul.u32 8, %s20
      %p265 = scmp.lt.s32.totalorder %s19, 1
      %s266 = scalar_select %p265, %s19, 1
      %p267 = scmp.lt.s32.totalorder %s264, 31
      %s268 = scalar_select %p267, %s264, 31
      %s269 = smul.addr %s266, 32
      %s270 = sadd.s32 %s268, %s269
      %s271 = smul.addr %s270, 4
      %s272 = scalar_lea.vmem %s4, %s271
      %s273 = smul.u32 8, %s20
      %p274 = scmp.lt.s32.totalorder %s19, 1
      %s275 = scalar_select %p274, %s19, 1
      %p276 = scmp.lt.s32.totalorder %s273, 31
      %s277 = scalar_select %p276, %s273, 31
      %s278 = smul.addr %s275, 32
      %s279 = sadd.s32 %s277, %s278
      %s280 = smul.addr %s279, 4
      %s281 = scalar_lea.vmem %s0, %s280
      %s282 = smul.u32 8, %s20
      %p283 = scmp.lt.s32.totalorder %s19, 1
      %s284 = scalar_select %p283, %s19, 1
      %s285 = smul.addr %s284, 34
      %s286 = smul.addr %s285, 4
      %s287 = scalar_lea.vmem %s1, %s286
      %p288 = scmp.lt.s32.totalorder %s19, 1
      %s289 = scalar_select %p288, %s19, 1
      %s290 = smul.addr %s289, 34
      %s291 = smul.addr %s290, 4
      %s292 = scalar_lea.vmem %s2, %s291
      %s293 = smul.u32 8, %s20
      %p294 = scmp.lt.s32.totalorder %s19, 1
      %s295 = scalar_select %p294, %s19, 1
      %p296 = scmp.lt.s32.totalorder %s293, 31
      %s297 = scalar_select %p296, %s293, 31
      %s298 = smul.addr %s295, 32
      %s299 = sadd.s32 %s297, %s298
      %s300 = smul.addr %s299, 8
      %s301 = scalar_lea.vmem %s3, %s300
      %s302 = smul.u32 8, %s20
      %s303 = smul.u32 8, %s20
      %p304 = scmp.lt.s32.totalorder %s19, 1
      %s305 = scalar_select %p304, %s19, 1
      %p306 = scmp.lt.s32.totalorder %s303, 31
      %s307 = scalar_select %p306, %s303, 31
      %s308 = smul.addr %s305, 32
      %s309 = sadd.s32 %s307, %s308
      %s310 = smul.addr %s309, 4
      %s311 = scalar_lea.vmem %s4, %s310
      %s312 = smul.u32 8, %s20
      %s314 = smul.u32 %s20, 64
      %v315 = vld [vmem:[%s281] sm:$0xf]
      %v316 = vld [vmem:[%s281 + $0x4] sm:$0xf]
      %v317 = vld [vmem:[%s281 + $0x8] sm:$0xf]
      %v318 = vld [vmem:[%s281 + $0xc] sm:$0xf]
      %v319 = vld [vmem:[%s281 + $0x10] sm:$0xf]
      %v320 = vld [vmem:[%s281 + $0x14] sm:$0xf]
      %v321 = vld [vmem:[%s281 + $0x18] sm:$0xf]
      %v322 = vld [vmem:[%s281 + $0x1c] sm:$0xf]
      %s323 = sshra.s32 %s314, 3
      %s324 = sand.u32 %s314, 7
      %s325 = smul.addr %s323, 4
      %s326 = scalar_lea.vmem %s287, %s325
      %v327 = vld [vmem:[%s326] sm:$0xf]
      %v328 = vld [vmem:[%s326 + $0x4] sm:$0xf]
      %v329 = vld [vmem:[%s326 + $0x8] sm:$0xf]
      %v330 = vld [vmem:[%s326 + $0xc] sm:$0xf]
      %v331 = vld [vmem:[%s326 + $0x10] sm:$0xf]
      %v332 = vld [vmem:[%s326 + $0x14] sm:$0xf]
      %v333 = vld [vmem:[%s326 + $0x18] sm:$0xf]
      %v334 = vld [vmem:[%s326 + $0x1c] sm:$0xf]
      %v335 = vld [vmem:[%s326 + $0x20] sm:$0xf]
      %v336 = vld [vmem:[%s326 + $0x24] sm:$0xf]
      %s337 = smul.addr %s323, 4
      %s338 = scalar_lea.vmem %s292, %s337
      %v339 = vld [vmem:[%s338] sm:$0xf]
      %v340 = vld [vmem:[%s338 + $0x4] sm:$0xf]
      %v341 = vld [vmem:[%s338 + $0x8] sm:$0xf]
      %v342 = vld [vmem:[%s338 + $0xc] sm:$0xf]
      %v343 = vld [vmem:[%s338 + $0x10] sm:$0xf]
      %v344 = vld [vmem:[%s338 + $0x14] sm:$0xf]
      %v345 = vld [vmem:[%s338 + $0x18] sm:$0xf]
      %v346 = vld [vmem:[%s338 + $0x1c] sm:$0xf]
      %v347 = vld [vmem:[%s338 + $0x20] sm:$0xf]
      %v348 = vld [vmem:[%s338 + $0x24] sm:$0xf]
      %v349 = vld [vmem:[%s301] sm:$0xff]
      %v350 = vld [vmem:[%s301 + $0x8] sm:$0xff]
      %v351 = vld [vmem:[%s301 + $0x10] sm:$0xff]
      %v352 = vld [vmem:[%s301 + $0x18] sm:$0xff]
      %v353 = vld [vmem:[%s301 + $0x20] sm:$0xff]
      %v354 = vld [vmem:[%s301 + $0x28] sm:$0xff]
      %v355 = vld [vmem:[%s301 + $0x30] sm:$0xff]
      %v356 = vld [vmem:[%s301 + $0x38] sm:$0xff]
      %s357 = ssub.s32 %s314, 8
      %v358 = vlaneseq
      %v359 = vand.u32 %v358, 127
      %v360 = vstv %s357
      %v361 = vadd.s32 %v360, %v359
      %vm362 = vcmp.ge.s32.totalorder %v361, 0
      %vm363 = vcmp.lt.s32.totalorder %v361, 256
      %vm364 = vmand %vm362, %vm363
      %v373 = vunpack.c.l.b16 %v315
      %v374 = vunpack.c.l.b16 %v316
      %v375 = vunpack.c.l.b16 %v317
      %v376 = vunpack.c.l.b16 %v318
      %v377 = vunpack.c.l.b16 %v319
      %v378 = vunpack.c.l.b16 %v320
      %v379 = vunpack.c.l.b16 %v321
      %v380 = vunpack.c.l.b16 %v322
      %v381 = vpack.c.b16 %v374, %v373
      %v382 = vpack.c.b16 %v376, %v375
      %v383 = vpack.c.b16 %v378, %v377
      %v384 = vpack.c.b16 %v380, %v379
      %v395 = vunpack.c.l.b16 %v327
      %v396 = vunpack.c.l.b16 %v328
      %v397 = vunpack.c.l.b16 %v329
      %v398 = vunpack.c.l.b16 %v330
      %v399 = vunpack.c.l.b16 %v331
      %v400 = vunpack.c.l.b16 %v332
      %v401 = vunpack.c.l.b16 %v333
      %v402 = vunpack.c.l.b16 %v334
      %v403 = vunpack.c.l.b16 %v335
      %v404 = vunpack.c.l.b16 %v336
      %v405 = vpack.c.b16 %v396, %v395
      %v406 = vpack.c.b16 %v398, %v397
      %v407 = vpack.c.b16 %v400, %v399
      %v408 = vpack.c.b16 %v402, %v401
      %v409 = vpack.c.b16 %v404, %v403
      %vm410 = vcmask 130048
      %v412 = vsel %vm410, %v381, 0
      %v415 = vsel %vm410, %v382, 0
      %v418 = vsel %vm410, %v383, 0
      %v421 = vsel %vm410, %v384, 0
      %v424 = vsel %vm410, %v405, 0
      %v427 = vsel %vm410, %v406, 0
      %v430 = vsel %vm410, %v407, 0
      %v433 = vsel %vm410, %v408, 0
      %v436 = vsel %vm410, %v409, 0
      %438 = vmatprep.subr.bf16.mxu0 0
      %439 = vmatpush1.bf16.xpose.msra.mxu0 %v424
      %440 = vmatprep.subr.bf16.mxu0 0
      %441 = vmatpush1.bf16.xpose.msra.mxu0 %v427
      %442 = vmatprep.subr.bf16.mxu0 0
      %443 = vmatpush1.bf16.xpose.msra.mxu0 %v430
      %444 = vmatprep.subr.bf16.mxu0 0
      %445 = vmatpush1.bf16.xpose.msra.mxu0 %v433
      %446 = vmatprep.subr.bf16.mxu0 0
      %447 = vmatpush1.bf16.xpose.msra.mxu0 %v436
      %448 = vmatprep.subr.bf16.mxu0 0
      %449 = vmatpush1.bf16.xpose.msra.mxu0 0
      %450 = vmatprep.subr.bf16.mxu0 0
      %451 = vmatpush1.bf16.xpose.msra.mxu0 0
      %452 = vmatprep.subr.bf16.mxu0 0
      %453 = vmatpush1.bf16.xpose.msra.mxu0 0
      %454 = vmatprep.subr.bf16.mxu0 0
      %455 = vmatpush1.bf16.xpose.msra.mxu0 0
      %456 = vmatprep.subr.bf16.mxu0 0
      %457 = vmatpush1.bf16.xpose.msra.mxu0 0
      %458 = vmatprep.subr.bf16.mxu0 0
      %459 = vmatpush1.bf16.xpose.msra.mxu0 0
      %460 = vmatprep.subr.bf16.mxu0 0
      %461 = vmatpush1.bf16.xpose.msra.mxu0 0
      %462 = vmatprep.subr.bf16.mxu0 0
      %463 = vmatpush1.bf16.xpose.msra.mxu0 0
      %464 = vmatprep.subr.bf16.mxu0 0
      %465 = vmatpush1.bf16.xpose.msra.mxu0 0
      %466 = vmatprep.subr.bf16.mxu0 0
      %467 = vmatpush1.bf16.xpose.msra.mxu0 0
      %468 = vmatprep.subr.bf16.mxu0 0
      %469 = vmatpush1.bf16.xpose.msra.mxu0 0
      %470 = vmatprep.mubr.bf16.mxu0 0
      %471 = vmatmul.mubr.bf16.gmra.mrb[0].mxu0 %v412
      %v472 = vpop.f32.mrb[0].mxu0
      %v473 = vadd.f32 0.0, %v472
      %v474 = vpop.f32.mrb[0].mxu0
      %v475 = vpop.f32.mrb[0].mxu0
      %v476 = vadd.f32 0.0, %v475
      %v477 = vpop.f32.mrb[0].mxu0
      %478 = vmatprep.mubr.bf16.mxu0 0
      %479 = vmatmul.mubr.bf16.gmra.mrb[0].mxu0 %v415
      %v480 = vpop.f32.mrb[0].mxu0
      %v481 = vadd.f32 0.0, %v480
      %v482 = vpop.f32.mrb[0].mxu0
      %v483 = vpop.f32.mrb[0].mxu0
      %v484 = vadd.f32 0.0, %v483
      %v485 = vpop.f32.mrb[0].mxu0
      %486 = vmatprep.mubr.bf16.mxu0 0
      %487 = vmatmul.mubr.bf16.gmra.mrb[0].mxu0 %v418
      %v488 = vpop.f32.mrb[0].mxu0
      %v489 = vadd.f32 0.0, %v488
      %v490 = vpop.f32.mrb[0].mxu0
      %v491 = vpop.f32.mrb[0].mxu0
      %v492 = vadd.f32 0.0, %v491
      %v493 = vpop.f32.mrb[0].mxu0
      %494 = vmatprep.mubr.bf16.mxu0 0
      %495 = vmatmul.mubr.bf16.gmra.mrb[0].mxu0 %v421
      %v496 = vpop.f32.mrb[0].mxu0
      %v497 = vadd.f32 0.0, %v496
      %v498 = vpop.f32.mrb[0].mxu0
      %v499 = vpop.f32.mrb[0].mxu0
      %v500 = vadd.f32 0.0, %v499
      %v501 = vpop.f32.mrb[0].mxu0
      %502 = vdwg.mxu0
      %vm503 = vcmp.gt.f32.partialorder %v349, 0.0
      %vm504 = vcmp.gt.f32.partialorder %v350, 0.0
      %vm505 = vcmp.gt.f32.partialorder %v351, 0.0
      %vm506 = vcmp.gt.f32.partialorder %v352, 0.0
      %vm507 = vcmp.gt.f32.partialorder %v353, 0.0
      %vm508 = vcmp.gt.f32.partialorder %v354, 0.0
      %vm509 = vcmp.gt.f32.partialorder %v355, 0.0
      %vm510 = vcmp.gt.f32.partialorder %v356, 0.0
      %v511 = vsel %vm503, 1, 0
      %v512 = vsel %vm504, 1, 0
      %v513 = vsel %vm505, 1, 0
      %v514 = vsel %vm506, 1, 0
      %v515 = vsel %vm507, 1, 0
      %v516 = vsel %vm508, 1, 0
      %v517 = vsel %vm509, 1, 0
      %v518 = vsel %vm510, 1, 0
      %519 = vset.pattern.permute.xlu0 0
      %520 = vperm.xlu0 %519, %v511
      %v521 = vpop.permute.xlu0 %520
      %522 = vset.pattern.permute.xlu0 0
      %523 = vperm.xlu0 %522, %v512
      %v524 = vpop.permute.xlu0 %523
      %525 = vset.pattern.permute.xlu0 0
      %526 = vperm.xlu0 %525, %v513
      %v527 = vpop.permute.xlu0 %526
      %528 = vset.pattern.permute.xlu0 0
      %529 = vperm.xlu0 %528, %v514
      %v530 = vpop.permute.xlu0 %529
      %531 = vset.pattern.permute.xlu0 0
      %532 = vperm.xlu0 %531, %v515
      %v533 = vpop.permute.xlu0 %532
      %534 = vset.pattern.permute.xlu0 0
      %535 = vperm.xlu0 %534, %v516
      %v536 = vpop.permute.xlu0 %535
      %537 = vset.pattern.permute.xlu0 0
      %538 = vperm.xlu0 %537, %v517
      %v539 = vpop.permute.xlu0 %538
      %540 = vset.pattern.permute.xlu0 0
      %541 = vperm.xlu0 %540, %v518
      %v542 = vpop.permute.xlu0 %541
      %vm543 = vcmp.eq.s32.totalorder %v521, 1
      %vm544 = vcmp.eq.s32.totalorder %v524, 1
      %vm545 = vcmp.eq.s32.totalorder %v527, 1
      %vm546 = vcmp.eq.s32.totalorder %v530, 1
      %vm547 = vcmp.eq.s32.totalorder %v533, 1
      %vm548 = vcmp.eq.s32.totalorder %v536, 1
      %vm549 = vcmp.eq.s32.totalorder %v539, 1
      %vm550 = vcmp.eq.s32.totalorder %v542, 1
      %v551 = vsel %vm543, %v473, -1e+10
      %v552 = vsel %vm544, %v476, -1e+10
      %v553 = vsel %vm545, %v481, -1e+10
      %v554 = vsel %vm546, %v484, -1e+10
      %v555 = vsel %vm547, %v489, -1e+10
      %v556 = vsel %vm548, %v492, -1e+10
      %v557 = vsel %vm549, %v497, -1e+10
      %v558 = vsel %vm550, %v500, -1e+10
      %v559 = vmul.f32 %v551, 0.25
      %v560 = vmul.f32 %v552, 0.25
      %v561 = vmul.f32 %v553, 0.25
      %v562 = vmul.f32 %v554, 0.25
      %v563 = vmul.f32 %v555, 0.25
      %v564 = vmul.f32 %v556, 0.25
      %v565 = vmul.f32 %v557, 0.25
      %v566 = vmul.f32 %v558, 0.25
      %v567 = vsel %vm364, 1, 0
      %vm568 = vcmp.eq.s32.totalorder %v567, 1
      %v569 = vsel %vm568, %v559, -1e+30
      %v570 = vsel %vm568, %v560, -1e+30
      %v571 = vsel %vm568, %v561, -1e+30
      %v572 = vsel %vm568, %v562, -1e+30
      %v573 = vsel %vm568, %v563, -1e+30
      %v574 = vsel %vm568, %v564, -1e+30
      %v575 = vsel %vm568, %v565, -1e+30
      %v576 = vsel %vm568, %v566, -1e+30
      %vm577 = vcmask 654336
      %v578 = vsel %vm577, %v569, -inf
      %579 = vmax.xlane.f32.xlu0 %v578
      %v580 = vpop.xlane.xlu0 %579
      %v581 = vsel %vm577, %v570, -inf
      %582 = vmax.xlane.f32.xlu0 %v581
      %v583 = vpop.xlane.xlu0 %582
      %v584 = vsel %vm577, %v571, -inf
      %585 = vmax.xlane.f32.xlu0 %v584
      %v586 = vpop.xlane.xlu0 %585
      %v587 = vsel %vm577, %v572, -inf
      %588 = vmax.xlane.f32.xlu0 %v587
      %v589 = vpop.xlane.xlu0 %588
      %v590 = vsel %vm577, %v573, -inf
      %591 = vmax.xlane.f32.xlu0 %v590
      %v592 = vpop.xlane.xlu0 %591
      %v593 = vsel %vm577, %v574, -inf
      %594 = vmax.xlane.f32.xlu0 %v593
      %v595 = vpop.xlane.xlu0 %594
      %v596 = vsel %vm577, %v575, -inf
      %597 = vmax.xlane.f32.xlu0 %v596
      %v598 = vpop.xlane.xlu0 %597
      %v599 = vsel %vm577, %v576, -inf
      %600 = vmax.xlane.f32.xlu0 %v599
      %v601 = vpop.xlane.xlu0 %600
      %v602 = vsub.f32 %v569, %v580
      %v603 = vsub.f32 %v570, %v583
      %v604 = vsub.f32 %v571, %v586
      %v605 = vsub.f32 %v572, %v589
      %v606 = vsub.f32 %v573, %v592
      %v607 = vsub.f32 %v574, %v595
      %v608 = vsub.f32 %v575, %v598
      %v609 = vsub.f32 %v576, %v601
      %v610 = vmul.f32 %v602, 1.442695
      %v611 = vpow.pop %v610
      %v612 = vmul.f32 %v603, 1.442695
      %v613 = vpow.pop %v612
      %v614 = vmul.f32 %v604, 1.442695
      %v615 = vpow.pop %v614
      %v616 = vmul.f32 %v605, 1.442695
      %v617 = vpow.pop %v616
      %v618 = vmul.f32 %v606, 1.442695
      %v619 = vpow.pop %v618
      %v620 = vmul.f32 %v607, 1.442695
      %v621 = vpow.pop %v620
      %v622 = vmul.f32 %v608, 1.442695
      %v623 = vpow.pop %v622
      %v624 = vmul.f32 %v609, 1.442695
      %v625 = vpow.pop %v624
      %v626 = vsel %vm577, %v611, 0.0
      %627 = vadd.xlane.f32.xlu0 %v626
      %v628 = vpop.xlane.xlu0 %627
      %v629 = vsel %vm577, %v613, 0.0
      %630 = vadd.xlane.f32.xlu0 %v629
      %v631 = vpop.xlane.xlu0 %630
      %v632 = vsel %vm577, %v615, 0.0
      %633 = vadd.xlane.f32.xlu0 %v632
      %v634 = vpop.xlane.xlu0 %633
      %v635 = vsel %vm577, %v617, 0.0
      %636 = vadd.xlane.f32.xlu0 %v635
      %v637 = vpop.xlane.xlu0 %636
      %v638 = vsel %vm577, %v619, 0.0
      %639 = vadd.xlane.f32.xlu0 %v638
      %v640 = vpop.xlane.xlu0 %639
      %v641 = vsel %vm577, %v621, 0.0
      %642 = vadd.xlane.f32.xlu0 %v641
      %v643 = vpop.xlane.xlu0 %642
      %v644 = vsel %vm577, %v623, 0.0
      %645 = vadd.xlane.f32.xlu0 %v644
      %v646 = vpop.xlane.xlu0 %645
      %v647 = vsel %vm577, %v625, 0.0
      %648 = vadd.xlane.f32.xlu0 %v647
      %v649 = vpop.xlane.xlu0 %648
      %v650 = vrcp.pop %v628
      %v651 = vmul.f32 %v611, %v650
      %v652 = vrcp.pop %v631
      %v653 = vmul.f32 %v613, %v652
      %v654 = vrcp.pop %v634
      %v655 = vmul.f32 %v615, %v654
      %v656 = vrcp.pop %v637
      %v657 = vmul.f32 %v617, %v656
      %v658 = vrcp.pop %v640
      %v659 = vmul.f32 %v619, %v658
      %v660 = vrcp.pop %v643
      %v661 = vmul.f32 %v621, %v660
      %v662 = vrcp.pop %v646
      %v663 = vmul.f32 %v623, %v662
      %v664 = vrcp.pop %v649
      %v665 = vmul.f32 %v625, %v664
      %v666 = vpack.c.bf16 %v653, %v651
      %v667 = vpack.c.bf16 %v657, %v655
      %v668 = vpack.c.bf16 %v661, %v659
      %v669 = vpack.c.bf16 %v665, %v663
      %v680 = vunpack.c.l.b16 %v339
      %v681 = vunpack.c.l.b16 %v340
      %v682 = vunpack.c.l.b16 %v341
      %v683 = vunpack.c.l.b16 %v342
      %v684 = vunpack.c.l.b16 %v343
      %v685 = vunpack.c.l.b16 %v344
      %v686 = vunpack.c.l.b16 %v345
      %v687 = vunpack.c.l.b16 %v346
      %v688 = vunpack.c.l.b16 %v347
      %v689 = vunpack.c.l.b16 %v348
      %v690 = vpack.c.b16 %v681, %v680
      %v691 = vpack.c.b16 %v683, %v682
      %v692 = vpack.c.b16 %v685, %v684
      %v693 = vpack.c.b16 %v687, %v686
      %v694 = vpack.c.b16 %v689, %v688
      %v701 = vsel %vm577, %v666, 0
      %v704 = vsel %vm577, %v667, 0
      %v707 = vsel %vm577, %v668, 0
      %v710 = vsel %vm577, %v669, 0
      %712 = vmatprep.subr.bf16.mxu0 0
      %713 = vmatpush1.bf16.msra.mxu0 %v690
      %714 = vmatprep.subr.bf16.mxu0 0
      %715 = vmatpush1.bf16.msra.mxu0 %v691
      %716 = vmatprep.subr.bf16.mxu0 0
      %717 = vmatpush1.bf16.msra.mxu0 %v692
      %718 = vmatprep.subr.bf16.mxu0 0
      %719 = vmatpush1.bf16.msra.mxu0 %v693
      %720 = vmatprep.subr.bf16.mxu0 0
      %721 = vmatpush1.bf16.msra.mxu0 %v694
      %722 = vmatprep.subr.bf16.mxu0 0
      %723 = vmatpush1.bf16.msra.mxu0 0
      %724 = vmatprep.subr.bf16.mxu0 0
      %725 = vmatpush1.bf16.msra.mxu0 0
      %726 = vmatprep.subr.bf16.mxu0 0
      %727 = vmatpush1.bf16.msra.mxu0 0
      %728 = vmatprep.subr.bf16.mxu0 0
      %729 = vmatpush1.bf16.msra.mxu0 0
      %730 = vmatprep.subr.bf16.mxu0 0
      %731 = vmatpush1.bf16.msra.mxu0 0
      %732 = vmatprep.subr.bf16.mxu0 0
      %733 = vmatpush1.bf16.msra.mxu0 0
      %734 = vmatprep.subr.bf16.mxu0 0
      %735 = vmatpush1.bf16.msra.mxu0 0
      %736 = vmatprep.subr.bf16.mxu0 0
      %737 = vmatpush1.bf16.msra.mxu0 0
      %738 = vmatprep.subr.bf16.mxu0 0
      %739 = vmatpush1.bf16.msra.mxu0 0
      %740 = vmatprep.subr.bf16.mxu0 0
      %741 = vmatpush1.bf16.msra.mxu0 0
      %742 = vmatprep.subr.bf16.mxu0 0
      %743 = vmatpush1.bf16.msra.mxu0 0
      %744 = vmatprep.mubr.bf16.mxu0 0
      %745 = vmatmul.mubr.bf16.gmra.mrb[0].mxu0 %v701
      %v746 = vpop.f32.mrb[0].mxu0
      %v747 = vadd.f32 0.0, %v746
      %v748 = vpop.f32.mrb[0].mxu0
      %v749 = vpop.f32.mrb[0].mxu0
      %v750 = vadd.f32 0.0, %v749
      %v751 = vpop.f32.mrb[0].mxu0
      %752 = vmatprep.mubr.bf16.mxu0 0
      %753 = vmatmul.mubr.bf16.gmra.mrb[0].mxu0 %v704
      %v754 = vpop.f32.mrb[0].mxu0
      %v755 = vadd.f32 0.0, %v754
      %v756 = vpop.f32.mrb[0].mxu0
      %v757 = vpop.f32.mrb[0].mxu0
      %v758 = vadd.f32 0.0, %v757
      %v759 = vpop.f32.mrb[0].mxu0
      %760 = vmatprep.mubr.bf16.mxu0 0
      %761 = vmatmul.mubr.bf16.gmra.mrb[0].mxu0 %v707
      %v762 = vpop.f32.mrb[0].mxu0
      %v763 = vadd.f32 0.0, %v762
      %v764 = vpop.f32.mrb[0].mxu0
      %v765 = vpop.f32.mrb[0].mxu0
      %v766 = vadd.f32 0.0, %v765
      %v767 = vpop.f32.mrb[0].mxu0
      %768 = vmatprep.mubr.bf16.mxu0 0
      %769 = vmatmul.mubr.bf16.gmra.mrb[0].mxu0 %v710
      %v770 = vpop.f32.mrb[0].mxu0
      %v771 = vadd.f32 0.0, %v770
      %v772 = vpop.f32.mrb[0].mxu0
      %v773 = vpop.f32.mrb[0].mxu0
      %v774 = vadd.f32 0.0, %v773
      %v775 = vpop.f32.mrb[0].mxu0
      %776 = vdwg.mxu0
      %777 = vrot.lane.b32.xlu0 %v381, 112
      %v778 = vpop.permute.xlu0 %777
      %779 = vrot.lane.b32.xlu0 %v382, 112
      %v780 = vpop.permute.xlu0 %779
      %781 = vrot.lane.b32.xlu0 %v383, 112
      %v782 = vpop.permute.xlu0 %781
      %783 = vrot.lane.b32.xlu0 %v384, 112
      %v784 = vpop.permute.xlu0 %783
      %785 = vrot.lane.b32.xlu0 %v405, 112
      %v786 = vpop.permute.xlu0 %785
      %787 = vrot.lane.b32.xlu0 %v406, 112
      %v788 = vpop.permute.xlu0 %787
      %789 = vrot.lane.b32.xlu0 %v407, 112
      %v790 = vpop.permute.xlu0 %789
      %791 = vrot.lane.b32.xlu0 %v408, 112
      %v792 = vpop.permute.xlu0 %791
      %793 = vrot.lane.b32.xlu0 %v409, 112
      %v794 = vpop.permute.xlu0 %793
      %v796 = vsel %vm410, %v778, 0
      %v799 = vsel %vm410, %v780, 0
      %v802 = vsel %vm410, %v782, 0
      %v805 = vsel %vm410, %v784, 0
      %v808 = vsel %vm410, %v786, 0
      %v811 = vsel %vm410, %v788, 0
      %v814 = vsel %vm410, %v790, 0
      %v817 = vsel %vm410, %v792, 0
      %v820 = vsel %vm410, %v794, 0
      %822 = vmatprep.subr.bf16.mxu0 0
      %823 = vmatpush1.bf16.xpose.msra.mxu0 %v808
      %824 = vmatprep.subr.bf16.mxu0 0
      %825 = vmatpush1.bf16.xpose.msra.mxu0 %v811
      %826 = vmatprep.subr.bf16.mxu0 0
      %827 = vmatpush1.bf16.xpose.msra.mxu0 %v814
      %828 = vmatprep.subr.bf16.mxu0 0
      %829 = vmatpush1.bf16.xpose.msra.mxu0 %v817
      %830 = vmatprep.subr.bf16.mxu0 0
      %831 = vmatpush1.bf16.xpose.msra.mxu0 %v820
      %832 = vmatprep.subr.bf16.mxu0 0
      %833 = vmatpush1.bf16.xpose.msra.mxu0 0
      %834 = vmatprep.subr.bf16.mxu0 0
      %835 = vmatpush1.bf16.xpose.msra.mxu0 0
      %836 = vmatprep.subr.bf16.mxu0 0
      %837 = vmatpush1.bf16.xpose.msra.mxu0 0
      %838 = vmatprep.subr.bf16.mxu0 0
      %839 = vmatpush1.bf16.xpose.msra.mxu0 0
      %840 = vmatprep.subr.bf16.mxu0 0
      %841 = vmatpush1.bf16.xpose.msra.mxu0 0
      %842 = vmatprep.subr.bf16.mxu0 0
      %843 = vmatpush1.bf16.xpose.msra.mxu0 0
      %844 = vmatprep.subr.bf16.mxu0 0
      %845 = vmatpush1.bf16.xpose.msra.mxu0 0
      %846 = vmatprep.subr.bf16.mxu0 0
      %847 = vmatpush1.bf16.xpose.msra.mxu0 0
      %848 = vmatprep.subr.bf16.mxu0 0
      %849 = vmatpush1.bf16.xpose.msra.mxu0 0
      %850 = vmatprep.subr.bf16.mxu0 0
      %851 = vmatpush1.bf16.xpose.msra.mxu0 0
      %852 = vmatprep.subr.bf16.mxu0 0
      %853 = vmatpush1.bf16.xpose.msra.mxu0 0
      %854 = vmatprep.mubr.bf16.mxu0 0
      %855 = vmatmul.mubr.bf16.gmra.mrb[0].mxu0 %v796
      %v856 = vpop.f32.mrb[0].mxu0
      %v857 = vadd.f32 0.0, %v856
      %v858 = vpop.f32.mrb[0].mxu0
      %v859 = vpop.f32.mrb[0].mxu0
      %v860 = vadd.f32 0.0, %v859
      %v861 = vpop.f32.mrb[0].mxu0
      %862 = vmatprep.mubr.bf16.mxu0 0
      %863 = vmatmul.mubr.bf16.gmra.mrb[0].mxu0 %v799
      %v864 = vpop.f32.mrb[0].mxu0
      %v865 = vadd.f32 0.0, %v864
      %v866 = vpop.f32.mrb[0].mxu0
      %v867 = vpop.f32.mrb[0].mxu0
      %v868 = vadd.f32 0.0, %v867
      %v869 = vpop.f32.mrb[0].mxu0
      %870 = vmatprep.mubr.bf16.mxu0 0
      %871 = vmatmul.mubr.bf16.gmra.mrb[0].mxu0 %v802
      %v872 = vpop.f32.mrb[0].mxu0
      %v873 = vadd.f32 0.0, %v872
      %v874 = vpop.f32.mrb[0].mxu0
      %v875 = vpop.f32.mrb[0].mxu0
      %v876 = vadd.f32 0.0, %v875
      %v877 = vpop.f32.mrb[0].mxu0
      %878 = vmatprep.mubr.bf16.mxu0 0
      %879 = vmatmul.mubr.bf16.gmra.mrb[0].mxu0 %v805
      %v880 = vpop.f32.mrb[0].mxu0
      %v881 = vadd.f32 0.0, %v880
      %v882 = vpop.f32.mrb[0].mxu0
      %v883 = vpop.f32.mrb[0].mxu0
      %v884 = vadd.f32 0.0, %v883
      %v885 = vpop.f32.mrb[0].mxu0
      %886 = vdwg.mxu0
      %v887 = vsel %vm543, %v857, -1e+10
      %v888 = vsel %vm544, %v860, -1e+10
      %v889 = vsel %vm545, %v865, -1e+10
      %v890 = vsel %vm546, %v868, -1e+10
      %v891 = vsel %vm547, %v873, -1e+10
      %v892 = vsel %vm548, %v876, -1e+10
      %v893 = vsel %vm549, %v881, -1e+10
      %v894 = vsel %vm550, %v884, -1e+10
      %v895 = vmul.f32 %v887, 0.25
      %v896 = vmul.f32 %v888, 0.25
      %v897 = vmul.f32 %v889, 0.25
      %v898 = vmul.f32 %v890, 0.25
      %v899 = vmul.f32 %v891, 0.25
      %v900 = vmul.f32 %v892, 0.25
      %v901 = vmul.f32 %v893, 0.25
      %v902 = vmul.f32 %v894, 0.25
      %v903 = vsel %vm568, %v895, -1e+30
      %v904 = vsel %vm568, %v896, -1e+30
      %v905 = vsel %vm568, %v897, -1e+30
      %v906 = vsel %vm568, %v898, -1e+30
      %v907 = vsel %vm568, %v899, -1e+30
      %v908 = vsel %vm568, %v900, -1e+30
      %v909 = vsel %vm568, %v901, -1e+30
      %v910 = vsel %vm568, %v902, -1e+30
      %v911 = vsel %vm577, %v903, -inf
      %912 = vmax.xlane.f32.xlu0 %v911
      %v913 = vpop.xlane.xlu0 %912
      %v914 = vsel %vm577, %v904, -inf
      %915 = vmax.xlane.f32.xlu0 %v914
      %v916 = vpop.xlane.xlu0 %915
      %v917 = vsel %vm577, %v905, -inf
      %918 = vmax.xlane.f32.xlu0 %v917
      %v919 = vpop.xlane.xlu0 %918
      %v920 = vsel %vm577, %v906, -inf
      %921 = vmax.xlane.f32.xlu0 %v920
      %v922 = vpop.xlane.xlu0 %921
      %v923 = vsel %vm577, %v907, -inf
      %924 = vmax.xlane.f32.xlu0 %v923
      %v925 = vpop.xlane.xlu0 %924
      %v926 = vsel %vm577, %v908, -inf
      %927 = vmax.xlane.f32.xlu0 %v926
      %v928 = vpop.xlane.xlu0 %927
      %v929 = vsel %vm577, %v909, -inf
      %930 = vmax.xlane.f32.xlu0 %v929
      %v931 = vpop.xlane.xlu0 %930
      %v932 = vsel %vm577, %v910, -inf
      %933 = vmax.xlane.f32.xlu0 %v932
      %v934 = vpop.xlane.xlu0 %933
      %v935 = vsub.f32 %v903, %v913
      %v936 = vsub.f32 %v904, %v916
      %v937 = vsub.f32 %v905, %v919
      %v938 = vsub.f32 %v906, %v922
      %v939 = vsub.f32 %v907, %v925
      %v940 = vsub.f32 %v908, %v928
      %v941 = vsub.f32 %v909, %v931
      %v942 = vsub.f32 %v910, %v934
      %v943 = vmul.f32 %v935, 1.442695
      %v944 = vpow.pop %v943
      %v945 = vmul.f32 %v936, 1.442695
      %v946 = vpow.pop %v945
      %v947 = vmul.f32 %v937, 1.442695
      %v948 = vpow.pop %v947
      %v949 = vmul.f32 %v938, 1.442695
      %v950 = vpow.pop %v949
      %v951 = vmul.f32 %v939, 1.442695
      %v952 = vpow.pop %v951
      %v953 = vmul.f32 %v940, 1.442695
      %v954 = vpow.pop %v953
      %v955 = vmul.f32 %v941, 1.442695
      %v956 = vpow.pop %v955
      %v957 = vmul.f32 %v942, 1.442695
      %v958 = vpow.pop %v957
      %v959 = vsel %vm577, %v944, 0.0
      %960 = vadd.xlane.f32.xlu0 %v959
      %v961 = vpop.xlane.xlu0 %960
      %v962 = vsel %vm577, %v946, 0.0
      %963 = vadd.xlane.f32.xlu0 %v962
      %v964 = vpop.xlane.xlu0 %963
      %v965 = vsel %vm577, %v948, 0.0
      %966 = vadd.xlane.f32.xlu0 %v965
      %v967 = vpop.xlane.xlu0 %966
      %v968 = vsel %vm577, %v950, 0.0
      %969 = vadd.xlane.f32.xlu0 %v968
      %v970 = vpop.xlane.xlu0 %969
      %v971 = vsel %vm577, %v952, 0.0
      %972 = vadd.xlane.f32.xlu0 %v971
      %v973 = vpop.xlane.xlu0 %972
      %v974 = vsel %vm577, %v954, 0.0
      %975 = vadd.xlane.f32.xlu0 %v974
      %v976 = vpop.xlane.xlu0 %975
      %v977 = vsel %vm577, %v956, 0.0
      %978 = vadd.xlane.f32.xlu0 %v977
      %v979 = vpop.xlane.xlu0 %978
      %v980 = vsel %vm577, %v958, 0.0
      %981 = vadd.xlane.f32.xlu0 %v980
      %v982 = vpop.xlane.xlu0 %981
      %v983 = vrcp.pop %v961
      %v984 = vmul.f32 %v944, %v983
      %v985 = vrcp.pop %v964
      %v986 = vmul.f32 %v946, %v985
      %v987 = vrcp.pop %v967
      %v988 = vmul.f32 %v948, %v987
      %v989 = vrcp.pop %v970
      %v990 = vmul.f32 %v950, %v989
      %v991 = vrcp.pop %v973
      %v992 = vmul.f32 %v952, %v991
      %v993 = vrcp.pop %v976
      %v994 = vmul.f32 %v954, %v993
      %v995 = vrcp.pop %v979
      %v996 = vmul.f32 %v956, %v995
      %v997 = vrcp.pop %v982
      %v998 = vmul.f32 %v958, %v997
      %v999 = vpack.c.bf16 %v986, %v984
      %v1000 = vpack.c.bf16 %v990, %v988
      %v1001 = vpack.c.bf16 %v994, %v992
      %v1002 = vpack.c.bf16 %v998, %v996
      %1003 = vrot.lane.b32.xlu0 %v690, 112
      %v1004 = vpop.permute.xlu0 %1003
      %1005 = vrot.lane.b32.xlu0 %v691, 112
      %v1006 = vpop.permute.xlu0 %1005
      %1007 = vrot.lane.b32.xlu0 %v692, 112
      %v1008 = vpop.permute.xlu0 %1007
      %1009 = vrot.lane.b32.xlu0 %v693, 112
      %v1010 = vpop.permute.xlu0 %1009
      %1011 = vrot.lane.b32.xlu0 %v694, 112
      %v1012 = vpop.permute.xlu0 %1011
      %v1019 = vsel %vm577, %v999, 0
      %v1022 = vsel %vm577, %v1000, 0
      %v1025 = vsel %vm577, %v1001, 0
      %v1028 = vsel %vm577, %v1002, 0
      %1030 = vmatprep.subr.bf16.mxu0 0
      %1031 = vmatpush1.bf16.msra.mxu0 %v1004
      %1032 = vmatprep.subr.bf16.mxu0 0
      %1033 = vmatpush1.bf16.msra.mxu0 %v1006
      %1034 = vmatprep.subr.bf16.mxu0 0
      %1035 = vmatpush1.bf16.msra.mxu0 %v1008
      %1036 = vmatprep.subr.bf16.mxu0 0
      %1037 = vmatpush1.bf16.msra.mxu0 %v1010
      %1038 = vmatprep.subr.bf16.mxu0 0
      %1039 = vmatpush1.bf16.msra.mxu0 %v1012
      %1040 = vmatprep.subr.bf16.mxu0 0
      %1041 = vmatpush1.bf16.msra.mxu0 0
      %1042 = vmatprep.subr.bf16.mxu0 0
      %1043 = vmatpush1.bf16.msra.mxu0 0
      %1044 = vmatprep.subr.bf16.mxu0 0
      %1045 = vmatpush1.bf16.msra.mxu0 0
      %1046 = vmatprep.subr.bf16.mxu0 0
      %1047 = vmatpush1.bf16.msra.mxu0 0
      %1048 = vmatprep.subr.bf16.mxu0 0
      %1049 = vmatpush1.bf16.msra.mxu0 0
      %1050 = vmatprep.subr.bf16.mxu0 0
      %1051 = vmatpush1.bf16.msra.mxu0 0
      %1052 = vmatprep.subr.bf16.mxu0 0
      %1053 = vmatpush1.bf16.msra.mxu0 0
      %1054 = vmatprep.subr.bf16.mxu0 0
      %1055 = vmatpush1.bf16.msra.mxu0 0
      %1056 = vmatprep.subr.bf16.mxu0 0
      %1057 = vmatpush1.bf16.msra.mxu0 0
      %1058 = vmatprep.subr.bf16.mxu0 0
      %1059 = vmatpush1.bf16.msra.mxu0 0
      %1060 = vmatprep.subr.bf16.mxu0 0
      %1061 = vmatpush1.bf16.msra.mxu0 0
      %1062 = vmatprep.mubr.bf16.mxu0 0
      %1063 = vmatmul.mubr.bf16.gmra.mrb[0].mxu0 %v1019
      %v1064 = vpop.f32.mrb[0].mxu0
      %v1065 = vadd.f32 0.0, %v1064
      %v1066 = vpop.f32.mrb[0].mxu0
      %v1067 = vpop.f32.mrb[0].mxu0
      %v1068 = vadd.f32 0.0, %v1067
      %v1069 = vpop.f32.mrb[0].mxu0
      %1070 = vmatprep.mubr.bf16.mxu0 0
      %1071 = vmatmul.mubr.bf16.gmra.mrb[0].mxu0 %v1022
      %v1072 = vpop.f32.mrb[0].mxu0
      %v1073 = vadd.f32 0.0, %v1072
      %v1074 = vpop.f32.mrb[0].mxu0
      %v1075 = vpop.f32.mrb[0].mxu0
      %v1076 = vadd.f32 0.0, %v1075
      %v1077 = vpop.f32.mrb[0].mxu0
      %1078 = vmatprep.mubr.bf16.mxu0 0
      %1079 = vmatmul.mubr.bf16.gmra.mrb[0].mxu0 %v1025
      %v1080 = vpop.f32.mrb[0].mxu0
      %v1081 = vadd.f32 0.0, %v1080
      %v1082 = vpop.f32.mrb[0].mxu0
      %v1083 = vpop.f32.mrb[0].mxu0
      %v1084 = vadd.f32 0.0, %v1083
      %v1085 = vpop.f32.mrb[0].mxu0
      %1086 = vmatprep.mubr.bf16.mxu0 0
      %1087 = vmatmul.mubr.bf16.gmra.mrb[0].mxu0 %v1028
      %v1088 = vpop.f32.mrb[0].mxu0
      %v1089 = vadd.f32 0.0, %v1088
      %v1090 = vpop.f32.mrb[0].mxu0
      %v1091 = vpop.f32.mrb[0].mxu0
      %v1092 = vadd.f32 0.0, %v1091
      %v1093 = vpop.f32.mrb[0].mxu0
      %1094 = vdwg.mxu0
      %1095 = vrot.lane.b32.xlu0 %v381, 96
      %v1096 = vpop.permute.xlu0 %1095
      %1097 = vrot.lane.b32.xlu0 %v382, 96
      %v1098 = vpop.permute.xlu0 %1097
      %1099 = vrot.lane.b32.xlu0 %v383, 96
      %v1100 = vpop.permute.xlu0 %1099
      %1101 = vrot.lane.b32.xlu0 %v384, 96
      %v1102 = vpop.permute.xlu0 %1101
      %1103 = vrot.lane.b32.xlu0 %v405, 96
      %v1104 = vpop.permute.xlu0 %1103
      %1105 = vrot.lane.b32.xlu0 %v406, 96
      %v1106 = vpop.permute.xlu0 %1105
      %1107 = vrot.lane.b32.xlu0 %v407, 96
      %v1108 = vpop.permute.xlu0 %1107
      %1109 = vrot.lane.b32.xlu0 %v408, 96
      %v1110 = vpop.permute.xlu0 %1109
      %1111 = vrot.lane.b32.xlu0 %v409, 96
      %v1112 = vpop.permute.xlu0 %1111
      %v1114 = vsel %vm410, %v1096, 0
      %v1117 = vsel %vm410, %v1098, 0
      %v1120 = vsel %vm410, %v1100, 0
      %v1123 = vsel %vm410, %v1102, 0
      %v1126 = vsel %vm410, %v1104, 0
      %v1129 = vsel %vm410, %v1106, 0
      %v1132 = vsel %vm410, %v1108, 0
      %v1135 = vsel %vm410, %v1110, 0
      %v1138 = vsel %vm410, %v1112, 0
      %1140 = vmatprep.subr.bf16.mxu0 0
      %1141 = vmatpush1.bf16.xpose.msra.mxu0 %v1126
      %1142 = vmatprep.subr.bf16.mxu0 0
      %1143 = vmatpush1.bf16.xpose.msra.mxu0 %v1129
      %1144 = vmatprep.subr.bf16.mxu0 0
      %1145 = vmatpush1.bf16.xpose.msra.mxu0 %v1132
      %1146 = vmatprep.subr.bf16.mxu0 0
      %1147 = vmatpush1.bf16.xpose.msra.mxu0 %v1135
      %1148 = vmatprep.subr.bf16.mxu0 0
      %1149 = vmatpush1.bf16.xpose.msra.mxu0 %v1138
      %1150 = vmatprep.subr.bf16.mxu0 0
      %1151 = vmatpush1.bf16.xpose.msra.mxu0 0
      %1152 = vmatprep.subr.bf16.mxu0 0
      %1153 = vmatpush1.bf16.xpose.msra.mxu0 0
      %1154 = vmatprep.subr.bf16.mxu0 0
      %1155 = vmatpush1.bf16.xpose.msra.mxu0 0
      %1156 = vmatprep.subr.bf16.mxu0 0
      %1157 = vmatpush1.bf16.xpose.msra.mxu0 0
      %1158 = vmatprep.subr.bf16.mxu0 0
      %1159 = vmatpush1.bf16.xpose.msra.mxu0 0
      %1160 = vmatprep.subr.bf16.mxu0 0
      %1161 = vmatpush1.bf16.xpose.msra.mxu0 0
      %1162 = vmatprep.subr.bf16.mxu0 0
      %1163 = vmatpush1.bf16.xpose.msra.mxu0 0
      %1164 = vmatprep.subr.bf16.mxu0 0
      %1165 = vmatpush1.bf16.xpose.msra.mxu0 0
      %1166 = vmatprep.subr.bf16.mxu0 0
      %1167 = vmatpush1.bf16.xpose.msra.mxu0 0
      %1168 = vmatprep.subr.bf16.mxu0 0
      %1169 = vmatpush1.bf16.xpose.msra.mxu0 0
      %1170 = vmatprep.subr.bf16.mxu0 0
      %1171 = vmatpush1.bf16.xpose.msra.mxu0 0
      %1172 = vmatprep.mubr.bf16.mxu0 0
      %1173 = vmatmul.mubr.bf16.gmra.mrb[0].mxu0 %v1114
      %v1174 = vpop.f32.mrb[0].mxu0
      %v1175 = vadd.f32 0.0, %v1174
      %v1176 = vpop.f32.mrb[0].mxu0
      %v1177 = vpop.f32.mrb[0].mxu0
      %v1178 = vadd.f32 0.0, %v1177
      %v1179 = vpop.f32.mrb[0].mxu0
      %1180 = vmatprep.mubr.bf16.mxu0 0
      %1181 = vmatmul.mubr.bf16.gmra.mrb[0].mxu0 %v1117
      %v1182 = vpop.f32.mrb[0].mxu0
      %v1183 = vadd.f32 0.0, %v1182
      %v1184 = vpop.f32.mrb[0].mxu0
      %v1185 = vpop.f32.mrb[0].mxu0
      %v1186 = vadd.f32 0.0, %v1185
      %v1187 = vpop.f32.mrb[0].mxu0
      %1188 = vmatprep.mubr.bf16.mxu0 0
      %1189 = vmatmul.mubr.bf16.gmra.mrb[0].mxu0 %v1120
      %v1190 = vpop.f32.mrb[0].mxu0
      %v1191 = vadd.f32 0.0, %v1190
      %v1192 = vpop.f32.mrb[0].mxu0
      %v1193 = vpop.f32.mrb[0].mxu0
      %v1194 = vadd.f32 0.0, %v1193
      %v1195 = vpop.f32.mrb[0].mxu0
      %1196 = vmatprep.mubr.bf16.mxu0 0
      %1197 = vmatmul.mubr.bf16.gmra.mrb[0].mxu0 %v1123
      %v1198 = vpop.f32.mrb[0].mxu0
      %v1199 = vadd.f32 0.0, %v1198
      %v1200 = vpop.f32.mrb[0].mxu0
      %v1201 = vpop.f32.mrb[0].mxu0
      %v1202 = vadd.f32 0.0, %v1201
      %v1203 = vpop.f32.mrb[0].mxu0
      %1204 = vdwg.mxu0
      %v1205 = vsel %vm543, %v1175, -1e+10
      %v1206 = vsel %vm544, %v1178, -1e+10
      %v1207 = vsel %vm545, %v1183, -1e+10
      %v1208 = vsel %vm546, %v1186, -1e+10
      %v1209 = vsel %vm547, %v1191, -1e+10
      %v1210 = vsel %vm548, %v1194, -1e+10
      %v1211 = vsel %vm549, %v1199, -1e+10
      %v1212 = vsel %vm550, %v1202, -1e+10
      %v1213 = vmul.f32 %v1205, 0.25
      %v1214 = vmul.f32 %v1206, 0.25
      %v1215 = vmul.f32 %v1207, 0.25
      %v1216 = vmul.f32 %v1208, 0.25
      %v1217 = vmul.f32 %v1209, 0.25
      %v1218 = vmul.f32 %v1210, 0.25
      %v1219 = vmul.f32 %v1211, 0.25
      %v1220 = vmul.f32 %v1212, 0.25
      %v1221 = vsel %vm568, %v1213, -1e+30
      %v1222 = vsel %vm568, %v1214, -1e+30
      %v1223 = vsel %vm568, %v1215, -1e+30
      %v1224 = vsel %vm568, %v1216, -1e+30
      %v1225 = vsel %vm568, %v1217, -1e+30
      %v1226 = vsel %vm568, %v1218, -1e+30
      %v1227 = vsel %vm568, %v1219, -1e+30
      %v1228 = vsel %vm568, %v1220, -1e+30
      %v1229 = vsel %vm577, %v1221, -inf
      %1230 = vmax.xlane.f32.xlu0 %v1229
      %v1231 = vpop.xlane.xlu0 %1230
      %v1232 = vsel %vm577, %v1222, -inf
      %1233 = vmax.xlane.f32.xlu0 %v1232
      %v1234 = vpop.xlane.xlu0 %1233
      %v1235 = vsel %vm577, %v1223, -inf
      %1236 = vmax.xlane.f32.xlu0 %v1235
      %v1237 = vpop.xlane.xlu0 %1236
      %v1238 = vsel %vm577, %v1224, -inf
      %1239 = vmax.xlane.f32.xlu0 %v1238
      %v1240 = vpop.xlane.xlu0 %1239
      %v1241 = vsel %vm577, %v1225, -inf
      %1242 = vmax.xlane.f32.xlu0 %v1241
      %v1243 = vpop.xlane.xlu0 %1242
      %v1244 = vsel %vm577, %v1226, -inf
      %1245 = vmax.xlane.f32.xlu0 %v1244
      %v1246 = vpop.xlane.xlu0 %1245
      %v1247 = vsel %vm577, %v1227, -inf
      %1248 = vmax.xlane.f32.xlu0 %v1247
      %v1249 = vpop.xlane.xlu0 %1248
      %v1250 = vsel %vm577, %v1228, -inf
      %1251 = vmax.xlane.f32.xlu0 %v1250
      %v1252 = vpop.xlane.xlu0 %1251
      %v1253 = vsub.f32 %v1221, %v1231
      %v1254 = vsub.f32 %v1222, %v1234
      %v1255 = vsub.f32 %v1223, %v1237
      %v1256 = vsub.f32 %v1224, %v1240
      %v1257 = vsub.f32 %v1225, %v1243
      %v1258 = vsub.f32 %v1226, %v1246
      %v1259 = vsub.f32 %v1227, %v1249
      %v1260 = vsub.f32 %v1228, %v1252
      %v1261 = vmul.f32 %v1253, 1.442695
      %v1262 = vpow.pop %v1261
      %v1263 = vmul.f32 %v1254, 1.442695
      %v1264 = vpow.pop %v1263
      %v1265 = vmul.f32 %v1255, 1.442695
      %v1266 = vpow.pop %v1265
      %v1267 = vmul.f32 %v1256, 1.442695
      %v1268 = vpow.pop %v1267
      %v1269 = vmul.f32 %v1257, 1.442695
      %v1270 = vpow.pop %v1269
      %v1271 = vmul.f32 %v1258, 1.442695
      %v1272 = vpow.pop %v1271
      %v1273 = vmul.f32 %v1259, 1.442695
      %v1274 = vpow.pop %v1273
      %v1275 = vmul.f32 %v1260, 1.442695
      %v1276 = vpow.pop %v1275
      %v1277 = vsel %vm577, %v1262, 0.0
      %1278 = vadd.xlane.f32.xlu0 %v1277
      %v1279 = vpop.xlane.xlu0 %1278
      %v1280 = vsel %vm577, %v1264, 0.0
      %1281 = vadd.xlane.f32.xlu0 %v1280
      %v1282 = vpop.xlane.xlu0 %1281
      %v1283 = vsel %vm577, %v1266, 0.0
      %1284 = vadd.xlane.f32.xlu0 %v1283
      %v1285 = vpop.xlane.xlu0 %1284
      %v1286 = vsel %vm577, %v1268, 0.0
      %1287 = vadd.xlane.f32.xlu0 %v1286
      %v1288 = vpop.xlane.xlu0 %1287
      %v1289 = vsel %vm577, %v1270, 0.0
      %1290 = vadd.xlane.f32.xlu0 %v1289
      %v1291 = vpop.xlane.xlu0 %1290
      %v1292 = vsel %vm577, %v1272, 0.0
      %1293 = vadd.xlane.f32.xlu0 %v1292
      %v1294 = vpop.xlane.xlu0 %1293
      %v1295 = vsel %vm577, %v1274, 0.0
      %1296 = vadd.xlane.f32.xlu0 %v1295
      %v1297 = vpop.xlane.xlu0 %1296
      %v1298 = vsel %vm577, %v1276, 0.0
      %1299 = vadd.xlane.f32.xlu0 %v1298
      %v1300 = vpop.xlane.xlu0 %1299
      %v1301 = vrcp.pop %v1279
      %v1302 = vmul.f32 %v1262, %v1301
      %v1303 = vrcp.pop %v1282
      %v1304 = vmul.f32 %v1264, %v1303
      %v1305 = vrcp.pop %v1285
      %v1306 = vmul.f32 %v1266, %v1305
      %v1307 = vrcp.pop %v1288
      %v1308 = vmul.f32 %v1268, %v1307
      %v1309 = vrcp.pop %v1291
      %v1310 = vmul.f32 %v1270, %v1309
      %v1311 = vrcp.pop %v1294
      %v1312 = vmul.f32 %v1272, %v1311
      %v1313 = vrcp.pop %v1297
      %v1314 = vmul.f32 %v1274, %v1313
      %v1315 = vrcp.pop %v1300
      %v1316 = vmul.f32 %v1276, %v1315
      %v1317 = vpack.c.bf16 %v1304, %v1302
      %v1318 = vpack.c.bf16 %v1308, %v1306
      %v1319 = vpack.c.bf16 %v1312, %v1310
      %v1320 = vpack.c.bf16 %v1316, %v1314
      %1321 = vrot.lane.b32.xlu0 %v690, 96
      %v1322 = vpop.permute.xlu0 %1321
      %1323 = vrot.lane.b32.xlu0 %v691, 96
      %v1324 = vpop.permute.xlu0 %1323
      %1325 = vrot.lane.b32.xlu0 %v692, 96
      %v1326 = vpop.permute.xlu0 %1325
      %1327 = vrot.lane.b32.xlu0 %v693, 96
      %v1328 = vpop.permute.xlu0 %1327
      %1329 = vrot.lane.b32.xlu0 %v694, 96
      %v1330 = vpop.permute.xlu0 %1329
      %v1337 = vsel %vm577, %v1317, 0
      %v1340 = vsel %vm577, %v1318, 0
      %v1343 = vsel %vm577, %v1319, 0
      %v1346 = vsel %vm577, %v1320, 0
      %1348 = vmatprep.subr.bf16.mxu0 0
      %1349 = vmatpush1.bf16.msra.mxu0 %v1322
      %1350 = vmatprep.subr.bf16.mxu0 0
      %1351 = vmatpush1.bf16.msra.mxu0 %v1324
      %1352 = vmatprep.subr.bf16.mxu0 0
      %1353 = vmatpush1.bf16.msra.mxu0 %v1326
      %1354 = vmatprep.subr.bf16.mxu0 0
      %1355 = vmatpush1.bf16.msra.mxu0 %v1328
      %1356 = vmatprep.subr.bf16.mxu0 0
      %1357 = vmatpush1.bf16.msra.mxu0 %v1330
      %1358 = vmatprep.subr.bf16.mxu0 0
      %1359 = vmatpush1.bf16.msra.mxu0 0
      %1360 = vmatprep.subr.bf16.mxu0 0
      %1361 = vmatpush1.bf16.msra.mxu0 0
      %1362 = vmatprep.subr.bf16.mxu0 0
      %1363 = vmatpush1.bf16.msra.mxu0 0
      %1364 = vmatprep.subr.bf16.mxu0 0
      %1365 = vmatpush1.bf16.msra.mxu0 0
      %1366 = vmatprep.subr.bf16.mxu0 0
      %1367 = vmatpush1.bf16.msra.mxu0 0
      %1368 = vmatprep.subr.bf16.mxu0 0
      %1369 = vmatpush1.bf16.msra.mxu0 0
      %1370 = vmatprep.subr.bf16.mxu0 0
      %1371 = vmatpush1.bf16.msra.mxu0 0
      %1372 = vmatprep.subr.bf16.mxu0 0
      %1373 = vmatpush1.bf16.msra.mxu0 0
      %1374 = vmatprep.subr.bf16.mxu0 0
      %1375 = vmatpush1.bf16.msra.mxu0 0
      %1376 = vmatprep.subr.bf16.mxu0 0
      %1377 = vmatpush1.bf16.msra.mxu0 0
      %1378 = vmatprep.subr.bf16.mxu0 0
      %1379 = vmatpush1.bf16.msra.mxu0 0
      %1380 = vmatprep.mubr.bf16.mxu0 0
      %1381 = vmatmul.mubr.bf16.gmra.mrb[0].mxu0 %v1337
      %v1382 = vpop.f32.mrb[0].mxu0
      %v1383 = vadd.f32 0.0, %v1382
      %v1384 = vpop.f32.mrb[0].mxu0
      %v1385 = vpop.f32.mrb[0].mxu0
      %v1386 = vadd.f32 0.0, %v1385
      %v1387 = vpop.f32.mrb[0].mxu0
      %1388 = vmatprep.mubr.bf16.mxu0 0
      %1389 = vmatmul.mubr.bf16.gmra.mrb[0].mxu0 %v1340
      %v1390 = vpop.f32.mrb[0].mxu0
      %v1391 = vadd.f32 0.0, %v1390
      %v1392 = vpop.f32.mrb[0].mxu0
      %v1393 = vpop.f32.mrb[0].mxu0
      %v1394 = vadd.f32 0.0, %v1393
      %v1395 = vpop.f32.mrb[0].mxu0
      %1396 = vmatprep.mubr.bf16.mxu0 0
      %1397 = vmatmul.mubr.bf16.gmra.mrb[0].mxu0 %v1343
      %v1398 = vpop.f32.mrb[0].mxu0
      %v1399 = vadd.f32 0.0, %v1398
      %v1400 = vpop.f32.mrb[0].mxu0
      %v1401 = vpop.f32.mrb[0].mxu0
      %v1402 = vadd.f32 0.0, %v1401
      %v1403 = vpop.f32.mrb[0].mxu0
      %1404 = vmatprep.mubr.bf16.mxu0 0
      %1405 = vmatmul.mubr.bf16.gmra.mrb[0].mxu0 %v1346
      %v1406 = vpop.f32.mrb[0].mxu0
      %v1407 = vadd.f32 0.0, %v1406
      %v1408 = vpop.f32.mrb[0].mxu0
      %v1409 = vpop.f32.mrb[0].mxu0
      %v1410 = vadd.f32 0.0, %v1409
      %v1411 = vpop.f32.mrb[0].mxu0
      %1412 = vdwg.mxu0
      %1413 = vrot.lane.b32.xlu0 %v381, 80
      %v1414 = vpop.permute.xlu0 %1413
      %1415 = vrot.lane.b32.xlu0 %v382, 80
      %v1416 = vpop.permute.xlu0 %1415
      %1417 = vrot.lane.b32.xlu0 %v383, 80
      %v1418 = vpop.permute.xlu0 %1417
      %1419 = vrot.lane.b32.xlu0 %v384, 80
      %v1420 = vpop.permute.xlu0 %1419
      %1421 = vrot.lane.b32.xlu0 %v405, 80
      %v1422 = vpop.permute.xlu0 %1421
      %1423 = vrot.lane.b32.xlu0 %v406, 80
      %v1424 = vpop.permute.xlu0 %1423
      %1425 = vrot.lane.b32.xlu0 %v407, 80
      %v1426 = vpop.permute.xlu0 %1425
      %1427 = vrot.lane.b32.xlu0 %v408, 80
      %v1428 = vpop.permute.xlu0 %1427
      %1429 = vrot.lane.b32.xlu0 %v409, 80
      %v1430 = vpop.permute.xlu0 %1429
      %v1432 = vsel %vm410, %v1414, 0
      %v1435 = vsel %vm410, %v1416, 0
      %v1438 = vsel %vm410, %v1418, 0
      %v1441 = vsel %vm410, %v1420, 0
      %v1444 = vsel %vm410, %v1422, 0
      %v1447 = vsel %vm410, %v1424, 0
      %v1450 = vsel %vm410, %v1426, 0
      %v1453 = vsel %vm410, %v1428, 0
      %v1456 = vsel %vm410, %v1430, 0
      %1458 = vmatprep.subr.bf16.mxu0 0
      %1459 = vmatpush1.bf16.xpose.msra.mxu0 %v1444
      %1460 = vmatprep.subr.bf16.mxu0 0
      %1461 = vmatpush1.bf16.xpose.msra.mxu0 %v1447
      %1462 = vmatprep.subr.bf16.mxu0 0
      %1463 = vmatpush1.bf16.xpose.msra.mxu0 %v1450
      %1464 = vmatprep.subr.bf16.mxu0 0
      %1465 = vmatpush1.bf16.xpose.msra.mxu0 %v1453
      %1466 = vmatprep.subr.bf16.mxu0 0
      %1467 = vmatpush1.bf16.xpose.msra.mxu0 %v1456
      %1468 = vmatprep.subr.bf16.mxu0 0
      %1469 = vmatpush1.bf16.xpose.msra.mxu0 0
      %1470 = vmatprep.subr.bf16.mxu0 0
      %1471 = vmatpush1.bf16.xpose.msra.mxu0 0
      %1472 = vmatprep.subr.bf16.mxu0 0
      %1473 = vmatpush1.bf16.xpose.msra.mxu0 0
      %1474 = vmatprep.subr.bf16.mxu0 0
      %1475 = vmatpush1.bf16.xpose.msra.mxu0 0
      %1476 = vmatprep.subr.bf16.mxu0 0
      %1477 = vmatpush1.bf16.xpose.msra.mxu0 0
      %1478 = vmatprep.subr.bf16.mxu0 0
      %1479 = vmatpush1.bf16.xpose.msra.mxu0 0
      %1480 = vmatprep.subr.bf16.mxu0 0
      %1481 = vmatpush1.bf16.xpose.msra.mxu0 0
      %1482 = vmatprep.subr.bf16.mxu0 0
      %1483 = vmatpush1.bf16.xpose.msra.mxu0 0
      %1484 = vmatprep.subr.bf16.mxu0 0
      %1485 = vmatpush1.bf16.xpose.msra.mxu0 0
      %1486 = vmatprep.subr.bf16.mxu0 0
      %1487 = vmatpush1.bf16.xpose.msra.mxu0 0
      %1488 = vmatprep.subr.bf16.mxu0 0
      %1489 = vmatpush1.bf16.xpose.msra.mxu0 0
      %1490 = vmatprep.mubr.bf16.mxu0 0
      %1491 = vmatmul.mubr.bf16.gmra.mrb[0].mxu0 %v1432
      %v1492 = vpop.f32.mrb[0].mxu0
      %v1493 = vadd.f32 0.0, %v1492
      %v1494 = vpop.f32.mrb[0].mxu0
      %v1495 = vpop.f32.mrb[0].mxu0
      %v1496 = vadd.f32 0.0, %v1495
      %v1497 = vpop.f32.mrb[0].mxu0
      %1498 = vmatprep.mubr.bf16.mxu0 0
      %1499 = vmatmul.mubr.bf16.gmra.mrb[0].mxu0 %v1435
      %v1500 = vpop.f32.mrb[0].mxu0
      %v1501 = vadd.f32 0.0, %v1500
      %v1502 = vpop.f32.mrb[0].mxu0
      %v1503 = vpop.f32.mrb[0].mxu0
      %v1504 = vadd.f32 0.0, %v1503
      %v1505 = vpop.f32.mrb[0].mxu0
      %1506 = vmatprep.mubr.bf16.mxu0 0
      %1507 = vmatmul.mubr.bf16.gmra.mrb[0].mxu0 %v1438
      %v1508 = vpop.f32.mrb[0].mxu0
      %v1509 = vadd.f32 0.0, %v1508
      %v1510 = vpop.f32.mrb[0].mxu0
      %v1511 = vpop.f32.mrb[0].mxu0
      %v1512 = vadd.f32 0.0, %v1511
      %v1513 = vpop.f32.mrb[0].mxu0
      %1514 = vmatprep.mubr.bf16.mxu0 0
      %1515 = vmatmul.mubr.bf16.gmra.mrb[0].mxu0 %v1441
      %v1516 = vpop.f32.mrb[0].mxu0
      %v1517 = vadd.f32 0.0, %v1516
      %v1518 = vpop.f32.mrb[0].mxu0
      %v1519 = vpop.f32.mrb[0].mxu0
      %v1520 = vadd.f32 0.0, %v1519
      %v1521 = vpop.f32.mrb[0].mxu0
      %1522 = vdwg.mxu0
      %v1523 = vsel %vm543, %v1493, -1e+10
      %v1524 = vsel %vm544, %v1496, -1e+10
      %v1525 = vsel %vm545, %v1501, -1e+10
      %v1526 = vsel %vm546, %v1504, -1e+10
      %v1527 = vsel %vm547, %v1509, -1e+10
      %v1528 = vsel %vm548, %v1512, -1e+10
      %v1529 = vsel %vm549, %v1517, -1e+10
      %v1530 = vsel %vm550, %v1520, -1e+10
      %v1531 = vmul.f32 %v1523, 0.25
      %v1532 = vmul.f32 %v1524, 0.25
      %v1533 = vmul.f32 %v1525, 0.25
      %v1534 = vmul.f32 %v1526, 0.25
      %v1535 = vmul.f32 %v1527, 0.25
      %v1536 = vmul.f32 %v1528, 0.25
      %v1537 = vmul.f32 %v1529, 0.25
      %v1538 = vmul.f32 %v1530, 0.25
      %v1539 = vsel %vm568, %v1531, -1e+30
      %v1540 = vsel %vm568, %v1532, -1e+30
      %v1541 = vsel %vm568, %v1533, -1e+30
      %v1542 = vsel %vm568, %v1534, -1e+30
      %v1543 = vsel %vm568, %v1535, -1e+30
      %v1544 = vsel %vm568, %v1536, -1e+30
      %v1545 = vsel %vm568, %v1537, -1e+30
      %v1546 = vsel %vm568, %v1538, -1e+30
      %v1547 = vsel %vm577, %v1539, -inf
      %1548 = vmax.xlane.f32.xlu0 %v1547
      %v1549 = vpop.xlane.xlu0 %1548
      %v1550 = vsel %vm577, %v1540, -inf
      %1551 = vmax.xlane.f32.xlu0 %v1550
      %v1552 = vpop.xlane.xlu0 %1551
      %v1553 = vsel %vm577, %v1541, -inf
      %1554 = vmax.xlane.f32.xlu0 %v1553
      %v1555 = vpop.xlane.xlu0 %1554
      %v1556 = vsel %vm577, %v1542, -inf
      %1557 = vmax.xlane.f32.xlu0 %v1556
      %v1558 = vpop.xlane.xlu0 %1557
      %v1559 = vsel %vm577, %v1543, -inf
      %1560 = vmax.xlane.f32.xlu0 %v1559
      %v1561 = vpop.xlane.xlu0 %1560
      %v1562 = vsel %vm577, %v1544, -inf
      %1563 = vmax.xlane.f32.xlu0 %v1562
      %v1564 = vpop.xlane.xlu0 %1563
      %v1565 = vsel %vm577, %v1545, -inf
      %1566 = vmax.xlane.f32.xlu0 %v1565
      %v1567 = vpop.xlane.xlu0 %1566
      %v1568 = vsel %vm577, %v1546, -inf
      %1569 = vmax.xlane.f32.xlu0 %v1568
      %v1570 = vpop.xlane.xlu0 %1569
      %v1571 = vsub.f32 %v1539, %v1549
      %v1572 = vsub.f32 %v1540, %v1552
      %v1573 = vsub.f32 %v1541, %v1555
      %v1574 = vsub.f32 %v1542, %v1558
      %v1575 = vsub.f32 %v1543, %v1561
      %v1576 = vsub.f32 %v1544, %v1564
      %v1577 = vsub.f32 %v1545, %v1567
      %v1578 = vsub.f32 %v1546, %v1570
      %v1579 = vmul.f32 %v1571, 1.442695
      %v1580 = vpow.pop %v1579
      %v1581 = vmul.f32 %v1572, 1.442695
      %v1582 = vpow.pop %v1581
      %v1583 = vmul.f32 %v1573, 1.442695
      %v1584 = vpow.pop %v1583
      %v1585 = vmul.f32 %v1574, 1.442695
      %v1586 = vpow.pop %v1585
      %v1587 = vmul.f32 %v1575, 1.442695
      %v1588 = vpow.pop %v1587
      %v1589 = vmul.f32 %v1576, 1.442695
      %v1590 = vpow.pop %v1589
      %v1591 = vmul.f32 %v1577, 1.442695
      %v1592 = vpow.pop %v1591
      %v1593 = vmul.f32 %v1578, 1.442695
      %v1594 = vpow.pop %v1593
      %v1595 = vsel %vm577, %v1580, 0.0
      %1596 = vadd.xlane.f32.xlu0 %v1595
      %v1597 = vpop.xlane.xlu0 %1596
      %v1598 = vsel %vm577, %v1582, 0.0
      %1599 = vadd.xlane.f32.xlu0 %v1598
      %v1600 = vpop.xlane.xlu0 %1599
      %v1601 = vsel %vm577, %v1584, 0.0
      %1602 = vadd.xlane.f32.xlu0 %v1601
      %v1603 = vpop.xlane.xlu0 %1602
      %v1604 = vsel %vm577, %v1586, 0.0
      %1605 = vadd.xlane.f32.xlu0 %v1604
      %v1606 = vpop.xlane.xlu0 %1605
      %v1607 = vsel %vm577, %v1588, 0.0
      %1608 = vadd.xlane.f32.xlu0 %v1607
      %v1609 = vpop.xlane.xlu0 %1608
      %v1610 = vsel %vm577, %v1590, 0.0
      %1611 = vadd.xlane.f32.xlu0 %v1610
      %v1612 = vpop.xlane.xlu0 %1611
      %v1613 = vsel %vm577, %v1592, 0.0
      %1614 = vadd.xlane.f32.xlu0 %v1613
      %v1615 = vpop.xlane.xlu0 %1614
      %v1616 = vsel %vm577, %v1594, 0.0
      %1617 = vadd.xlane.f32.xlu0 %v1616
      %v1618 = vpop.xlane.xlu0 %1617
      %v1619 = vrcp.pop %v1597
      %v1620 = vmul.f32 %v1580, %v1619
      %v1621 = vrcp.pop %v1600
      %v1622 = vmul.f32 %v1582, %v1621
      %v1623 = vrcp.pop %v1603
      %v1624 = vmul.f32 %v1584, %v1623
      %v1625 = vrcp.pop %v1606
      %v1626 = vmul.f32 %v1586, %v1625
      %v1627 = vrcp.pop %v1609
      %v1628 = vmul.f32 %v1588, %v1627
      %v1629 = vrcp.pop %v1612
      %v1630 = vmul.f32 %v1590, %v1629
      %v1631 = vrcp.pop %v1615
      %v1632 = vmul.f32 %v1592, %v1631
      %v1633 = vrcp.pop %v1618
      %v1634 = vmul.f32 %v1594, %v1633
      %v1635 = vpack.c.bf16 %v1622, %v1620
      %v1636 = vpack.c.bf16 %v1626, %v1624
      %v1637 = vpack.c.bf16 %v1630, %v1628
      %v1638 = vpack.c.bf16 %v1634, %v1632
      %1639 = vrot.lane.b32.xlu0 %v690, 80
      %v1640 = vpop.permute.xlu0 %1639
      %1641 = vrot.lane.b32.xlu0 %v691, 80
      %v1642 = vpop.permute.xlu0 %1641
      %1643 = vrot.lane.b32.xlu0 %v692, 80
      %v1644 = vpop.permute.xlu0 %1643
      %1645 = vrot.lane.b32.xlu0 %v693, 80
      %v1646 = vpop.permute.xlu0 %1645
      %1647 = vrot.lane.b32.xlu0 %v694, 80
      %v1648 = vpop.permute.xlu0 %1647
      %v1655 = vsel %vm577, %v1635, 0
      %v1658 = vsel %vm577, %v1636, 0
      %v1661 = vsel %vm577, %v1637, 0
      %v1664 = vsel %vm577, %v1638, 0
      %1666 = vmatprep.subr.bf16.mxu0 0
      %1667 = vmatpush1.bf16.msra.mxu0 %v1640
      %1668 = vmatprep.subr.bf16.mxu0 0
      %1669 = vmatpush1.bf16.msra.mxu0 %v1642
      %1670 = vmatprep.subr.bf16.mxu0 0
      %1671 = vmatpush1.bf16.msra.mxu0 %v1644
      %1672 = vmatprep.subr.bf16.mxu0 0
      %1673 = vmatpush1.bf16.msra.mxu0 %v1646
      %1674 = vmatprep.subr.bf16.mxu0 0
      %1675 = vmatpush1.bf16.msra.mxu0 %v1648
      %1676 = vmatprep.subr.bf16.mxu0 0
      %1677 = vmatpush1.bf16.msra.mxu0 0
      %1678 = vmatprep.subr.bf16.mxu0 0
      %1679 = vmatpush1.bf16.msra.mxu0 0
      %1680 = vmatprep.subr.bf16.mxu0 0
      %1681 = vmatpush1.bf16.msra.mxu0 0
      %1682 = vmatprep.subr.bf16.mxu0 0
      %1683 = vmatpush1.bf16.msra.mxu0 0
      %1684 = vmatprep.subr.bf16.mxu0 0
      %1685 = vmatpush1.bf16.msra.mxu0 0
      %1686 = vmatprep.subr.bf16.mxu0 0
      %1687 = vmatpush1.bf16.msra.mxu0 0
      %1688 = vmatprep.subr.bf16.mxu0 0
      %1689 = vmatpush1.bf16.msra.mxu0 0
      %1690 = vmatprep.subr.bf16.mxu0 0
      %1691 = vmatpush1.bf16.msra.mxu0 0
      %1692 = vmatprep.subr.bf16.mxu0 0
      %1693 = vmatpush1.bf16.msra.mxu0 0
      %1694 = vmatprep.subr.bf16.mxu0 0
      %1695 = vmatpush1.bf16.msra.mxu0 0
      %1696 = vmatprep.subr.bf16.mxu0 0
      %1697 = vmatpush1.bf16.msra.mxu0 0
      %1698 = vmatprep.mubr.bf16.mxu0 0
      %1699 = vmatmul.mubr.bf16.gmra.mrb[0].mxu0 %v1655
      %v1700 = vpop.f32.mrb[0].mxu0
      %v1701 = vadd.f32 0.0, %v1700
      %v1702 = vpop.f32.mrb[0].mxu0
      %v1703 = vpop.f32.mrb[0].mxu0
      %v1704 = vadd.f32 0.0, %v1703
      %v1705 = vpop.f32.mrb[0].mxu0
      %1706 = vmatprep.mubr.bf16.mxu0 0
      %1707 = vmatmul.mubr.bf16.gmra.mrb[0].mxu0 %v1658
      %v1708 = vpop.f32.mrb[0].mxu0
      %v1709 = vadd.f32 0.0, %v1708
      %v1710 = vpop.f32.mrb[0].mxu0
      %v1711 = vpop.f32.mrb[0].mxu0
      %v1712 = vadd.f32 0.0, %v1711
      %v1713 = vpop.f32.mrb[0].mxu0
      %1714 = vmatprep.mubr.bf16.mxu0 0
      %1715 = vmatmul.mubr.bf16.gmra.mrb[0].mxu0 %v1661
      %v1716 = vpop.f32.mrb[0].mxu0
      %v1717 = vadd.f32 0.0, %v1716
      %v1718 = vpop.f32.mrb[0].mxu0
      %v1719 = vpop.f32.mrb[0].mxu0
      %v1720 = vadd.f32 0.0, %v1719
      %v1721 = vpop.f32.mrb[0].mxu0
      %1722 = vmatprep.mubr.bf16.mxu0 0
      %1723 = vmatmul.mubr.bf16.gmra.mrb[0].mxu0 %v1664
      %v1724 = vpop.f32.mrb[0].mxu0
      %v1725 = vadd.f32 0.0, %v1724
      %v1726 = vpop.f32.mrb[0].mxu0
      %v1727 = vpop.f32.mrb[0].mxu0
      %v1728 = vadd.f32 0.0, %v1727
      %v1729 = vpop.f32.mrb[0].mxu0
      %1730 = vdwg.mxu0
      %1731 = vrot.lane.b32.xlu0 %v381, 64
      %v1732 = vpop.permute.xlu0 %1731
      %1733 = vrot.lane.b32.xlu0 %v382, 64
      %v1734 = vpop.permute.xlu0 %1733
      %1735 = vrot.lane.b32.xlu0 %v383, 64
      %v1736 = vpop.permute.xlu0 %1735
      %1737 = vrot.lane.b32.xlu0 %v384, 64
      %v1738 = vpop.permute.xlu0 %1737
      %1739 = vrot.lane.b32.xlu0 %v405, 64
      %v1740 = vpop.permute.xlu0 %1739
      %1741 = vrot.lane.b32.xlu0 %v406, 64
      %v1742 = vpop.permute.xlu0 %1741
      %1743 = vrot.lane.b32.xlu0 %v407, 64
      %v1744 = vpop.permute.xlu0 %1743
      %1745 = vrot.lane.b32.xlu0 %v408, 64
      %v1746 = vpop.permute.xlu0 %1745
      %1747 = vrot.lane.b32.xlu0 %v409, 64
      %v1748 = vpop.permute.xlu0 %1747
      %v1750 = vsel %vm410, %v1732, 0
      %v1753 = vsel %vm410, %v1734, 0
      %v1756 = vsel %vm410, %v1736, 0
      %v1759 = vsel %vm410, %v1738, 0
      %v1762 = vsel %vm410, %v1740, 0
      %v1765 = vsel %vm410, %v1742, 0
      %v1768 = vsel %vm410, %v1744, 0
      %v1771 = vsel %vm410, %v1746, 0
      %v1774 = vsel %vm410, %v1748, 0
      %1776 = vmatprep.subr.bf16.mxu0 0
      %1777 = vmatpush1.bf16.xpose.msra.mxu0 %v1762
      %1778 = vmatprep.subr.bf16.mxu0 0
      %1779 = vmatpush1.bf16.xpose.msra.mxu0 %v1765
      %1780 = vmatprep.subr.bf16.mxu0 0
      %1781 = vmatpush1.bf16.xpose.msra.mxu0 %v1768
      %1782 = vmatprep.subr.bf16.mxu0 0
      %1783 = vmatpush1.bf16.xpose.msra.mxu0 %v1771
      %1784 = vmatprep.subr.bf16.mxu0 0
      %1785 = vmatpush1.bf16.xpose.msra.mxu0 %v1774
      %1786 = vmatprep.subr.bf16.mxu0 0
      %1787 = vmatpush1.bf16.xpose.msra.mxu0 0
      %1788 = vmatprep.subr.bf16.mxu0 0
      %1789 = vmatpush1.bf16.xpose.msra.mxu0 0
      %1790 = vmatprep.subr.bf16.mxu0 0
      %1791 = vmatpush1.bf16.xpose.msra.mxu0 0
      %1792 = vmatprep.subr.bf16.mxu0 0
      %1793 = vmatpush1.bf16.xpose.msra.mxu0 0
      %1794 = vmatprep.subr.bf16.mxu0 0
      %1795 = vmatpush1.bf16.xpose.msra.mxu0 0
      %1796 = vmatprep.subr.bf16.mxu0 0
      %1797 = vmatpush1.bf16.xpose.msra.mxu0 0
      %1798 = vmatprep.subr.bf16.mxu0 0
      %1799 = vmatpush1.bf16.xpose.msra.mxu0 0
      %1800 = vmatprep.subr.bf16.mxu0 0
      %1801 = vmatpush1.bf16.xpose.msra.mxu0 0
      %1802 = vmatprep.subr.bf16.mxu0 0
      %1803 = vmatpush1.bf16.xpose.msra.mxu0 0
      %1804 = vmatprep.subr.bf16.mxu0 0
      %1805 = vmatpush1.bf16.xpose.msra.mxu0 0
      %1806 = vmatprep.subr.bf16.mxu0 0
      %1807 = vmatpush1.bf16.xpose.msra.mxu0 0
      %1808 = vmatprep.mubr.bf16.mxu0 0
      %1809 = vmatmul.mubr.bf16.gmra.mrb[0].mxu0 %v1750
      %v1810 = vpop.f32.mrb[0].mxu0
      %v1811 = vadd.f32 0.0, %v1810
      %v1812 = vpop.f32.mrb[0].mxu0
      %v1813 = vpop.f32.mrb[0].mxu0
      %v1814 = vadd.f32 0.0, %v1813
      %v1815 = vpop.f32.mrb[0].mxu0
      %1816 = vmatprep.mubr.bf16.mxu0 0
      %1817 = vmatmul.mubr.bf16.gmra.mrb[0].mxu0 %v1753
      %v1818 = vpop.f32.mrb[0].mxu0
      %v1819 = vadd.f32 0.0, %v1818
      %v1820 = vpop.f32.mrb[0].mxu0
      %v1821 = vpop.f32.mrb[0].mxu0
      %v1822 = vadd.f32 0.0, %v1821
      %v1823 = vpop.f32.mrb[0].mxu0
      %1824 = vmatprep.mubr.bf16.mxu0 0
      %1825 = vmatmul.mubr.bf16.gmra.mrb[0].mxu0 %v1756
      %v1826 = vpop.f32.mrb[0].mxu0
      %v1827 = vadd.f32 0.0, %v1826
      %v1828 = vpop.f32.mrb[0].mxu0
      %v1829 = vpop.f32.mrb[0].mxu0
      %v1830 = vadd.f32 0.0, %v1829
      %v1831 = vpop.f32.mrb[0].mxu0
      %1832 = vmatprep.mubr.bf16.mxu0 0
      %1833 = vmatmul.mubr.bf16.gmra.mrb[0].mxu0 %v1759
      %v1834 = vpop.f32.mrb[0].mxu0
      %v1835 = vadd.f32 0.0, %v1834
      %v1836 = vpop.f32.mrb[0].mxu0
      %v1837 = vpop.f32.mrb[0].mxu0
      %v1838 = vadd.f32 0.0, %v1837
      %v1839 = vpop.f32.mrb[0].mxu0
      %1840 = vdwg.mxu0
      %v1841 = vsel %vm543, %v1811, -1e+10
      %v1842 = vsel %vm544, %v1814, -1e+10
      %v1843 = vsel %vm545, %v1819, -1e+10
      %v1844 = vsel %vm546, %v1822, -1e+10
      %v1845 = vsel %vm547, %v1827, -1e+10
      %v1846 = vsel %vm548, %v1830, -1e+10
      %v1847 = vsel %vm549, %v1835, -1e+10
      %v1848 = vsel %vm550, %v1838, -1e+10
      %v1849 = vmul.f32 %v1841, 0.25
      %v1850 = vmul.f32 %v1842, 0.25
      %v1851 = vmul.f32 %v1843, 0.25
      %v1852 = vmul.f32 %v1844, 0.25
      %v1853 = vmul.f32 %v1845, 0.25
      %v1854 = vmul.f32 %v1846, 0.25
      %v1855 = vmul.f32 %v1847, 0.25
      %v1856 = vmul.f32 %v1848, 0.25
      %v1857 = vsel %vm568, %v1849, -1e+30
      %v1858 = vsel %vm568, %v1850, -1e+30
      %v1859 = vsel %vm568, %v1851, -1e+30
      %v1860 = vsel %vm568, %v1852, -1e+30
      %v1861 = vsel %vm568, %v1853, -1e+30
      %v1862 = vsel %vm568, %v1854, -1e+30
      %v1863 = vsel %vm568, %v1855, -1e+30
      %v1864 = vsel %vm568, %v1856, -1e+30
      %v1865 = vsel %vm577, %v1857, -inf
      %1866 = vmax.xlane.f32.xlu0 %v1865
      %v1867 = vpop.xlane.xlu0 %1866
      %v1868 = vsel %vm577, %v1858, -inf
      %1869 = vmax.xlane.f32.xlu0 %v1868
      %v1870 = vpop.xlane.xlu0 %1869
      %v1871 = vsel %vm577, %v1859, -inf
      %1872 = vmax.xlane.f32.xlu0 %v1871
      %v1873 = vpop.xlane.xlu0 %1872
      %v1874 = vsel %vm577, %v1860, -inf
      %1875 = vmax.xlane.f32.xlu0 %v1874
      %v1876 = vpop.xlane.xlu0 %1875
      %v1877 = vsel %vm577, %v1861, -inf
      %1878 = vmax.xlane.f32.xlu0 %v1877
      %v1879 = vpop.xlane.xlu0 %1878
      %v1880 = vsel %vm577, %v1862, -inf
      %1881 = vmax.xlane.f32.xlu0 %v1880
      %v1882 = vpop.xlane.xlu0 %1881
      %v1883 = vsel %vm577, %v1863, -inf
      %1884 = vmax.xlane.f32.xlu0 %v1883
      %v1885 = vpop.xlane.xlu0 %1884
      %v1886 = vsel %vm577, %v1864, -inf
      %1887 = vmax.xlane.f32.xlu0 %v1886
      %v1888 = vpop.xlane.xlu0 %1887
      %v1889 = vsub.f32 %v1857, %v1867
      %v1890 = vsub.f32 %v1858, %v1870
      %v1891 = vsub.f32 %v1859, %v1873
      %v1892 = vsub.f32 %v1860, %v1876
      %v1893 = vsub.f32 %v1861, %v1879
      %v1894 = vsub.f32 %v1862, %v1882
      %v1895 = vsub.f32 %v1863, %v1885
      %v1896 = vsub.f32 %v1864, %v1888
      %v1897 = vmul.f32 %v1889, 1.442695
      %v1898 = vpow.pop %v1897
      %v1899 = vmul.f32 %v1890, 1.442695
      %v1900 = vpow.pop %v1899
      %v1901 = vmul.f32 %v1891, 1.442695
      %v1902 = vpow.pop %v1901
      %v1903 = vmul.f32 %v1892, 1.442695
      %v1904 = vpow.pop %v1903
      %v1905 = vmul.f32 %v1893, 1.442695
      %v1906 = vpow.pop %v1905
      %v1907 = vmul.f32 %v1894, 1.442695
      %v1908 = vpow.pop %v1907
      %v1909 = vmul.f32 %v1895, 1.442695
      %v1910 = vpow.pop %v1909
      %v1911 = vmul.f32 %v1896, 1.442695
      %v1912 = vpow.pop %v1911
      %v1913 = vsel %vm577, %v1898, 0.0
      %1914 = vadd.xlane.f32.xlu0 %v1913
      %v1915 = vpop.xlane.xlu0 %1914
      %v1916 = vsel %vm577, %v1900, 0.0
      %1917 = vadd.xlane.f32.xlu0 %v1916
      %v1918 = vpop.xlane.xlu0 %1917
      %v1919 = vsel %vm577, %v1902, 0.0
      %1920 = vadd.xlane.f32.xlu0 %v1919
      %v1921 = vpop.xlane.xlu0 %1920
      %v1922 = vsel %vm577, %v1904, 0.0
      %1923 = vadd.xlane.f32.xlu0 %v1922
      %v1924 = vpop.xlane.xlu0 %1923
      %v1925 = vsel %vm577, %v1906, 0.0
      %1926 = vadd.xlane.f32.xlu0 %v1925
      %v1927 = vpop.xlane.xlu0 %1926
      %v1928 = vsel %vm577, %v1908, 0.0
      %1929 = vadd.xlane.f32.xlu0 %v1928
      %v1930 = vpop.xlane.xlu0 %1929
      %v1931 = vsel %vm577, %v1910, 0.0
      %1932 = vadd.xlane.f32.xlu0 %v1931
      %v1933 = vpop.xlane.xlu0 %1932
      %v1934 = vsel %vm577, %v1912, 0.0
      %1935 = vadd.xlane.f32.xlu0 %v1934
      %v1936 = vpop.xlane.xlu0 %1935
      %v1937 = vrcp.pop %v1915
      %v1938 = vmul.f32 %v1898, %v1937
      %v1939 = vrcp.pop %v1918
      %v1940 = vmul.f32 %v1900, %v1939
      %v1941 = vrcp.pop %v1921
      %v1942 = vmul.f32 %v1902, %v1941
      %v1943 = vrcp.pop %v1924
      %v1944 = vmul.f32 %v1904, %v1943
      %v1945 = vrcp.pop %v1927
      %v1946 = vmul.f32 %v1906, %v1945
      %v1947 = vrcp.pop %v1930
      %v1948 = vmul.f32 %v1908, %v1947
      %v1949 = vrcp.pop %v1933
      %v1950 = vmul.f32 %v1910, %v1949
      %v1951 = vrcp.pop %v1936
      %v1952 = vmul.f32 %v1912, %v1951
      %v1953 = vpack.c.bf16 %v1940, %v1938
      %v1954 = vpack.c.bf16 %v1944, %v1942
      %v1955 = vpack.c.bf16 %v1948, %v1946
      %v1956 = vpack.c.bf16 %v1952, %v1950
      %1957 = vrot.lane.b32.xlu0 %v690, 64
      %v1958 = vpop.permute.xlu0 %1957
      %1959 = vrot.lane.b32.xlu0 %v691, 64
      %v1960 = vpop.permute.xlu0 %1959
      %1961 = vrot.lane.b32.xlu0 %v692, 64
      %v1962 = vpop.permute.xlu0 %1961
      %1963 = vrot.lane.b32.xlu0 %v693, 64
      %v1964 = vpop.permute.xlu0 %1963
      %1965 = vrot.lane.b32.xlu0 %v694, 64
      %v1966 = vpop.permute.xlu0 %1965
      %v1973 = vsel %vm577, %v1953, 0
      %v1976 = vsel %vm577, %v1954, 0
      %v1979 = vsel %vm577, %v1955, 0
      %v1982 = vsel %vm577, %v1956, 0
      %1984 = vmatprep.subr.bf16.mxu0 0
      %1985 = vmatpush1.bf16.msra.mxu0 %v1958
      %1986 = vmatprep.subr.bf16.mxu0 0
      %1987 = vmatpush1.bf16.msra.mxu0 %v1960
      %1988 = vmatprep.subr.bf16.mxu0 0
      %1989 = vmatpush1.bf16.msra.mxu0 %v1962
      %1990 = vmatprep.subr.bf16.mxu0 0
      %1991 = vmatpush1.bf16.msra.mxu0 %v1964
      %1992 = vmatprep.subr.bf16.mxu0 0
      %1993 = vmatpush1.bf16.msra.mxu0 %v1966
      %1994 = vmatprep.subr.bf16.mxu0 0
      %1995 = vmatpush1.bf16.msra.mxu0 0
      %1996 = vmatprep.subr.bf16.mxu0 0
      %1997 = vmatpush1.bf16.msra.mxu0 0
      %1998 = vmatprep.subr.bf16.mxu0 0
      %1999 = vmatpush1.bf16.msra.mxu0 0
      %2000 = vmatprep.subr.bf16.mxu0 0
      %2001 = vmatpush1.bf16.msra.mxu0 0
      %2002 = vmatprep.subr.bf16.mxu0 0
      %2003 = vmatpush1.bf16.msra.mxu0 0
      %2004 = vmatprep.subr.bf16.mxu0 0
      %2005 = vmatpush1.bf16.msra.mxu0 0
      %2006 = vmatprep.subr.bf16.mxu0 0
      %2007 = vmatpush1.bf16.msra.mxu0 0
      %2008 = vmatprep.subr.bf16.mxu0 0
      %2009 = vmatpush1.bf16.msra.mxu0 0
      %2010 = vmatprep.subr.bf16.mxu0 0
      %2011 = vmatpush1.bf16.msra.mxu0 0
      %2012 = vmatprep.subr.bf16.mxu0 0
      %2013 = vmatpush1.bf16.msra.mxu0 0
      %2014 = vmatprep.subr.bf16.mxu0 0
      %2015 = vmatpush1.bf16.msra.mxu0 0
      %2016 = vmatprep.mubr.bf16.mxu0 0
      %2017 = vmatmul.mubr.bf16.gmra.mrb[0].mxu0 %v1973
      %v2018 = vpop.f32.mrb[0].mxu0
      %v2019 = vadd.f32 0.0, %v2018
      %v2020 = vpop.f32.mrb[0].mxu0
      %v2021 = vpop.f32.mrb[0].mxu0
      %v2022 = vadd.f32 0.0, %v2021
      %v2023 = vpop.f32.mrb[0].mxu0
      %2024 = vmatprep.mubr.bf16.mxu0 0
      %2025 = vmatmul.mubr.bf16.gmra.mrb[0].mxu0 %v1976
      %v2026 = vpop.f32.mrb[0].mxu0
      %v2027 = vadd.f32 0.0, %v2026
      %v2028 = vpop.f32.mrb[0].mxu0
      %v2029 = vpop.f32.mrb[0].mxu0
      %v2030 = vadd.f32 0.0, %v2029
      %v2031 = vpop.f32.mrb[0].mxu0
      %2032 = vmatprep.mubr.bf16.mxu0 0
      %2033 = vmatmul.mubr.bf16.gmra.mrb[0].mxu0 %v1979
      %v2034 = vpop.f32.mrb[0].mxu0
      %v2035 = vadd.f32 0.0, %v2034
      %v2036 = vpop.f32.mrb[0].mxu0
      %v2037 = vpop.f32.mrb[0].mxu0
      %v2038 = vadd.f32 0.0, %v2037
      %v2039 = vpop.f32.mrb[0].mxu0
      %2040 = vmatprep.mubr.bf16.mxu0 0
      %2041 = vmatmul.mubr.bf16.gmra.mrb[0].mxu0 %v1982
      %v2042 = vpop.f32.mrb[0].mxu0
      %v2043 = vadd.f32 0.0, %v2042
      %v2044 = vpop.f32.mrb[0].mxu0
      %v2045 = vpop.f32.mrb[0].mxu0
      %v2046 = vadd.f32 0.0, %v2045
      %v2047 = vpop.f32.mrb[0].mxu0
      %2048 = vdwg.mxu0
      %2049 = vrot.lane.b32.xlu0 %v381, 48
      %v2050 = vpop.permute.xlu0 %2049
      %2051 = vrot.lane.b32.xlu0 %v382, 48
      %v2052 = vpop.permute.xlu0 %2051
      %2053 = vrot.lane.b32.xlu0 %v383, 48
      %v2054 = vpop.permute.xlu0 %2053
      %2055 = vrot.lane.b32.xlu0 %v384, 48
      %v2056 = vpop.permute.xlu0 %2055
      %2057 = vrot.lane.b32.xlu0 %v405, 48
      %v2058 = vpop.permute.xlu0 %2057
      %2059 = vrot.lane.b32.xlu0 %v406, 48
      %v2060 = vpop.permute.xlu0 %2059
      %2061 = vrot.lane.b32.xlu0 %v407, 48
      %v2062 = vpop.permute.xlu0 %2061
      %2063 = vrot.lane.b32.xlu0 %v408, 48
      %v2064 = vpop.permute.xlu0 %2063
      %2065 = vrot.lane.b32.xlu0 %v409, 48
      %v2066 = vpop.permute.xlu0 %2065
      %v2068 = vsel %vm410, %v2050, 0
      %v2071 = vsel %vm410, %v2052, 0
      %v2074 = vsel %vm410, %v2054, 0
      %v2077 = vsel %vm410, %v2056, 0
      %v2080 = vsel %vm410, %v2058, 0
      %v2083 = vsel %vm410, %v2060, 0
      %v2086 = vsel %vm410, %v2062, 0
      %v2089 = vsel %vm410, %v2064, 0
      %v2092 = vsel %vm410, %v2066, 0
      %2094 = vmatprep.subr.bf16.mxu0 0
      %2095 = vmatpush1.bf16.xpose.msra.mxu0 %v2080
      %2096 = vmatprep.subr.bf16.mxu0 0
      %2097 = vmatpush1.bf16.xpose.msra.mxu0 %v2083
      %2098 = vmatprep.subr.bf16.mxu0 0
      %2099 = vmatpush1.bf16.xpose.msra.mxu0 %v2086
      %2100 = vmatprep.subr.bf16.mxu0 0
      %2101 = vmatpush1.bf16.xpose.msra.mxu0 %v2089
      %2102 = vmatprep.subr.bf16.mxu0 0
      %2103 = vmatpush1.bf16.xpose.msra.mxu0 %v2092
      %2104 = vmatprep.subr.bf16.mxu0 0
      %2105 = vmatpush1.bf16.xpose.msra.mxu0 0
      %2106 = vmatprep.subr.bf16.mxu0 0
      %2107 = vmatpush1.bf16.xpose.msra.mxu0 0
      %2108 = vmatprep.subr.bf16.mxu0 0
      %2109 = vmatpush1.bf16.xpose.msra.mxu0 0
      %2110 = vmatprep.subr.bf16.mxu0 0
      %2111 = vmatpush1.bf16.xpose.msra.mxu0 0
      %2112 = vmatprep.subr.bf16.mxu0 0
      %2113 = vmatpush1.bf16.xpose.msra.mxu0 0
      %2114 = vmatprep.subr.bf16.mxu0 0
      %2115 = vmatpush1.bf16.xpose.msra.mxu0 0
      %2116 = vmatprep.subr.bf16.mxu0 0
      %2117 = vmatpush1.bf16.xpose.msra.mxu0 0
      %2118 = vmatprep.subr.bf16.mxu0 0
      %2119 = vmatpush1.bf16.xpose.msra.mxu0 0
      %2120 = vmatprep.subr.bf16.mxu0 0
      %2121 = vmatpush1.bf16.xpose.msra.mxu0 0
      %2122 = vmatprep.subr.bf16.mxu0 0
      %2123 = vmatpush1.bf16.xpose.msra.mxu0 0
      %2124 = vmatprep.subr.bf16.mxu0 0
      %2125 = vmatpush1.bf16.xpose.msra.mxu0 0
      %2126 = vmatprep.mubr.bf16.mxu0 0
      %2127 = vmatmul.mubr.bf16.gmra.mrb[0].mxu0 %v2068
      %v2128 = vpop.f32.mrb[0].mxu0
      %v2129 = vadd.f32 0.0, %v2128
      %v2130 = vpop.f32.mrb[0].mxu0
      %v2131 = vpop.f32.mrb[0].mxu0
      %v2132 = vadd.f32 0.0, %v2131
      %v2133 = vpop.f32.mrb[0].mxu0
      %2134 = vmatprep.mubr.bf16.mxu0 0
      %2135 = vmatmul.mubr.bf16.gmra.mrb[0].mxu0 %v2071
      %v2136 = vpop.f32.mrb[0].mxu0
      %v2137 = vadd.f32 0.0, %v2136
      %v2138 = vpop.f32.mrb[0].mxu0
      %v2139 = vpop.f32.mrb[0].mxu0
      %v2140 = vadd.f32 0.0, %v2139
      %v2141 = vpop.f32.mrb[0].mxu0
      %2142 = vmatprep.mubr.bf16.mxu0 0
      %2143 = vmatmul.mubr.bf16.gmra.mrb[0].mxu0 %v2074
      %v2144 = vpop.f32.mrb[0].mxu0
      %v2145 = vadd.f32 0.0, %v2144
      %v2146 = vpop.f32.mrb[0].mxu0
      %v2147 = vpop.f32.mrb[0].mxu0
      %v2148 = vadd.f32 0.0, %v2147
      %v2149 = vpop.f32.mrb[0].mxu0
      %2150 = vmatprep.mubr.bf16.mxu0 0
      %2151 = vmatmul.mubr.bf16.gmra.mrb[0].mxu0 %v2077
      %v2152 = vpop.f32.mrb[0].mxu0
      %v2153 = vadd.f32 0.0, %v2152
      %v2154 = vpop.f32.mrb[0].mxu0
      %v2155 = vpop.f32.mrb[0].mxu0
      %v2156 = vadd.f32 0.0, %v2155
      %v2157 = vpop.f32.mrb[0].mxu0
      %2158 = vdwg.mxu0
      %v2159 = vsel %vm543, %v2129, -1e+10
      %v2160 = vsel %vm544, %v2132, -1e+10
      %v2161 = vsel %vm545, %v2137, -1e+10
      %v2162 = vsel %vm546, %v2140, -1e+10
      %v2163 = vsel %vm547, %v2145, -1e+10
      %v2164 = vsel %vm548, %v2148, -1e+10
      %v2165 = vsel %vm549, %v2153, -1e+10
      %v2166 = vsel %vm550, %v2156, -1e+10
      %v2167 = vmul.f32 %v2159, 0.25
      %v2168 = vmul.f32 %v2160, 0.25
      %v2169 = vmul.f32 %v2161, 0.25
      %v2170 = vmul.f32 %v2162, 0.25
      %v2171 = vmul.f32 %v2163, 0.25
      %v2172 = vmul.f32 %v2164, 0.25
      %v2173 = vmul.f32 %v2165, 0.25
      %v2174 = vmul.f32 %v2166, 0.25
      %v2175 = vsel %vm568, %v2167, -1e+30
      %v2176 = vsel %vm568, %v2168, -1e+30
      %v2177 = vsel %vm568, %v2169, -1e+30
      %v2178 = vsel %vm568, %v2170, -1e+30
      %v2179 = vsel %vm568, %v2171, -1e+30
      %v2180 = vsel %vm568, %v2172, -1e+30
      %v2181 = vsel %vm568, %v2173, -1e+30
      %v2182 = vsel %vm568, %v2174, -1e+30
      %v2183 = vsel %vm577, %v2175, -inf
      %2184 = vmax.xlane.f32.xlu0 %v2183
      %v2185 = vpop.xlane.xlu0 %2184
      %v2186 = vsel %vm577, %v2176, -inf
      %2187 = vmax.xlane.f32.xlu0 %v2186
      %v2188 = vpop.xlane.xlu0 %2187
      %v2189 = vsel %vm577, %v2177, -inf
      %2190 = vmax.xlane.f32.xlu0 %v2189
      %v2191 = vpop.xlane.xlu0 %2190
      %v2192 = vsel %vm577, %v2178, -inf
      %2193 = vmax.xlane.f32.xlu0 %v2192
      %v2194 = vpop.xlane.xlu0 %2193
      %v2195 = vsel %vm577, %v2179, -inf
      %2196 = vmax.xlane.f32.xlu0 %v2195
      %v2197 = vpop.xlane.xlu0 %2196
      %v2198 = vsel %vm577, %v2180, -inf
      %2199 = vmax.xlane.f32.xlu0 %v2198
      %v2200 = vpop.xlane.xlu0 %2199
      %v2201 = vsel %vm577, %v2181, -inf
      %2202 = vmax.xlane.f32.xlu0 %v2201
      %v2203 = vpop.xlane.xlu0 %2202
      %v2204 = vsel %vm577, %v2182, -inf
      %2205 = vmax.xlane.f32.xlu0 %v2204
      %v2206 = vpop.xlane.xlu0 %2205
      %v2207 = vsub.f32 %v2175, %v2185
      %v2208 = vsub.f32 %v2176, %v2188
      %v2209 = vsub.f32 %v2177, %v2191
      %v2210 = vsub.f32 %v2178, %v2194
      %v2211 = vsub.f32 %v2179, %v2197
      %v2212 = vsub.f32 %v2180, %v2200
      %v2213 = vsub.f32 %v2181, %v2203
      %v2214 = vsub.f32 %v2182, %v2206
      %v2215 = vmul.f32 %v2207, 1.442695
      %v2216 = vpow.pop %v2215
      %v2217 = vmul.f32 %v2208, 1.442695
      %v2218 = vpow.pop %v2217
      %v2219 = vmul.f32 %v2209, 1.442695
      %v2220 = vpow.pop %v2219
      %v2221 = vmul.f32 %v2210, 1.442695
      %v2222 = vpow.pop %v2221
      %v2223 = vmul.f32 %v2211, 1.442695
      %v2224 = vpow.pop %v2223
      %v2225 = vmul.f32 %v2212, 1.442695
      %v2226 = vpow.pop %v2225
      %v2227 = vmul.f32 %v2213, 1.442695
      %v2228 = vpow.pop %v2227
      %v2229 = vmul.f32 %v2214, 1.442695
      %v2230 = vpow.pop %v2229
      %v2231 = vsel %vm577, %v2216, 0.0
      %2232 = vadd.xlane.f32.xlu0 %v2231
      %v2233 = vpop.xlane.xlu0 %2232
      %v2234 = vsel %vm577, %v2218, 0.0
      %2235 = vadd.xlane.f32.xlu0 %v2234
      %v2236 = vpop.xlane.xlu0 %2235
      %v2237 = vsel %vm577, %v2220, 0.0
      %2238 = vadd.xlane.f32.xlu0 %v2237
      %v2239 = vpop.xlane.xlu0 %2238
      %v2240 = vsel %vm577, %v2222, 0.0
      %2241 = vadd.xlane.f32.xlu0 %v2240
      %v2242 = vpop.xlane.xlu0 %2241
      %v2243 = vsel %vm577, %v2224, 0.0
      %2244 = vadd.xlane.f32.xlu0 %v2243
      %v2245 = vpop.xlane.xlu0 %2244
      %v2246 = vsel %vm577, %v2226, 0.0
      %2247 = vadd.xlane.f32.xlu0 %v2246
      %v2248 = vpop.xlane.xlu0 %2247
      %v2249 = vsel %vm577, %v2228, 0.0
      %2250 = vadd.xlane.f32.xlu0 %v2249
      %v2251 = vpop.xlane.xlu0 %2250
      %v2252 = vsel %vm577, %v2230, 0.0
      %2253 = vadd.xlane.f32.xlu0 %v2252
      %v2254 = vpop.xlane.xlu0 %2253
      %v2255 = vrcp.pop %v2233
      %v2256 = vmul.f32 %v2216, %v2255
      %v2257 = vrcp.pop %v2236
      %v2258 = vmul.f32 %v2218, %v2257
      %v2259 = vrcp.pop %v2239
      %v2260 = vmul.f32 %v2220, %v2259
      %v2261 = vrcp.pop %v2242
      %v2262 = vmul.f32 %v2222, %v2261
      %v2263 = vrcp.pop %v2245
      %v2264 = vmul.f32 %v2224, %v2263
      %v2265 = vrcp.pop %v2248
      %v2266 = vmul.f32 %v2226, %v2265
      %v2267 = vrcp.pop %v2251
      %v2268 = vmul.f32 %v2228, %v2267
      %v2269 = vrcp.pop %v2254
      %v2270 = vmul.f32 %v2230, %v2269
      %v2271 = vpack.c.bf16 %v2258, %v2256
      %v2272 = vpack.c.bf16 %v2262, %v2260
      %v2273 = vpack.c.bf16 %v2266, %v2264
      %v2274 = vpack.c.bf16 %v2270, %v2268
      %2275 = vrot.lane.b32.xlu0 %v690, 48
      %v2276 = vpop.permute.xlu0 %2275
      %2277 = vrot.lane.b32.xlu0 %v691, 48
      %v2278 = vpop.permute.xlu0 %2277
      %2279 = vrot.lane.b32.xlu0 %v692, 48
      %v2280 = vpop.permute.xlu0 %2279
      %2281 = vrot.lane.b32.xlu0 %v693, 48
      %v2282 = vpop.permute.xlu0 %2281
      %2283 = vrot.lane.b32.xlu0 %v694, 48
      %v2284 = vpop.permute.xlu0 %2283
      %v2291 = vsel %vm577, %v2271, 0
      %v2294 = vsel %vm577, %v2272, 0
      %v2297 = vsel %vm577, %v2273, 0
      %v2300 = vsel %vm577, %v2274, 0
      %2302 = vmatprep.subr.bf16.mxu0 0
      %2303 = vmatpush1.bf16.msra.mxu0 %v2276
      %2304 = vmatprep.subr.bf16.mxu0 0
      %2305 = vmatpush1.bf16.msra.mxu0 %v2278
      %2306 = vmatprep.subr.bf16.mxu0 0
      %2307 = vmatpush1.bf16.msra.mxu0 %v2280
      %2308 = vmatprep.subr.bf16.mxu0 0
      %2309 = vmatpush1.bf16.msra.mxu0 %v2282
      %2310 = vmatprep.subr.bf16.mxu0 0
      %2311 = vmatpush1.bf16.msra.mxu0 %v2284
      %2312 = vmatprep.subr.bf16.mxu0 0
      %2313 = vmatpush1.bf16.msra.mxu0 0
      %2314 = vmatprep.subr.bf16.mxu0 0
      %2315 = vmatpush1.bf16.msra.mxu0 0
      %2316 = vmatprep.subr.bf16.mxu0 0
      %2317 = vmatpush1.bf16.msra.mxu0 0
      %2318 = vmatprep.subr.bf16.mxu0 0
      %2319 = vmatpush1.bf16.msra.mxu0 0
      %2320 = vmatprep.subr.bf16.mxu0 0
      %2321 = vmatpush1.bf16.msra.mxu0 0
      %2322 = vmatprep.subr.bf16.mxu0 0
      %2323 = vmatpush1.bf16.msra.mxu0 0
      %2324 = vmatprep.subr.bf16.mxu0 0
      %2325 = vmatpush1.bf16.msra.mxu0 0
      %2326 = vmatprep.subr.bf16.mxu0 0
      %2327 = vmatpush1.bf16.msra.mxu0 0
      %2328 = vmatprep.subr.bf16.mxu0 0
      %2329 = vmatpush1.bf16.msra.mxu0 0
      %2330 = vmatprep.subr.bf16.mxu0 0
      %2331 = vmatpush1.bf16.msra.mxu0 0
      %2332 = vmatprep.subr.bf16.mxu0 0
      %2333 = vmatpush1.bf16.msra.mxu0 0
      %2334 = vmatprep.mubr.bf16.mxu0 0
      %2335 = vmatmul.mubr.bf16.gmra.mrb[0].mxu0 %v2291
      %v2336 = vpop.f32.mrb[0].mxu0
      %v2337 = vadd.f32 0.0, %v2336
      %v2338 = vpop.f32.mrb[0].mxu0
      %v2339 = vpop.f32.mrb[0].mxu0
      %v2340 = vadd.f32 0.0, %v2339
      %v2341 = vpop.f32.mrb[0].mxu0
      %2342 = vmatprep.mubr.bf16.mxu0 0
      %2343 = vmatmul.mubr.bf16.gmra.mrb[0].mxu0 %v2294
      %v2344 = vpop.f32.mrb[0].mxu0
      %v2345 = vadd.f32 0.0, %v2344
      %v2346 = vpop.f32.mrb[0].mxu0
      %v2347 = vpop.f32.mrb[0].mxu0
      %v2348 = vadd.f32 0.0, %v2347
      %v2349 = vpop.f32.mrb[0].mxu0
      %2350 = vmatprep.mubr.bf16.mxu0 0
      %2351 = vmatmul.mubr.bf16.gmra.mrb[0].mxu0 %v2297
      %v2352 = vpop.f32.mrb[0].mxu0
      %v2353 = vadd.f32 0.0, %v2352
      %v2354 = vpop.f32.mrb[0].mxu0
      %v2355 = vpop.f32.mrb[0].mxu0
      %v2356 = vadd.f32 0.0, %v2355
      %v2357 = vpop.f32.mrb[0].mxu0
      %2358 = vmatprep.mubr.bf16.mxu0 0
      %2359 = vmatmul.mubr.bf16.gmra.mrb[0].mxu0 %v2300
      %v2360 = vpop.f32.mrb[0].mxu0
      %v2361 = vadd.f32 0.0, %v2360
      %v2362 = vpop.f32.mrb[0].mxu0
      %v2363 = vpop.f32.mrb[0].mxu0
      %v2364 = vadd.f32 0.0, %v2363
      %v2365 = vpop.f32.mrb[0].mxu0
      %2366 = vdwg.mxu0
      %2367 = vrot.lane.b32.xlu0 %v381, 32
      %v2368 = vpop.permute.xlu0 %2367
      %2369 = vrot.lane.b32.xlu0 %v382, 32
      %v2370 = vpop.permute.xlu0 %2369
      %2371 = vrot.lane.b32.xlu0 %v383, 32
      %v2372 = vpop.permute.xlu0 %2371
      %2373 = vrot.lane.b32.xlu0 %v384, 32
      %v2374 = vpop.permute.xlu0 %2373
      %2375 = vrot.lane.b32.xlu0 %v405, 32
      %v2376 = vpop.permute.xlu0 %2375
      %2377 = vrot.lane.b32.xlu0 %v406, 32
      %v2378 = vpop.permute.xlu0 %2377
      %2379 = vrot.lane.b32.xlu0 %v407, 32
      %v2380 = vpop.permute.xlu0 %2379
      %2381 = vrot.lane.b32.xlu0 %v408, 32
      %v2382 = vpop.permute.xlu0 %2381
      %2383 = vrot.lane.b32.xlu0 %v409, 32
      %v2384 = vpop.permute.xlu0 %2383
      %v2386 = vsel %vm410, %v2368, 0
      %v2389 = vsel %vm410, %v2370, 0
      %v2392 = vsel %vm410, %v2372, 0
      %v2395 = vsel %vm410, %v2374, 0
      %v2398 = vsel %vm410, %v2376, 0
      %v2401 = vsel %vm410, %v2378, 0
      %v2404 = vsel %vm410, %v2380, 0
      %v2407 = vsel %vm410, %v2382, 0
      %v2410 = vsel %vm410, %v2384, 0
      %2412 = vmatprep.subr.bf16.mxu0 0
      %2413 = vmatpush1.bf16.xpose.msra.mxu0 %v2398
      %2414 = vmatprep.subr.bf16.mxu0 0
      %2415 = vmatpush1.bf16.xpose.msra.mxu0 %v2401
      %2416 = vmatprep.subr.bf16.mxu0 0
      %2417 = vmatpush1.bf16.xpose.msra.mxu0 %v2404
      %2418 = vmatprep.subr.bf16.mxu0 0
      %2419 = vmatpush1.bf16.xpose.msra.mxu0 %v2407
      %2420 = vmatprep.subr.bf16.mxu0 0
      %2421 = vmatpush1.bf16.xpose.msra.mxu0 %v2410
      %2422 = vmatprep.subr.bf16.mxu0 0
      %2423 = vmatpush1.bf16.xpose.msra.mxu0 0
      %2424 = vmatprep.subr.bf16.mxu0 0
      %2425 = vmatpush1.bf16.xpose.msra.mxu0 0
      %2426 = vmatprep.subr.bf16.mxu0 0
      %2427 = vmatpush1.bf16.xpose.msra.mxu0 0
      %2428 = vmatprep.subr.bf16.mxu0 0
      %2429 = vmatpush1.bf16.xpose.msra.mxu0 0
      %2430 = vmatprep.subr.bf16.mxu0 0
      %2431 = vmatpush1.bf16.xpose.msra.mxu0 0
      %2432 = vmatprep.subr.bf16.mxu0 0
      %2433 = vmatpush1.bf16.xpose.msra.mxu0 0
      %2434 = vmatprep.subr.bf16.mxu0 0
      %2435 = vmatpush1.bf16.xpose.msra.mxu0 0
      %2436 = vmatprep.subr.bf16.mxu0 0
      %2437 = vmatpush1.bf16.xpose.msra.mxu0 0
      %2438 = vmatprep.subr.bf16.mxu0 0
      %2439 = vmatpush1.bf16.xpose.msra.mxu0 0
      %2440 = vmatprep.subr.bf16.mxu0 0
      %2441 = vmatpush1.bf16.xpose.msra.mxu0 0
      %2442 = vmatprep.subr.bf16.mxu0 0
      %2443 = vmatpush1.bf16.xpose.msra.mxu0 0
      %2444 = vmatprep.mubr.bf16.mxu0 0
      %2445 = vmatmul.mubr.bf16.gmra.mrb[0].mxu0 %v2386
      %v2446 = vpop.f32.mrb[0].mxu0
      %v2447 = vadd.f32 0.0, %v2446
      %v2448 = vpop.f32.mrb[0].mxu0
      %v2449 = vpop.f32.mrb[0].mxu0
      %v2450 = vadd.f32 0.0, %v2449
      %v2451 = vpop.f32.mrb[0].mxu0
      %2452 = vmatprep.mubr.bf16.mxu0 0
      %2453 = vmatmul.mubr.bf16.gmra.mrb[0].mxu0 %v2389
      %v2454 = vpop.f32.mrb[0].mxu0
      %v2455 = vadd.f32 0.0, %v2454
      %v2456 = vpop.f32.mrb[0].mxu0
      %v2457 = vpop.f32.mrb[0].mxu0
      %v2458 = vadd.f32 0.0, %v2457
      %v2459 = vpop.f32.mrb[0].mxu0
      %2460 = vmatprep.mubr.bf16.mxu0 0
      %2461 = vmatmul.mubr.bf16.gmra.mrb[0].mxu0 %v2392
      %v2462 = vpop.f32.mrb[0].mxu0
      %v2463 = vadd.f32 0.0, %v2462
      %v2464 = vpop.f32.mrb[0].mxu0
      %v2465 = vpop.f32.mrb[0].mxu0
      %v2466 = vadd.f32 0.0, %v2465
      %v2467 = vpop.f32.mrb[0].mxu0
      %2468 = vmatprep.mubr.bf16.mxu0 0
      %2469 = vmatmul.mubr.bf16.gmra.mrb[0].mxu0 %v2395
      %v2470 = vpop.f32.mrb[0].mxu0
      %v2471 = vadd.f32 0.0, %v2470
      %v2472 = vpop.f32.mrb[0].mxu0
      %v2473 = vpop.f32.mrb[0].mxu0
      %v2474 = vadd.f32 0.0, %v2473
      %v2475 = vpop.f32.mrb[0].mxu0
      %2476 = vdwg.mxu0
      %v2477 = vsel %vm543, %v2447, -1e+10
      %v2478 = vsel %vm544, %v2450, -1e+10
      %v2479 = vsel %vm545, %v2455, -1e+10
      %v2480 = vsel %vm546, %v2458, -1e+10
      %v2481 = vsel %vm547, %v2463, -1e+10
      %v2482 = vsel %vm548, %v2466, -1e+10
      %v2483 = vsel %vm549, %v2471, -1e+10
      %v2484 = vsel %vm550, %v2474, -1e+10
      %v2485 = vmul.f32 %v2477, 0.25
      %v2486 = vmul.f32 %v2478, 0.25
      %v2487 = vmul.f32 %v2479, 0.25
      %v2488 = vmul.f32 %v2480, 0.25
      %v2489 = vmul.f32 %v2481, 0.25
      %v2490 = vmul.f32 %v2482, 0.25
      %v2491 = vmul.f32 %v2483, 0.25
      %v2492 = vmul.f32 %v2484, 0.25
      %v2493 = vsel %vm568, %v2485, -1e+30
      %v2494 = vsel %vm568, %v2486, -1e+30
      %v2495 = vsel %vm568, %v2487, -1e+30
      %v2496 = vsel %vm568, %v2488, -1e+30
      %v2497 = vsel %vm568, %v2489, -1e+30
      %v2498 = vsel %vm568, %v2490, -1e+30
      %v2499 = vsel %vm568, %v2491, -1e+30
      %v2500 = vsel %vm568, %v2492, -1e+30
      %v2501 = vsel %vm577, %v2493, -inf
      %2502 = vmax.xlane.f32.xlu0 %v2501
      %v2503 = vpop.xlane.xlu0 %2502
      %v2504 = vsel %vm577, %v2494, -inf
      %2505 = vmax.xlane.f32.xlu0 %v2504
      %v2506 = vpop.xlane.xlu0 %2505
      %v2507 = vsel %vm577, %v2495, -inf
      %2508 = vmax.xlane.f32.xlu0 %v2507
      %v2509 = vpop.xlane.xlu0 %2508
      %v2510 = vsel %vm577, %v2496, -inf
      %2511 = vmax.xlane.f32.xlu0 %v2510
      %v2512 = vpop.xlane.xlu0 %2511
      %v2513 = vsel %vm577, %v2497, -inf
      %2514 = vmax.xlane.f32.xlu0 %v2513
      %v2515 = vpop.xlane.xlu0 %2514
      %v2516 = vsel %vm577, %v2498, -inf
      %2517 = vmax.xlane.f32.xlu0 %v2516
      %v2518 = vpop.xlane.xlu0 %2517
      %v2519 = vsel %vm577, %v2499, -inf
      %2520 = vmax.xlane.f32.xlu0 %v2519
      %v2521 = vpop.xlane.xlu0 %2520
      %v2522 = vsel %vm577, %v2500, -inf
      %2523 = vmax.xlane.f32.xlu0 %v2522
      %v2524 = vpop.xlane.xlu0 %2523
      %v2525 = vsub.f32 %v2493, %v2503
      %v2526 = vsub.f32 %v2494, %v2506
      %v2527 = vsub.f32 %v2495, %v2509
      %v2528 = vsub.f32 %v2496, %v2512
      %v2529 = vsub.f32 %v2497, %v2515
      %v2530 = vsub.f32 %v2498, %v2518
      %v2531 = vsub.f32 %v2499, %v2521
      %v2532 = vsub.f32 %v2500, %v2524
      %v2533 = vmul.f32 %v2525, 1.442695
      %v2534 = vpow.pop %v2533
      %v2535 = vmul.f32 %v2526, 1.442695
      %v2536 = vpow.pop %v2535
      %v2537 = vmul.f32 %v2527, 1.442695
      %v2538 = vpow.pop %v2537
      %v2539 = vmul.f32 %v2528, 1.442695
      %v2540 = vpow.pop %v2539
      %v2541 = vmul.f32 %v2529, 1.442695
      %v2542 = vpow.pop %v2541
      %v2543 = vmul.f32 %v2530, 1.442695
      %v2544 = vpow.pop %v2543
      %v2545 = vmul.f32 %v2531, 1.442695
      %v2546 = vpow.pop %v2545
      %v2547 = vmul.f32 %v2532, 1.442695
      %v2548 = vpow.pop %v2547
      %v2549 = vsel %vm577, %v2534, 0.0
      %2550 = vadd.xlane.f32.xlu0 %v2549
      %v2551 = vpop.xlane.xlu0 %2550
      %v2552 = vsel %vm577, %v2536, 0.0
      %2553 = vadd.xlane.f32.xlu0 %v2552
      %v2554 = vpop.xlane.xlu0 %2553
      %v2555 = vsel %vm577, %v2538, 0.0
      %2556 = vadd.xlane.f32.xlu0 %v2555
      %v2557 = vpop.xlane.xlu0 %2556
      %v2558 = vsel %vm577, %v2540, 0.0
      %2559 = vadd.xlane.f32.xlu0 %v2558
      %v2560 = vpop.xlane.xlu0 %2559
      %v2561 = vsel %vm577, %v2542, 0.0
      %2562 = vadd.xlane.f32.xlu0 %v2561
      %v2563 = vpop.xlane.xlu0 %2562
      %v2564 = vsel %vm577, %v2544, 0.0
      %2565 = vadd.xlane.f32.xlu0 %v2564
      %v2566 = vpop.xlane.xlu0 %2565
      %v2567 = vsel %vm577, %v2546, 0.0
      %2568 = vadd.xlane.f32.xlu0 %v2567
      %v2569 = vpop.xlane.xlu0 %2568
      %v2570 = vsel %vm577, %v2548, 0.0
      %2571 = vadd.xlane.f32.xlu0 %v2570
      %v2572 = vpop.xlane.xlu0 %2571
      %v2573 = vrcp.pop %v2551
      %v2574 = vmul.f32 %v2534, %v2573
      %v2575 = vrcp.pop %v2554
      %v2576 = vmul.f32 %v2536, %v2575
      %v2577 = vrcp.pop %v2557
      %v2578 = vmul.f32 %v2538, %v2577
      %v2579 = vrcp.pop %v2560
      %v2580 = vmul.f32 %v2540, %v2579
      %v2581 = vrcp.pop %v2563
      %v2582 = vmul.f32 %v2542, %v2581
      %v2583 = vrcp.pop %v2566
      %v2584 = vmul.f32 %v2544, %v2583
      %v2585 = vrcp.pop %v2569
      %v2586 = vmul.f32 %v2546, %v2585
      %v2587 = vrcp.pop %v2572
      %v2588 = vmul.f32 %v2548, %v2587
      %v2589 = vpack.c.bf16 %v2576, %v2574
      %v2590 = vpack.c.bf16 %v2580, %v2578
      %v2591 = vpack.c.bf16 %v2584, %v2582
      %v2592 = vpack.c.bf16 %v2588, %v2586
      %2593 = vrot.lane.b32.xlu0 %v690, 32
      %v2594 = vpop.permute.xlu0 %2593
      %2595 = vrot.lane.b32.xlu0 %v691, 32
      %v2596 = vpop.permute.xlu0 %2595
      %2597 = vrot.lane.b32.xlu0 %v692, 32
      %v2598 = vpop.permute.xlu0 %2597
      %2599 = vrot.lane.b32.xlu0 %v693, 32
      %v2600 = vpop.permute.xlu0 %2599
      %2601 = vrot.lane.b32.xlu0 %v694, 32
      %v2602 = vpop.permute.xlu0 %2601
      %v2609 = vsel %vm577, %v2589, 0
      %v2612 = vsel %vm577, %v2590, 0
      %v2615 = vsel %vm577, %v2591, 0
      %v2618 = vsel %vm577, %v2592, 0
      %2620 = vmatprep.subr.bf16.mxu0 0
      %2621 = vmatpush1.bf16.msra.mxu0 %v2594
      %2622 = vmatprep.subr.bf16.mxu0 0
      %2623 = vmatpush1.bf16.msra.mxu0 %v2596
      %2624 = vmatprep.subr.bf16.mxu0 0
      %2625 = vmatpush1.bf16.msra.mxu0 %v2598
      %2626 = vmatprep.subr.bf16.mxu0 0
      %2627 = vmatpush1.bf16.msra.mxu0 %v2600
      %2628 = vmatprep.subr.bf16.mxu0 0
      %2629 = vmatpush1.bf16.msra.mxu0 %v2602
      %2630 = vmatprep.subr.bf16.mxu0 0
      %2631 = vmatpush1.bf16.msra.mxu0 0
      %2632 = vmatprep.subr.bf16.mxu0 0
      %2633 = vmatpush1.bf16.msra.mxu0 0
      %2634 = vmatprep.subr.bf16.mxu0 0
      %2635 = vmatpush1.bf16.msra.mxu0 0
      %2636 = vmatprep.subr.bf16.mxu0 0
      %2637 = vmatpush1.bf16.msra.mxu0 0
      %2638 = vmatprep.subr.bf16.mxu0 0
      %2639 = vmatpush1.bf16.msra.mxu0 0
      %2640 = vmatprep.subr.bf16.mxu0 0
      %2641 = vmatpush1.bf16.msra.mxu0 0
      %2642 = vmatprep.subr.bf16.mxu0 0
      %2643 = vmatpush1.bf16.msra.mxu0 0
      %2644 = vmatprep.subr.bf16.mxu0 0
      %2645 = vmatpush1.bf16.msra.mxu0 0
      %2646 = vmatprep.subr.bf16.mxu0 0
      %2647 = vmatpush1.bf16.msra.mxu0 0
      %2648 = vmatprep.subr.bf16.mxu0 0
      %2649 = vmatpush1.bf16.msra.mxu0 0
      %2650 = vmatprep.subr.bf16.mxu0 0
      %2651 = vmatpush1.bf16.msra.mxu0 0
      %2652 = vmatprep.mubr.bf16.mxu0 0
      %2653 = vmatmul.mubr.bf16.gmra.mrb[0].mxu0 %v2609
      %v2654 = vpop.f32.mrb[0].mxu0
      %v2655 = vadd.f32 0.0, %v2654
      %v2656 = vpop.f32.mrb[0].mxu0
      %v2657 = vpop.f32.mrb[0].mxu0
      %v2658 = vadd.f32 0.0, %v2657
      %v2659 = vpop.f32.mrb[0].mxu0
      %2660 = vmatprep.mubr.bf16.mxu0 0
      %2661 = vmatmul.mubr.bf16.gmra.mrb[0].mxu0 %v2612
      %v2662 = vpop.f32.mrb[0].mxu0
      %v2663 = vadd.f32 0.0, %v2662
      %v2664 = vpop.f32.mrb[0].mxu0
      %v2665 = vpop.f32.mrb[0].mxu0
      %v2666 = vadd.f32 0.0, %v2665
      %v2667 = vpop.f32.mrb[0].mxu0
      %2668 = vmatprep.mubr.bf16.mxu0 0
      %2669 = vmatmul.mubr.bf16.gmra.mrb[0].mxu0 %v2615
      %v2670 = vpop.f32.mrb[0].mxu0
      %v2671 = vadd.f32 0.0, %v2670
      %v2672 = vpop.f32.mrb[0].mxu0
      %v2673 = vpop.f32.mrb[0].mxu0
      %v2674 = vadd.f32 0.0, %v2673
      %v2675 = vpop.f32.mrb[0].mxu0
      %2676 = vmatprep.mubr.bf16.mxu0 0
      %2677 = vmatmul.mubr.bf16.gmra.mrb[0].mxu0 %v2618
      %v2678 = vpop.f32.mrb[0].mxu0
      %v2679 = vadd.f32 0.0, %v2678
      %v2680 = vpop.f32.mrb[0].mxu0
      %v2681 = vpop.f32.mrb[0].mxu0
      %v2682 = vadd.f32 0.0, %v2681
      %v2683 = vpop.f32.mrb[0].mxu0
      %2684 = vdwg.mxu0
      %2685 = vrot.lane.b32.xlu0 %v381, 16
      %v2686 = vpop.permute.xlu0 %2685
      %2687 = vrot.lane.b32.xlu0 %v382, 16
      %v2688 = vpop.permute.xlu0 %2687
      %2689 = vrot.lane.b32.xlu0 %v383, 16
      %v2690 = vpop.permute.xlu0 %2689
      %2691 = vrot.lane.b32.xlu0 %v384, 16
      %v2692 = vpop.permute.xlu0 %2691
      %2693 = vrot.lane.b32.xlu0 %v405, 16
      %v2694 = vpop.permute.xlu0 %2693
      %2695 = vrot.lane.b32.xlu0 %v406, 16
      %v2696 = vpop.permute.xlu0 %2695
      %2697 = vrot.lane.b32.xlu0 %v407, 16
      %v2698 = vpop.permute.xlu0 %2697
      %2699 = vrot.lane.b32.xlu0 %v408, 16
      %v2700 = vpop.permute.xlu0 %2699
      %2701 = vrot.lane.b32.xlu0 %v409, 16
      %v2702 = vpop.permute.xlu0 %2701
      %v2704 = vsel %vm410, %v2686, 0
      %v2707 = vsel %vm410, %v2688, 0
      %v2710 = vsel %vm410, %v2690, 0
      %v2713 = vsel %vm410, %v2692, 0
      %v2716 = vsel %vm410, %v2694, 0
      %v2719 = vsel %vm410, %v2696, 0
      %v2722 = vsel %vm410, %v2698, 0
      %v2725 = vsel %vm410, %v2700, 0
      %v2728 = vsel %vm410, %v2702, 0
      %2730 = vmatprep.subr.bf16.mxu0 0
      %2731 = vmatpush1.bf16.xpose.msra.mxu0 %v2716
      %2732 = vmatprep.subr.bf16.mxu0 0
      %2733 = vmatpush1.bf16.xpose.msra.mxu0 %v2719
      %2734 = vmatprep.subr.bf16.mxu0 0
      %2735 = vmatpush1.bf16.xpose.msra.mxu0 %v2722
      %2736 = vmatprep.subr.bf16.mxu0 0
      %2737 = vmatpush1.bf16.xpose.msra.mxu0 %v2725
      %2738 = vmatprep.subr.bf16.mxu0 0
      %2739 = vmatpush1.bf16.xpose.msra.mxu0 %v2728
      %2740 = vmatprep.subr.bf16.mxu0 0
      %2741 = vmatpush1.bf16.xpose.msra.mxu0 0
      %2742 = vmatprep.subr.bf16.mxu0 0
      %2743 = vmatpush1.bf16.xpose.msra.mxu0 0
      %2744 = vmatprep.subr.bf16.mxu0 0
      %2745 = vmatpush1.bf16.xpose.msra.mxu0 0
      %2746 = vmatprep.subr.bf16.mxu0 0
      %2747 = vmatpush1.bf16.xpose.msra.mxu0 0
      %2748 = vmatprep.subr.bf16.mxu0 0
      %2749 = vmatpush1.bf16.xpose.msra.mxu0 0
      %2750 = vmatprep.subr.bf16.mxu0 0
      %2751 = vmatpush1.bf16.xpose.msra.mxu0 0
      %2752 = vmatprep.subr.bf16.mxu0 0
      %2753 = vmatpush1.bf16.xpose.msra.mxu0 0
      %2754 = vmatprep.subr.bf16.mxu0 0
      %2755 = vmatpush1.bf16.xpose.msra.mxu0 0
      %2756 = vmatprep.subr.bf16.mxu0 0
      %2757 = vmatpush1.bf16.xpose.msra.mxu0 0
      %2758 = vmatprep.subr.bf16.mxu0 0
      %2759 = vmatpush1.bf16.xpose.msra.mxu0 0
      %2760 = vmatprep.subr.bf16.mxu0 0
      %2761 = vmatpush1.bf16.xpose.msra.mxu0 0
      %2762 = vmatprep.mubr.bf16.mxu0 0
      %2763 = vmatmul.mubr.bf16.gmra.mrb[0].mxu0 %v2704
      %v2764 = vpop.f32.mrb[0].mxu0
      %v2765 = vadd.f32 0.0, %v2764
      %v2766 = vpop.f32.mrb[0].mxu0
      %v2767 = vpop.f32.mrb[0].mxu0
      %v2768 = vadd.f32 0.0, %v2767
      %v2769 = vpop.f32.mrb[0].mxu0
      %2770 = vmatprep.mubr.bf16.mxu0 0
      %2771 = vmatmul.mubr.bf16.gmra.mrb[0].mxu0 %v2707
      %v2772 = vpop.f32.mrb[0].mxu0
      %v2773 = vadd.f32 0.0, %v2772
      %v2774 = vpop.f32.mrb[0].mxu0
      %v2775 = vpop.f32.mrb[0].mxu0
      %v2776 = vadd.f32 0.0, %v2775
      %v2777 = vpop.f32.mrb[0].mxu0
      %2778 = vmatprep.mubr.bf16.mxu0 0
      %2779 = vmatmul.mubr.bf16.gmra.mrb[0].mxu0 %v2710
      %v2780 = vpop.f32.mrb[0].mxu0
      %v2781 = vadd.f32 0.0, %v2780
      %v2782 = vpop.f32.mrb[0].mxu0
      %v2783 = vpop.f32.mrb[0].mxu0
      %v2784 = vadd.f32 0.0, %v2783
      %v2785 = vpop.f32.mrb[0].mxu0
      %2786 = vmatprep.mubr.bf16.mxu0 0
      %2787 = vmatmul.mubr.bf16.gmra.mrb[0].mxu0 %v2713
      %v2788 = vpop.f32.mrb[0].mxu0
      %v2789 = vadd.f32 0.0, %v2788
      %v2790 = vpop.f32.mrb[0].mxu0
      %v2791 = vpop.f32.mrb[0].mxu0
      %v2792 = vadd.f32 0.0, %v2791
      %v2793 = vpop.f32.mrb[0].mxu0
      %2794 = vdwg.mxu0
      %v2795 = vsel %vm543, %v2765, -1e+10
      %v2796 = vsel %vm544, %v2768, -1e+10
      %v2797 = vsel %vm545, %v2773, -1e+10
      %v2798 = vsel %vm546, %v2776, -1e+10
      %v2799 = vsel %vm547, %v2781, -1e+10
      %v2800 = vsel %vm548, %v2784, -1e+10
      %v2801 = vsel %vm549, %v2789, -1e+10
      %v2802 = vsel %vm550, %v2792, -1e+10
      %v2803 = vmul.f32 %v2795, 0.25
      %v2804 = vmul.f32 %v2796, 0.25
      %v2805 = vmul.f32 %v2797, 0.25
      %v2806 = vmul.f32 %v2798, 0.25
      %v2807 = vmul.f32 %v2799, 0.25
      %v2808 = vmul.f32 %v2800, 0.25
      %v2809 = vmul.f32 %v2801, 0.25
      %v2810 = vmul.f32 %v2802, 0.25
      %v2811 = vsel %vm568, %v2803, -1e+30
      %v2812 = vsel %vm568, %v2804, -1e+30
      %v2813 = vsel %vm568, %v2805, -1e+30
      %v2814 = vsel %vm568, %v2806, -1e+30
      %v2815 = vsel %vm568, %v2807, -1e+30
      %v2816 = vsel %vm568, %v2808, -1e+30
      %v2817 = vsel %vm568, %v2809, -1e+30
      %v2818 = vsel %vm568, %v2810, -1e+30
      %v2819 = vsel %vm577, %v2811, -inf
      %2820 = vmax.xlane.f32.xlu0 %v2819
      %v2821 = vpop.xlane.xlu0 %2820
      %v2822 = vsel %vm577, %v2812, -inf
      %2823 = vmax.xlane.f32.xlu0 %v2822
      %v2824 = vpop.xlane.xlu0 %2823
      %v2825 = vsel %vm577, %v2813, -inf
      %2826 = vmax.xlane.f32.xlu0 %v2825
      %v2827 = vpop.xlane.xlu0 %2826
      %v2828 = vsel %vm577, %v2814, -inf
      %2829 = vmax.xlane.f32.xlu0 %v2828
      %v2830 = vpop.xlane.xlu0 %2829
      %v2831 = vsel %vm577, %v2815, -inf
      %2832 = vmax.xlane.f32.xlu0 %v2831
      %v2833 = vpop.xlane.xlu0 %2832
      %v2834 = vsel %vm577, %v2816, -inf
      %2835 = vmax.xlane.f32.xlu0 %v2834
      %v2836 = vpop.xlane.xlu0 %2835
      %v2837 = vsel %vm577, %v2817, -inf
      %2838 = vmax.xlane.f32.xlu0 %v2837
      %v2839 = vpop.xlane.xlu0 %2838
      %v2840 = vsel %vm577, %v2818, -inf
      %2841 = vmax.xlane.f32.xlu0 %v2840
      %v2842 = vpop.xlane.xlu0 %2841
      %v2843 = vsub.f32 %v2811, %v2821
      %v2844 = vsub.f32 %v2812, %v2824
      %v2845 = vsub.f32 %v2813, %v2827
      %v2846 = vsub.f32 %v2814, %v2830
      %v2847 = vsub.f32 %v2815, %v2833
      %v2848 = vsub.f32 %v2816, %v2836
      %v2849 = vsub.f32 %v2817, %v2839
      %v2850 = vsub.f32 %v2818, %v2842
      %v2851 = vmul.f32 %v2843, 1.442695
      %v2852 = vpow.pop %v2851
      %v2853 = vmul.f32 %v2844, 1.442695
      %v2854 = vpow.pop %v2853
      %v2855 = vmul.f32 %v2845, 1.442695
      %v2856 = vpow.pop %v2855
      %v2857 = vmul.f32 %v2846, 1.442695
      %v2858 = vpow.pop %v2857
      %v2859 = vmul.f32 %v2847, 1.442695
      %v2860 = vpow.pop %v2859
      %v2861 = vmul.f32 %v2848, 1.442695
      %v2862 = vpow.pop %v2861
      %v2863 = vmul.f32 %v2849, 1.442695
      %v2864 = vpow.pop %v2863
      %v2865 = vmul.f32 %v2850, 1.442695
      %v2866 = vpow.pop %v2865
      %v2867 = vsel %vm577, %v2852, 0.0
      %2868 = vadd.xlane.f32.xlu0 %v2867
      %v2869 = vpop.xlane.xlu0 %2868
      %v2870 = vsel %vm577, %v2854, 0.0
      %2871 = vadd.xlane.f32.xlu0 %v2870
      %v2872 = vpop.xlane.xlu0 %2871
      %v2873 = vsel %vm577, %v2856, 0.0
      %2874 = vadd.xlane.f32.xlu0 %v2873
      %v2875 = vpop.xlane.xlu0 %2874
      %v2876 = vsel %vm577, %v2858, 0.0
      %2877 = vadd.xlane.f32.xlu0 %v2876
      %v2878 = vpop.xlane.xlu0 %2877
      %v2879 = vsel %vm577, %v2860, 0.0
      %2880 = vadd.xlane.f32.xlu0 %v2879
      %v2881 = vpop.xlane.xlu0 %2880
      %v2882 = vsel %vm577, %v2862, 0.0
      %2883 = vadd.xlane.f32.xlu0 %v2882
      %v2884 = vpop.xlane.xlu0 %2883
      %v2885 = vsel %vm577, %v2864, 0.0
      %2886 = vadd.xlane.f32.xlu0 %v2885
      %v2887 = vpop.xlane.xlu0 %2886
      %v2888 = vsel %vm577, %v2866, 0.0
      %2889 = vadd.xlane.f32.xlu0 %v2888
      %v2890 = vpop.xlane.xlu0 %2889
      %v2891 = vrcp.pop %v2869
      %v2892 = vmul.f32 %v2852, %v2891
      %v2893 = vrcp.pop %v2872
      %v2894 = vmul.f32 %v2854, %v2893
      %v2895 = vrcp.pop %v2875
      %v2896 = vmul.f32 %v2856, %v2895
      %v2897 = vrcp.pop %v2878
      %v2898 = vmul.f32 %v2858, %v2897
      %v2899 = vrcp.pop %v2881
      %v2900 = vmul.f32 %v2860, %v2899
      %v2901 = vrcp.pop %v2884
      %v2902 = vmul.f32 %v2862, %v2901
      %v2903 = vrcp.pop %v2887
      %v2904 = vmul.f32 %v2864, %v2903
      %v2905 = vrcp.pop %v2890
      %v2906 = vmul.f32 %v2866, %v2905
      %v2907 = vpack.c.bf16 %v2894, %v2892
      %v2908 = vpack.c.bf16 %v2898, %v2896
      %v2909 = vpack.c.bf16 %v2902, %v2900
      %v2910 = vpack.c.bf16 %v2906, %v2904
      %2911 = vrot.lane.b32.xlu0 %v690, 16
      %v2912 = vpop.permute.xlu0 %2911
      %2913 = vrot.lane.b32.xlu0 %v691, 16
      %v2914 = vpop.permute.xlu0 %2913
      %2915 = vrot.lane.b32.xlu0 %v692, 16
      %v2916 = vpop.permute.xlu0 %2915
      %2917 = vrot.lane.b32.xlu0 %v693, 16
      %v2918 = vpop.permute.xlu0 %2917
      %2919 = vrot.lane.b32.xlu0 %v694, 16
      %v2920 = vpop.permute.xlu0 %2919
      %v2927 = vsel %vm577, %v2907, 0
      %v2930 = vsel %vm577, %v2908, 0
      %v2933 = vsel %vm577, %v2909, 0
      %v2936 = vsel %vm577, %v2910, 0
      %2938 = vmatprep.subr.bf16.mxu0 0
      %2939 = vmatpush1.bf16.msra.mxu0 %v2912
      %2940 = vmatprep.subr.bf16.mxu0 0
      %2941 = vmatpush1.bf16.msra.mxu0 %v2914
      %2942 = vmatprep.subr.bf16.mxu0 0
      %2943 = vmatpush1.bf16.msra.mxu0 %v2916
      %2944 = vmatprep.subr.bf16.mxu0 0
      %2945 = vmatpush1.bf16.msra.mxu0 %v2918
      %2946 = vmatprep.subr.bf16.mxu0 0
      %2947 = vmatpush1.bf16.msra.mxu0 %v2920
      %2948 = vmatprep.subr.bf16.mxu0 0
      %2949 = vmatpush1.bf16.msra.mxu0 0
      %2950 = vmatprep.subr.bf16.mxu0 0
      %2951 = vmatpush1.bf16.msra.mxu0 0
      %2952 = vmatprep.subr.bf16.mxu0 0
      %2953 = vmatpush1.bf16.msra.mxu0 0
      %2954 = vmatprep.subr.bf16.mxu0 0
      %2955 = vmatpush1.bf16.msra.mxu0 0
      %2956 = vmatprep.subr.bf16.mxu0 0
      %2957 = vmatpush1.bf16.msra.mxu0 0
      %2958 = vmatprep.subr.bf16.mxu0 0
      %2959 = vmatpush1.bf16.msra.mxu0 0
      %2960 = vmatprep.subr.bf16.mxu0 0
      %2961 = vmatpush1.bf16.msra.mxu0 0
      %2962 = vmatprep.subr.bf16.mxu0 0
      %2963 = vmatpush1.bf16.msra.mxu0 0
      %2964 = vmatprep.subr.bf16.mxu0 0
      %2965 = vmatpush1.bf16.msra.mxu0 0
      %2966 = vmatprep.subr.bf16.mxu0 0
      %2967 = vmatpush1.bf16.msra.mxu0 0
      %2968 = vmatprep.subr.bf16.mxu0 0
      %2969 = vmatpush1.bf16.msra.mxu0 0
      %2970 = vmatprep.mubr.bf16.mxu0 0
      %2971 = vmatmul.mubr.bf16.gmra.mrb[0].mxu0 %v2927
      %v2972 = vpop.f32.mrb[0].mxu0
      %v2973 = vadd.f32 0.0, %v2972
      %v2974 = vpop.f32.mrb[0].mxu0
      %v2975 = vpop.f32.mrb[0].mxu0
      %v2976 = vadd.f32 0.0, %v2975
      %v2977 = vpop.f32.mrb[0].mxu0
      %2978 = vmatprep.mubr.bf16.mxu0 0
      %2979 = vmatmul.mubr.bf16.gmra.mrb[0].mxu0 %v2930
      %v2980 = vpop.f32.mrb[0].mxu0
      %v2981 = vadd.f32 0.0, %v2980
      %v2982 = vpop.f32.mrb[0].mxu0
      %v2983 = vpop.f32.mrb[0].mxu0
      %v2984 = vadd.f32 0.0, %v2983
      %v2985 = vpop.f32.mrb[0].mxu0
      %2986 = vmatprep.mubr.bf16.mxu0 0
      %2987 = vmatmul.mubr.bf16.gmra.mrb[0].mxu0 %v2933
      %v2988 = vpop.f32.mrb[0].mxu0
      %v2989 = vadd.f32 0.0, %v2988
      %v2990 = vpop.f32.mrb[0].mxu0
      %v2991 = vpop.f32.mrb[0].mxu0
      %v2992 = vadd.f32 0.0, %v2991
      %v2993 = vpop.f32.mrb[0].mxu0
      %2994 = vmatprep.mubr.bf16.mxu0 0
      %2995 = vmatmul.mubr.bf16.gmra.mrb[0].mxu0 %v2936
      %v2996 = vpop.f32.mrb[0].mxu0
      %v2997 = vadd.f32 0.0, %v2996
      %v2998 = vpop.f32.mrb[0].mxu0
      %v2999 = vpop.f32.mrb[0].mxu0
      %v3000 = vadd.f32 0.0, %v2999
      %v3001 = vpop.f32.mrb[0].mxu0
      %3002 = vdwg.mxu0
      %3011 = vrot.lane.b32.xlu0 %v1065, 16
      %v3012 = vpop.permute.xlu0 %3011
      %3013 = vrot.lane.b32.xlu0 %v1068, 16
      %v3014 = vpop.permute.xlu0 %3013
      %3015 = vrot.lane.b32.xlu0 %v1073, 16
      %v3016 = vpop.permute.xlu0 %3015
      %3017 = vrot.lane.b32.xlu0 %v1076, 16
      %v3018 = vpop.permute.xlu0 %3017
      %3019 = vrot.lane.b32.xlu0 %v1081, 16
      %v3020 = vpop.permute.xlu0 %3019
      %3021 = vrot.lane.b32.xlu0 %v1084, 16
      %v3022 = vpop.permute.xlu0 %3021
      %3023 = vrot.lane.b32.xlu0 %v1089, 16
      %v3024 = vpop.permute.xlu0 %3023
      %3025 = vrot.lane.b32.xlu0 %v1092, 16
      %v3026 = vpop.permute.xlu0 %3025
      %3043 = vrot.lane.b32.xlu0 %v1383, 32
      %v3044 = vpop.permute.xlu0 %3043
      %3045 = vrot.lane.b32.xlu0 %v1386, 32
      %v3046 = vpop.permute.xlu0 %3045
      %3047 = vrot.lane.b32.xlu0 %v1391, 32
      %v3048 = vpop.permute.xlu0 %3047
      %3049 = vrot.lane.b32.xlu0 %v1394, 32
      %v3050 = vpop.permute.xlu0 %3049
      %3051 = vrot.lane.b32.xlu0 %v1399, 32
      %v3052 = vpop.permute.xlu0 %3051
      %3053 = vrot.lane.b32.xlu0 %v1402, 32
      %v3054 = vpop.permute.xlu0 %3053
      %3055 = vrot.lane.b32.xlu0 %v1407, 32
      %v3056 = vpop.permute.xlu0 %3055
      %3057 = vrot.lane.b32.xlu0 %v1410, 32
      %v3058 = vpop.permute.xlu0 %3057
      %3075 = vrot.lane.b32.xlu0 %v1701, 48
      %v3076 = vpop.permute.xlu0 %3075
      %3077 = vrot.lane.b32.xlu0 %v1704, 48
      %v3078 = vpop.permute.xlu0 %3077
      %3079 = vrot.lane.b32.xlu0 %v1709, 48
      %v3080 = vpop.permute.xlu0 %3079
      %3081 = vrot.lane.b32.xlu0 %v1712, 48
      %v3082 = vpop.permute.xlu0 %3081
      %3083 = vrot.lane.b32.xlu0 %v1717, 48
      %v3084 = vpop.permute.xlu0 %3083
      %3085 = vrot.lane.b32.xlu0 %v1720, 48
      %v3086 = vpop.permute.xlu0 %3085
      %3087 = vrot.lane.b32.xlu0 %v1725, 48
      %v3088 = vpop.permute.xlu0 %3087
      %3089 = vrot.lane.b32.xlu0 %v1728, 48
      %v3090 = vpop.permute.xlu0 %3089
      %3107 = vrot.lane.b32.xlu0 %v2019, 64
      %v3108 = vpop.permute.xlu0 %3107
      %3109 = vrot.lane.b32.xlu0 %v2022, 64
      %v3110 = vpop.permute.xlu0 %3109
      %3111 = vrot.lane.b32.xlu0 %v2027, 64
      %v3112 = vpop.permute.xlu0 %3111
      %3113 = vrot.lane.b32.xlu0 %v2030, 64
      %v3114 = vpop.permute.xlu0 %3113
      %3115 = vrot.lane.b32.xlu0 %v2035, 64
      %v3116 = vpop.permute.xlu0 %3115
      %3117 = vrot.lane.b32.xlu0 %v2038, 64
      %v3118 = vpop.permute.xlu0 %3117
      %3119 = vrot.lane.b32.xlu0 %v2043, 64
      %v3120 = vpop.permute.xlu0 %3119
      %3121 = vrot.lane.b32.xlu0 %v2046, 64
      %v3122 = vpop.permute.xlu0 %3121
      %3139 = vrot.lane.b32.xlu0 %v2337, 80
      %v3140 = vpop.permute.xlu0 %3139
      %3141 = vrot.lane.b32.xlu0 %v2340, 80
      %v3142 = vpop.permute.xlu0 %3141
      %3143 = vrot.lane.b32.xlu0 %v2345, 80
      %v3144 = vpop.permute.xlu0 %3143
      %3145 = vrot.lane.b32.xlu0 %v2348, 80
      %v3146 = vpop.permute.xlu0 %3145
      %3147 = vrot.lane.b32.xlu0 %v2353, 80
      %v3148 = vpop.permute.xlu0 %3147
      %3149 = vrot.lane.b32.xlu0 %v2356, 80
      %v3150 = vpop.permute.xlu0 %3149
      %3151 = vrot.lane.b32.xlu0 %v2361, 80
      %v3152 = vpop.permute.xlu0 %3151
      %3153 = vrot.lane.b32.xlu0 %v2364, 80
      %v3154 = vpop.permute.xlu0 %3153
      %3171 = vrot.lane.b32.xlu0 %v2655, 96
      %v3172 = vpop.permute.xlu0 %3171
      %3173 = vrot.lane.b32.xlu0 %v2658, 96
      %v3174 = vpop.permute.xlu0 %3173
      %3175 = vrot.lane.b32.xlu0 %v2663, 96
      %v3176 = vpop.permute.xlu0 %3175
      %3177 = vrot.lane.b32.xlu0 %v2666, 96
      %v3178 = vpop.permute.xlu0 %3177
      %3179 = vrot.lane.b32.xlu0 %v2671, 96
      %v3180 = vpop.permute.xlu0 %3179
      %3181 = vrot.lane.b32.xlu0 %v2674, 96
      %v3182 = vpop.permute.xlu0 %3181
      %3183 = vrot.lane.b32.xlu0 %v2679, 96
      %v3184 = vpop.permute.xlu0 %3183
      %3185 = vrot.lane.b32.xlu0 %v2682, 96
      %v3186 = vpop.permute.xlu0 %3185
      %3203 = vrot.lane.b32.xlu0 %v2973, 112
      %v3204 = vpop.permute.xlu0 %3203
      %3205 = vrot.lane.b32.xlu0 %v2976, 112
      %v3206 = vpop.permute.xlu0 %3205
      %3207 = vrot.lane.b32.xlu0 %v2981, 112
      %v3208 = vpop.permute.xlu0 %3207
      %3209 = vrot.lane.b32.xlu0 %v2984, 112
      %v3210 = vpop.permute.xlu0 %3209
      %3211 = vrot.lane.b32.xlu0 %v2989, 112
      %v3212 = vpop.permute.xlu0 %3211
      %3213 = vrot.lane.b32.xlu0 %v2992, 112
      %v3214 = vpop.permute.xlu0 %3213
      %3215 = vrot.lane.b32.xlu0 %v2997, 112
      %v3216 = vpop.permute.xlu0 %3215
      %3217 = vrot.lane.b32.xlu0 %v3000, 112
      %v3218 = vpop.permute.xlu0 %3217
      %v3227 = vsel %vm410, %v747, %v3012
      %v3228 = vsel %vm410, %v750, %v3014
      %v3229 = vsel %vm410, %v755, %v3016
      %v3230 = vsel %vm410, %v758, %v3018
      %v3231 = vsel %vm410, %v763, %v3020
      %v3232 = vsel %vm410, %v766, %v3022
      %v3233 = vsel %vm410, %v771, %v3024
      %v3234 = vsel %vm410, %v774, %v3026
      %vm3235 = vcmask 261120
      %v3236 = vsel %vm3235, %v3227, %v3044
      %v3237 = vsel %vm3235, %v3228, %v3046
      %v3238 = vsel %vm3235, %v3229, %v3048
      %v3239 = vsel %vm3235, %v3230, %v3050
      %v3240 = vsel %vm3235, %v3231, %v3052
      %v3241 = vsel %vm3235, %v3232, %v3054
      %v3242 = vsel %vm3235, %v3233, %v3056
      %v3243 = vsel %vm3235, %v3234, %v3058
      %vm3244 = vcmask 392192
      %v3245 = vsel %vm3244, %v3236, %v3076
      %v3246 = vsel %vm3244, %v3237, %v3078
      %v3247 = vsel %vm3244, %v3238, %v3080
      %v3248 = vsel %vm3244, %v3239, %v3082
      %v3249 = vsel %vm3244, %v3240, %v3084
      %v3250 = vsel %vm3244, %v3241, %v3086
      %v3251 = vsel %vm3244, %v3242, %v3088
      %v3252 = vsel %vm3244, %v3243, %v3090
      %vm3253 = vcmask 523264
      %v3254 = vsel %vm3253, %v3245, %v3108
      %v3255 = vsel %vm3253, %v3246, %v3110
      %v3256 = vsel %vm3253, %v3247, %v3112
      %v3257 = vsel %vm3253, %v3248, %v3114
      %v3258 = vsel %vm3253, %v3249, %v3116
      %v3259 = vsel %vm3253, %v3250, %v3118
      %v3260 = vsel %vm3253, %v3251, %v3120
      %v3261 = vsel %vm3253, %v3252, %v3122
      %v3262 = vsel %vm577, %v3254, %v3140
      %v3263 = vsel %vm577, %v3255, %v3142
      %v3264 = vsel %vm577, %v3256, %v3144
      %v3265 = vsel %vm577, %v3257, %v3146
      %v3266 = vsel %vm577, %v3258, %v3148
      %v3267 = vsel %vm577, %v3259, %v3150
      %v3268 = vsel %vm577, %v3260, %v3152
      %v3269 = vsel %vm577, %v3261, %v3154
      %vm3270 = vcmask 785408
      %v3271 = vsel %vm3270, %v3262, %v3172
      %v3272 = vsel %vm3270, %v3263, %v3174
      %v3273 = vsel %vm3270, %v3264, %v3176
      %v3274 = vsel %vm3270, %v3265, %v3178
      %v3275 = vsel %vm3270, %v3266, %v3180
      %v3276 = vsel %vm3270, %v3267, %v3182
      %v3277 = vsel %vm3270, %v3268, %v3184
      %v3278 = vsel %vm3270, %v3269, %v3186
      %vm3279 = vcmask 916480
      %v3280 = vsel %vm3279, %v3271, %v3204
      %v3281 = vsel %vm3279, %v3272, %v3206
      %v3282 = vsel %vm3279, %v3273, %v3208
      %v3283 = vsel %vm3279, %v3274, %v3210
      %v3284 = vsel %vm3279, %v3275, %v3212
      %v3285 = vsel %vm3279, %v3276, %v3214
      %v3286 = vsel %vm3279, %v3277, %v3216
      %v3287 = vsel %vm3279, %v3278, %v3218
      %v3288 = vpack.c.bf16 %v3281, %v3280
      %v3289 = vpack.c.bf16 %v3283, %v3282
      %v3290 = vpack.c.bf16 %v3285, %v3284
      %v3291 = vpack.c.bf16 %v3287, %v3286
      %v3296 = vunpack.c.l.b16 %v3288
      %v3297 = vunpack.c.h.b16 %v3288
      %v3298 = vunpack.c.l.b16 %v3289
      %v3299 = vunpack.c.h.b16 %v3289
      %v3300 = vunpack.c.l.b16 %v3290
      %v3301 = vunpack.c.h.b16 %v3290
      %v3302 = vunpack.c.l.b16 %v3291
      %v3303 = vunpack.c.h.b16 %v3291
      %v3304 = vpack.c.b16 %v3296, %v3296
      %v3305 = vpack.c.b16 %v3297, %v3297
      %v3306 = vpack.c.b16 %v3298, %v3298
      %v3307 = vpack.c.b16 %v3299, %v3299
      %v3308 = vpack.c.b16 %v3300, %v3300
      %v3309 = vpack.c.b16 %v3301, %v3301
      %v3310 = vpack.c.b16 %v3302, %v3302
      %v3311 = vpack.c.b16 %v3303, %v3303
      %3320 = vst [vmem:[%s311] sm:$0xf] %v3304
      %3321 = vst [vmem:[%s311 + $0x4] sm:$0xf] %v3305
      %3322 = vst [vmem:[%s311 + $0x8] sm:$0xf] %v3306
      %3323 = vst [vmem:[%s311 + $0xc] sm:$0xf] %v3307
      %3324 = vst [vmem:[%s311 + $0x10] sm:$0xf] %v3308
      %3325 = vst [vmem:[%s311 + $0x14] sm:$0xf] %v3309
      %3326 = vst [vmem:[%s311 + $0x18] sm:$0xf] %v3310
      %3327 = vst [vmem:[%s311 + $0x1c] sm:$0xf] %v3311
      %s3328 = smul.u32 8, %s20
      %p3329 = scmp.lt.s32.totalorder %s19, 1
      %s3330 = scalar_select %p3329, %s19, 1
      %p3331 = scmp.lt.s32.totalorder %s3328, 31
      %s3332 = scalar_select %p3331, %s3328, 31
      %s3333 = smul.addr %s3330, 32
      %s3334 = sadd.s32 %s3332, %s3333
      %s3335 = smul.addr %s3334, 4
      %s3336 = scalar_lea.vmem %s4, %s3335
      // Predicated region
      $region37: #{backbone_forward.13} parent=35 // pred_check
        %p3337 = pneg %p155
      $region38: #{backbone_forward.13} parent=35 // pred_check_branch
        %3339 = sbr.rel (%p3337) target = $region40
      $region39: #{backbone_forward.13} parent=35 // pred_region
        %s3340 = smul.u32 8, %s20
      $region40: #{backbone_forward.13} parent=35 // pred_fallthru
        _
    $region36: #{backbone_forward.13} parent=5 // pred_fallthru
      _
    %p3341 = scmp.le.s32.totalorder 2, %s10
    // Predicated region
    $region41: #{backbone_forward.13} parent=5 // pred_check
      %p3342 = pneg %p3341
    $region42: #{backbone_forward.13} parent=5 // pred_check_branch
      %3344 = sbr.rel (%p3342) target = $region44
    $region43: #{backbone_forward.13} parent=5 // pred_region
      %s3345 = ssub.s32 %s10, 2
      // Predicated region
      $region45: #{backbone_forward.13} parent=43 // pred_check
        %p3346 = pneg %p161
      $region46: #{backbone_forward.13} parent=43 // pred_check_branch
        %3348 = sbr.rel (%p3346) target = $region48
      $region47: #{backbone_forward.13} parent=43 // pred_region
        %s3349 = smul.u32 8, %s22
        %p3350 = scmp.lt.s32.totalorder %s21, 1
        %s3351 = scalar_select %p3350, %s21, 1
        %p3352 = scmp.lt.s32.totalorder %s3349, 31
        %s3353 = scalar_select %p3352, %s3349, 31
        %s3354 = smul.addr %s3351, 32
        %s3355 = sadd.s32 %s3353, %s3354
        %s3356 = smul.addr %s3355, 4
        %s3357 = scalar_lea.vmem %s4, %s3356
      $region48: #{backbone_forward.13} parent=43 // pred_fallthru
        _
    $region44: #{backbone_forward.13} parent=5 // pred_fallthru
      _
  $region6: #{backbone_forward.13} parent=0 // loop_footer
    %s14 = sadd.s32 1, %s10
  $region7: #{backbone_forward.13} parent=0 // loop_footer_branch
    %9 = sbr.rel target = $region3
  $region8: #{backbone_forward.13} parent=0 // loop_exit
    _

// kernel: backbone_forward.19
$region0: #{backbone_forward.19}
  #allocation0 [shape = 'u32[]', space=smem, size = 0x4, offset = 0x4, fixed_abs, tag = 'smem constant byte address 0x4 - core index']
  #allocation1 [shape = 'u32[144,128]{1,0:T(1,128)}', space=vmem, size = 0x12000, scoped, tag = 'internal scratch']
  %s0 = inlined_call_operand.vmem [shape: bf16[512,128], index: 0, kind: input, shape index: {}]
  %s1 = inlined_call_operand.vmem [shape: bf16[128,512], index: 1, kind: input, shape index: {}]
  %s2 = inlined_call_operand.vmem [shape: f32[1,512], index: 2, kind: input, shape index: {}]
  %s3 = inlined_call_operand.vmem [shape: bf16[512,128], index: 3, kind: input, shape index: {}]
  %s4 = inlined_call_operand.vmem [shape: f32[1,128], index: 4, kind: input, shape index: {}]
  %s5 = inlined_call_operand.vmem [shape: f32[1,128], index: 5, kind: input, shape index: {}]
  %s6 = inlined_call_operand.vmem [shape: f32[1,128], index: 6, kind: input, shape index: {}]
  %s7 = inlined_call_operand.hbm [shape: bf16[512,128], index: 7, kind: output, shape index: {}]
  %s8 = sld [smem:[#allocation0]]
  $region61: #{backbone_forward.19} parent=0
    _
  %s10 = ssub.s32 1, %s8
  %s11 = scalar_select 0, %s10, %s8
  $region1: #{backbone_forward.19} parent=0
    #allocation2 [shape = 'u8[65536]{0}', space=vmem, size = 0x10000, scoped, tag = 'output window, operand 0']
    #allocation3 [shape = 's32[2]{0}', space=sflag, size = 0x8, scoped, tag = 'scoped memory for backbone_forward.19']
    %12 = vsyncpa [#allocation3], 0
    %s13 = scalar_lea.sflag [#allocation3], 1
    %14 = vsyncpa %s13, 0
    loop: start=0, step=1, limit=6
    $region2: #{backbone_forward.19} parent=1 // loop_pre_header
      _
    $region3: #{backbone_forward.19} parent=1 // loop_header
      %s16 = sphi 0, %s20
      %p17 = scmp.ge.s32.totalorder %s16, 6
      %s26 = sphi 0, %s28
      %s29 = sphi 0, %s26
      %s30 = sphi 0, %s29
      %s46 = sphi 0, %s30
      %s50 = sphi 0, %s50
      %s52 = sphi 0, %s50
      %s53 = sphi 0, %s52
      %s67 = sphi 0, %s53
      %s71 = sphi 0, %s71
      %s73 = sphi 0, %s71
      %s74 = sphi 0, %s73
      %s88 = sphi 0, %s74
      %s92 = sphi 0, %s92
      %s94 = sphi 0, %s92
      %s95 = sphi 0, %s94
      %s109 = sphi 0, %s95
      %s113 = sphi 0, %s113
      %s115 = sphi 0, %s113
      %s116 = sphi 0, %s115
      %s130 = sphi 0, %s116
      %s134 = sphi 0, %s134
      %s136 = sphi 0, %s134
      %s137 = sphi 0, %s136
      %s151 = sphi 0, %s137
      %s155 = sphi 0, %s155
      %s157 = sphi 0, %s155
      %s158 = sphi 0, %s157
      %s172 = sphi 0, %s158
      %s178 = sphi 0, %s180
      %s181 = sphi 0, %s178
      %s182 = sphi 0, %s181
      %s198 = sphi 0, %s182
    $region4: #{backbone_forward.19} parent=1 // loop_header_branch
      %19 = sbr.rel (%p17) target = $region8
    $region5: #{backbone_forward.19} parent=1 // loop_body
      %s21 = ssub.s32 %s16, 1
      %s22 = ssub.s32 %s16, 2
      %s23 = sadd.s32 %s16, 1
      %s24 = ssub.s32 %s16, %s23
      %p25 = scmp.eq.s32.totalorder %s24, 0
      %s27 = sadd.s32 %s26, 1
      %s28 = scalar_select %p25, %s26, %s27
      %p31 = pneg %p25
      %p32 = scmp.eq.s32.totalorder %s16, 3
      %p33 = por %p31, %p32
      %p34 = scmp.ne.s32.totalorder %s26, %s29
      %p35 = scmp.eq.s32.totalorder %s16, 0
      %p36 = por %p34, %p35
      %p37 = scmp.ne.s32.totalorder %s26, %s29
      %p38 = scmp.eq.s32.totalorder %s21, 3
      %p39 = por %p37, %p38
      %p40 = scmp.ne.s32.totalorder %s29, %s30
      %p41 = scmp.eq.s32.totalorder %s21, 0
      %p42 = por %p40, %p41
      %p43 = scmp.ne.s32.totalorder %s29, %s30
      %p44 = scmp.eq.s32.totalorder %s22, 3
      %p45 = por %p43, %p44
      %p47 = scmp.ne.s32.totalorder %s30, %s46
      %p48 = scmp.eq.s32.totalorder %s22, 0
      %p49 = por %p47, %p48
      %s51 = sadd.s32 %s50, 1
      %p54 = scmp.eq.s32.totalorder %s16, 3
      %p55 = scmp.ne.s32.totalorder %s50, %s52
      %p56 = scmp.eq.s32.totalorder %s16, 0
      %p57 = por %p55, %p56
      %p58 = scmp.ne.s32.totalorder %s50, %s52
      %p59 = scmp.eq.s32.totalorder %s21, 3
      %p60 = por %p58, %p59
      %p61 = scmp.ne.s32.totalorder %s52, %s53
      %p62 = scmp.eq.s32.totalorder %s21, 0
      %p63 = por %p61, %p62
      %p64 = scmp.ne.s32.totalorder %s52, %s53
      %p65 = scmp.eq.s32.totalorder %s22, 3
      %p66 = por %p64, %p65
      %p68 = scmp.ne.s32.totalorder %s53, %s67
      %p69 = scmp.eq.s32.totalorder %s22, 0
      %p70 = por %p68, %p69
      %s72 = sadd.s32 %s71, 1
      %p75 = scmp.eq.s32.totalorder %s16, 3
      %p76 = scmp.ne.s32.totalorder %s71, %s73
      %p77 = scmp.eq.s32.totalorder %s16, 0
      %p78 = por %p76, %p77
      %p79 = scmp.ne.s32.totalorder %s71, %s73
      %p80 = scmp.eq.s32.totalorder %s21, 3
      %p81 = por %p79, %p80
      %p82 = scmp.ne.s32.totalorder %s73, %s74
      %p83 = scmp.eq.s32.totalorder %s21, 0
      %p84 = por %p82, %p83
      %p85 = scmp.ne.s32.totalorder %s73, %s74
      %p86 = scmp.eq.s32.totalorder %s22, 3
      %p87 = por %p85, %p86
      %p89 = scmp.ne.s32.totalorder %s74, %s88
      %p90 = scmp.eq.s32.totalorder %s22, 0
      %p91 = por %p89, %p90
      %s93 = sadd.s32 %s92, 1
      %p96 = scmp.eq.s32.totalorder %s16, 3
      %p97 = scmp.ne.s32.totalorder %s92, %s94
      %p98 = scmp.eq.s32.totalorder %s16, 0
      %p99 = por %p97, %p98
      %p100 = scmp.ne.s32.totalorder %s92, %s94
      %p101 = scmp.eq.s32.totalorder %s21, 3
      %p102 = por %p100, %p101
      %p103 = scmp.ne.s32.totalorder %s94, %s95
      %p104 = scmp.eq.s32.totalorder %s21, 0
      %p105 = por %p103, %p104
      %p106 = scmp.ne.s32.totalorder %s94, %s95
      %p107 = scmp.eq.s32.totalorder %s22, 3
      %p108 = por %p106, %p107
      %p110 = scmp.ne.s32.totalorder %s95, %s109
      %p111 = scmp.eq.s32.totalorder %s22, 0
      %p112 = por %p110, %p111
      %s114 = sadd.s32 %s113, 1
      %p117 = scmp.eq.s32.totalorder %s16, 3
      %p118 = scmp.ne.s32.totalorder %s113, %s115
      %p119 = scmp.eq.s32.totalorder %s16, 0
      %p120 = por %p118, %p119
      %p121 = scmp.ne.s32.totalorder %s113, %s115
      %p122 = scmp.eq.s32.totalorder %s21, 3
      %p123 = por %p121, %p122
      %p124 = scmp.ne.s32.totalorder %s115, %s116
      %p125 = scmp.eq.s32.totalorder %s21, 0
      %p126 = por %p124, %p125
      %p127 = scmp.ne.s32.totalorder %s115, %s116
      %p128 = scmp.eq.s32.totalorder %s22, 3
      %p129 = por %p127, %p128
      %p131 = scmp.ne.s32.totalorder %s116, %s130
      %p132 = scmp.eq.s32.totalorder %s22, 0
      %p133 = por %p131, %p132
      %s135 = sadd.s32 %s134, 1
      %p138 = scmp.eq.s32.totalorder %s16, 3
      %p139 = scmp.ne.s32.totalorder %s134, %s136
      %p140 = scmp.eq.s32.totalorder %s16, 0
      %p141 = por %p139, %p140
      %p142 = scmp.ne.s32.totalorder %s134, %s136
      %p143 = scmp.eq.s32.totalorder %s21, 3
      %p144 = por %p142, %p143
      %p145 = scmp.ne.s32.totalorder %s136, %s137
      %p146 = scmp.eq.s32.totalorder %s21, 0
      %p147 = por %p145, %p146
      %p148 = scmp.ne.s32.totalorder %s136, %s137
      %p149 = scmp.eq.s32.totalorder %s22, 3
      %p150 = por %p148, %p149
      %p152 = scmp.ne.s32.totalorder %s137, %s151
      %p153 = scmp.eq.s32.totalorder %s22, 0
      %p154 = por %p152, %p153
      %s156 = sadd.s32 %s155, 1
      %p159 = scmp.eq.s32.totalorder %s16, 3
      %p160 = scmp.ne.s32.totalorder %s155, %s157
      %p161 = scmp.eq.s32.totalorder %s16, 0
      %p162 = por %p160, %p161
      %p163 = scmp.ne.s32.totalorder %s155, %s157
      %p164 = scmp.eq.s32.totalorder %s21, 3
      %p165 = por %p163, %p164
      %p166 = scmp.ne.s32.totalorder %s157, %s158
      %p167 = scmp.eq.s32.totalorder %s21, 0
      %p168 = por %p166, %p167
      %p169 = scmp.ne.s32.totalorder %s157, %s158
      %p170 = scmp.eq.s32.totalorder %s22, 3
      %p171 = por %p169, %p170
      %p173 = scmp.ne.s32.totalorder %s158, %s172
      %p174 = scmp.eq.s32.totalorder %s22, 0
      %p175 = por %p173, %p174
      %s176 = ssub.s32 %s16, %s23
      %p177 = scmp.eq.s32.totalorder %s176, 0
      %s179 = sadd.s32 %s178, 1
      %s180 = scalar_select %p177, %s178, %s179
      %p183 = pneg %p177
      %p184 = scmp.eq.s32.totalorder %s16, 3
      %p185 = por %p183, %p184
      %p186 = scmp.ne.s32.totalorder %s178, %s181
      %p187 = scmp.eq.s32.totalorder %s16, 0
      %p188 = por %p186, %p187
      %p189 = scmp.ne.s32.totalorder %s178, %s181
      %p190 = scmp.eq.s32.totalorder %s21, 3
      %p191 = por %p189, %p190
      %p192 = scmp.ne.s32.totalorder %s181, %s182
      %p193 = scmp.eq.s32.totalorder %s21, 0
      %p194 = por %p192, %p193
      %p195 = scmp.ne.s32.totalorder %s181, %s182
      %p196 = scmp.eq.s32.totalorder %s22, 3
      %p197 = por %p195, %p196
      %p199 = scmp.ne.s32.totalorder %s182, %s198
      %p200 = scmp.eq.s32.totalorder %s22, 0
      %p201 = por %p199, %p200
      %p202 = scmp.le.s32.totalorder 1, %s16
      %p203 = scmp.lt.s32.totalorder %s16, 5
      %p204 = pnand %p202, %p203
      %p205 = pneg %p204
      // Predicated region
      $region9: #{backbone_forward.19} parent=5 // pred_check
        _
      $region10: #{backbone_forward.19} parent=5 // pred_check_branch
        %207 = sbr.rel (%p204) target = $region12
      $region11: #{backbone_forward.19} parent=5 // pred_region
        %s208 = ssub.s32 %s16, 1
        // Predicated region
        $region13: #{backbone_forward.19} parent=11 // pred_check
          %p209 = pneg %p63
        $region14: #{backbone_forward.19} parent=11 // pred_check_branch
          %211 = sbr.rel (%p209) target = $region16
        $region15: #{backbone_forward.19} parent=11 // pred_region
          _
        $region16: #{backbone_forward.19} parent=11 // pred_fallthru
          _
        // Predicated region
        $region17: #{backbone_forward.19} parent=11 // pred_check
          %p212 = pneg %p84
        $region18: #{backbone_forward.19} parent=11 // pred_check_branch
          %214 = sbr.rel (%p212) target = $region20
        $region19: #{backbone_forward.19} parent=11 // pred_region
          _
        $region20: #{backbone_forward.19} parent=11 // pred_fallthru
          _
        // Predicated region
        $region21: #{backbone_forward.19} parent=11 // pred_check
          %p215 = pneg %p105
        $region22: #{backbone_forward.19} parent=11 // pred_check_branch
          %217 = sbr.rel (%p215) target = $region24
        $region23: #{backbone_forward.19} parent=11 // pred_region
          _
        $region24: #{backbone_forward.19} parent=11 // pred_fallthru
          _
        // Predicated region
        $region25: #{backbone_forward.19} parent=11 // pred_check
          %p218 = pneg %p126
        $region26: #{backbone_forward.19} parent=11 // pred_check_branch
          %220 = sbr.rel (%p218) target = $region28
        $region27: #{backbone_forward.19} parent=11 // pred_region
          _
        $region28: #{backbone_forward.19} parent=11 // pred_fallthru
          _
        // Predicated region
        $region29: #{backbone_forward.19} parent=11 // pred_check
          %p221 = pneg %p147
        $region30: #{backbone_forward.19} parent=11 // pred_check_branch
          %223 = sbr.rel (%p221) target = $region32
        $region31: #{backbone_forward.19} parent=11 // pred_region
          _
        $region32: #{backbone_forward.19} parent=11 // pred_fallthru
          _
        // Predicated region
        $region33: #{backbone_forward.19} parent=11 // pred_check
          %p224 = pneg %p168
        $region34: #{backbone_forward.19} parent=11 // pred_check_branch
          %226 = sbr.rel (%p224) target = $region36
        $region35: #{backbone_forward.19} parent=11 // pred_region
          _
        $region36: #{backbone_forward.19} parent=11 // pred_fallthru
          _
      $region12: #{backbone_forward.19} parent=5 // pred_fallthru
        _
      %p227 = scmp.lt.s32.totalorder %s16, 4
      // Predicated region
      $region37: #{backbone_forward.19} parent=5 // pred_check
        %p228 = pneg %p227
      $region38: #{backbone_forward.19} parent=5 // pred_check_branch
        %230 = sbr.rel (%p228) target = $region40
      $region39: #{backbone_forward.19} parent=5 // pred_region
        // Predicated region
        $region41: #{backbone_forward.19} parent=39 // pred_check
          %p231 = pneg %p36
        $region42: #{backbone_forward.19} parent=39 // pred_check_branch
          %233 = sbr.rel (%p231) target = $region44
        $region43: #{backbone_forward.19} parent=39 // pred_region
          %s234 = smul.u32 16, %s16
          %p235 = scmp.lt.s32.totalorder %s234, 63
          %s236 = scalar_select %p235, %s234, 63
          %s237 = smul.addr %s236, 4
          %s238 = scalar_lea.vmem %s0, %s237
          %s239 = smul.u32 16, %s16
        $region44: #{backbone_forward.19} parent=39 // pred_fallthru
          _
      $region40: #{backbone_forward.19} parent=5 // pred_fallthru
        _
      %p240 = scmp.le.s32.totalorder 1, %s16
      %p241 = scmp.lt.s32.totalorder %s16, 5
      %p242 = pnand %p240, %p241
      %p243 = pneg %p242
      // Predicated region
      $region45: #{backbone_forward.19} parent=5 // pred_check
        _
      $region46: #{backbone_forward.19} parent=5 // pred_check_branch
        %245 = sbr.rel (%p242) target = $region48
      $region47: #{backbone_forward.19} parent=5 // pred_region
        %s246 = ssub.s32 %s16, 1
        %s247 = smul.u32 16, %s21
        %p248 = scmp.lt.s32.totalorder %s247, 63
        %s249 = scalar_select %p248, %s247, 63
        %s250 = smul.addr %s249, 4
        %s251 = scalar_lea.vmem %s0, %s250
        %p252 = pneg %p42
        %p253 = pneg %p39
        %p254 = pneg %p63
        %p255 = pneg %p60
        %p256 = pneg %p84
        %p257 = pneg %p81
        %p258 = pneg %p105
        %p259 = pneg %p102
        %p260 = pneg %p126
        %p261 = pneg %p123
        %p262 = pneg %p147
        %p263 = pneg %p144
        %p264 = pneg %p168
        %p265 = pneg %p165
        %p266 = pneg %p194
        %p267 = pneg %p191
        %s268 = sand.u32 %s181, 1
        %s269 = scalar_lea.sflag [#allocation3], %s268
        %s270 = sand.u32 %s181, 1
        %s271 = smul.addr %s270, 64
        %s272 = scalar_lea.vmem [#allocation2], %s271
        %s273 = smul.u32 16, %s21
        %p274 = scmp.lt.s32.totalorder %s273, 63
        %s275 = scalar_select %p274, %s273, 63
        %s276 = smul.addr %s275, 4
        %s277 = scalar_lea.vmem %s0, %s276
        %s278 = smul.u32 16, %s21
        %s279 = smul.u32 16, %s21
        %v281 = vld [vmem:[%s277] sm:$0xf]
        %v282 = vld [vmem:[%s277 + $0x4] sm:$0xf]
        %v283 = vld [vmem:[%s277 + $0x8] sm:$0xf]
        %v284 = vld [vmem:[%s277 + $0xc] sm:$0xf]
        %v285 = vld [vmem:[%s277 + $0x10] sm:$0xf]
        %v286 = vld [vmem:[%s277 + $0x14] sm:$0xf]
        %v287 = vld [vmem:[%s277 + $0x18] sm:$0xf]
        %v288 = vld [vmem:[%s277 + $0x1c] sm:$0xf]
        %v289 = vld [vmem:[%s277 + $0x20] sm:$0xf]
        %v290 = vld [vmem:[%s277 + $0x24] sm:$0xf]
        %v291 = vld [vmem:[%s277 + $0x28] sm:$0xf]
        %v292 = vld [vmem:[%s277 + $0x2c] sm:$0xf]
        %v293 = vld [vmem:[%s277 + $0x30] sm:$0xf]
        %v294 = vld [vmem:[%s277 + $0x34] sm:$0xf]
        %v295 = vld [vmem:[%s277 + $0x38] sm:$0xf]
        %v296 = vld [vmem:[%s277 + $0x3c] sm:$0xf]
        %v297 = vld [vmem:[%s1] sm:$0xff]
        %v298 = vld [vmem:[%s1 + $0x8] sm:$0xff]
        %v299 = vld [vmem:[%s1 + $0x10] sm:$0xff]
        %v300 = vld [vmem:[%s1 + $0x18] sm:$0xff]
        %v301 = vld [vmem:[%s1 + $0x20] sm:$0xff]
        %v302 = vld [vmem:[%s1 + $0x28] sm:$0xff]
        %v303 = vld [vmem:[%s1 + $0x30] sm:$0xff]
        %v304 = vld [vmem:[%s1 + $0x38] sm:$0xff]
        %v305 = vld [vmem:[%s1 + $0x40] sm:$0xff]
        %v306 = vld [vmem:[%s1 + $0x48] sm:$0xff]
        %v307 = vld [vmem:[%s1 + $0x50] sm:$0xff]
        %v308 = vld [vmem:[%s1 + $0x58] sm:$0xff]
        %v309 = vld [vmem:[%s1 + $0x60] sm:$0xff]
        %v310 = vld [vmem:[%s1 + $0x68] sm:$0xff]
        %v311 = vld [vmem:[%s1 + $0x70] sm:$0xff]
        %v312 = vld [vmem:[%s1 + $0x78] sm:$0xff]
        %v313 = vld [vmem:[%s1 + $0x80] sm:$0xff]
        %v314 = vld [vmem:[%s1 + $0x88] sm:$0xff]
        %v315 = vld [vmem:[%s1 + $0x90] sm:$0xff]
        %v316 = vld [vmem:[%s1 + $0x98] sm:$0xff]
        %v317 = vld [vmem:[%s1 + $0xa0] sm:$0xff]
        %v318 = vld [vmem:[%s1 + $0xa8] sm:$0xff]
        %v319 = vld [vmem:[%s1 + $0xb0] sm:$0xff]
        %v320 = vld [vmem:[%s1 + $0xb8] sm:$0xff]
        %v321 = vld [vmem:[%s1 + $0xc0] sm:$0xff]
        %v322 = vld [vmem:[%s1 + $0xc8] sm:$0xff]
        %v323 = vld [vmem:[%s1 + $0xd0] sm:$0xff]
        %v324 = vld [vmem:[%s1 + $0xd8] sm:$0xff]
        %v325 = vld [vmem:[%s1 + $0xe0] sm:$0xff]
        %v326 = vld [vmem:[%s1 + $0xe8] sm:$0xff]
        %v327 = vld [vmem:[%s1 + $0xf0] sm:$0xff]
        %v328 = vld [vmem:[%s1 + $0xf8] sm:$0xff]
        %v329 = vld [vmem:[%s2] sm:$0xf]
        %v331 = vlaneseq
        %v332 = vshrl.u32 %v331, 7
        %v333 = vsub.s32 0, %v332
        %v334 = vrot.slane %v329, %v333
        %v335 = vlaneseq
        %v336 = vshrl.u32 %v335, 7
        %v337 = vsub.s32 1, %v336
        %v338 = vrot.slane %v329, %v337
        %v339 = vlaneseq
        %v340 = vshrl.u32 %v339, 7
        %v341 = vsub.s32 2, %v340
        %v342 = vrot.slane %v329, %v341
        %v343 = vlaneseq
        %v344 = vshrl.u32 %v343, 7
        %v345 = vsub.s32 3, %v344
        %v346 = vrot.slane %v329, %v345
        %v367 = vunpack.c.l.b16 %v281
        %v368 = vunpack.c.l.b16 %v282
        %v369 = vunpack.c.l.b16 %v283
        %v370 = vunpack.c.l.b16 %v284
        %v371 = vunpack.c.l.b16 %v285
        %v372 = vunpack.c.l.b16 %v286
        %v373 = vunpack.c.l.b16 %v287
        %v374 = vunpack.c.l.b16 %v288
        %v375 = vunpack.c.l.b16 %v289
        %v376 = vunpack.c.l.b16 %v290
        %v377 = vunpack.c.l.b16 %v291
        %v378 = vunpack.c.l.b16 %v292
        %v379 = vunpack.c.l.b16 %v293
        %v380 = vunpack.c.l.b16 %v294
        %v381 = vunpack.c.l.b16 %v295
        %v382 = vunpack.c.l.b16 %v296
        %v383 = vpack.c.b16 %v368, %v367
        %v384 = vpack.c.b16 %v370, %v369
        %v385 = vpack.c.b16 %v372, %v371
        %v386 = vpack.c.b16 %v374, %v373
        %v387 = vpack.c.b16 %v376, %v375
        %v388 = vpack.c.b16 %v378, %v377
        %v389 = vpack.c.b16 %v380, %v379
        %v390 = vpack.c.b16 %v382, %v381
        %v431 = vunpack.c.l.b16 %v297
        %v432 = vunpack.c.h.b16 %v297
        %v433 = vunpack.c.l.b16 %v298
        %v434 = vunpack.c.h.b16 %v298
        %v435 = vunpack.c.l.b16 %v299
        %v436 = vunpack.c.h.b16 %v299
        %v437 = vunpack.c.l.b16 %v300
        %v438 = vunpack.c.h.b16 %v300
        %v439 = vunpack.c.l.b16 %v301
        %v440 = vunpack.c.h.b16 %v301
        %v441 = vunpack.c.l.b16 %v302
        %v442 = vunpack.c.h.b16 %v302
        %v443 = vunpack.c.l.b16 %v303
        %v444 = vunpack.c.h.b16 %v303
        %v445 = vunpack.c.l.b16 %v304
        %v446 = vunpack.c.h.b16 %v304
        %v447 = vunpack.c.l.b16 %v305
        %v448 = vunpack.c.h.b16 %v305
        %v449 = vunpack.c.l.b16 %v306
        %v450 = vunpack.c.h.b16 %v306
        %v451 = vunpack.c.l.b16 %v307
        %v452 = vunpack.c.h.b16 %v307
        %v453 = vunpack.c.l.b16 %v308
        %v454 = vunpack.c.h.b16 %v308
        %v455 = vunpack.c.l.b16 %v309
        %v456 = vunpack.c.h.b16 %v309
        %v457 = vunpack.c.l.b16 %v310
        %v458 = vunpack.c.h.b16 %v310
        %v459 = vunpack.c.l.b16 %v311
        %v460 = vunpack.c.h.b16 %v311
        %v461 = vunpack.c.l.b16 %v312
        %v462 = vunpack.c.h.b16 %v312
        %v463 = vunpack.c.l.b16 %v313
        %v464 = vunpack.c.h.b16 %v313
        %v465 = vunpack.c.l.b16 %v314
        %v466 = vunpack.c.h.b16 %v314
        %v467 = vunpack.c.l.b16 %v315
        %v468 = vunpack.c.h.b16 %v315
        %v469 = vunpack.c.l.b16 %v316
        %v470 = vunpack.c.h.b16 %v316
        %v471 = vunpack.c.l.b16 %v317
        %v472 = vunpack.c.h.b16 %v317
        %v473 = vunpack.c.l.b16 %v318
        %v474 = vunpack.c.h.b16 %v318
        %v475 = vunpack.c.l.b16 %v319
        %v476 = vunpack.c.h.b16 %v319
        %v477 = vunpack.c.l.b16 %v320
        %v478 = vunpack.c.h.b16 %v320
        %v479 = vunpack.c.l.b16 %v321
        %v480 = vunpack.c.h.b16 %v321
        %v481 = vunpack.c.l.b16 %v322
        %v482 = vunpack.c.h.b16 %v322
        %v483 = vunpack.c.l.b16 %v323
        %v484 = vunpack.c.h.b16 %v323
        %v485 = vunpack.c.l.b16 %v324
        %v486 = vunpack.c.h.b16 %v324
        %v487 = vunpack.c.l.b16 %v325
        %v488 = vunpack.c.h.b16 %v325
        %v489 = vunpack.c.l.b16 %v326
        %v490 = vunpack.c.h.b16 %v326
        %v491 = vunpack.c.l.b16 %v327
        %v492 = vunpack.c.h.b16 %v327
        %v493 = vunpack.c.l.b16 %v328
        %v494 = vunpack.c.h.b16 %v328
        %v495 = vpack.c.b16 %v435, %v431
        %v496 = vpack.c.b16 %v436, %v432
        %v497 = vpack.c.b16 %v437, %v433
        %v498 = vpack.c.b16 %v438, %v434
        %v499 = vpack.c.b16 %v443, %v439
        %v500 = vpack.c.b16 %v444, %v440
        %v501 = vpack.c.b16 %v445, %v441
        %v502 = vpack.c.b16 %v446, %v442
        %v503 = vpack.c.b16 %v451, %v447
        %v504 = vpack.c.b16 %v452, %v448
        %v505 = vpack.c.b16 %v453, %v449
        %v506 = vpack.c.b16 %v454, %v450
        %v507 = vpack.c.b16 %v459, %v455
        %v508 = vpack.c.b16 %v460, %v456
        %v509 = vpack.c.b16 %v461, %v457
        %v510 = vpack.c.b16 %v462, %v458
        %v511 = vpack.c.b16 %v467, %v463
        %v512 = vpack.c.b16 %v468, %v464
        %v513 = vpack.c.b16 %v469, %v465
        %v514 = vpack.c.b16 %v470, %v466
        %v515 = vpack.c.b16 %v475, %v471
        %v516 = vpack.c.b16 %v476, %v472
        %v517 = vpack.c.b16 %v477, %v473
        %v518 = vpack.c.b16 %v478, %v474
        %v519 = vpack.c.b16 %v483, %v479
        %v520 = vpack.c.b16 %v484, %v480
        %v521 = vpack.c.b16 %v485, %v481
        %v522 = vpack.c.b16 %v486, %v482
        %v523 = vpack.c.b16 %v491, %v487
        %v524 = vpack.c.b16 %v492, %v488
        %v525 = vpack.c.b16 %v493, %v489
        %v526 = vpack.c.b16 %v494, %v490
        %559 = vmatprep.subr.bf16.mxu0 %v496
        %560 = vmatpush1.bf16.msra.mxu0 %v495
        %561 = vmatprep.subr.bf16.mxu0 %v500
        %562 = vmatpush1.bf16.msra.mxu0 %v499
        %563 = vmatprep.subr.bf16.mxu0 %v504
        %564 = vmatpush1.bf16.msra.mxu0 %v503
        %565 = vmatprep.subr.bf16.mxu0 %v508
        %566 = vmatpush1.bf16.msra.mxu0 %v507
        %567 = vmatprep.subr.bf16.mxu0 %v512
        %568 = vmatpush1.bf16.msra.mxu0 %v511
        %569 = vmatprep.subr.bf16.mxu0 %v516
        %570 = vmatpush1.bf16.msra.mxu0 %v515
        %571 = vmatprep.subr.bf16.mxu0 %v520
        %572 = vmatpush1.bf16.msra.mxu0 %v519
        %573 = vmatprep.subr.bf16.mxu0 %v524
        %574 = vmatpush1.bf16.msra.mxu0 %v523
        %575 = vmatprep.subr.bf16.mxu0 0
        %576 = vmatpush1.bf16.msra.mxu0 0
        %577 = vmatprep.subr.bf16.mxu0 0
        %578 = vmatpush1.bf16.msra.mxu0 0
        %579 = vmatprep.subr.bf16.mxu0 0
        %580 = vmatpush1.bf16.msra.mxu0 0
        %581 = vmatprep.subr.bf16.mxu0 0
        %582 = vmatpush1.bf16.msra.mxu0 0
        %583 = vmatprep.subr.bf16.mxu0 0
        %584 = vmatpush1.bf16.msra.mxu0 0
        %585 = vmatprep.subr.bf16.mxu0 0
        %586 = vmatpush1.bf16.msra.mxu0 0
        %587 = vmatprep.subr.bf16.mxu0 0
        %588 = vmatpush1.bf16.msra.mxu0 0
        %589 = vmatprep.subr.bf16.mxu0 0
        %590 = vmatpush1.bf16.msra.mxu0 0
        %591 = vmatprep.mubr.bf16.mxu0 0
        %592 = vmatmul.mubr.bf16.gmra.mrb[0].mxu0 %v383
        %v593 = vpop.f32.mrb[0].mxu0
        %v594 = vadd.f32 %v334, %v593
        %v595 = vpop.f32.mrb[0].mxu0
        %v596 = vadd.f32 %v338, %v595
        %v597 = vpop.f32.mrb[0].mxu0
        %v598 = vadd.f32 %v334, %v597
        %v599 = vpop.f32.mrb[0].mxu0
        %v600 = vadd.f32 %v338, %v599
        %601 = vmatprep.mubr.bf16.mxu0 0
        %602 = vmatmul.mubr.bf16.gmra.mrb[0].mxu0 %v384
        %v603 = vpop.f32.mrb[0].mxu0
        %v604 = vadd.f32 %v334, %v603
        %v605 = vpop.f32.mrb[0].mxu0
        %v606 = vadd.f32 %v338, %v605
        %v607 = vpop.f32.mrb[0].mxu0
        %v608 = vadd.f32 %v334, %v607
        %v609 = vpop.f32.mrb[0].mxu0
        %v610 = vadd.f32 %v338, %v609
        %611 = vmatprep.mubr.bf16.mxu0 0
        %612 = vmatmul.mubr.bf16.gmra.mrb[0].mxu0 %v385
        %v613 = vpop.f32.mrb[0].mxu0
        %v614 = vadd.f32 %v334, %v613
        %v615 = vpop.f32.mrb[0].mxu0
        %v616 = vadd.f32 %v338, %v615
        %v617 = vpop.f32.mrb[0].mxu0
        %v618 = vadd.f32 %v334, %v617
        %v619 = vpop.f32.mrb[0].mxu0
        %v620 = vadd.f32 %v338, %v619
        %621 = vmatprep.mubr.bf16.mxu0 0
        %622 = vmatmul.mubr.bf16.gmra.mrb[0].mxu0 %v386
        %v623 = vpop.f32.mrb[0].mxu0
        %v624 = vadd.f32 %v334, %v623
        %v625 = vpop.f32.mrb[0].mxu0
        %v626 = vadd.f32 %v338, %v625
        %v627 = vpop.f32.mrb[0].mxu0
        %v628 = vadd.f32 %v334, %v627
        %v629 = vpop.f32.mrb[0].mxu0
        %v630 = vadd.f32 %v338, %v629
        %631 = vmatprep.mubr.bf16.mxu0 0
        %632 = vmatmul.mubr.bf16.gmra.mrb[0].mxu0 %v387
        %v633 = vpop.f32.mrb[0].mxu0
        %v634 = vadd.f32 %v334, %v633
        %v635 = vpop.f32.mrb[0].mxu0
        %v636 = vadd.f32 %v338, %v635
        %v637 = vpop.f32.mrb[0].mxu0
        %v638 = vadd.f32 %v334, %v637
        %v639 = vpop.f32.mrb[0].mxu0
        %v640 = vadd.f32 %v338, %v639
        %641 = vmatprep.mubr.bf16.mxu0 0
        %642 = vmatmul.mubr.bf16.gmra.mrb[0].mxu0 %v388
        %v643 = vpop.f32.mrb[0].mxu0
        %v644 = vadd.f32 %v334, %v643
        %v645 = vpop.f32.mrb[0].mxu0
        %v646 = vadd.f32 %v338, %v645
        %v647 = vpop.f32.mrb[0].mxu0
        %v648 = vadd.f32 %v334, %v647
        %v649 = vpop.f32.mrb[0].mxu0
        %v650 = vadd.f32 %v338, %v649
        %651 = vmatprep.mubr.bf16.mxu0 0
        %652 = vmatmul.mubr.bf16.gmra.mrb[0].mxu0 %v389
        %v653 = vpop.f32.mrb[0].mxu0
        %v654 = vadd.f32 %v334, %v653
        %v655 = vpop.f32.mrb[0].mxu0
        %v656 = vadd.f32 %v338, %v655
        %v657 = vpop.f32.mrb[0].mxu0
        %v658 = vadd.f32 %v334, %v657
        %v659 = vpop.f32.mrb[0].mxu0
        %v660 = vadd.f32 %v338, %v659
        %661 = vmatprep.mubr.bf16.mxu0 0
        %662 = vmatmul.mubr.bf16.gmra.mrb[0].mxu0 %v390
        %v663 = vpop.f32.mrb[0].mxu0
        %v664 = vadd.f32 %v334, %v663
        %v665 = vpop.f32.mrb[0].mxu0
        %v666 = vadd.f32 %v338, %v665
        %v667 = vpop.f32.mrb[0].mxu0
        %v668 = vadd.f32 %v334, %v667
        %v669 = vpop.f32.mrb[0].mxu0
        %v670 = vadd.f32 %v338, %v669
        %671 = vdwg.mxu0
        %672 = vmatprep.subr.bf16.mxu0 %v498
        %673 = vmatpush1.bf16.msra.mxu0 %v497
        %674 = vmatprep.subr.bf16.mxu0 %v502
        %675 = vmatpush1.bf16.msra.mxu0 %v501
        %676 = vmatprep.subr.bf16.mxu0 %v506
        %677 = vmatpush1.bf16.msra.mxu0 %v505
        %678 = vmatprep.subr.bf16.mxu0 %v510
        %679 = vmatpush1.bf16.msra.mxu0 %v509
        %680 = vmatprep.subr.bf16.mxu0 %v514
        %681 = vmatpush1.bf16.msra.mxu0 %v513
        %682 = vmatprep.subr.bf16.mxu0 %v518
        %683 = vmatpush1.bf16.msra.mxu0 %v517
        %684 = vmatprep.subr.bf16.mxu0 %v522
        %685 = vmatpush1.bf16.msra.mxu0 %v521
        %686 = vmatprep.subr.bf16.mxu0 %v526
        %687 = vmatpush1.bf16.msra.mxu0 %v525
        %688 = vmatprep.subr.bf16.mxu0 0
        %689 = vmatpush1.bf16.msra.mxu0 0
        %690 = vmatprep.subr.bf16.mxu0 0
        %691 = vmatpush1.bf16.msra.mxu0 0
        %692 = vmatprep.subr.bf16.mxu0 0
        %693 = vmatpush1.bf16.msra.mxu0 0
        %694 = vmatprep.subr.bf16.mxu0 0
        %695 = vmatpush1.bf16.msra.mxu0 0
        %696 = vmatprep.subr.bf16.mxu0 0
        %697 = vmatpush1.bf16.msra.mxu0 0
        %698 = vmatprep.subr.bf16.mxu0 0
        %699 = vmatpush1.bf16.msra.mxu0 0
        %700 = vmatprep.subr.bf16.mxu0 0
        %701 = vmatpush1.bf16.msra.mxu0 0
        %702 = vmatprep.subr.bf16.mxu0 0
        %703 = vmatpush1.bf16.msra.mxu0 0
        %704 = vmatprep.mubr.bf16.mxu0 0
        %705 = vmatmul.mubr.bf16.gmra.mrb[0].mxu0 %v383
        %v706 = vpop.f32.mrb[0].mxu0
        %v707 = vadd.f32 %v342, %v706
        %v708 = vpop.f32.mrb[0].mxu0
        %v709 = vadd.f32 %v346, %v708
        %v710 = vpop.f32.mrb[0].mxu0
        %v711 = vadd.f32 %v342, %v710
        %v712 = vpop.f32.mrb[0].mxu0
        %v713 = vadd.f32 %v346, %v712
        %714 = vmatprep.mubr.bf16.mxu0 0
        %715 = vmatmul.mubr.bf16.gmra.mrb[0].mxu0 %v384
        %v716 = vpop.f32.mrb[0].mxu0
        %v717 = vadd.f32 %v342, %v716
        %v718 = vpop.f32.mrb[0].mxu0
        %v719 = vadd.f32 %v346, %v718
        %v720 = vpop.f32.mrb[0].mxu0
        %v721 = vadd.f32 %v342, %v720
        %v722 = vpop.f32.mrb[0].mxu0
        %v723 = vadd.f32 %v346, %v722
        %724 = vmatprep.mubr.bf16.mxu0 0
        %725 = vmatmul.mubr.bf16.gmra.mrb[0].mxu0 %v385
        %v726 = vpop.f32.mrb[0].mxu0
        %v727 = vadd.f32 %v342, %v726
        %v728 = vpop.f32.mrb[0].mxu0
        %v729 = vadd.f32 %v346, %v728
        %v730 = vpop.f32.mrb[0].mxu0
        %v731 = vadd.f32 %v342, %v730
        %v732 = vpop.f32.mrb[0].mxu0
        %v733 = vadd.f32 %v346, %v732
        %734 = vmatprep.mubr.bf16.mxu0 0
        %735 = vmatmul.mubr.bf16.gmra.mrb[0].mxu0 %v386
        %v736 = vpop.f32.mrb[0].mxu0
        %v737 = vadd.f32 %v342, %v736
        %v738 = vpop.f32.mrb[0].mxu0
        %v739 = vadd.f32 %v346, %v738
        %v740 = vpop.f32.mrb[0].mxu0
        %v741 = vadd.f32 %v342, %v740
        %v742 = vpop.f32.mrb[0].mxu0
        %v743 = vadd.f32 %v346, %v742
        %744 = vmatprep.mubr.bf16.mxu0 0
        %745 = vmatmul.mubr.bf16.gmra.mrb[0].mxu0 %v387
        %v746 = vpop.f32.mrb[0].mxu0
        %v747 = vadd.f32 %v342, %v746
        %v748 = vpop.f32.mrb[0].mxu0
        %v749 = vadd.f32 %v346, %v748
        %v750 = vpop.f32.mrb[0].mxu0
        %v751 = vadd.f32 %v342, %v750
        %v752 = vpop.f32.mrb[0].mxu0
        %v753 = vadd.f32 %v346, %v752
        %754 = vmatprep.mubr.bf16.mxu0 0
        %755 = vmatmul.mubr.bf16.gmra.mrb[0].mxu0 %v388
        %v756 = vpop.f32.mrb[0].mxu0
        %v757 = vadd.f32 %v342, %v756
        %v758 = vpop.f32.mrb[0].mxu0
        %v759 = vadd.f32 %v346, %v758
        %v760 = vpop.f32.mrb[0].mxu0
        %v761 = vadd.f32 %v342, %v760
        %v762 = vpop.f32.mrb[0].mxu0
        %v763 = vadd.f32 %v346, %v762
        %764 = vmatprep.mubr.bf16.mxu0 0
        %765 = vmatmul.mubr.bf16.gmra.mrb[0].mxu0 %v389
        %v766 = vpop.f32.mrb[0].mxu0
        %v767 = vadd.f32 %v342, %v766
        %v768 = vpop.f32.mrb[0].mxu0
        %v769 = vadd.f32 %v346, %v768
        %v770 = vpop.f32.mrb[0].mxu0
        %v771 = vadd.f32 %v342, %v770
        %v772 = vpop.f32.mrb[0].mxu0
        %v773 = vadd.f32 %v346, %v772
        %774 = vmatprep.mubr.bf16.mxu0 0
        %775 = vmatmul.mubr.bf16.gmra.mrb[0].mxu0 %v390
        %v776 = vpop.f32.mrb[0].mxu0
        %v777 = vadd.f32 %v342, %v776
        %v778 = vpop.f32.mrb[0].mxu0
        %v779 = vadd.f32 %v346, %v778
        %v780 = vpop.f32.mrb[0].mxu0
        %v781 = vadd.f32 %v342, %v780
        %v782 = vpop.f32.mrb[0].mxu0
        %v783 = vadd.f32 %v346, %v782
        %784 = vdwg.mxu0
        %v785 = vmul.f32 %v594, 0.5
        %v786 = vmul.f32 %v596, 0.5
        %v787 = vmul.f32 %v707, 0.5
        %v788 = vmul.f32 %v709, 0.5
        %v789 = vmul.f32 %v598, 0.5
        %v790 = vmul.f32 %v600, 0.5
        %v791 = vmul.f32 %v711, 0.5
        %v792 = vmul.f32 %v713, 0.5
        %v793 = vmul.f32 %v604, 0.5
        %v794 = vmul.f32 %v606, 0.5
        %v795 = vmul.f32 %v717, 0.5
        %v796 = vmul.f32 %v719, 0.5
        %v797 = vmul.f32 %v608, 0.5
        %v798 = vmul.f32 %v610, 0.5
        %v799 = vmul.f32 %v721, 0.5
        %v800 = vmul.f32 %v723, 0.5
        %v801 = vmul.f32 %v614, 0.5
        %v802 = vmul.f32 %v616, 0.5
        %v803 = vmul.f32 %v727, 0.5
        %v804 = vmul.f32 %v729, 0.5
        %v805 = vmul.f32 %v618, 0.5
        %v806 = vmul.f32 %v620, 0.5
        %v807 = vmul.f32 %v731, 0.5
        %v808 = vmul.f32 %v733, 0.5
        %v809 = vmul.f32 %v624, 0.5
        %v810 = vmul.f32 %v626, 0.5
        %v811 = vmul.f32 %v737, 0.5
        %v812 = vmul.f32 %v739, 0.5
        %v813 = vmul.f32 %v628, 0.5
        %v814 = vmul.f32 %v630, 0.5
        %v815 = vmul.f32 %v741, 0.5
        %v816 = vmul.f32 %v743, 0.5
        %v817 = vmul.f32 %v634, 0.5
        %v818 = vmul.f32 %v636, 0.5
        %v819 = vmul.f32 %v747, 0.5
        %v820 = vmul.f32 %v749, 0.5
        %v821 = vmul.f32 %v638, 0.5
        %v822 = vmul.f32 %v640, 0.5
        %v823 = vmul.f32 %v751, 0.5
        %v824 = vmul.f32 %v753, 0.5
        %v825 = vmul.f32 %v644, 0.5
        %v826 = vmul.f32 %v646, 0.5
        %v827 = vmul.f32 %v757, 0.5
        %v828 = vmul.f32 %v759, 0.5
        %v829 = vmul.f32 %v648, 0.5
        %v830 = vmul.f32 %v650, 0.5
        %v831 = vmul.f32 %v761, 0.5
        %v832 = vmul.f32 %v763, 0.5
        %v833 = vmul.f32 %v654, 0.5
        %v834 = vmul.f32 %v656, 0.5
        %v835 = vmul.f32 %v767, 0.5
        %v836 = vmul.f32 %v769, 0.5
        %v837 = vmul.f32 %v658, 0.5
        %v838 = vmul.f32 %v660, 0.5
        %v839 = vmul.f32 %v771, 0.5
        %v840 = vmul.f32 %v773, 0.5
        %v841 = vmul.f32 %v664, 0.5
        %v842 = vmul.f32 %v666, 0.5
        %v843 = vmul.f32 %v777, 0.5
        %v844 = vmul.f32 %v779, 0.5
        %v845 = vmul.f32 %v668, 0.5
        %v846 = vmul.f32 %v670, 0.5
        %v847 = vmul.f32 %v781, 0.5
        %v848 = vmul.f32 %v783, 0.5
        %v849 = vmul.f32 %v594, 0.044715
        %v850 = vmul.f32 %v596, 0.044715
        %v851 = vmul.f32 %v707, 0.044715
        %v852 = vmul.f32 %v709, 0.044715
        %v853 = vmul.f32 %v598, 0.044715
        %v854 = vmul.f32 %v600, 0.044715
        %v855 = vmul.f32 %v711, 0.044715
        %v856 = vmul.f32 %v713, 0.044715
        %v857 = vmul.f32 %v604, 0.044715
        %v858 = vmul.f32 %v606, 0.044715
        %v859 = vmul.f32 %v717, 0.044715
        %v860 = vmul.f32 %v719, 0.044715
        %v861 = vmul.f32 %v608, 0.044715
        %v862 = vmul.f32 %v610, 0.044715
        %v863 = vmul.f32 %v721, 0.044715
        %v864 = vmul.f32 %v723, 0.044715
        %v865 = vmul.f32 %v614, 0.044715
        %v866 = vmul.f32 %v616, 0.044715
        %v867 = vmul.f32 %v727, 0.044715
        %v868 = vmul.f32 %v729, 0.044715
        %v869 = vmul.f32 %v618, 0.044715
        %v870 = vmul.f32 %v620, 0.044715
        %v871 = vmul.f32 %v731, 0.044715
        %v872 = vmul.f32 %v733, 0.044715
        %v873 = vmul.f32 %v624, 0.044715
        %v874 = vmul.f32 %v626, 0.044715
        %v875 = vmul.f32 %v737, 0.044715
        %v876 = vmul.f32 %v739, 0.044715
        %v877 = vmul.f32 %v628, 0.044715
        %v878 = vmul.f32 %v630, 0.044715
        %v879 = vmul.f32 %v741, 0.044715
        %v880 = vmul.f32 %v743, 0.044715
        %v881 = vmul.f32 %v634, 0.044715
        %v882 = vmul.f32 %v636, 0.044715
        %v883 = vmul.f32 %v747, 0.044715
        %v884 = vmul.f32 %v749, 0.044715
        %v885 = vmul.f32 %v638, 0.044715
        %v886 = vmul.f32 %v640, 0.044715
        %v887 = vmul.f32 %v751, 0.044715
        %v888 = vmul.f32 %v753, 0.044715
        %v889 = vmul.f32 %v644, 0.044715
        %v890 = vmul.f32 %v646, 0.044715
        %v891 = vmul.f32 %v757, 0.044715
        %v892 = vmul.f32 %v759, 0.044715
        %v893 = vmul.f32 %v648, 0.044715
        %v894 = vmul.f32 %v650, 0.044715
        %v895 = vmul.f32 %v761, 0.044715
        %v896 = vmul.f32 %v763, 0.044715
        %v897 = vmul.f32 %v654, 0.044715
        %v898 = vmul.f32 %v656, 0.044715
        %v899 = vmul.f32 %v767, 0.044715
        %v900 = vmul.f32 %v769, 0.044715
        %v901 = vmul.f32 %v658, 0.044715
        %v902 = vmul.f32 %v660, 0.044715
        %v903 = vmul.f32 %v771, 0.044715
        %v904 = vmul.f32 %v773, 0.044715
        %v905 = vmul.f32 %v664, 0.044715
        %v906 = vmul.f32 %v666, 0.044715
        %v907 = vmul.f32 %v777, 0.044715
        %v908 = vmul.f32 %v779, 0.044715
        %v909 = vmul.f32 %v668, 0.044715
        %v910 = vmul.f32 %v670, 0.044715
        %v911 = vmul.f32 %v781, 0.044715
        %v912 = vmul.f32 %v783, 0.044715
        %v913 = vmul.f32 %v849, %v594
        %v914 = vmul.f32 %v850, %v596
        %v915 = vmul.f32 %v851, %v707
        %v916 = vmul.f32 %v852, %v709
        %v917 = vmul.f32 %v853, %v598
        %v918 = vmul.f32 %v854, %v600
        %v919 = vmul.f32 %v855, %v711
        %v920 = vmul.f32 %v856, %v713
        %v921 = vmul.f32 %v857, %v604
        %v922 = vmul.f32 %v858, %v606
        %v923 = vmul.f32 %v859, %v717
        %v924 = vmul.f32 %v860, %v719
        %v925 = vmul.f32 %v861, %v608
        %v926 = vmul.f32 %v862, %v610
        %v927 = vmul.f32 %v863, %v721
        %v928 = vmul.f32 %v864, %v723
        %v929 = vmul.f32 %v865, %v614
        %v930 = vmul.f32 %v866, %v616
        %v931 = vmul.f32 %v867, %v727
        %v932 = vmul.f32 %v868, %v729
        %v933 = vmul.f32 %v869, %v618
        %v934 = vmul.f32 %v870, %v620
        %v935 = vmul.f32 %v871, %v731
        %v936 = vmul.f32 %v872, %v733
        %v937 = vmul.f32 %v873, %v624
        %v938 = vmul.f32 %v874, %v626
        %v939 = vmul.f32 %v875, %v737
        %v940 = vmul.f32 %v876, %v739
        %v941 = vmul.f32 %v877, %v628
        %v942 = vmul.f32 %v878, %v630
        %v943 = vmul.f32 %v879, %v741
        %v944 = vmul.f32 %v880, %v743
        %v945 = vmul.f32 %v881, %v634
        %v946 = vmul.f32 %v882, %v636
        %v947 = vmul.f32 %v883, %v747
        %v948 = vmul.f32 %v884, %v749
        %v949 = vmul.f32 %v885, %v638
        %v950 = vmul.f32 %v886, %v640
        %v951 = vmul.f32 %v887, %v751
        %v952 = vmul.f32 %v888, %v753
        %v953 = vmul.f32 %v889, %v644
        %v954 = vmul.f32 %v890, %v646
        %v955 = vmul.f32 %v891, %v757
        %v956 = vmul.f32 %v892, %v759
        %v957 = vmul.f32 %v893, %v648
        %v958 = vmul.f32 %v894, %v650
        %v959 = vmul.f32 %v895, %v761
        %v960 = vmul.f32 %v896, %v763
        %v961 = vmul.f32 %v897, %v654
        %v962 = vmul.f32 %v898, %v656
        %v963 = vmul.f32 %v899, %v767
        %v964 = vmul.f32 %v900, %v769
        %v965 = vmul.f32 %v901, %v658
        %v966 = vmul.f32 %v902, %v660
        %v967 = vmul.f32 %v903, %v771
        %v968 = vmul.f32 %v904, %v773
        %v969 = vmul.f32 %v905, %v664
        %v970 = vmul.f32 %v906, %v666
        %v971 = vmul.f32 %v907, %v777
        %v972 = vmul.f32 %v908, %v779
        %v973 = vmul.f32 %v909, %v668
        %v974 = vmul.f32 %v910, %v670
        %v975 = vmul.f32 %v911, %v781
        %v976 = vmul.f32 %v912, %v783
        %v977 = vmul.f32 %v913, %v594
        %v978 = vmul.f32 %v914, %v596
        %v979 = vmul.f32 %v915, %v707
        %v980 = vmul.f32 %v916, %v709
        %v981 = vmul.f32 %v917, %v598
        %v982 = vmul.f32 %v918, %v600
        %v983 = vmul.f32 %v919, %v711
        %v984 = vmul.f32 %v920, %v713
        %v985 = vmul.f32 %v921, %v604
        %v986 = vmul.f32 %v922, %v606
        %v987 = vmul.f32 %v923, %v717
        %v988 = vmul.f32 %v924, %v719
        %v989 = vmul.f32 %v925, %v608
        %v990 = vmul.f32 %v926, %v610
        %v991 = vmul.f32 %v927, %v721
        %v992 = vmul.f32 %v928, %v723
        %v993 = vmul.f32 %v929, %v614
        %v994 = vmul.f32 %v930, %v616
        %v995 = vmul.f32 %v931, %v727
        %v996 = vmul.f32 %v932, %v729
        %v997 = vmul.f32 %v933, %v618
        %v998 = vmul.f32 %v934, %v620
        %v999 = vmul.f32 %v935, %v731
        %v1000 = vmul.f32 %v936, %v733
        %v1001 = vmul.f32 %v937, %v624
        %v1002 = vmul.f32 %v938, %v626
        %v1003 = vmul.f32 %v939, %v737
        %v1004 = vmul.f32 %v940, %v739
        %v1005 = vmul.f32 %v941, %v628
        %v1006 = vmul.f32 %v942, %v630
        %v1007 = vmul.f32 %v943, %v741
        %v1008 = vmul.f32 %v944, %v743
        %v1009 = vmul.f32 %v945, %v634
        %v1010 = vmul.f32 %v946, %v636
        %v1011 = vmul.f32 %v947, %v747
        %v1012 = vmul.f32 %v948, %v749
        %v1013 = vmul.f32 %v949, %v638
        %v1014 = vmul.f32 %v950, %v640
        %v1015 = vmul.f32 %v951, %v751
        %v1016 = vmul.f32 %v952, %v753
        %v1017 = vmul.f32 %v953, %v644
        %v1018 = vmul.f32 %v954, %v646
        %v1019 = vmul.f32 %v955, %v757
        %v1020 = vmul.f32 %v956, %v759
        %v1021 = vmul.f32 %v957, %v648
        %v1022 = vmul.f32 %v958, %v650
        %v1023 = vmul.f32 %v959, %v761
        %v1024 = vmul.f32 %v960, %v763
        %v1025 = vmul.f32 %v961, %v654
        %v1026 = vmul.f32 %v962, %v656
        %v1027 = vmul.f32 %v963, %v767
        %v1028 = vmul.f32 %v964, %v769
        %v1029 = vmul.f32 %v965, %v658
        %v1030 = vmul.f32 %v966, %v660
        %v1031 = vmul.f32 %v967, %v771
        %v1032 = vmul.f32 %v968, %v773
        %v1033 = vmul.f32 %v969, %v664
        %v1034 = vmul.f32 %v970, %v666
        %v1035 = vmul.f32 %v971, %v777
        %v1036 = vmul.f32 %v972, %v779
        %v1037 = vmul.f32 %v973, %v668
        %v1038 = vmul.f32 %v974, %v670
        %v1039 = vmul.f32 %v975, %v781
        %v1040 = vmul.f32 %v976, %v783
        %v1041 = vadd.f32 %v594, %v977
        %v1042 = vadd.f32 %v596, %v978
        %v1043 = vadd.f32 %v707, %v979
        %v1044 = vadd.f32 %v709, %v980
        %v1045 = vadd.f32 %v598, %v981
        %v1046 = vadd.f32 %v600, %v982
        %v1047 = vadd.f32 %v711, %v983
        %v1048 = vadd.f32 %v713, %v984
        %v1049 = vadd.f32 %v604, %v985
        %v1050 = vadd.f32 %v606, %v986
        %v1051 = vadd.f32 %v717, %v987
        %v1052 = vadd.f32 %v719, %v988
        %v1053 = vadd.f32 %v608, %v989
        %v1054 = vadd.f32 %v610, %v990
        %v1055 = vadd.f32 %v721, %v991
        %v1056 = vadd.f32 %v723, %v992
        %v1057 = vadd.f32 %v614, %v993
        %v1058 = vadd.f32 %v616, %v994
        %v1059 = vadd.f32 %v727, %v995
        %v1060 = vadd.f32 %v729, %v996
        %v1061 = vadd.f32 %v618, %v997
        %v1062 = vadd.f32 %v620, %v998
        %v1063 = vadd.f32 %v731, %v999
        %v1064 = vadd.f32 %v733, %v1000
        %v1065 = vadd.f32 %v624, %v1001
        %v1066 = vadd.f32 %v626, %v1002
        %v1067 = vadd.f32 %v737, %v1003
        %v1068 = vadd.f32 %v739, %v1004
        %v1069 = vadd.f32 %v628, %v1005
        %v1070 = vadd.f32 %v630, %v1006
        %v1071 = vadd.f32 %v741, %v1007
        %v1072 = vadd.f32 %v743, %v1008
        %v1073 = vadd.f32 %v634, %v1009
        %v1074 = vadd.f32 %v636, %v1010
        %v1075 = vadd.f32 %v747, %v1011
        %v1076 = vadd.f32 %v749, %v1012
        %v1077 = vadd.f32 %v638, %v1013
        %v1078 = vadd.f32 %v640, %v1014
        %v1079 = vadd.f32 %v751, %v1015
        %v1080 = vadd.f32 %v753, %v1016
        %v1081 = vadd.f32 %v644, %v1017
        %v1082 = vadd.f32 %v646, %v1018
        %v1083 = vadd.f32 %v757, %v1019
        %v1084 = vadd.f32 %v759, %v1020
        %v1085 = vadd.f32 %v648, %v1021
        %v1086 = vadd.f32 %v650, %v1022
        %v1087 = vadd.f32 %v761, %v1023
        %v1088 = vadd.f32 %v763, %v1024
        %v1089 = vadd.f32 %v654, %v1025
        %v1090 = vadd.f32 %v656, %v1026
        %v1091 = vadd.f32 %v767, %v1027
        %v1092 = vadd.f32 %v769, %v1028
        %v1093 = vadd.f32 %v658, %v1029
        %v1094 = vadd.f32 %v660, %v1030
        %v1095 = vadd.f32 %v771, %v1031
        %v1096 = vadd.f32 %v773, %v1032
        %v1097 = vadd.f32 %v664, %v1033
        %v1098 = vadd.f32 %v666, %v1034
        %v1099 = vadd.f32 %v777, %v1035
        %v1100 = vadd.f32 %v779, %v1036
        %v1101 = vadd.f32 %v668, %v1037
        %v1102 = vadd.f32 %v670, %v1038
        %v1103 = vadd.f32 %v781, %v1039
        %v1104 = vadd.f32 %v783, %v1040
        %v1105 = vmul.f32 %v1041, 0.7978846
        %v1106 = vmul.f32 %v1042, 0.7978846
        %v1107 = vmul.f32 %v1043, 0.7978846
        %v1108 = vmul.f32 %v1044, 0.7978846
        %v1109 = vmul.f32 %v1045, 0.7978846
        %v1110 = vmul.f32 %v1046, 0.7978846
        %v1111 = vmul.f32 %v1047, 0.7978846
        %v1112 = vmul.f32 %v1048, 0.7978846
        %v1113 = vmul.f32 %v1049, 0.7978846
        %v1114 = vmul.f32 %v1050, 0.7978846
        %v1115 = vmul.f32 %v1051, 0.7978846
        %v1116 = vmul.f32 %v1052, 0.7978846
        %v1117 = vmul.f32 %v1053, 0.7978846
        %v1118 = vmul.f32 %v1054, 0.7978846
        %v1119 = vmul.f32 %v1055, 0.7978846
        %v1120 = vmul.f32 %v1056, 0.7978846
        %v1121 = vmul.f32 %v1057, 0.7978846
        %v1122 = vmul.f32 %v1058, 0.7978846
        %v1123 = vmul.f32 %v1059, 0.7978846
        %v1124 = vmul.f32 %v1060, 0.7978846
        %v1125 = vmul.f32 %v1061, 0.7978846
        %v1126 = vmul.f32 %v1062, 0.7978846
        %v1127 = vmul.f32 %v1063, 0.7978846
        %v1128 = vmul.f32 %v1064, 0.7978846
        %v1129 = vmul.f32 %v1065, 0.7978846
        %v1130 = vmul.f32 %v1066, 0.7978846
        %v1131 = vmul.f32 %v1067, 0.7978846
        %v1132 = vmul.f32 %v1068, 0.7978846
        %v1133 = vmul.f32 %v1069, 0.7978846
        %v1134 = vmul.f32 %v1070, 0.7978846
        %v1135 = vmul.f32 %v1071, 0.7978846
        %v1136 = vmul.f32 %v1072, 0.7978846
        %v1137 = vmul.f32 %v1073, 0.7978846
        %v1138 = vmul.f32 %v1074, 0.7978846
        %v1139 = vmul.f32 %v1075, 0.7978846
        %v1140 = vmul.f32 %v1076, 0.7978846
        %v1141 = vmul.f32 %v1077, 0.7978846
        %v1142 = vmul.f32 %v1078, 0.7978846
        %v1143 = vmul.f32 %v1079, 0.7978846
        %v1144 = vmul.f32 %v1080, 0.7978846
        %v1145 = vmul.f32 %v1081, 0.7978846
        %v1146 = vmul.f32 %v1082, 0.7978846
        %v1147 = vmul.f32 %v1083, 0.7978846
        %v1148 = vmul.f32 %v1084, 0.7978846
        %v1149 = vmul.f32 %v1085, 0.7978846
        %v1150 = vmul.f32 %v1086, 0.7978846
        %v1151 = vmul.f32 %v1087, 0.7978846
        %v1152 = vmul.f32 %v1088, 0.7978846
        %v1153 = vmul.f32 %v1089, 0.7978846
        %v1154 = vmul.f32 %v1090, 0.7978846
        %v1155 = vmul.f32 %v1091, 0.7978846
        %v1156 = vmul.f32 %v1092, 0.7978846
        %v1157 = vmul.f32 %v1093, 0.7978846
        %v1158 = vmul.f32 %v1094, 0.7978846
        %v1159 = vmul.f32 %v1095, 0.7978846
        %v1160 = vmul.f32 %v1096, 0.7978846
        %v1161 = vmul.f32 %v1097, 0.7978846
        %v1162 = vmul.f32 %v1098, 0.7978846
        %v1163 = vmul.f32 %v1099, 0.7978846
        %v1164 = vmul.f32 %v1100, 0.7978846
        %v1165 = vmul.f32 %v1101, 0.7978846
        %v1166 = vmul.f32 %v1102, 0.7978846
        %v1167 = vmul.f32 %v1103, 0.7978846
        %v1168 = vmul.f32 %v1104, 0.7978846
        %v1169 = vtanh.pop %v1105
        %v1170 = vtanh.pop %v1106
        %v1171 = vtanh.pop %v1107
        %v1172 = vtanh.pop %v1108
        %v1173 = vtanh.pop %v1109
        %v1174 = vtanh.pop %v1110
        %v1175 = vtanh.pop %v1111
        %v1176 = vtanh.pop %v1112
        %v1177 = vtanh.pop %v1113
        %v1178 = vtanh.pop %v1114
        %v1179 = vtanh.pop %v1115
        %v1180 = vtanh.pop %v1116
        %v1181 = vtanh.pop %v1117
        %v1182 = vtanh.pop %v1118
        %v1183 = vtanh.pop %v1119
        %v1184 = vtanh.pop %v1120
        %v1185 = vtanh.pop %v1121
        %v1186 = vtanh.pop %v1122
        %v1187 = vtanh.pop %v1123
        %v1188 = vtanh.pop %v1124
        %v1189 = vtanh.pop %v1125
        %v1190 = vtanh.pop %v1126
        %v1191 = vtanh.pop %v1127
        %v1192 = vtanh.pop %v1128
        %v1193 = vtanh.pop %v1129
        %v1194 = vtanh.pop %v1130
        %v1195 = vtanh.pop %v1131
        %v1196 = vtanh.pop %v1132
        %v1197 = vtanh.pop %v1133
        %v1198 = vtanh.pop %v1134
        %v1199 = vtanh.pop %v1135
        %v1200 = vtanh.pop %v1136
        %v1201 = vtanh.pop %v1137
        %v1202 = vtanh.pop %v1138
        %v1203 = vtanh.pop %v1139
        %v1204 = vtanh.pop %v1140
        %v1205 = vtanh.pop %v1141
        %v1206 = vtanh.pop %v1142
        %v1207 = vtanh.pop %v1143
        %v1208 = vtanh.pop %v1144
        %v1209 = vtanh.pop %v1145
        %v1210 = vtanh.pop %v1146
        %v1211 = vtanh.pop %v1147
        %v1212 = vtanh.pop %v1148
        %v1213 = vtanh.pop %v1149
        %v1214 = vtanh.pop %v1150
        %v1215 = vtanh.pop %v1151
        %v1216 = vtanh.pop %v1152
        %v1217 = vtanh.pop %v1153
        %v1218 = vtanh.pop %v1154
        %v1219 = vtanh.pop %v1155
        %v1220 = vtanh.pop %v1156
        %v1221 = vtanh.pop %v1157
        %v1222 = vtanh.pop %v1158
        %v1223 = vtanh.pop %v1159
        %v1224 = vtanh.pop %v1160
        %v1225 = vtanh.pop %v1161
        %v1226 = vtanh.pop %v1162
        %v1227 = vtanh.pop %v1163
        %v1228 = vtanh.pop %v1164
        %v1229 = vtanh.pop %v1165
        %v1230 = vtanh.pop %v1166
        %v1231 = vtanh.pop %v1167
        %v1232 = vtanh.pop %v1168
        %v1233 = vadd.f32 %v1169, 1.0
        %v1234 = vadd.f32 %v1170, 1.0
        %v1235 = vadd.f32 %v1171, 1.0
        %v1236 = vadd.f32 %v1172, 1.0
        %v1237 = vadd.f32 %v1173, 1.0
        %v1238 = vadd.f32 %v1174, 1.0
        %v1239 = vadd.f32 %v1175, 1.0
        %v1240 = vadd.f32 %v1176, 1.0
        %v1241 = vadd.f32 %v1177, 1.0
        %v1242 = vadd.f32 %v1178, 1.0
        %v1243 = vadd.f32 %v1179, 1.0
        %v1244 = vadd.f32 %v1180, 1.0
        %v1245 = vadd.f32 %v1181, 1.0
        %v1246 = vadd.f32 %v1182, 1.0
        %v1247 = vadd.f32 %v1183, 1.0
        %v1248 = vadd.f32 %v1184, 1.0
        %v1249 = vadd.f32 %v1185, 1.0
        %v1250 = vadd.f32 %v1186, 1.0
        %v1251 = vadd.f32 %v1187, 1.0
        %v1252 = vadd.f32 %v1188, 1.0
        %v1253 = vadd.f32 %v1189, 1.0
        %v1254 = vadd.f32 %v1190, 1.0
        %v1255 = vadd.f32 %v1191, 1.0
        %v1256 = vadd.f32 %v1192, 1.0
        %v1257 = vadd.f32 %v1193, 1.0
        %v1258 = vadd.f32 %v1194, 1.0
        %v1259 = vadd.f32 %v1195, 1.0
        %v1260 = vadd.f32 %v1196, 1.0
        %v1261 = vadd.f32 %v1197, 1.0
        %v1262 = vadd.f32 %v1198, 1.0
        %v1263 = vadd.f32 %v1199, 1.0
        %v1264 = vadd.f32 %v1200, 1.0
        %v1265 = vadd.f32 %v1201, 1.0
        %v1266 = vadd.f32 %v1202, 1.0
        %v1267 = vadd.f32 %v1203, 1.0
        %v1268 = vadd.f32 %v1204, 1.0
        %v1269 = vadd.f32 %v1205, 1.0
        %v1270 = vadd.f32 %v1206, 1.0
        %v1271 = vadd.f32 %v1207, 1.0
        %v1272 = vadd.f32 %v1208, 1.0
        %v1273 = vadd.f32 %v1209, 1.0
        %v1274 = vadd.f32 %v1210, 1.0
        %v1275 = vadd.f32 %v1211, 1.0
        %v1276 = vadd.f32 %v1212, 1.0
        %v1277 = vadd.f32 %v1213, 1.0
        %v1278 = vadd.f32 %v1214, 1.0
        %v1279 = vadd.f32 %v1215, 1.0
        %v1280 = vadd.f32 %v1216, 1.0
        %v1281 = vadd.f32 %v1217, 1.0
        %v1282 = vadd.f32 %v1218, 1.0
        %v1283 = vadd.f32 %v1219, 1.0
        %v1284 = vadd.f32 %v1220, 1.0
        %v1285 = vadd.f32 %v1221, 1.0
        %v1286 = vadd.f32 %v1222, 1.0
        %v1287 = vadd.f32 %v1223, 1.0
        %v1288 = vadd.f32 %v1224, 1.0
        %v1289 = vadd.f32 %v1225, 1.0
        %v1290 = vadd.f32 %v1226, 1.0
        %v1291 = vadd.f32 %v1227, 1.0
        %v1292 = vadd.f32 %v1228, 1.0
        %v1293 = vadd.f32 %v1229, 1.0
        %v1294 = vadd.f32 %v1230, 1.0
        %v1295 = vadd.f32 %v1231, 1.0
        %v1296 = vadd.f32 %v1232, 1.0
        %v1297 = vmul.f32 %v785, %v1233
        %v1298 = vmul.f32 %v786, %v1234
        %v1299 = vmul.f32 %v787, %v1235
        %v1300 = vmul.f32 %v788, %v1236
        %v1301 = vmul.f32 %v789, %v1237
        %v1302 = vmul.f32 %v790, %v1238
        %v1303 = vmul.f32 %v791, %v1239
        %v1304 = vmul.f32 %v792, %v1240
        %v1305 = vmul.f32 %v793, %v1241
        %v1306 = vmul.f32 %v794, %v1242
        %v1307 = vmul.f32 %v795, %v1243
        %v1308 = vmul.f32 %v796, %v1244
        %v1309 = vmul.f32 %v797, %v1245
        %v1310 = vmul.f32 %v798, %v1246
        %v1311 = vmul.f32 %v799, %v1247
        %v1312 = vmul.f32 %v800, %v1248
        %v1313 = vmul.f32 %v801, %v1249
        %v1314 = vmul.f32 %v802, %v1250
        %v1315 = vmul.f32 %v803, %v1251
        %v1316 = vmul.f32 %v804, %v1252
        %v1317 = vmul.f32 %v805, %v1253
        %v1318 = vmul.f32 %v806, %v1254
        %v1319 = vmul.f32 %v807, %v1255
        %v1320 = vmul.f32 %v808, %v1256
        %v1321 = vmul.f32 %v809, %v1257
        %v1322 = vmul.f32 %v810, %v1258
        %v1323 = vmul.f32 %v811, %v1259
        %v1324 = vmul.f32 %v812, %v1260
        %v1325 = vmul.f32 %v813, %v1261
        %v1326 = vmul.f32 %v814, %v1262
        %v1327 = vmul.f32 %v815, %v1263
        %v1328 = vmul.f32 %v816, %v1264
        %v1329 = vmul.f32 %v817, %v1265
        %v1330 = vmul.f32 %v818, %v1266
        %v1331 = vmul.f32 %v819, %v1267
        %v1332 = vmul.f32 %v820, %v1268
        %v1333 = vmul.f32 %v821, %v1269
        %v1334 = vmul.f32 %v822, %v1270
        %v1335 = vmul.f32 %v823, %v1271
        %v1336 = vmul.f32 %v824, %v1272
        %v1337 = vmul.f32 %v825, %v1273
        %v1338 = vmul.f32 %v826, %v1274
        %v1339 = vmul.f32 %v827, %v1275
        %v1340 = vmul.f32 %v828, %v1276
        %v1341 = vmul.f32 %v829, %v1277
        %v1342 = vmul.f32 %v830, %v1278
        %v1343 = vmul.f32 %v831, %v1279
        %v1344 = vmul.f32 %v832, %v1280
        %v1345 = vmul.f32 %v833, %v1281
        %v1346 = vmul.f32 %v834, %v1282
        %v1347 = vmul.f32 %v835, %v1283
        %v1348 = vmul.f32 %v836, %v1284
        %v1349 = vmul.f32 %v837, %v1285
        %v1350 = vmul.f32 %v838, %v1286
        %v1351 = vmul.f32 %v839, %v1287
        %v1352 = vmul.f32 %v840, %v1288
        %v1353 = vmul.f32 %v841, %v1289
        %v1354 = vmul.f32 %v842, %v1290
        %v1355 = vmul.f32 %v843, %v1291
        %v1356 = vmul.f32 %v844, %v1292
        %v1357 = vmul.f32 %v845, %v1293
        %v1358 = vmul.f32 %v846, %v1294
        %v1359 = vmul.f32 %v847, %v1295
        %v1360 = vmul.f32 %v848, %v1296
        %v1361 = vpack.c.bf16 %v1301, %v1297
        %v1362 = vpack.c.bf16 %v1302, %v1298
        %v1363 = vpack.c.bf16 %v1303, %v1299
        %v1364 = vpack.c.bf16 %v1304, %v1300
        %v1365 = vpack.c.bf16 %v1309, %v1305
        %v1366 = vpack.c.bf16 %v1310, %v1306
        %v1367 = vpack.c.bf16 %v1311, %v1307
        %v1368 = vpack.c.bf16 %v1312, %v1308
        %v1369 = vpack.c.bf16 %v1317, %v1313
        %v1370 = vpack.c.bf16 %v1318, %v1314
        %v1371 = vpack.c.bf16 %v1319, %v1315
        %v1372 = vpack.c.bf16 %v1320, %v1316
        %v1373 = vpack.c.bf16 %v1325, %v1321
        %v1374 = vpack.c.bf16 %v1326, %v1322
        %v1375 = vpack.c.bf16 %v1327, %v1323
        %v1376 = vpack.c.bf16 %v1328, %v1324
        %v1377 = vpack.c.bf16 %v1333, %v1329
        %v1378 = vpack.c.bf16 %v1334, %v1330
        %v1379 = vpack.c.bf16 %v1335, %v1331
        %v1380 = vpack.c.bf16 %v1336, %v1332
        %v1381 = vpack.c.bf16 %v1341, %v1337
        %v1382 = vpack.c.bf16 %v1342, %v1338
        %v1383 = vpack.c.bf16 %v1343, %v1339
        %v1384 = vpack.c.bf16 %v1344, %v1340
        %v1385 = vpack.c.bf16 %v1349, %v1345
        %v1386 = vpack.c.bf16 %v1350, %v1346
        %v1387 = vpack.c.bf16 %v1351, %v1347
        %v1388 = vpack.c.bf16 %v1352, %v1348
        %v1389 = vpack.c.bf16 %v1357, %v1353
        %v1390 = vpack.c.bf16 %v1358, %v1354
        %v1391 = vpack.c.bf16 %v1359, %v1355
        %v1392 = vpack.c.bf16 %v1360, %v1356
        %v1393 = vld [vmem:[%s3] sm:$0xf]
        %v1394 = vld [vmem:[%s3 + $0x4] sm:$0xf]
        %v1395 = vld [vmem:[%s3 + $0x8] sm:$0xf]
        %v1396 = vld [vmem:[%s3 + $0xc] sm:$0xf]
        %v1397 = vld [vmem:[%s3 + $0x10] sm:$0xf]
        %v1398 = vld [vmem:[%s3 + $0x14] sm:$0xf]
        %v1399 = vld [vmem:[%s3 + $0x18] sm:$0xf]
        %v1400 = vld [vmem:[%s3 + $0x1c] sm:$0xf]
        %v1401 = vld [vmem:[%s3 + $0x20] sm:$0xf]
        %v1402 = vld [vmem:[%s3 + $0x24] sm:$0xf]
        %v1403 = vld [vmem:[%s3 + $0x28] sm:$0xf]
        %v1404 = vld [vmem:[%s3 + $0x2c] sm:$0xf]
        %v1405 = vld [vmem:[%s3 + $0x30] sm:$0xf]
        %v1406 = vld [vmem:[%s3 + $0x34] sm:$0xf]
        %v1407 = vld [vmem:[%s3 + $0x38] sm:$0xf]
        %v1408 = vld [vmem:[%s3 + $0x3c] sm:$0xf]
        %v1409 = vld [vmem:[%s3 + $0x40] sm:$0xf]
        %v1410 = vld [vmem:[%s3 + $0x44] sm:$0xf]
        %v1411 = vld [vmem:[%s3 + $0x48] sm:$0xf]
        %v1412 = vld [vmem:[%s3 + $0x4c] sm:$0xf]
        %v1413 = vld [vmem:[%s3 + $0x50] sm:$0xf]
        %v1414 = vld [vmem:[%s3 + $0x54] sm:$0xf]
        %v1415 = vld [vmem:[%s3 + $0x58] sm:$0xf]
        %v1416 = vld [vmem:[%s3 + $0x5c] sm:$0xf]
        %v1417 = vld [vmem:[%s3 + $0x60] sm:$0xf]
        %v1418 = vld [vmem:[%s3 + $0x64] sm:$0xf]
        %v1419 = vld [vmem:[%s3 + $0x68] sm:$0xf]
        %v1420 = vld [vmem:[%s3 + $0x6c] sm:$0xf]
        %v1421 = vld [vmem:[%s3 + $0x70] sm:$0xf]
        %v1422 = vld [vmem:[%s3 + $0x74] sm:$0xf]
        %v1423 = vld [vmem:[%s3 + $0x78] sm:$0xf]
        %v1424 = vld [vmem:[%s3 + $0x7c] sm:$0xf]
        %v1425 = vld [vmem:[%s3 + $0x80] sm:$0xf]
        %v1426 = vld [vmem:[%s3 + $0x84] sm:$0xf]
        %v1427 = vld [vmem:[%s3 + $0x88] sm:$0xf]
        %v1428 = vld [vmem:[%s3 + $0x8c] sm:$0xf]
        %v1429 = vld [vmem:[%s3 + $0x90] sm:$0xf]
        %v1430 = vld [vmem:[%s3 + $0x94] sm:$0xf]
        %v1431 = vld [vmem:[%s3 + $0x98] sm:$0xf]
        %v1432 = vld [vmem:[%s3 + $0x9c] sm:$0xf]
        %v1433 = vld [vmem:[%s3 + $0xa0] sm:$0xf]
        %v1434 = vld [vmem:[%s3 + $0xa4] sm:$0xf]
        %v1435 = vld [vmem:[%s3 + $0xa8] sm:$0xf]
        %v1436 = vld [vmem:[%s3 + $0xac] sm:$0xf]
        %v1437 = vld [vmem:[%s3 + $0xb0] sm:$0xf]
        %v1438 = vld [vmem:[%s3 + $0xb4] sm:$0xf]
        %v1439 = vld [vmem:[%s3 + $0xb8] sm:$0xf]
        %v1440 = vld [vmem:[%s3 + $0xbc] sm:$0xf]
        %v1441 = vld [vmem:[%s3 + $0xc0] sm:$0xf]
        %v1442 = vld [vmem:[%s3 + $0xc4] sm:$0xf]
        %v1443 = vld [vmem:[%s3 + $0xc8] sm:$0xf]
        %v1444 = vld [vmem:[%s3 + $0xcc] sm:$0xf]
        %v1445 = vld [vmem:[%s3 + $0xd0] sm:$0xf]
        %v1446 = vld [vmem:[%s3 + $0xd4] sm:$0xf]
        %v1447 = vld [vmem:[%s3 + $0xd8] sm:$0xf]
        %v1448 = vld [vmem:[%s3 + $0xdc] sm:$0xf]
        %v1449 = vld [vmem:[%s3 + $0xe0] sm:$0xf]
        %v1450 = vld [vmem:[%s3 + $0xe4] sm:$0xf]
        %v1451 = vld [vmem:[%s3 + $0xe8] sm:$0xf]
        %v1452 = vld [vmem:[%s3 + $0xec] sm:$0xf]
        %v1453 = vld [vmem:[%s3 + $0xf0] sm:$0xf]
        %v1454 = vld [vmem:[%s3 + $0xf4] sm:$0xf]
        %v1455 = vld [vmem:[%s3 + $0xf8] sm:$0xf]
        %v1456 = vld [vmem:[%s3 + $0xfc] sm:$0xf]
        %v1457 = vld [vmem:[%s4] sm:$0x1]
        %v1459 = vlaneseq
        %v1460 = vshrl.u32 %v1459, 7
        %v1461 = vsub.s32 0, %v1460
        %v1462 = vrot.slane %v1457, %v1461
        %v1528 = vunpack.c.l.b16 %v1393
        %v1529 = vunpack.c.l.b16 %v1394
        %v1530 = vunpack.c.l.b16 %v1395
        %v1531 = vunpack.c.l.b16 %v1396
        %v1532 = vunpack.c.l.b16 %v1397
        %v1533 = vunpack.c.l.b16 %v1398
        %v1534 = vunpack.c.l.b16 %v1399
        %v1535 = vunpack.c.l.b16 %v1400
        %v1536 = vunpack.c.l.b16 %v1401
        %v1537 = vunpack.c.l.b16 %v1402
        %v1538 = vunpack.c.l.b16 %v1403
        %v1539 = vunpack.c.l.b16 %v1404
        %v1540 = vunpack.c.l.b16 %v1405
        %v1541 = vunpack.c.l.b16 %v1406
        %v1542 = vunpack.c.l.b16 %v1407
        %v1543 = vunpack.c.l.b16 %v1408
        %v1544 = vunpack.c.l.b16 %v1409
        %v1545 = vunpack.c.l.b16 %v1410
        %v1546 = vunpack.c.l.b16 %v1411
        %v1547 = vunpack.c.l.b16 %v1412
        %v1548 = vunpack.c.l.b16 %v1413
        %v1549 = vunpack.c.l.b16 %v1414
        %v1550 = vunpack.c.l.b16 %v1415
        %v1551 = vunpack.c.l.b16 %v1416
        %v1552 = vunpack.c.l.b16 %v1417
        %v1553 = vunpack.c.l.b16 %v1418
        %v1554 = vunpack.c.l.b16 %v1419
        %v1555 = vunpack.c.l.b16 %v1420
        %v1556 = vunpack.c.l.b16 %v1421
        %v1557 = vunpack.c.l.b16 %v1422
        %v1558 = vunpack.c.l.b16 %v1423
        %v1559 = vunpack.c.l.b16 %v1424
        %v1560 = vunpack.c.l.b16 %v1425
        %v1561 = vunpack.c.l.b16 %v1426
        %v1562 = vunpack.c.l.b16 %v1427
        %v1563 = vunpack.c.l.b16 %v1428
        %v1564 = vunpack.c.l.b16 %v1429
        %v1565 = vunpack.c.l.b16 %v1430
        %v1566 = vunpack.c.l.b16 %v1431
        %v1567 = vunpack.c.l.b16 %v1432
        %v1568 = vunpack.c.l.b16 %v1433
        %v1569 = vunpack.c.l.b16 %v1434
        %v1570 = vunpack.c.l.b16 %v1435
        %v1571 = vunpack.c.l.b16 %v1436
        %v1572 = vunpack.c.l.b16 %v1437
        %v1573 = vunpack.c.l.b16 %v1438
        %v1574 = vunpack.c.l.b16 %v1439
        %v1575 = vunpack.c.l.b16 %v1440
        %v1576 = vunpack.c.l.b16 %v1441
        %v1577 = vunpack.c.l.b16 %v1442
        %v1578 = vunpack.c.l.b16 %v1443
        %v1579 = vunpack.c.l.b16 %v1444
        %v1580 = vunpack.c.l.b16 %v1445
        %v1581 = vunpack.c.l.b16 %v1446
        %v1582 = vunpack.c.l.b16 %v1447
        %v1583 = vunpack.c.l.b16 %v1448
        %v1584 = vunpack.c.l.b16 %v1449
        %v1585 = vunpack.c.l.b16 %v1450
        %v1586 = vunpack.c.l.b16 %v1451
        %v1587 = vunpack.c.l.b16 %v1452
        %v1588 = vunpack.c.l.b16 %v1453
        %v1589 = vunpack.c.l.b16 %v1454
        %v1590 = vunpack.c.l.b16 %v1455
        %v1591 = vunpack.c.l.b16 %v1456
        %v1592 = vpack.c.b16 %v1529, %v1528
        %v1593 = vpack.c.b16 %v1531, %v1530
        %v1594 = vpack.c.b16 %v1533, %v1532
        %v1595 = vpack.c.b16 %v1535, %v1534
        %v1596 = vpack.c.b16 %v1537, %v1536
        %v1597 = vpack.c.b16 %v1539, %v1538
        %v1598 = vpack.c.b16 %v1541, %v1540
        %v1599 = vpack.c.b16 %v1543, %v1542
        %v1600 = vpack.c.b16 %v1545, %v1544
        %v1601 = vpack.c.b16 %v1547, %v1546
        %v1602 = vpack.c.b16 %v1549, %v1548
        %v1603 = vpack.c.b16 %v1551, %v1550
        %v1604 = vpack.c.b16 %v1553, %v1552
        %v1605 = vpack.c.b16 %v1555, %v1554
        %v1606 = vpack.c.b16 %v1557, %v1556
        %v1607 = vpack.c.b16 %v1559, %v1558
        %v1608 = vpack.c.b16 %v1561, %v1560
        %v1609 = vpack.c.b16 %v1563, %v1562
        %v1610 = vpack.c.b16 %v1565, %v1564
        %v1611 = vpack.c.b16 %v1567, %v1566
        %v1612 = vpack.c.b16 %v1569, %v1568
        %v1613 = vpack.c.b16 %v1571, %v1570
        %v1614 = vpack.c.b16 %v1573, %v1572
        %v1615 = vpack.c.b16 %v1575, %v1574
        %v1616 = vpack.c.b16 %v1577, %v1576
        %v1617 = vpack.c.b16 %v1579, %v1578
        %v1618 = vpack.c.b16 %v1581, %v1580
        %v1619 = vpack.c.b16 %v1583, %v1582
        %v1620 = vpack.c.b16 %v1585, %v1584
        %v1621 = vpack.c.b16 %v1587, %v1586
        %v1622 = vpack.c.b16 %v1589, %v1588
        %v1623 = vpack.c.b16 %v1591, %v1590
        %1656 = vmatprep.subr.bf16.mxu0 0
        %1657 = vmatpush1.bf16.msra.mxu0 %v1592
        %1658 = vmatprep.subr.bf16.mxu0 0
        %1659 = vmatpush1.bf16.msra.mxu0 %v1593
        %1660 = vmatprep.subr.bf16.mxu0 0
        %1661 = vmatpush1.bf16.msra.mxu0 %v1594
        %1662 = vmatprep.subr.bf16.mxu0 0
        %1663 = vmatpush1.bf16.msra.mxu0 %v1595
        %1664 = vmatprep.subr.bf16.mxu0 0
        %1665 = vmatpush1.bf16.msra.mxu0 %v1596
        %1666 = vmatprep.subr.bf16.mxu0 0
        %1667 = vmatpush1.bf16.msra.mxu0 %v1597
        %1668 = vmatprep.subr.bf16.mxu0 0
        %1669 = vmatpush1.bf16.msra.mxu0 %v1598
        %1670 = vmatprep.subr.bf16.mxu0 0
        %1671 = vmatpush1.bf16.msra.mxu0 %v1599
        %1672 = vmatprep.subr.bf16.mxu0 0
        %1673 = vmatpush1.bf16.msra.mxu0 %v1600
        %1674 = vmatprep.subr.bf16.mxu0 0
        %1675 = vmatpush1.bf16.msra.mxu0 %v1601
        %1676 = vmatprep.subr.bf16.mxu0 0
        %1677 = vmatpush1.bf16.msra.mxu0 %v1602
        %1678 = vmatprep.subr.bf16.mxu0 0
        %1679 = vmatpush1.bf16.msra.mxu0 %v1603
        %1680 = vmatprep.subr.bf16.mxu0 0
        %1681 = vmatpush1.bf16.msra.mxu0 %v1604
        %1682 = vmatprep.subr.bf16.mxu0 0
        %1683 = vmatpush1.bf16.msra.mxu0 %v1605
        %1684 = vmatprep.subr.bf16.mxu0 0
        %1685 = vmatpush1.bf16.msra.mxu0 %v1606
        %1686 = vmatprep.subr.bf16.mxu0 0
        %1687 = vmatpush1.bf16.msra.mxu0 %v1607
        %1688 = vmatprep.mubr.bf16.mxu0 %v1362
        %1689 = vmatmul.mubr.bf16.gmra.mrb[0].mxu0 %v1361
        %v1690 = vpop.f32.mrb[0].mxu0
        %v1691 = vadd.f32 %v1462, %v1690
        %v1692 = vpop.f32.mrb[0].mxu0
        %v1693 = vpop.f32.mrb[0].mxu0
        %v1694 = vadd.f32 %v1462, %v1693
        %v1695 = vpop.f32.mrb[0].mxu0
        %1696 = vmatprep.mubr.bf16.mxu0 %v1366
        %1697 = vmatmul.mubr.bf16.gmra.mrb[0].mxu0 %v1365
        %v1698 = vpop.f32.mrb[0].mxu0
        %v1699 = vadd.f32 %v1462, %v1698
        %v1700 = vpop.f32.mrb[0].mxu0
        %v1701 = vpop.f32.mrb[0].mxu0
        %v1702 = vadd.f32 %v1462, %v1701
        %v1703 = vpop.f32.mrb[0].mxu0
        %1704 = vmatprep.mubr.bf16.mxu0 %v1370
        %1705 = vmatmul.mubr.bf16.gmra.mrb[0].mxu0 %v1369
        %v1706 = vpop.f32.mrb[0].mxu0
        %v1707 = vadd.f32 %v1462, %v1706
        %v1708 = vpop.f32.mrb[0].mxu0
        %v1709 = vpop.f32.mrb[0].mxu0
        %v1710 = vadd.f32 %v1462, %v1709
        %v1711 = vpop.f32.mrb[0].mxu0
        %1712 = vmatprep.mubr.bf16.mxu0 %v1374
        %1713 = vmatmul.mubr.bf16.gmra.mrb[0].mxu0 %v1373
        %v1714 = vpop.f32.mrb[0].mxu0
        %v1715 = vadd.f32 %v1462, %v1714
        %v1716 = vpop.f32.mrb[0].mxu0
        %v1717 = vpop.f32.mrb[0].mxu0
        %v1718 = vadd.f32 %v1462, %v1717
        %v1719 = vpop.f32.mrb[0].mxu0
        %1720 = vmatprep.mubr.bf16.mxu0 %v1378
        %1721 = vmatmul.mubr.bf16.gmra.mrb[0].mxu0 %v1377
        %v1722 = vpop.f32.mrb[0].mxu0
        %v1723 = vadd.f32 %v1462, %v1722
        %v1724 = vpop.f32.mrb[0].mxu0
        %v1725 = vpop.f32.mrb[0].mxu0
        %v1726 = vadd.f32 %v1462, %v1725
        %v1727 = vpop.f32.mrb[0].mxu0
        %1728 = vmatprep.mubr.bf16.mxu0 %v1382
        %1729 = vmatmul.mubr.bf16.gmra.mrb[0].mxu0 %v1381
        %v1730 = vpop.f32.mrb[0].mxu0
        %v1731 = vadd.f32 %v1462, %v1730
        %v1732 = vpop.f32.mrb[0].mxu0
        %v1733 = vpop.f32.mrb[0].mxu0
        %v1734 = vadd.f32 %v1462, %v1733
        %v1735 = vpop.f32.mrb[0].mxu0
        %1736 = vmatprep.mubr.bf16.mxu0 %v1386
        %1737 = vmatmul.mubr.bf16.gmra.mrb[0].mxu0 %v1385
        %v1738 = vpop.f32.mrb[0].mxu0
        %v1739 = vadd.f32 %v1462, %v1738
        %v1740 = vpop.f32.mrb[0].mxu0
        %v1741 = vpop.f32.mrb[0].mxu0
        %v1742 = vadd.f32 %v1462, %v1741
        %v1743 = vpop.f32.mrb[0].mxu0
        %1744 = vmatprep.mubr.bf16.mxu0 %v1390
        %1745 = vmatmul.mubr.bf16.gmra.mrb[0].mxu0 %v1389
        %v1746 = vpop.f32.mrb[0].mxu0
        %v1747 = vadd.f32 %v1462, %v1746
        %v1748 = vpop.f32.mrb[0].mxu0
        %v1749 = vpop.f32.mrb[0].mxu0
        %v1750 = vadd.f32 %v1462, %v1749
        %v1751 = vpop.f32.mrb[0].mxu0
        %1752 = vdwg.mxu0
        %1753 = vmatprep.subr.bf16.mxu0 0
        %1754 = vmatpush1.bf16.msra.mxu0 %v1608
        %1755 = vmatprep.subr.bf16.mxu0 0
        %1756 = vmatpush1.bf16.msra.mxu0 %v1609
        %1757 = vmatprep.subr.bf16.mxu0 0
        %1758 = vmatpush1.bf16.msra.mxu0 %v1610
        %1759 = vmatprep.subr.bf16.mxu0 0
        %1760 = vmatpush1.bf16.msra.mxu0 %v1611
        %1761 = vmatprep.subr.bf16.mxu0 0
        %1762 = vmatpush1.bf16.msra.mxu0 %v1612
        %1763 = vmatprep.subr.bf16.mxu0 0
        %1764 = vmatpush1.bf16.msra.mxu0 %v1613
        %1765 = vmatprep.subr.bf16.mxu0 0
        %1766 = vmatpush1.bf16.msra.mxu0 %v1614
        %1767 = vmatprep.subr.bf16.mxu0 0
        %1768 = vmatpush1.bf16.msra.mxu0 %v1615
        %1769 = vmatprep.subr.bf16.mxu0 0
        %1770 = vmatpush1.bf16.msra.mxu0 %v1616
        %1771 = vmatprep.subr.bf16.mxu0 0
        %1772 = vmatpush1.bf16.msra.mxu0 %v1617
        %1773 = vmatprep.subr.bf16.mxu0 0
        %1774 = vmatpush1.bf16.msra.mxu0 %v1618
        %1775 = vmatprep.subr.bf16.mxu0 0
        %1776 = vmatpush1.bf16.msra.mxu0 %v1619
        %1777 = vmatprep.subr.bf16.mxu0 0
        %1778 = vmatpush1.bf16.msra.mxu0 %v1620
        %1779 = vmatprep.subr.bf16.mxu0 0
        %1780 = vmatpush1.bf16.msra.mxu0 %v1621
        %1781 = vmatprep.subr.bf16.mxu0 0
        %1782 = vmatpush1.bf16.msra.mxu0 %v1622
        %1783 = vmatprep.subr.bf16.mxu0 0
        %1784 = vmatpush1.bf16.msra.mxu0 %v1623
        %1785 = vmatprep.mubr.bf16.mxu0 %v1364
        %1786 = vmatmul.mubr.bf16.gmra.mrb[0].mxu0 %v1363
        %v1787 = vpop.f32.mrb[0].mxu0
        %v1788 = vadd.f32 %v1691, %v1787
        %v1789 = vpop.f32.mrb[0].mxu0
        %v1790 = vpop.f32.mrb[0].mxu0
        %v1791 = vadd.f32 %v1694, %v1790
        %v1792 = vpop.f32.mrb[0].mxu0
        %1793 = vmatprep.mubr.bf16.mxu0 %v1368
        %1794 = vmatmul.mubr.bf16.gmra.mrb[0].mxu0 %v1367
        %v1795 = vpop.f32.mrb[0].mxu0
        %v1796 = vadd.f32 %v1699, %v1795
        %v1797 = vpop.f32.mrb[0].mxu0
        %v1798 = vpop.f32.mrb[0].mxu0
        %v1799 = vadd.f32 %v1702, %v1798
        %v1800 = vpop.f32.mrb[0].mxu0
        %1801 = vmatprep.mubr.bf16.mxu0 %v1372
        %1802 = vmatmul.mubr.bf16.gmra.mrb[0].mxu0 %v1371
        %v1803 = vpop.f32.mrb[0].mxu0
        %v1804 = vadd.f32 %v1707, %v1803
        %v1805 = vpop.f32.mrb[0].mxu0
        %v1806 = vpop.f32.mrb[0].mxu0
        %v1807 = vadd.f32 %v1710, %v1806
        %v1808 = vpop.f32.mrb[0].mxu0
        %1809 = vmatprep.mubr.bf16.mxu0 %v1376
        %1810 = vmatmul.mubr.bf16.gmra.mrb[0].mxu0 %v1375
        %v1811 = vpop.f32.mrb[0].mxu0
        %v1812 = vadd.f32 %v1715, %v1811
        %v1813 = vpop.f32.mrb[0].mxu0
        %v1814 = vpop.f32.mrb[0].mxu0
        %v1815 = vadd.f32 %v1718, %v1814
        %v1816 = vpop.f32.mrb[0].mxu0
        %1817 = vmatprep.mubr.bf16.mxu0 %v1380
        %1818 = vmatmul.mubr.bf16.gmra.mrb[0].mxu0 %v1379
        %v1819 = vpop.f32.mrb[0].mxu0
        %v1820 = vadd.f32 %v1723, %v1819
        %v1821 = vpop.f32.mrb[0].mxu0
        %v1822 = vpop.f32.mrb[0].mxu0
        %v1823 = vadd.f32 %v1726, %v1822
        %v1824 = vpop.f32.mrb[0].mxu0
        %1825 = vmatprep.mubr.bf16.mxu0 %v1384
        %1826 = vmatmul.mubr.bf16.gmra.mrb[0].mxu0 %v1383
        %v1827 = vpop.f32.mrb[0].mxu0
        %v1828 = vadd.f32 %v1731, %v1827
        %v1829 = vpop.f32.mrb[0].mxu0
        %v1830 = vpop.f32.mrb[0].mxu0
        %v1831 = vadd.f32 %v1734, %v1830
        %v1832 = vpop.f32.mrb[0].mxu0
        %1833 = vmatprep.mubr.bf16.mxu0 %v1388
        %1834 = vmatmul.mubr.bf16.gmra.mrb[0].mxu0 %v1387
        %v1835 = vpop.f32.mrb[0].mxu0
        %v1836 = vadd.f32 %v1739, %v1835
        %v1837 = vpop.f32.mrb[0].mxu0
        %v1838 = vpop.f32.mrb[0].mxu0
        %v1839 = vadd.f32 %v1742, %v1838
        %v1840 = vpop.f32.mrb[0].mxu0
        %1841 = vmatprep.mubr.bf16.mxu0 %v1392
        %1842 = vmatmul.mubr.bf16.gmra.mrb[0].mxu0 %v1391
        %v1843 = vpop.f32.mrb[0].mxu0
        %v1844 = vadd.f32 %v1747, %v1843
        %v1845 = vpop.f32.mrb[0].mxu0
        %v1846 = vpop.f32.mrb[0].mxu0
        %v1847 = vadd.f32 %v1750, %v1846
        %v1848 = vpop.f32.mrb[0].mxu0
        %1849 = vdwg.mxu0
        %v1850 = vunpack.c.l.bf16 %v281
        %v1851 = vunpack.c.l.bf16 %v282
        %v1852 = vunpack.c.l.bf16 %v283
        %v1853 = vunpack.c.l.bf16 %v284
        %v1854 = vunpack.c.l.bf16 %v285
        %v1855 = vunpack.c.l.bf16 %v286
        %v1856 = vunpack.c.l.bf16 %v287
        %v1857 = vunpack.c.l.bf16 %v288
        %v1858 = vunpack.c.l.bf16 %v289
        %v1859 = vunpack.c.l.bf16 %v290
        %v1860 = vunpack.c.l.bf16 %v291
        %v1861 = vunpack.c.l.bf16 %v292
        %v1862 = vunpack.c.l.bf16 %v293
        %v1863 = vunpack.c.l.bf16 %v294
        %v1864 = vunpack.c.l.bf16 %v295
        %v1865 = vunpack.c.l.bf16 %v296
        %v1866 = vadd.f32 %v1788, %v1850
        %v1867 = vadd.f32 %v1791, %v1851
        %v1868 = vadd.f32 %v1796, %v1852
        %v1869 = vadd.f32 %v1799, %v1853
        %v1870 = vadd.f32 %v1804, %v1854
        %v1871 = vadd.f32 %v1807, %v1855
        %v1872 = vadd.f32 %v1812, %v1856
        %v1873 = vadd.f32 %v1815, %v1857
        %v1874 = vadd.f32 %v1820, %v1858
        %v1875 = vadd.f32 %v1823, %v1859
        %v1876 = vadd.f32 %v1828, %v1860
        %v1877 = vadd.f32 %v1831, %v1861
        %v1878 = vadd.f32 %v1836, %v1862
        %v1879 = vadd.f32 %v1839, %v1863
        %v1880 = vadd.f32 %v1844, %v1864
        %v1881 = vadd.f32 %v1847, %v1865
        %1882 = vadd.xlane.f32.xlu0 %v1866
        %v1883 = vpop.xlane.xlu0 %1882
        %1884 = vadd.xlane.f32.xlu0 %v1867
        %v1885 = vpop.xlane.xlu0 %1884
        %1886 = vadd.xlane.f32.xlu0 %v1868
        %v1887 = vpop.xlane.xlu0 %1886
        %1888 = vadd.xlane.f32.xlu0 %v1869
        %v1889 = vpop.xlane.xlu0 %1888
        %1890 = vadd.xlane.f32.xlu0 %v1870
        %v1891 = vpop.xlane.xlu0 %1890
        %1892 = vadd.xlane.f32.xlu0 %v1871
        %v1893 = vpop.xlane.xlu0 %1892
        %1894 = vadd.xlane.f32.xlu0 %v1872
        %v1895 = vpop.xlane.xlu0 %1894
        %1896 = vadd.xlane.f32.xlu0 %v1873
        %v1897 = vpop.xlane.xlu0 %1896
        %1898 = vadd.xlane.f32.xlu0 %v1874
        %v1899 = vpop.xlane.xlu0 %1898
        %1900 = vadd.xlane.f32.xlu0 %v1875
        %v1901 = vpop.xlane.xlu0 %1900
        %1902 = vadd.xlane.f32.xlu0 %v1876
        %v1903 = vpop.xlane.xlu0 %1902
        %1904 = vadd.xlane.f32.xlu0 %v1877
        %v1905 = vpop.xlane.xlu0 %1904
        %1906 = vadd.xlane.f32.xlu0 %v1878
        %v1907 = vpop.xlane.xlu0 %1906
        %1908 = vadd.xlane.f32.xlu0 %v1879
        %v1909 = vpop.xlane.xlu0 %1908
        %1910 = vadd.xlane.f32.xlu0 %v1880
        %v1911 = vpop.xlane.xlu0 %1910
        %1912 = vadd.xlane.f32.xlu0 %v1881
        %v1913 = vpop.xlane.xlu0 %1912
        %v1914 = vrcp.pop 128.0
        %v1915 = vmul.f32 %v1883, %v1914
        %v1916 = vmul.f32 %v1885, %v1914
        %v1917 = vmul.f32 %v1887, %v1914
        %v1918 = vmul.f32 %v1889, %v1914
        %v1919 = vmul.f32 %v1891, %v1914
        %v1920 = vmul.f32 %v1893, %v1914
        %v1921 = vmul.f32 %v1895, %v1914
        %v1922 = vmul.f32 %v1897, %v1914
        %v1923 = vmul.f32 %v1899, %v1914
        %v1924 = vmul.f32 %v1901, %v1914
        %v1925 = vmul.f32 %v1903, %v1914
        %v1926 = vmul.f32 %v1905, %v1914
        %v1927 = vmul.f32 %v1907, %v1914
        %v1928 = vmul.f32 %v1909, %v1914
        %v1929 = vmul.f32 %v1911, %v1914
        %v1930 = vmul.f32 %v1913, %v1914
        %v1931 = vsub.f32 %v1866, %v1915
        %v1932 = vsub.f32 %v1867, %v1916
        %v1933 = vsub.f32 %v1868, %v1917
        %v1934 = vsub.f32 %v1869, %v1918
        %v1935 = vsub.f32 %v1870, %v1919
        %v1936 = vsub.f32 %v1871, %v1920
        %v1937 = vsub.f32 %v1872, %v1921
        %v1938 = vsub.f32 %v1873, %v1922
        %v1939 = vsub.f32 %v1874, %v1923
        %v1940 = vsub.f32 %v1875, %v1924
        %v1941 = vsub.f32 %v1876, %v1925
        %v1942 = vsub.f32 %v1877, %v1926
        %v1943 = vsub.f32 %v1878, %v1927
        %v1944 = vsub.f32 %v1879, %v1928
        %v1945 = vsub.f32 %v1880, %v1929
        %v1946 = vsub.f32 %v1881, %v1930
        %v1947 = vmul.f32 %v1931, %v1931
        %v1948 = vmul.f32 %v1932, %v1932
        %v1949 = vmul.f32 %v1933, %v1933
        %v1950 = vmul.f32 %v1934, %v1934
        %v1951 = vmul.f32 %v1935, %v1935
        %v1952 = vmul.f32 %v1936, %v1936
        %v1953 = vmul.f32 %v1937, %v1937
        %v1954 = vmul.f32 %v1938, %v1938
        %v1955 = vmul.f32 %v1939, %v1939
        %v1956 = vmul.f32 %v1940, %v1940
        %v1957 = vmul.f32 %v1941, %v1941
        %v1958 = vmul.f32 %v1942, %v1942
        %v1959 = vmul.f32 %v1943, %v1943
        %v1960 = vmul.f32 %v1944, %v1944
        %v1961 = vmul.f32 %v1945, %v1945
        %v1962 = vmul.f32 %v1946, %v1946
        %1963 = vadd.xlane.f32.xlu0 %v1947
        %v1964 = vpop.xlane.xlu0 %1963
        %1965 = vadd.xlane.f32.xlu0 %v1948
        %v1966 = vpop.xlane.xlu0 %1965
        %1967 = vadd.xlane.f32.xlu0 %v1949
        %v1968 = vpop.xlane.xlu0 %1967
        %1969 = vadd.xlane.f32.xlu0 %v1950
        %v1970 = vpop.xlane.xlu0 %1969
        %1971 = vadd.xlane.f32.xlu0 %v1951
        %v1972 = vpop.xlane.xlu0 %1971
        %1973 = vadd.xlane.f32.xlu0 %v1952
        %v1974 = vpop.xlane.xlu0 %1973
        %1975 = vadd.xlane.f32.xlu0 %v1953
        %v1976 = vpop.xlane.xlu0 %1975
        %1977 = vadd.xlane.f32.xlu0 %v1954
        %v1978 = vpop.xlane.xlu0 %1977
        %1979 = vadd.xlane.f32.xlu0 %v1955
        %v1980 = vpop.xlane.xlu0 %1979
        %1981 = vadd.xlane.f32.xlu0 %v1956
        %v1982 = vpop.xlane.xlu0 %1981
        %1983 = vadd.xlane.f32.xlu0 %v1957
        %v1984 = vpop.xlane.xlu0 %1983
        %1985 = vadd.xlane.f32.xlu0 %v1958
        %v1986 = vpop.xlane.xlu0 %1985
        %1987 = vadd.xlane.f32.xlu0 %v1959
        %v1988 = vpop.xlane.xlu0 %1987
        %1989 = vadd.xlane.f32.xlu0 %v1960
        %v1990 = vpop.xlane.xlu0 %1989
        %1991 = vadd.xlane.f32.xlu0 %v1961
        %v1992 = vpop.xlane.xlu0 %1991
        %1993 = vadd.xlane.f32.xlu0 %v1962
        %v1994 = vpop.xlane.xlu0 %1993
        %v1995 = vmul.f32 %v1964, %v1914
        %v1996 = vmul.f32 %v1966, %v1914
        %v1997 = vmul.f32 %v1968, %v1914
        %v1998 = vmul.f32 %v1970, %v1914
        %v1999 = vmul.f32 %v1972, %v1914
        %v2000 = vmul.f32 %v1974, %v1914
        %v2001 = vmul.f32 %v1976, %v1914
        %v2002 = vmul.f32 %v1978, %v1914
        %v2003 = vmul.f32 %v1980, %v1914
        %v2004 = vmul.f32 %v1982, %v1914
        %v2005 = vmul.f32 %v1984, %v1914
        %v2006 = vmul.f32 %v1986, %v1914
        %v2007 = vmul.f32 %v1988, %v1914
        %v2008 = vmul.f32 %v1990, %v1914
        %v2009 = vmul.f32 %v1992, %v1914
        %v2010 = vmul.f32 %v1994, %v1914
        %v2011 = vadd.f32 %v1995, 1e-05
        %v2012 = vadd.f32 %v1996, 1e-05
        %v2013 = vadd.f32 %v1997, 1e-05
        %v2014 = vadd.f32 %v1998, 1e-05
        %v2015 = vadd.f32 %v1999, 1e-05
        %v2016 = vadd.f32 %v2000, 1e-05
        %v2017 = vadd.f32 %v2001, 1e-05
        %v2018 = vadd.f32 %v2002, 1e-05
        %v2019 = vadd.f32 %v2003, 1e-05
        %v2020 = vadd.f32 %v2004, 1e-05
        %v2021 = vadd.f32 %v2005, 1e-05
        %v2022 = vadd.f32 %v2006, 1e-05
        %v2023 = vadd.f32 %v2007, 1e-05
        %v2024 = vadd.f32 %v2008, 1e-05
        %v2025 = vadd.f32 %v2009, 1e-05
        %v2026 = vadd.f32 %v2010, 1e-05
        %v2027 = vrsqrt.pop %v2011
        %v2028 = vrsqrt.pop %v2012
        %v2029 = vrsqrt.pop %v2013
        %v2030 = vrsqrt.pop %v2014
        %v2031 = vrsqrt.pop %v2015
        %v2032 = vrsqrt.pop %v2016
        %v2033 = vrsqrt.pop %v2017
        %v2034 = vrsqrt.pop %v2018
        %v2035 = vrsqrt.pop %v2019
        %v2036 = vrsqrt.pop %v2020
        %v2037 = vrsqrt.pop %v2021
        %v2038 = vrsqrt.pop %v2022
        %v2039 = vrsqrt.pop %v2023
        %v2040 = vrsqrt.pop %v2024
        %v2041 = vrsqrt.pop %v2025
        %v2042 = vrsqrt.pop %v2026
        %v2043 = vmul.f32 %v1931, %v2027
        %v2044 = vmul.f32 %v1932, %v2028
        %v2045 = vmul.f32 %v1933, %v2029
        %v2046 = vmul.f32 %v1934, %v2030
        %v2047 = vmul.f32 %v1935, %v2031
        %v2048 = vmul.f32 %v1936, %v2032
        %v2049 = vmul.f32 %v1937, %v2033
        %v2050 = vmul.f32 %v1938, %v2034
        %v2051 = vmul.f32 %v1939, %v2035
        %v2052 = vmul.f32 %v1940, %v2036
        %v2053 = vmul.f32 %v1941, %v2037
        %v2054 = vmul.f32 %v1942, %v2038
        %v2055 = vmul.f32 %v1943, %v2039
        %v2056 = vmul.f32 %v1944, %v2040
        %v2057 = vmul.f32 %v1945, %v2041
        %v2058 = vmul.f32 %v1946, %v2042
        %v2059 = vld [vmem:[%s5] sm:$0x1]
        %v2061 = vlaneseq
        %v2062 = vshrl.u32 %v2061, 7
        %v2063 = vsub.s32 0, %v2062
        %v2064 = vrot.slane %v2059, %v2063
        %v2066 = vmul.f32 %v2043, %v2064
        %v2067 = vmul.f32 %v2044, %v2064
        %v2068 = vmul.f32 %v2045, %v2064
        %v2069 = vmul.f32 %v2046, %v2064
        %v2070 = vmul.f32 %v2047, %v2064
        %v2071 = vmul.f32 %v2048, %v2064
        %v2072 = vmul.f32 %v2049, %v2064
        %v2073 = vmul.f32 %v2050, %v2064
        %v2074 = vmul.f32 %v2051, %v2064
        %v2075 = vmul.f32 %v2052, %v2064
        %v2076 = vmul.f32 %v2053, %v2064
        %v2077 = vmul.f32 %v2054, %v2064
        %v2078 = vmul.f32 %v2055, %v2064
        %v2079 = vmul.f32 %v2056, %v2064
        %v2080 = vmul.f32 %v2057, %v2064
        %v2081 = vmul.f32 %v2058, %v2064
        %v2082 = vld [vmem:[%s6] sm:$0x1]
        %v2084 = vlaneseq
        %v2085 = vshrl.u32 %v2084, 7
        %v2086 = vsub.s32 0, %v2085
        %v2087 = vrot.slane %v2082, %v2086
        %v2089 = vadd.f32 %v2066, %v2087
        %v2090 = vadd.f32 %v2067, %v2087
        %v2091 = vadd.f32 %v2068, %v2087
        %v2092 = vadd.f32 %v2069, %v2087
        %v2093 = vadd.f32 %v2070, %v2087
        %v2094 = vadd.f32 %v2071, %v2087
        %v2095 = vadd.f32 %v2072, %v2087
        %v2096 = vadd.f32 %v2073, %v2087
        %v2097 = vadd.f32 %v2074, %v2087
        %v2098 = vadd.f32 %v2075, %v2087
        %v2099 = vadd.f32 %v2076, %v2087
        %v2100 = vadd.f32 %v2077, %v2087
        %v2101 = vadd.f32 %v2078, %v2087
        %v2102 = vadd.f32 %v2079, %v2087
        %v2103 = vadd.f32 %v2080, %v2087
        %v2104 = vadd.f32 %v2081, %v2087
        %v2105 = vpack.c.bf16 %v2090, %v2089
        %v2106 = vpack.c.bf16 %v2092, %v2091
        %v2107 = vpack.c.bf16 %v2094, %v2093
        %v2108 = vpack.c.bf16 %v2096, %v2095
        %v2109 = vpack.c.bf16 %v2098, %v2097
        %v2110 = vpack.c.bf16 %v2100, %v2099
        %v2111 = vpack.c.bf16 %v2102, %v2101
        %v2112 = vpack.c.bf16 %v2104, %v2103
        %v2121 = vunpack.c.l.b16 %v2105
        %v2122 = vunpack.c.h.b16 %v2105
        %v2123 = vunpack.c.l.b16 %v2106
        %v2124 = vunpack.c.h.b16 %v2106
        %v2125 = vunpack.c.l.b16 %v2107
        %v2126 = vunpack.c.h.b16 %v2107
        %v2127 = vunpack.c.l.b16 %v2108
        %v2128 = vunpack.c.h.b16 %v2108
        %v2129 = vunpack.c.l.b16 %v2109
        %v2130 = vunpack.c.h.b16 %v2109
        %v2131 = vunpack.c.l.b16 %v2110
        %v2132 = vunpack.c.h.b16 %v2110
        %v2133 = vunpack.c.l.b16 %v2111
        %v2134 = vunpack.c.h.b16 %v2111
        %v2135 = vunpack.c.l.b16 %v2112
        %v2136 = vunpack.c.h.b16 %v2112
        %v2137 = vpack.c.b16 %v2121, %v2121
        %v2138 = vpack.c.b16 %v2122, %v2122
        %v2139 = vpack.c.b16 %v2123, %v2123
        %v2140 = vpack.c.b16 %v2124, %v2124
        %v2141 = vpack.c.b16 %v2125, %v2125
        %v2142 = vpack.c.b16 %v2126, %v2126
        %v2143 = vpack.c.b16 %v2127, %v2127
        %v2144 = vpack.c.b16 %v2128, %v2128
        %v2145 = vpack.c.b16 %v2129, %v2129
        %v2146 = vpack.c.b16 %v2130, %v2130
        %v2147 = vpack.c.b16 %v2131, %v2131
        %v2148 = vpack.c.b16 %v2132, %v2132
        %v2149 = vpack.c.b16 %v2133, %v2133
        %v2150 = vpack.c.b16 %v2134, %v2134
        %v2151 = vpack.c.b16 %v2135, %v2135
        %v2152 = vpack.c.b16 %v2136, %v2136
        %2169 = vst [vmem:[%s272] sm:$0xf] %v2137
        %2170 = vst [vmem:[%s272 + $0x4] sm:$0xf] %v2138
        %2171 = vst [vmem:[%s272 + $0x8] sm:$0xf] %v2139
        %2172 = vst [vmem:[%s272 + $0xc] sm:$0xf] %v2140
        %2173 = vst [vmem:[%s272 + $0x10] sm:$0xf] %v2141
        %2174 = vst [vmem:[%s272 + $0x14] sm:$0xf] %v2142
        %2175 = vst [vmem:[%s272 + $0x18] sm:$0xf] %v2143
        %2176 = vst [vmem:[%s272 + $0x1c] sm:$0xf] %v2144
        %2177 = vst [vmem:[%s272 + $0x20] sm:$0xf] %v2145
        %2178 = vst [vmem:[%s272 + $0x24] sm:$0xf] %v2146
        %2179 = vst [vmem:[%s272 + $0x28] sm:$0xf] %v2147
        %2180 = vst [vmem:[%s272 + $0x2c] sm:$0xf] %v2148
        %2181 = vst [vmem:[%s272 + $0x30] sm:$0xf] %v2149
        %2182 = vst [vmem:[%s272 + $0x34] sm:$0xf] %v2150
        %2183 = vst [vmem:[%s272 + $0x38] sm:$0xf] %v2151
        %2184 = vst [vmem:[%s272 + $0x3c] sm:$0xf] %v2152
        %s2185 = sand.u32 %s181, 1
        %s2186 = scalar_lea.sflag [#allocation3], %s2185
        %s2187 = sand.u32 %s181, 1
        %s2188 = smul.addr %s2187, 64
        %s2189 = scalar_lea.vmem [#allocation2], %s2188
        // Predicated region
        $region49: #{backbone_forward.19} parent=47 // pred_check
          %p2190 = pneg %p191
        $region50: #{backbone_forward.19} parent=47 // pred_check_branch
          %2192 = sbr.rel (%p2190) target = $region52
        $region51: #{backbone_forward.19} parent=47 // pred_region
          %s2193 = smul.u32 16, %s21
          %s2195 = ssub.s32 1024, 1024
          %2196 = vsyncadd %s2186, %s2195
          %s2197 = smul.addr %s2193, 64
          %s2198 = scalar_lea.hbm %s7, %s2197
          %s2199 = sshll.u32 %s2189, 4
          %s2200 = int_to_ptr.vmem [resolvable:$true] %s2199
          %2205 = dma.vmem_to_hbm [thread:$0]  %s2200, 1024, %s2198, %s2186, 64, 64, 4
        $region52: #{backbone_forward.19} parent=47 // pred_fallthru
          _
      $region48: #{backbone_forward.19} parent=5 // pred_fallthru
        _
      %p2206 = scmp.le.s32.totalorder 2, %s16
      // Predicated region
      $region53: #{backbone_forward.19} parent=5 // pred_check
        %p2207 = pneg %p2206
      $region54: #{backbone_forward.19} parent=5 // pred_check_branch
        %2209 = sbr.rel (%p2207) target = $region56
      $region55: #{backbone_forward.19} parent=5 // pred_region
        %s2210 = ssub.s32 %s16, 2
        // Predicated region
        $region57: #{backbone_forward.19} parent=55 // pred_check
          %p2211 = pneg %p197
        $region58: #{backbone_forward.19} parent=55 // pred_check_branch
          %2213 = sbr.rel (%p2211) target = $region60
        $region59: #{backbone_forward.19} parent=55 // pred_region
          %s2214 = sand.u32 %s182, 1
          %s2215 = scalar_lea.sflag [#allocation3], %s2214
          %s2216 = sand.u32 %s182, 1
          %s2217 = smul.addr %s2216, 64
          %s2218 = scalar_lea.vmem [#allocation2], %s2217
          %2219 = dma.done %s2215, 1024
        $region60: #{backbone_forward.19} parent=55 // pred_fallthru
          _
      $region56: #{backbone_forward.19} parent=5 // pred_fallthru
        _
    $region6: #{backbone_forward.19} parent=1 // loop_footer
      %s20 = sadd.s32 1, %s16
    $region7: #{backbone_forward.19} parent=1 // loop_footer_branch
      %15 = sbr.rel target = $region3
    $region8: #{backbone_forward.19} parent=1 // loop_exit
      _
    %2220 = vsyncpa [#allocation3], 1
    %s2221 = scalar_lea.sflag [#allocation3], 1
    %2222 = vsyncpa %s2221, 1

</llo_original>
